<compile_context>
chip_gen: v7x
topology: tpu7x:2x2x1
jax: 0.10.0
libtpu: 0.0.40
codegen_flags: <defaults>
</compile_context>

<pallas_src>
import functools

import jax
import jax.numpy as jnp
from jax.experimental import pallas as pl
from jax.experimental.pallas import tpu as pltpu


def _layernorm(x, g, b, eps=1e-5):
    mu = jnp.mean(x, axis=-1, keepdims=True)
    var = jnp.mean((x - mu) ** 2, axis=-1, keepdims=True)
    return (x - mu) * jax.lax.rsqrt(var + eps) * g + b


def _transformer_kernel(x_ref, wqkv_ref, wout_ref, w1_ref, w2_ref, vec_ref,
                        o_ref, acc_ref, *, heads, dim_head, tokens, dim,
                        mlp_dim, block_patches, matmul_dtype):
    """One grid step = one transformer layer applied to a TB-patch slab."""
    layer = pl.program_id(1)
    last_layer = pl.num_programs(1) - 1
    inner = heads * dim_head
    scale = dim_head ** (-0.5)
    m = block_patches * tokens                    # tall MXU M dimension

    # Load the activation slab into the resident f32 accumulator once.
    @pl.when(layer == 0)
    def _():
        acc_ref[...] = x_ref[...].astype(jnp.float32).reshape(m, dim)

    # Packed per-layer vectors: rows = [ln1g, ln1b, bout, ln2g, ln2b, b2, b1].
    vec = vec_ref[...]
    ln1g, ln1b = vec[0:1, :dim], vec[1:2, :dim]
    bout = vec[2:3, :dim]
    ln2g, ln2b = vec[3:4, :dim], vec[4:5, :dim]
    b2 = vec[5:6, :dim]
    b1 = vec[6:7, :mlp_dim]

    x = acc_ref[...]                              # (m, dim), f32

    # ---------------- PreNorm + multi-head self attention ----------------
    xn = _layernorm(x, ln1g, ln1b).astype(matmul_dtype)
    qkv = jnp.dot(xn, wqkv_ref[...].astype(matmul_dtype),
                  preferred_element_type=jnp.float32)        # (m, 3*inner)

    head_outs = []
    for h in range(heads):                        # static unroll (heads small)
        q = qkv[:, h * dim_head:(h + 1) * dim_head]
        k = qkv[:, inner + h * dim_head:inner + (h + 1) * dim_head]
        v = qkv[:, 2 * inner + h * dim_head:2 * inner + (h + 1) * dim_head]
        q = q.reshape(block_patches, tokens, dim_head)
        k = k.reshape(block_patches, tokens, dim_head)
        v = v.reshape(block_patches, tokens, dim_head)
        # Attention batched over all TB patches in the slab.
        dots = jnp.einsum("bnd,bmd->bnm", q.astype(matmul_dtype),
                          k.astype(matmul_dtype),
                          preferred_element_type=jnp.float32) * scale
        dots = dots - jnp.max(dots, axis=-1, keepdims=True)
        e = jnp.exp(dots)
        p = e * pl.reciprocal(jnp.sum(e, axis=-1, keepdims=True), approx=True)
        head_outs.append(
            jnp.einsum("bnm,bmd->bnd", p.astype(matmul_dtype),
                       v.astype(matmul_dtype),
                       preferred_element_type=jnp.float32))
    attn = jnp.concatenate(head_outs, axis=-1).reshape(m, inner)
    attn_out = jnp.dot(attn.astype(matmul_dtype),
                       wout_ref[...].astype(matmul_dtype),
                       preferred_element_type=jnp.float32) + bout
    x = x + attn_out                              # residual 1 (f32)

    # ---------------- PreNorm + FeedForward (Linear -> SiLU -> Linear) ---
    xn2 = _layernorm(x, ln2g, ln2b).astype(matmul_dtype)
    h1 = jnp.dot(xn2, w1_ref[...].astype(matmul_dtype),
                 preferred_element_type=jnp.float32) + b1
    h1 = h1 * jax.nn.sigmoid(h1)                  # SiLU in f32 (VPU + EUP)
    ff = jnp.dot(h1.astype(matmul_dtype), w2_ref[...].astype(matmul_dtype),
                 preferred_element_type=jnp.float32) + b2
    x = x + ff                                    # residual 2 (f32)

    acc_ref[...] = x                              # stays resident in VMEM

    # Write the slab back to HBM only after the last layer.
    @pl.when(layer == last_layer)
    def _():
        o_ref[...] = x.reshape(block_patches, tokens, dim).astype(o_ref.dtype)


def _pick_block(num_patches, target):
    """Largest slab (#patches) <= target dividing num_patches; prefer x8."""
    if num_patches <= target:
        return num_patches
    t8 = target - target % 8
    for tb in range(t8, 7, -8):
        if num_patches % tb == 0:
            return tb
    for tb in range(target, 0, -1):
        if num_patches % tb == 0:
            return tb
    return num_patches


def transformer_forward(x, layer_params, *, heads, dim_head,
                        block_patches=256, matmul_dtype=jnp.float32):
    """x: (B, P, N, D) -> (B, P, N, D); whole transformer stack, one kernel."""
    B, P, N, D = x.shape
    depth = len(layer_params)
    inner = heads * dim_head
    mlp_dim = layer_params[0]["w1"].shape[1]
    BP = B * P
    TB = _pick_block(BP, block_patches)
    n_blocks = BP // TB

    x3 = x.reshape(BP, N, D)

    # Stack per-layer weights along a leading depth axis (indexed by the
    # layer grid coordinate inside the kernel).
    wqkv = jnp.stack([p["wqkv"] for p in layer_params])      # (depth, D, 3*inner)
    wout = jnp.stack([p["wout"] for p in layer_params])      # (depth, inner, D)
    w1 = jnp.stack([p["w1"] for p in layer_params])          # (depth, D, mlp)
    w2 = jnp.stack([p["w2"] for p in layer_params])          # (depth, mlp, D)

    # Pack the small per-layer vectors into one (depth, 8, W) array,
    # rows = [ln1g, ln1b, bout, ln2g, ln2b, b2, b1, pad].
    W = max(D, mlp_dim)

    def _row(v):
        v = v.reshape(-1).astype(jnp.float32)
        return jnp.pad(v, (0, W - v.shape[0]))

    vecs = jnp.stack([
        jnp.stack([_row(p["ln1g"]), _row(p["ln1b"]), _row(p["bout"]),
                   _row(p["ln2g"]), _row(p["ln2b"]), _row(p["b2"]),
                   _row(p["b1"]), jnp.zeros((W,), jnp.float32)])
        for p in layer_params])                               # (depth, 8, W)

    kernel = functools.partial(
        _transformer_kernel, heads=heads, dim_head=dim_head, tokens=N, dim=D,
        mlp_dim=mlp_dim, block_patches=TB, matmul_dtype=matmul_dtype)

    out3 = pl.pallas_call(
        kernel,
        out_shape=jax.ShapeDtypeStruct((BP, N, D), x.dtype),
        grid=(n_blocks, depth),
        in_specs=[
            pl.BlockSpec((TB, N, D), lambda i, l: (i, 0, 0)),          # x slab
            pl.BlockSpec((None, D, 3 * inner), lambda i, l: (l, 0, 0)),
            pl.BlockSpec((None, inner, D), lambda i, l: (l, 0, 0)),
            pl.BlockSpec((None, D, mlp_dim), lambda i, l: (l, 0, 0)),
            pl.BlockSpec((None, mlp_dim, D), lambda i, l: (l, 0, 0)),
            pl.BlockSpec((None, 8, W), lambda i, l: (l, 0, 0)),
        ],
        out_specs=pl.BlockSpec((TB, N, D), lambda i, l: (i, 0, 0)),
        scratch_shapes=[pltpu.VMEM((TB * N, D), jnp.float32)],
        compiler_params=pltpu.CompilerParams(
            dimension_semantics=("parallel", "arbitrary")),
    )(x3, wqkv, wout, w1, w2, vecs)

    return out3.reshape(B, P, N, D)


# ----------------------- pure-JAX reference ---------------------------------
def _ref_block(x, p, heads, dim_head):
    inner = heads * dim_head
    scale = dim_head ** (-0.5)

    def ln(y, g, b, eps=1e-5):
        mu = jnp.mean(y, axis=-1, keepdims=True)
        var = jnp.mean((y - mu) ** 2, axis=-1, keepdims=True)
        return (y - mu) / jnp.sqrt(var + eps) * g[0] + b[0]

    xn = ln(x, p["ln1g"], p["ln1b"])
    qkv = xn @ p["wqkv"]
    q, k, v = jnp.split(qkv, 3, axis=-1)
    B, P, N, _ = x.shape
    rs = lambda t: t.reshape(B, P, N, heads, dim_head).transpose(0, 1, 3, 2, 4)
    q, k, v = rs(q), rs(k), rs(v)
    dots = jnp.einsum("bphnd,bphmd->bphnm", q, k) * scale
    attn = jax.nn.softmax(dots, axis=-1)
    out = jnp.einsum("bphnm,bphmd->bphnd", attn, v)
    out = out.transpose(0, 1, 3, 2, 4).reshape(B, P, N, inner)
    x = x + (out @ p["wout"] + p["bout"][0])

    xn2 = ln(x, p["ln2g"], p["ln2b"])
    h1 = xn2 @ p["w1"] + p["b1"][0]
    h1 = h1 * jax.nn.sigmoid(h1)
    return x + (h1 @ p["w2"] + p["b2"][0])


def _ref_forward(x, layer_params, heads, dim_head):
    for p in layer_params:
        x = _ref_block(x, p, heads, dim_head)
    return x


# ----------------------- parameter init -------------------------------------
def init_params(key, dim, depth, heads, dim_head, mlp_dim):
    inner = heads * dim_head
    layers = []
    for _ in range(depth):
        keys = jax.random.split(key, 5)
        key = keys[0]
        layers.append(dict(
            ln1g=jnp.ones((1, dim), jnp.float32),
            ln1b=jnp.zeros((1, dim), jnp.float32),
            wqkv=0.05 * jax.random.normal(keys[1], (dim, 3 * inner), jnp.float32),
            wout=0.05 * jax.random.normal(keys[2], (inner, dim), jnp.float32),
            bout=jnp.zeros((1, dim), jnp.float32),
            ln2g=jnp.ones((1, dim), jnp.float32),
            ln2b=jnp.zeros((1, dim), jnp.float32),
            w1=0.05 * jax.random.normal(keys[3], (dim, mlp_dim), jnp.float32),
            b1=jnp.zeros((1, mlp_dim), jnp.float32),
            w2=0.05 * jax.random.normal(keys[4], (mlp_dim, dim), jnp.float32),
            b2=jnp.zeros((1, dim), jnp.float32),
        ))
    return layers


if __name__ == "__main__":
    # Small shapes: dim=32, depth=2, heads=4, dim_head=8, mlp_dim=64
    B, P, N, dim = 2, 4, 8, 32
    depth, heads, dim_head, mlp_dim = 2, 4, 8, 64

    key = jax.random.PRNGKey(0)
    kx, kp = jax.random.split(key)
    x = jax.random.normal(kx, (B, P, N, dim), jnp.float32)
    params = init_params(kp, dim, depth, heads, dim_head, mlp_dim)

    out = transformer_forward(x, params, heads=heads, dim_head=dim_head)
    out = jax.block_until_ready(out)

    ref = _ref_forward(x, params, heads, dim_head)
    assert out.shape == (B, P, N, dim)
    # pl.reciprocal(approx=True) in the softmax adds ~1e-4 relative error vs
    # the exact-divide reference, so tolerance is 1e-3 instead of 1e-4.
    assert jnp.allclose(out, ref, atol=1e-3, rtol=1e-3), "mismatch vs JAX reference"

    print("KERNEL_OK")
</pallas_src>

<mosaic_0001>
module attributes {stable_mosaic.version = 11 : i64} {
  func.func @_transformer_kernel(%arg0: i32, %arg1: i32, %arg2: memref<8x8x32xf32, #tpu.memory_space<vmem>>, %arg3: memref<1x32x96xf32, #tpu.memory_space<vmem>>, %arg4: memref<1x32x32xf32, #tpu.memory_space<vmem>>, %arg5: memref<1x32x64xf32, #tpu.memory_space<vmem>>, %arg6: memref<1x64x32xf32, #tpu.memory_space<vmem>>, %arg7: memref<1x8x64xf32, #tpu.memory_space<vmem>>, %arg8: memref<8x8x32xf32, #tpu.memory_space<vmem>>, %arg9: memref<64x32xf32, #tpu.memory_space<vmem>>) attributes {dimension_semantics = [#tpu.dimension_semantics<parallel>, #tpu.dimension_semantics<arbitrary>], iteration_bounds = array<i64: 1, 2>, scalar_prefetch = 0 : i64, scratch_operands = 1 : i64, tpu.core_type = #tpu.core_type<tc>, window_params = [{transform_indices = @transform_0, window_bounds = array<i64: 8, 8, 32>}, {transform_indices = @transform_1, window_bounds = array<i64: 1, 32, 96>}, {transform_indices = @transform_2, window_bounds = array<i64: 1, 32, 32>}, {transform_indices = @transform_3, window_bounds = array<i64: 1, 32, 64>}, {transform_indices = @transform_4, window_bounds = array<i64: 1, 64, 32>}, {transform_indices = @transform_5, window_bounds = array<i64: 1, 8, 64>}, {transform_indices = @transform_6, window_bounds = array<i64: 8, 8, 32>}]} {
    %c0_i32 = arith.constant 0 : i32
    %0 = arith.cmpi eq, %arg1, %c0_i32 : i32
    %1 = arith.extui %0 : i1 to i32
    %c0_i32_0 = arith.constant 0 : i32
    %2 = arith.cmpi ne, %1, %c0_i32_0 : i32
    scf.if %2 {
      %c0_54 = arith.constant 0 : index
      %c0_55 = arith.constant 0 : index
      %c0_56 = arith.constant 0 : index
      %169 = vector.load %arg2[%c0_54, %c0_55, %c0_56] : memref<8x8x32xf32, #tpu.memory_space<vmem>>, vector<8x8x32xf32>
      %170 = vector.shape_cast %169 : vector<8x8x32xf32> to vector<64x32xf32>
      %c0_57 = arith.constant 0 : index
      %c0_58 = arith.constant 0 : index
      %171 = vector.load %arg9[%c0_57, %c0_58] : memref<64x32xf32, #tpu.memory_space<vmem>>, vector<64x32xf32>
      tpu.vector_store %arg9[%c0_57, %c0_58], %170 {strides = array<i32>} : memref<64x32xf32, #tpu.memory_space<vmem>>, vector<64x32xf32>,
    } else {
    }
    %c0 = arith.constant 0 : index
    %c0_1 = arith.constant 0 : index
    %c0_2 = arith.constant 0 : index
    %3 = vector.load %arg7[%c0, %c0_1, %c0_2] : memref<1x8x64xf32, #tpu.memory_space<vmem>>, vector<1x8x64xf32>
    %4 = vector.shape_cast %3 : vector<1x8x64xf32> to vector<8x64xf32>
    %5 = vector.extract_strided_slice %4 {offsets = [0, 0], sizes = [1, 32], strides = [1, 1]} : vector<8x64xf32> to vector<1x32xf32>
    %6 = vector.extract_strided_slice %4 {offsets = [1, 0], sizes = [1, 32], strides = [1, 1]} : vector<8x64xf32> to vector<1x32xf32>
    %7 = vector.extract_strided_slice %4 {offsets = [2, 0], sizes = [1, 32], strides = [1, 1]} : vector<8x64xf32> to vector<1x32xf32>
    %8 = vector.extract_strided_slice %4 {offsets = [3, 0], sizes = [1, 32], strides = [1, 1]} : vector<8x64xf32> to vector<1x32xf32>
    %9 = vector.extract_strided_slice %4 {offsets = [4, 0], sizes = [1, 32], strides = [1, 1]} : vector<8x64xf32> to vector<1x32xf32>
    %10 = vector.extract_strided_slice %4 {offsets = [5, 0], sizes = [1, 32], strides = [1, 1]} : vector<8x64xf32> to vector<1x32xf32>
    %11 = vector.extract_strided_slice %4 {offsets = [6, 0], sizes = [1, 64], strides = [1, 1]} : vector<8x64xf32> to vector<1x64xf32>
    %c0_3 = arith.constant 0 : index
    %c0_4 = arith.constant 0 : index
    %12 = vector.load %arg9[%c0_3, %c0_4] : memref<64x32xf32, #tpu.memory_space<vmem>>, vector<64x32xf32>
    %cst = arith.constant dense<0.000000e+00> : vector<64xf32>
    %13 = vector.multi_reduction <add>, %12, %cst [1] : vector<64x32xf32> to vector<64xf32>
    %14 = vector.shape_cast %13 : vector<64xf32> to vector<64x1xf32>
    %cst_5 = arith.constant 3.200000e+01 : f32
    %15 = vector.broadcast %cst_5 : f32 to vector<64x1xf32>
    %16 = arith.divf %14, %15 : vector<64x1xf32>
    %17 = vector.broadcast %16 : vector<64x1xf32> to vector<64x32xf32>
    %18 = arith.subf %12, %17 : vector<64x32xf32>
    %19 = arith.mulf %18, %18 : vector<64x32xf32>
    %cst_6 = arith.constant dense<0.000000e+00> : vector<64xf32>
    %20 = vector.multi_reduction <add>, %19, %cst_6 [1] : vector<64x32xf32> to vector<64xf32>
    %21 = vector.shape_cast %20 : vector<64xf32> to vector<64x1xf32>
    %cst_7 = arith.constant 3.200000e+01 : f32
    %22 = vector.broadcast %cst_7 : f32 to vector<64x1xf32>
    %23 = arith.divf %21, %22 : vector<64x1xf32>
    %24 = vector.broadcast %16 : vector<64x1xf32> to vector<64x32xf32>
    %25 = arith.subf %12, %24 : vector<64x32xf32>
    %cst_8 = arith.constant 9.99999974E-6 : f32
    %26 = vector.broadcast %cst_8 : f32 to vector<64x1xf32>
    %27 = arith.addf %23, %26 : vector<64x1xf32>
    %28 = math.rsqrt %27 : vector<64x1xf32>
    %29 = vector.broadcast %28 : vector<64x1xf32> to vector<64x32xf32>
    %30 = arith.mulf %25, %29 : vector<64x32xf32>
    %31 = vector.broadcast %5 : vector<1x32xf32> to vector<64x32xf32>
    %32 = arith.mulf %30, %31 : vector<64x32xf32>
    %33 = vector.broadcast %6 : vector<1x32xf32> to vector<64x32xf32>
    %34 = arith.addf %32, %33 : vector<64x32xf32>
    %c0_9 = arith.constant 0 : index
    %c0_10 = arith.constant 0 : index
    %c0_11 = arith.constant 0 : index
    %35 = vector.load %arg3[%c0_9, %c0_10, %c0_11] : memref<1x32x96xf32, #tpu.memory_space<vmem>>, vector<1x32x96xf32>
    %36 = vector.shape_cast %35 : vector<1x32x96xf32> to vector<32x96xf32>
    %cst_12 = arith.constant dense<0.000000e+00> : vector<64x96xf32>
    %37 = tpu.matmul %34, %36, %cst_12 {dimension_numbers = #tpu.dot_dimension_numbers<[1], [0], [0], [1], [0, 0, 1, 1], [], []>} : vector<64x32xf32>, vector<32x96xf32>, vector<64x96xf32> -> vector<64x96xf32>
    %38 = vector.extract_strided_slice %37 {offsets = [0, 0], sizes = [64, 8], strides = [1, 1]} : vector<64x96xf32> to vector<64x8xf32>
    %39 = vector.extract_strided_slice %37 {offsets = [0, 32], sizes = [64, 8], strides = [1, 1]} : vector<64x96xf32> to vector<64x8xf32>
    %40 = vector.extract_strided_slice %37 {offsets = [0, 64], sizes = [64, 8], strides = [1, 1]} : vector<64x96xf32> to vector<64x8xf32>
    %41 = vector.shape_cast %38 : vector<64x8xf32> to vector<8x8x8xf32>
    %42 = vector.shape_cast %39 : vector<64x8xf32> to vector<8x8x8xf32>
    %43 = vector.shape_cast %40 : vector<64x8xf32> to vector<8x8x8xf32>
    "tpu.trace_start"() <{level = 10 : i32, message = "bnd,bmd->bnm"}> : () -> ()
    %cst_13 = arith.constant dense<0.000000e+00> : vector<8x8x8xf32>
    %44 = tpu.matmul %41, %42, %cst_13 {dimension_numbers = #tpu.dot_dimension_numbers<[2], [2], [1], [1], [0, 0, 0, 1, 1, 1], [0], [0]>} : vector<8x8x8xf32>, vector<8x8x8xf32>, vector<8x8x8xf32> -> vector<8x8x8xf32>
    "tpu.trace_stop"() : () -> ()
    %cst_14 = arith.constant 0.353553385 : f32
    %45 = vector.broadcast %cst_14 : f32 to vector<8x8x8xf32>
    %46 = arith.mulf %44, %45 : vector<8x8x8xf32>
    %cst_15 = arith.constant dense<0xFF800000> : vector<8x8xf32>
    %47 = vector.multi_reduction <maximumf>, %46, %cst_15 [2] : vector<8x8x8xf32> to vector<8x8xf32>
    %48 = vector.shape_cast %47 : vector<8x8xf32> to vector<8x8x1xf32>
    %49 = vector.broadcast %48 : vector<8x8x1xf32> to vector<8x8x8xf32>
    %50 = arith.subf %46, %49 : vector<8x8x8xf32>
    %51 = math.exp %50 : vector<8x8x8xf32>
    %cst_16 = arith.constant dense<0.000000e+00> : vector<8x8xf32>
    %52 = vector.multi_reduction <add>, %51, %cst_16 [2] : vector<8x8x8xf32> to vector<8x8xf32>
    %53 = vector.shape_cast %52 : vector<8x8xf32> to vector<8x8x1xf32>
    %54 = tpu.reciprocal %53 {approx = true} : vector<8x8x1xf32> -> vector<8x8x1xf32>
    %55 = vector.broadcast %54 : vector<8x8x1xf32> to vector<8x8x8xf32>
    %56 = arith.mulf %51, %55 : vector<8x8x8xf32>
    "tpu.trace_start"() <{level = 10 : i32, message = "bnm,bmd->bnd"}> : () -> ()
    %cst_17 = arith.constant dense<0.000000e+00> : vector<8x8x8xf32>
    %57 = tpu.matmul %56, %43, %cst_17 {dimension_numbers = #tpu.dot_dimension_numbers<[2], [1], [1], [2], [0, 0, 0, 1, 1, 2], [0], [0]>} : vector<8x8x8xf32>, vector<8x8x8xf32>, vector<8x8x8xf32> -> vector<8x8x8xf32>
    "tpu.trace_stop"() : () -> ()
    %58 = vector.extract_strided_slice %37 {offsets = [0, 8], sizes = [64, 8], strides = [1, 1]} : vector<64x96xf32> to vector<64x8xf32>
    %59 = vector.extract_strided_slice %37 {offsets = [0, 40], sizes = [64, 8], strides = [1, 1]} : vector<64x96xf32> to vector<64x8xf32>
    %60 = vector.extract_strided_slice %37 {offsets = [0, 72], sizes = [64, 8], strides = [1, 1]} : vector<64x96xf32> to vector<64x8xf32>
    %61 = vector.shape_cast %58 : vector<64x8xf32> to vector<8x8x8xf32>
    %62 = vector.shape_cast %59 : vector<64x8xf32> to vector<8x8x8xf32>
    %63 = vector.shape_cast %60 : vector<64x8xf32> to vector<8x8x8xf32>
    "tpu.trace_start"() <{level = 10 : i32, message = "bnd,bmd->bnm"}> : () -> ()
    %cst_18 = arith.constant dense<0.000000e+00> : vector<8x8x8xf32>
    %64 = tpu.matmul %61, %62, %cst_18 {dimension_numbers = #tpu.dot_dimension_numbers<[2], [2], [1], [1], [0, 0, 0, 1, 1, 1], [0], [0]>} : vector<8x8x8xf32>, vector<8x8x8xf32>, vector<8x8x8xf32> -> vector<8x8x8xf32>
    "tpu.trace_stop"() : () -> ()
    %cst_19 = arith.constant 0.353553385 : f32
    %65 = vector.broadcast %cst_19 : f32 to vector<8x8x8xf32>
    %66 = arith.mulf %64, %65 : vector<8x8x8xf32>
    %cst_20 = arith.constant dense<0xFF800000> : vector<8x8xf32>
    %67 = vector.multi_reduction <maximumf>, %66, %cst_20 [2] : vector<8x8x8xf32> to vector<8x8xf32>
    %68 = vector.shape_cast %67 : vector<8x8xf32> to vector<8x8x1xf32>
    %69 = vector.broadcast %68 : vector<8x8x1xf32> to vector<8x8x8xf32>
    %70 = arith.subf %66, %69 : vector<8x8x8xf32>
    %71 = math.exp %70 : vector<8x8x8xf32>
    %cst_21 = arith.constant dense<0.000000e+00> : vector<8x8xf32>
    %72 = vector.multi_reduction <add>, %71, %cst_21 [2] : vector<8x8x8xf32> to vector<8x8xf32>
    %73 = vector.shape_cast %72 : vector<8x8xf32> to vector<8x8x1xf32>
    %74 = tpu.reciprocal %73 {approx = true} : vector<8x8x1xf32> -> vector<8x8x1xf32>
    %75 = vector.broadcast %74 : vector<8x8x1xf32> to vector<8x8x8xf32>
    %76 = arith.mulf %71, %75 : vector<8x8x8xf32>
    "tpu.trace_start"() <{level = 10 : i32, message = "bnm,bmd->bnd"}> : () -> ()
    %cst_22 = arith.constant dense<0.000000e+00> : vector<8x8x8xf32>
    %77 = tpu.matmul %76, %63, %cst_22 {dimension_numbers = #tpu.dot_dimension_numbers<[2], [1], [1], [2], [0, 0, 0, 1, 1, 2], [0], [0]>} : vector<8x8x8xf32>, vector<8x8x8xf32>, vector<8x8x8xf32> -> vector<8x8x8xf32>
    "tpu.trace_stop"() : () -> ()
    %78 = vector.extract_strided_slice %37 {offsets = [0, 16], sizes = [64, 8], strides = [1, 1]} : vector<64x96xf32> to vector<64x8xf32>
    %79 = vector.extract_strided_slice %37 {offsets = [0, 48], sizes = [64, 8], strides = [1, 1]} : vector<64x96xf32> to vector<64x8xf32>
    %80 = vector.extract_strided_slice %37 {offsets = [0, 80], sizes = [64, 8], strides = [1, 1]} : vector<64x96xf32> to vector<64x8xf32>
    %81 = vector.shape_cast %78 : vector<64x8xf32> to vector<8x8x8xf32>
    %82 = vector.shape_cast %79 : vector<64x8xf32> to vector<8x8x8xf32>
    %83 = vector.shape_cast %80 : vector<64x8xf32> to vector<8x8x8xf32>
    "tpu.trace_start"() <{level = 10 : i32, message = "bnd,bmd->bnm"}> : () -> ()
    %cst_23 = arith.constant dense<0.000000e+00> : vector<8x8x8xf32>
    %84 = tpu.matmul %81, %82, %cst_23 {dimension_numbers = #tpu.dot_dimension_numbers<[2], [2], [1], [1], [0, 0, 0, 1, 1, 1], [0], [0]>} : vector<8x8x8xf32>, vector<8x8x8xf32>, vector<8x8x8xf32> -> vector<8x8x8xf32>
    "tpu.trace_stop"() : () -> ()
    %cst_24 = arith.constant 0.353553385 : f32
    %85 = vector.broadcast %cst_24 : f32 to vector<8x8x8xf32>
    %86 = arith.mulf %84, %85 : vector<8x8x8xf32>
    %cst_25 = arith.constant dense<0xFF800000> : vector<8x8xf32>
    %87 = vector.multi_reduction <maximumf>, %86, %cst_25 [2] : vector<8x8x8xf32> to vector<8x8xf32>
    %88 = vector.shape_cast %87 : vector<8x8xf32> to vector<8x8x1xf32>
    %89 = vector.broadcast %88 : vector<8x8x1xf32> to vector<8x8x8xf32>
    %90 = arith.subf %86, %89 : vector<8x8x8xf32>
    %91 = math.exp %90 : vector<8x8x8xf32>
    %cst_26 = arith.constant dense<0.000000e+00> : vector<8x8xf32>
    %92 = vector.multi_reduction <add>, %91, %cst_26 [2] : vector<8x8x8xf32> to vector<8x8xf32>
    %93 = vector.shape_cast %92 : vector<8x8xf32> to vector<8x8x1xf32>
    %94 = tpu.reciprocal %93 {approx = true} : vector<8x8x1xf32> -> vector<8x8x1xf32>
    %95 = vector.broadcast %94 : vector<8x8x1xf32> to vector<8x8x8xf32>
    %96 = arith.mulf %91, %95 : vector<8x8x8xf32>
    "tpu.trace_start"() <{level = 10 : i32, message = "bnm,bmd->bnd"}> : () -> ()
    %cst_27 = arith.constant dense<0.000000e+00> : vector<8x8x8xf32>
    %97 = tpu.matmul %96, %83, %cst_27 {dimension_numbers = #tpu.dot_dimension_numbers<[2], [1], [1], [2], [0, 0, 0, 1, 1, 2], [0], [0]>} : vector<8x8x8xf32>, vector<8x8x8xf32>, vector<8x8x8xf32> -> vector<8x8x8xf32>
    "tpu.trace_stop"() : () -> ()
    %98 = vector.extract_strided_slice %37 {offsets = [0, 24], sizes = [64, 8], strides = [1, 1]} : vector<64x96xf32> to vector<64x8xf32>
    %99 = vector.extract_strided_slice %37 {offsets = [0, 56], sizes = [64, 8], strides = [1, 1]} : vector<64x96xf32> to vector<64x8xf32>
    %100 = vector.extract_strided_slice %37 {offsets = [0, 88], sizes = [64, 8], strides = [1, 1]} : vector<64x96xf32> to vector<64x8xf32>
    %101 = vector.shape_cast %98 : vector<64x8xf32> to vector<8x8x8xf32>
    %102 = vector.shape_cast %99 : vector<64x8xf32> to vector<8x8x8xf32>
    %103 = vector.shape_cast %100 : vector<64x8xf32> to vector<8x8x8xf32>
    "tpu.trace_start"() <{level = 10 : i32, message = "bnd,bmd->bnm"}> : () -> ()
    %cst_28 = arith.constant dense<0.000000e+00> : vector<8x8x8xf32>
    %104 = tpu.matmul %101, %102, %cst_28 {dimension_numbers = #tpu.dot_dimension_numbers<[2], [2], [1], [1], [0, 0, 0, 1, 1, 1], [0], [0]>} : vector<8x8x8xf32>, vector<8x8x8xf32>, vector<8x8x8xf32> -> vector<8x8x8xf32>
    "tpu.trace_stop"() : () -> ()
    %cst_29 = arith.constant 0.353553385 : f32
    %105 = vector.broadcast %cst_29 : f32 to vector<8x8x8xf32>
    %106 = arith.mulf %104, %105 : vector<8x8x8xf32>
    %cst_30 = arith.constant dense<0xFF800000> : vector<8x8xf32>
    %107 = vector.multi_reduction <maximumf>, %106, %cst_30 [2] : vector<8x8x8xf32> to vector<8x8xf32>
    %108 = vector.shape_cast %107 : vector<8x8xf32> to vector<8x8x1xf32>
    %109 = vector.broadcast %108 : vector<8x8x1xf32> to vector<8x8x8xf32>
    %110 = arith.subf %106, %109 : vector<8x8x8xf32>
    %111 = math.exp %110 : vector<8x8x8xf32>
    %cst_31 = arith.constant dense<0.000000e+00> : vector<8x8xf32>
    %112 = vector.multi_reduction <add>, %111, %cst_31 [2] : vector<8x8x8xf32> to vector<8x8xf32>
    %113 = vector.shape_cast %112 : vector<8x8xf32> to vector<8x8x1xf32>
    %114 = tpu.reciprocal %113 {approx = true} : vector<8x8x1xf32> -> vector<8x8x1xf32>
    %115 = vector.broadcast %114 : vector<8x8x1xf32> to vector<8x8x8xf32>
    %116 = arith.mulf %111, %115 : vector<8x8x8xf32>
    "tpu.trace_start"() <{level = 10 : i32, message = "bnm,bmd->bnd"}> : () -> ()
    %cst_32 = arith.constant dense<0.000000e+00> : vector<8x8x8xf32>
    %117 = tpu.matmul %116, %103, %cst_32 {dimension_numbers = #tpu.dot_dimension_numbers<[2], [1], [1], [2], [0, 0, 0, 1, 1, 2], [0], [0]>} : vector<8x8x8xf32>, vector<8x8x8xf32>, vector<8x8x8xf32> -> vector<8x8x8xf32>
    "tpu.trace_stop"() : () -> ()
    %118 = tpu.concatenate %57, %77, %97, %117 in 2 : vector<8x8x8xf32>, vector<8x8x8xf32>, vector<8x8x8xf32>, vector<8x8x8xf32> -> vector<8x8x32xf32>
    %119 = vector.shape_cast %118 : vector<8x8x32xf32> to vector<64x32xf32>
    %c0_33 = arith.constant 0 : index
    %c0_34 = arith.constant 0 : index
    %c0_35 = arith.constant 0 : index
    %120 = vector.load %arg4[%c0_33, %c0_34, %c0_35] : memref<1x32x32xf32, #tpu.memory_space<vmem>>, vector<1x32x32xf32>
    %121 = vector.shape_cast %120 : vector<1x32x32xf32> to vector<32x32xf32>
    %cst_36 = arith.constant dense<0.000000e+00> : vector<64x32xf32>
    %122 = tpu.matmul %119, %121, %cst_36 {dimension_numbers = #tpu.dot_dimension_numbers<[1], [0], [0], [1], [0, 0, 1, 1], [], []>} : vector<64x32xf32>, vector<32x32xf32>, vector<64x32xf32> -> vector<64x32xf32>
    %123 = vector.broadcast %7 : vector<1x32xf32> to vector<64x32xf32>
    %124 = arith.addf %122, %123 : vector<64x32xf32>
    %125 = arith.addf %12, %124 : vector<64x32xf32>
    %cst_37 = arith.constant dense<0.000000e+00> : vector<64xf32>
    %126 = vector.multi_reduction <add>, %125, %cst_37 [1] : vector<64x32xf32> to vector<64xf32>
    %127 = vector.shape_cast %126 : vector<64xf32> to vector<64x1xf32>
    %cst_38 = arith.constant 3.200000e+01 : f32
    %128 = vector.broadcast %cst_38 : f32 to vector<64x1xf32>
    %129 = arith.divf %127, %128 : vector<64x1xf32>
    %130 = vector.broadcast %129 : vector<64x1xf32> to vector<64x32xf32>
    %131 = arith.subf %125, %130 : vector<64x32xf32>
    %132 = arith.mulf %131, %131 : vector<64x32xf32>
    %cst_39 = arith.constant dense<0.000000e+00> : vector<64xf32>
    %133 = vector.multi_reduction <add>, %132, %cst_39 [1] : vector<64x32xf32> to vector<64xf32>
    %134 = vector.shape_cast %133 : vector<64xf32> to vector<64x1xf32>
    %cst_40 = arith.constant 3.200000e+01 : f32
    %135 = vector.broadcast %cst_40 : f32 to vector<64x1xf32>
    %136 = arith.divf %134, %135 : vector<64x1xf32>
    %137 = vector.broadcast %129 : vector<64x1xf32> to vector<64x32xf32>
    %138 = arith.subf %125, %137 : vector<64x32xf32>
    %cst_41 = arith.constant 9.99999974E-6 : f32
    %139 = vector.broadcast %cst_41 : f32 to vector<64x1xf32>
    %140 = arith.addf %136, %139 : vector<64x1xf32>
    %141 = math.rsqrt %140 : vector<64x1xf32>
    %142 = vector.broadcast %141 : vector<64x1xf32> to vector<64x32xf32>
    %143 = arith.mulf %138, %142 : vector<64x32xf32>
    %144 = vector.broadcast %8 : vector<1x32xf32> to vector<64x32xf32>
    %145 = arith.mulf %143, %144 : vector<64x32xf32>
    %146 = vector.broadcast %9 : vector<1x32xf32> to vector<64x32xf32>
    %147 = arith.addf %145, %146 : vector<64x32xf32>
    %c0_42 = arith.constant 0 : index
    %c0_43 = arith.constant 0 : index
    %c0_44 = arith.constant 0 : index
    %148 = vector.load %arg5[%c0_42, %c0_43, %c0_44] : memref<1x32x64xf32, #tpu.memory_space<vmem>>, vector<1x32x64xf32>
    %149 = vector.shape_cast %148 : vector<1x32x64xf32> to vector<32x64xf32>
    %cst_45 = arith.constant dense<0.000000e+00> : vector<64x64xf32>
    %150 = tpu.matmul %147, %149, %cst_45 {dimension_numbers = #tpu.dot_dimension_numbers<[1], [0], [0], [1], [0, 0, 1, 1], [], []>} : vector<64x32xf32>, vector<32x64xf32>, vector<64x64xf32> -> vector<64x64xf32>
    %151 = vector.broadcast %11 : vector<1x64xf32> to vector<64x64xf32>
    %152 = arith.addf %150, %151 : vector<64x64xf32>
    %153 = arith.negf %152 : vector<64x64xf32>
    %154 = math.exp %153 : vector<64x64xf32>
    %cst_46 = arith.constant 1.000000e+00 : f32
    %155 = vector.broadcast %cst_46 : f32 to vector<64x64xf32>
    %156 = arith.addf %155, %154 : vector<64x64xf32>
    %157 = arith.divf %155, %156 : vector<64x64xf32>
    %158 = arith.mulf %152, %157 : vector<64x64xf32>
    %c0_47 = arith.constant 0 : index
    %c0_48 = arith.constant 0 : index
    %c0_49 = arith.constant 0 : index
    %159 = vector.load %arg6[%c0_47, %c0_48, %c0_49] : memref<1x64x32xf32, #tpu.memory_space<vmem>>, vector<1x64x32xf32>
    %160 = vector.shape_cast %159 : vector<1x64x32xf32> to vector<64x32xf32>
    %cst_50 = arith.constant dense<0.000000e+00> : vector<64x32xf32>
    %161 = tpu.matmul %158, %160, %cst_50 {dimension_numbers = #tpu.dot_dimension_numbers<[1], [0], [0], [1], [0, 0, 1, 1], [], []>} : vector<64x64xf32>, vector<64x32xf32>, vector<64x32xf32> -> vector<64x32xf32>
    %162 = vector.broadcast %10 : vector<1x32xf32> to vector<64x32xf32>
    %163 = arith.addf %161, %162 : vector<64x32xf32>
    %164 = arith.addf %125, %163 : vector<64x32xf32>
    %c0_51 = arith.constant 0 : index
    %c0_52 = arith.constant 0 : index
    %165 = vector.load %arg9[%c0_51, %c0_52] : memref<64x32xf32, #tpu.memory_space<vmem>>, vector<64x32xf32>
    tpu.vector_store %arg9[%c0_51, %c0_52], %164 {strides = array<i32>} : memref<64x32xf32, #tpu.memory_space<vmem>>, vector<64x32xf32>,
    %c1_i32 = arith.constant 1 : i32
    %166 = arith.cmpi eq, %arg1, %c1_i32 : i32
    %167 = arith.extui %166 : i1 to i32
    %c0_i32_53 = arith.constant 0 : i32
    %168 = arith.cmpi ne, %167, %c0_i32_53 : i32
    scf.if %168 {
      %169 = vector.shape_cast %164 : vector<64x32xf32> to vector<8x8x32xf32>
      %c0_54 = arith.constant 0 : index
      %c0_55 = arith.constant 0 : index
      %c0_56 = arith.constant 0 : index
      %170 = vector.load %arg8[%c0_54, %c0_55, %c0_56] : memref<8x8x32xf32, #tpu.memory_space<vmem>>, vector<8x8x32xf32>
      tpu.vector_store %arg8[%c0_54, %c0_55, %c0_56], %169 {strides = array<i32>} : memref<8x8x32xf32, #tpu.memory_space<vmem>>, vector<8x8x32xf32>,
    } else {
    }
    return
  }
  func.func @transform_0(%arg0: i32, %arg1: i32) -> (i32, i32, i32) {
    %c0_i32 = arith.constant 0 : i32
    %c0_i32_0 = arith.constant 0 : i32
    %c0_i32_1 = arith.constant 0 : i32
    return %arg0, %c0_i32, %c0_i32_0 : i32, i32, i32
  }
  func.func @transform_1(%arg0: i32, %arg1: i32) -> (i32, i32, i32) {
    %c0_i32 = arith.constant 0 : i32
    %c0_i32_0 = arith.constant 0 : i32
    %c0_i32_1 = arith.constant 0 : i32
    return %arg1, %c0_i32, %c0_i32_0 : i32, i32, i32
  }
  func.func @transform_2(%arg0: i32, %arg1: i32) -> (i32, i32, i32) {
    %c0_i32 = arith.constant 0 : i32
    %c0_i32_0 = arith.constant 0 : i32
    %c0_i32_1 = arith.constant 0 : i32
    return %arg1, %c0_i32, %c0_i32_0 : i32, i32, i32
  }
  func.func @transform_3(%arg0: i32, %arg1: i32) -> (i32, i32, i32) {
    %c0_i32 = arith.constant 0 : i32
    %c0_i32_0 = arith.constant 0 : i32
    %c0_i32_1 = arith.constant 0 : i32
    return %arg1, %c0_i32, %c0_i32_0 : i32, i32, i32
  }
  func.func @transform_4(%arg0: i32, %arg1: i32) -> (i32, i32, i32) {
    %c0_i32 = arith.constant 0 : i32
    %c0_i32_0 = arith.constant 0 : i32
    %c0_i32_1 = arith.constant 0 : i32
    return %arg1, %c0_i32, %c0_i32_0 : i32, i32, i32
  }
  func.func @transform_5(%arg0: i32, %arg1: i32) -> (i32, i32, i32) {
    %c0_i32 = arith.constant 0 : i32
    %c0_i32_0 = arith.constant 0 : i32
    %c0_i32_1 = arith.constant 0 : i32
    return %arg1, %c0_i32, %c0_i32_0 : i32, i32, i32
  }
  func.func @transform_6(%arg0: i32, %arg1: i32) -> (i32, i32, i32) {
    %c0_i32 = arith.constant 0 : i32
    %c0_i32_0 = arith.constant 0 : i32
    %c0_i32_1 = arith.constant 0 : i32
    return %arg0, %c0_i32, %c0_i32_0 : i32, i32, i32
  }
}

</mosaic_0001>

<llo_original>
// kernel: tpu_custom_call.1
$region0: #{tpu_custom_call.1}
  #allocation0 [shape = 'u32[]', space=smem, size = 0x4, offset = 0x4, fixed_abs, tag = 'smem constant byte address 0x4 - core index']
  #allocation1 [shape = 'u32[144,128]{1,0:T(1,128)}', space=vmem, size = 0x12000, scoped, tag = 'internal scratch']
  #allocation2 [shape = 'f32[64,32]{1,0:T(8,128)}', space=vmem, size = 0x8000, scoped, tag = 'scratch operand']
  %s0 = inlined_call_operand.vmem [shape: f32[8,8,32], index: 0, kind: input, shape index: {}]
  %s1 = inlined_call_operand.vmem [shape: f32[2,32,96], index: 1, kind: input, shape index: {}]
  %s2 = inlined_call_operand.vmem [shape: f32[2,32,32], index: 2, kind: input, shape index: {}]
  %s3 = inlined_call_operand.hbm [shape: f32[2,32,64], index: 3, kind: input, shape index: {}]
  %s4 = inlined_call_operand.vmem [shape: f32[2,64,32], index: 4, kind: input, shape index: {}]
  %s5 = inlined_call_operand.vmem [shape: f32[2,8,64], index: 5, kind: input, shape index: {}]
  %s6 = inlined_call_operand.hbm [shape: f32[8,8,32], index: 6, kind: output, shape index: {}]
  %s7 = sld [smem:[#allocation0]]
  $region69: #{tpu_custom_call.1} parent=0
    _
  %s9 = ssub.s32 1, %s7
  %s10 = scalar_select 0, %s9, %s7
  $region1: #{tpu_custom_call.1} parent=0
    #allocation3 [shape = 'u8[32768]{0}', space=vmem, size = 0x8000, scoped, tag = 'input window, operand 3']
    #allocation4 [shape = 's32[2]{0}', space=sflag, size = 0x8, scoped, tag = 'scoped memory for tpu_custom_call.1']
    #allocation5 [shape = 's32[2]{0}', space=sflag, size = 0x8, scoped, tag = 'scoped memory for tpu_custom_call.1']
    #allocation6 [shape = 'u8[32768]{0}', space=vmem, size = 0x8000, scoped, tag = 'output window, operand 0, single buffered']
    %11 = vsyncpa [#allocation4], 0
    %s12 = scalar_lea.sflag [#allocation4], 1
    %13 = vsyncpa %s12, 0
    %14 = vsyncpa [#allocation5], 0
    loop: start=0, step=1, limit=4
    $region2: #{tpu_custom_call.1} parent=1 // loop_pre_header
      _
    $region3: #{tpu_custom_call.1} parent=1 // loop_header
      %s16 = sphi 0, %s20
      %p17 = scmp.ge.s32.totalorder %s16, 4
      %s23 = sphi 0, %s35
      %s24 = sphi 0, %s31
      %s25 = sphi 0, %s23
      %s26 = sphi 0, %s24
      %s27 = sphi 0, %s25
      %s28 = sphi 0, %s26
      %s38 = sphi 0, %s40
      %s41 = sphi 0, %s38
      %s42 = sphi 0, %s41
      %s58 = sphi 0, %s42
      %s64 = sphi 0, %s66
      %s67 = sphi 0, %s64
      %s68 = sphi 0, %s67
      %s84 = sphi 0, %s68
      %s90 = sphi 0, %s92
      %s93 = sphi 0, %s90
      %s94 = sphi 0, %s93
      %s110 = sphi 0, %s94
      %s116 = sphi 0, %s118
      %s119 = sphi 0, %s116
      %s120 = sphi 0, %s119
      %s136 = sphi 0, %s120
      %s142 = sphi 0, %s144
      %s145 = sphi 0, %s142
      %s146 = sphi 0, %s145
      %s162 = sphi 0, %s146
      %s168 = sphi 0, %s170
      %s171 = sphi 0, %s168
      %s172 = sphi 0, %s171
      %s188 = sphi 0, %s172
      %s194 = sphi 0, %s196
      %s197 = sphi 0, %s194
      %s198 = sphi 0, %s197
      %s214 = sphi 0, %s198
    $region4: #{tpu_custom_call.1} parent=1 // loop_header_branch
      %19 = sbr.rel (%p17) target = $region8
    $region5: #{tpu_custom_call.1} parent=1 // loop_body
      %s21 = ssub.s32 %s16, 1
      %s22 = ssub.s32 %s16, 2
      %s29 = sadd.s32 1, %s24
      %p30 = scmp.ge.s32.totalorder %s29, 2
      %s31 = scalar_select %p30, 0, %s29
      %s32 = sadd.s32 1, %s23
      %s33 = scalar_select %p30, %s32, %s23
      %p34 = scmp.ge.s32.totalorder %s33, 1
      %s35 = scalar_select %p34, 0, %s33
      %s36 = ssub.s32 %s23, %s35
      %p37 = scmp.eq.s32.totalorder %s36, 0
      %s39 = sadd.s32 %s38, 1
      %s40 = scalar_select %p37, %s38, %s39
      %p43 = pneg %p37
      %p44 = scmp.eq.s32.totalorder %s16, 1
      %p45 = por %p43, %p44
      %p46 = scmp.ne.s32.totalorder %s38, %s41
      %p47 = scmp.eq.s32.totalorder %s16, 0
      %p48 = por %p46, %p47
      %p49 = scmp.ne.s32.totalorder %s38, %s41
      %p50 = scmp.eq.s32.totalorder %s21, 1
      %p51 = por %p49, %p50
      %p52 = scmp.ne.s32.totalorder %s41, %s42
      %p53 = scmp.eq.s32.totalorder %s21, 0
      %p54 = por %p52, %p53
      %p55 = scmp.ne.s32.totalorder %s41, %s42
      %p56 = scmp.eq.s32.totalorder %s22, 1
      %p57 = por %p55, %p56
      %p59 = scmp.ne.s32.totalorder %s42, %s58
      %p60 = scmp.eq.s32.totalorder %s22, 0
      %p61 = por %p59, %p60
      %s62 = ssub.s32 %s24, %s31
      %p63 = scmp.eq.s32.totalorder %s62, 0
      %s65 = sadd.s32 %s64, 1
      %s66 = scalar_select %p63, %s64, %s65
      %p69 = pneg %p63
      %p70 = scmp.eq.s32.totalorder %s16, 1
      %p71 = por %p69, %p70
      %p72 = scmp.ne.s32.totalorder %s64, %s67
      %p73 = scmp.eq.s32.totalorder %s16, 0
      %p74 = por %p72, %p73
      %p75 = scmp.ne.s32.totalorder %s64, %s67
      %p76 = scmp.eq.s32.totalorder %s21, 1
      %p77 = por %p75, %p76
      %p78 = scmp.ne.s32.totalorder %s67, %s68
      %p79 = scmp.eq.s32.totalorder %s21, 0
      %p80 = por %p78, %p79
      %p81 = scmp.ne.s32.totalorder %s67, %s68
      %p82 = scmp.eq.s32.totalorder %s22, 1
      %p83 = por %p81, %p82
      %p85 = scmp.ne.s32.totalorder %s68, %s84
      %p86 = scmp.eq.s32.totalorder %s22, 0
      %p87 = por %p85, %p86
      %s88 = ssub.s32 %s24, %s31
      %p89 = scmp.eq.s32.totalorder %s88, 0
      %s91 = sadd.s32 %s90, 1
      %s92 = scalar_select %p89, %s90, %s91
      %p95 = pneg %p89
      %p96 = scmp.eq.s32.totalorder %s16, 1
      %p97 = por %p95, %p96
      %p98 = scmp.ne.s32.totalorder %s90, %s93
      %p99 = scmp.eq.s32.totalorder %s16, 0
      %p100 = por %p98, %p99
      %p101 = scmp.ne.s32.totalorder %s90, %s93
      %p102 = scmp.eq.s32.totalorder %s21, 1
      %p103 = por %p101, %p102
      %p104 = scmp.ne.s32.totalorder %s93, %s94
      %p105 = scmp.eq.s32.totalorder %s21, 0
      %p106 = por %p104, %p105
      %p107 = scmp.ne.s32.totalorder %s93, %s94
      %p108 = scmp.eq.s32.totalorder %s22, 1
      %p109 = por %p107, %p108
      %p111 = scmp.ne.s32.totalorder %s94, %s110
      %p112 = scmp.eq.s32.totalorder %s22, 0
      %p113 = por %p111, %p112
      %s114 = ssub.s32 %s24, %s31
      %p115 = scmp.eq.s32.totalorder %s114, 0
      %s117 = sadd.s32 %s116, 1
      %s118 = scalar_select %p115, %s116, %s117
      %p121 = pneg %p115
      %p122 = scmp.eq.s32.totalorder %s16, 1
      %p123 = por %p121, %p122
      %p124 = scmp.ne.s32.totalorder %s116, %s119
      %p125 = scmp.eq.s32.totalorder %s16, 0
      %p126 = por %p124, %p125
      %p127 = scmp.ne.s32.totalorder %s116, %s119
      %p128 = scmp.eq.s32.totalorder %s21, 1
      %p129 = por %p127, %p128
      %p130 = scmp.ne.s32.totalorder %s119, %s120
      %p131 = scmp.eq.s32.totalorder %s21, 0
      %p132 = por %p130, %p131
      %p133 = scmp.ne.s32.totalorder %s119, %s120
      %p134 = scmp.eq.s32.totalorder %s22, 1
      %p135 = por %p133, %p134
      %p137 = scmp.ne.s32.totalorder %s120, %s136
      %p138 = scmp.eq.s32.totalorder %s22, 0
      %p139 = por %p137, %p138
      %s140 = ssub.s32 %s24, %s31
      %p141 = scmp.eq.s32.totalorder %s140, 0
      %s143 = sadd.s32 %s142, 1
      %s144 = scalar_select %p141, %s142, %s143
      %p147 = pneg %p141
      %p148 = scmp.eq.s32.totalorder %s16, 1
      %p149 = por %p147, %p148
      %p150 = scmp.ne.s32.totalorder %s142, %s145
      %p151 = scmp.eq.s32.totalorder %s16, 0
      %p152 = por %p150, %p151
      %p153 = scmp.ne.s32.totalorder %s142, %s145
      %p154 = scmp.eq.s32.totalorder %s21, 1
      %p155 = por %p153, %p154
      %p156 = scmp.ne.s32.totalorder %s145, %s146
      %p157 = scmp.eq.s32.totalorder %s21, 0
      %p158 = por %p156, %p157
      %p159 = scmp.ne.s32.totalorder %s145, %s146
      %p160 = scmp.eq.s32.totalorder %s22, 1
      %p161 = por %p159, %p160
      %p163 = scmp.ne.s32.totalorder %s146, %s162
      %p164 = scmp.eq.s32.totalorder %s22, 0
      %p165 = por %p163, %p164
      %s166 = ssub.s32 %s24, %s31
      %p167 = scmp.eq.s32.totalorder %s166, 0
      %s169 = sadd.s32 %s168, 1
      %s170 = scalar_select %p167, %s168, %s169
      %p173 = pneg %p167
      %p174 = scmp.eq.s32.totalorder %s16, 1
      %p175 = por %p173, %p174
      %p176 = scmp.ne.s32.totalorder %s168, %s171
      %p177 = scmp.eq.s32.totalorder %s16, 0
      %p178 = por %p176, %p177
      %p179 = scmp.ne.s32.totalorder %s168, %s171
      %p180 = scmp.eq.s32.totalorder %s21, 1
      %p181 = por %p179, %p180
      %p182 = scmp.ne.s32.totalorder %s171, %s172
      %p183 = scmp.eq.s32.totalorder %s21, 0
      %p184 = por %p182, %p183
      %p185 = scmp.ne.s32.totalorder %s171, %s172
      %p186 = scmp.eq.s32.totalorder %s22, 1
      %p187 = por %p185, %p186
      %p189 = scmp.ne.s32.totalorder %s172, %s188
      %p190 = scmp.eq.s32.totalorder %s22, 0
      %p191 = por %p189, %p190
      %s192 = ssub.s32 %s23, %s35
      %p193 = scmp.eq.s32.totalorder %s192, 0
      %s195 = sadd.s32 %s194, 1
      %s196 = scalar_select %p193, %s194, %s195
      %p199 = pneg %p193
      %p200 = scmp.eq.s32.totalorder %s16, 1
      %p201 = por %p199, %p200
      %p202 = scmp.ne.s32.totalorder %s194, %s197
      %p203 = scmp.eq.s32.totalorder %s16, 0
      %p204 = por %p202, %p203
      %p205 = scmp.ne.s32.totalorder %s194, %s197
      %p206 = scmp.eq.s32.totalorder %s21, 1
      %p207 = por %p205, %p206
      %p208 = scmp.ne.s32.totalorder %s197, %s198
      %p209 = scmp.eq.s32.totalorder %s21, 0
      %p210 = por %p208, %p209
      %p211 = scmp.ne.s32.totalorder %s197, %s198
      %p212 = scmp.eq.s32.totalorder %s22, 1
      %p213 = por %p211, %p212
      %p215 = scmp.ne.s32.totalorder %s198, %s214
      %p216 = scmp.eq.s32.totalorder %s22, 0
      %p217 = por %p215, %p216
      %p218 = scmp.le.s32.totalorder 1, %s16
      %p219 = scmp.lt.s32.totalorder %s16, 3
      %p220 = pnand %p218, %p219
      %p221 = pneg %p220
      // Predicated region
      $region9: #{tpu_custom_call.1} parent=5 // pred_check
        _
      $region10: #{tpu_custom_call.1} parent=5 // pred_check_branch
        %223 = sbr.rel (%p220) target = $region12
      $region11: #{tpu_custom_call.1} parent=5 // pred_region
        %s224 = ssub.s32 %s16, 1
        // Predicated region
        $region13: #{tpu_custom_call.1} parent=11 // pred_check
          %p225 = pneg %p54
        $region14: #{tpu_custom_call.1} parent=11 // pred_check_branch
          %227 = sbr.rel (%p225) target = $region16
        $region15: #{tpu_custom_call.1} parent=11 // pred_region
          %s228 = smul.u32 8, %s25
          %p229 = scmp.lt.s32.totalorder %s228, 7
          %s230 = scalar_select %p229, %s228, 7
          %s231 = smul.addr %s230, 8
          %s232 = scalar_lea.vmem %s0, %s231
          %s233 = smul.u32 8, %s25
        $region16: #{tpu_custom_call.1} parent=11 // pred_fallthru
          _
      $region12: #{tpu_custom_call.1} parent=5 // pred_fallthru
        _
      %p234 = scmp.lt.s32.totalorder %s16, 2
      // Predicated region
      $region17: #{tpu_custom_call.1} parent=5 // pred_check
        %p235 = pneg %p234
      $region18: #{tpu_custom_call.1} parent=5 // pred_check_branch
        %237 = sbr.rel (%p235) target = $region20
      $region19: #{tpu_custom_call.1} parent=5 // pred_region
        // Predicated region
        $region21: #{tpu_custom_call.1} parent=19 // pred_check
          %p238 = pneg %p74
        $region22: #{tpu_custom_call.1} parent=19 // pred_check_branch
          %240 = sbr.rel (%p238) target = $region24
        $region23: #{tpu_custom_call.1} parent=19 // pred_region
          %p241 = scmp.lt.s32.totalorder %s24, 1
          %s242 = scalar_select %p241, %s24, 1
          %s243 = smul.addr %s242, 4
          %s244 = smul.addr %s243, 8
          %s245 = scalar_lea.vmem %s1, %s244
        $region24: #{tpu_custom_call.1} parent=19 // pred_fallthru
          _
        // Predicated region
        $region25: #{tpu_custom_call.1} parent=19 // pred_check
          %p246 = pneg %p100
        $region26: #{tpu_custom_call.1} parent=19 // pred_check_branch
          %248 = sbr.rel (%p246) target = $region28
        $region27: #{tpu_custom_call.1} parent=19 // pred_region
          %p249 = scmp.lt.s32.totalorder %s24, 1
          %s250 = scalar_select %p249, %s24, 1
          %s251 = smul.addr %s250, 4
          %s252 = smul.addr %s251, 8
          %s253 = scalar_lea.vmem %s2, %s252
        $region28: #{tpu_custom_call.1} parent=19 // pred_fallthru
          _
        // Predicated region
        $region29: #{tpu_custom_call.1} parent=19 // pred_check
          %p254 = pneg %p126
        $region30: #{tpu_custom_call.1} parent=19 // pred_check_branch
          %256 = sbr.rel (%p254) target = $region32
        $region31: #{tpu_custom_call.1} parent=19 // pred_region
          %s257 = sand.u32 %s116, 1
          %s258 = scalar_lea.sflag [#allocation4], %s257
          %s259 = sand.u32 %s116, 1
          %s260 = smul.addr %s259, 32
          %s261 = scalar_lea.vmem [#allocation3], %s260
          %s263 = ssub.s32 512, 512
          %264 = vsyncadd %s258, %s263
          %s265 = smul.addr %s24, 4
          %s266 = smul.addr %s265, 128
          %s267 = scalar_lea.hbm %s3, %s266
          %s268 = sshll.u32 %s261, 4
          %s269 = int_to_ptr.vmem [resolvable:$true] %s268
          %274 = dma.hbm_to_vmem [thread:$0]  %s267, 512, %s269, %s258, 128, 128, 8
        $region32: #{tpu_custom_call.1} parent=19 // pred_fallthru
          _
        // Predicated region
        $region33: #{tpu_custom_call.1} parent=19 // pred_check
          %p275 = pneg %p152
        $region34: #{tpu_custom_call.1} parent=19 // pred_check_branch
          %277 = sbr.rel (%p275) target = $region36
        $region35: #{tpu_custom_call.1} parent=19 // pred_region
          %p278 = scmp.lt.s32.totalorder %s24, 1
          %s279 = scalar_select %p278, %s24, 1
          %s280 = smul.addr %s279, 8
          %s281 = smul.addr %s280, 8
          %s282 = scalar_lea.vmem %s4, %s281
        $region36: #{tpu_custom_call.1} parent=19 // pred_fallthru
          _
        // Predicated region
        $region37: #{tpu_custom_call.1} parent=19 // pred_check
          %p283 = pneg %p178
        $region38: #{tpu_custom_call.1} parent=19 // pred_check_branch
          %285 = sbr.rel (%p283) target = $region40
        $region39: #{tpu_custom_call.1} parent=19 // pred_region
          %p286 = scmp.lt.s32.totalorder %s24, 1
          %s287 = scalar_select %p286, %s24, 1
          %s288 = smul.addr %s287, 8
          %s289 = scalar_lea.vmem %s5, %s288
        $region40: #{tpu_custom_call.1} parent=19 // pred_fallthru
          _
      $region20: #{tpu_custom_call.1} parent=5 // pred_fallthru
        _
      %p290 = scmp.le.s32.totalorder 1, %s16
      %p291 = scmp.lt.s32.totalorder %s16, 3
      %p292 = pnand %p290, %p291
      %p293 = pneg %p292
      // Predicated region
      $region41: #{tpu_custom_call.1} parent=5 // pred_check
        _
      $region42: #{tpu_custom_call.1} parent=5 // pred_check_branch
        %295 = sbr.rel (%p292) target = $region44
      $region43: #{tpu_custom_call.1} parent=5 // pred_region
        %s296 = ssub.s32 %s16, 1
        %s297 = sand.u32 %s119, 1
        %s298 = scalar_lea.sflag [#allocation4], %s297
        %s299 = sand.u32 %s119, 1
        %s300 = smul.addr %s299, 32
        %s301 = scalar_lea.vmem [#allocation3], %s300
        // Predicated region
        $region45: #{tpu_custom_call.1} parent=43 // pred_check
          %p302 = pneg %p132
        $region46: #{tpu_custom_call.1} parent=43 // pred_check_branch
          %304 = sbr.rel (%p302) target = $region48
        $region47: #{tpu_custom_call.1} parent=43 // pred_region
          %305 = dma.done %s298, 512
        $region48: #{tpu_custom_call.1} parent=43 // pred_fallthru
          _
        %s306 = smul.u32 8, %s25
        %p307 = scmp.lt.s32.totalorder %s306, 7
        %s308 = scalar_select %p307, %s306, 7
        %s309 = smul.addr %s308, 8
        %s310 = scalar_lea.vmem %s0, %s309
        %p311 = pneg %p54
        %p312 = pneg %p51
        %p313 = scmp.lt.s32.totalorder %s26, 1
        %s314 = scalar_select %p313, %s26, 1
        %s315 = smul.addr %s314, 4
        %s316 = smul.addr %s315, 8
        %s317 = scalar_lea.vmem %s1, %s316
        %p318 = pneg %p80
        %p319 = pneg %p77
        %p320 = scmp.lt.s32.totalorder %s26, 1
        %s321 = scalar_select %p320, %s26, 1
        %s322 = smul.addr %s321, 4
        %s323 = smul.addr %s322, 8
        %s324 = scalar_lea.vmem %s2, %s323
        %p325 = pneg %p106
        %p326 = pneg %p103
        %s327 = sand.u32 %s119, 1
        %s328 = scalar_lea.sflag [#allocation4], %s327
        %s329 = sand.u32 %s119, 1
        %s330 = smul.addr %s329, 32
        %s331 = scalar_lea.vmem [#allocation3], %s330
        %p332 = pneg %p132
        %p333 = pneg %p129
        %p334 = scmp.lt.s32.totalorder %s26, 1
        %s335 = scalar_select %p334, %s26, 1
        %s336 = smul.addr %s335, 8
        %s337 = smul.addr %s336, 8
        %s338 = scalar_lea.vmem %s4, %s337
        %p339 = pneg %p158
        %p340 = pneg %p155
        %p341 = scmp.lt.s32.totalorder %s26, 1
        %s342 = scalar_select %p341, %s26, 1
        %s343 = smul.addr %s342, 8
        %s344 = scalar_lea.vmem %s5, %s343
        %p345 = pneg %p184
        %p346 = pneg %p181
        %p347 = pneg %p210
        %p348 = pneg %p207
        %s349 = smul.u32 8, %s25
        %p350 = scmp.lt.s32.totalorder %s349, 7
        %s351 = scalar_select %p350, %s349, 7
        %s352 = smul.addr %s351, 8
        %s353 = scalar_lea.vmem %s0, %s352
        %s354 = smul.u32 8, %s25
        %p355 = scmp.lt.s32.totalorder %s26, 1
        %s356 = scalar_select %p355, %s26, 1
        %s357 = smul.addr %s356, 4
        %s358 = smul.addr %s357, 8
        %s359 = scalar_lea.vmem %s1, %s358
        %p360 = scmp.lt.s32.totalorder %s26, 1
        %s361 = scalar_select %p360, %s26, 1
        %s362 = smul.addr %s361, 4
        %s363 = smul.addr %s362, 8
        %s364 = scalar_lea.vmem %s2, %s363
        %p365 = scmp.lt.s32.totalorder %s26, 1
        %s366 = scalar_select %p365, %s26, 1
        %s367 = smul.addr %s366, 8
        %s368 = smul.addr %s367, 8
        %s369 = scalar_lea.vmem %s4, %s368
        %p370 = scmp.lt.s32.totalorder %s26, 1
        %s371 = scalar_select %p370, %s26, 1
        %s372 = smul.addr %s371, 8
        %s373 = scalar_lea.vmem %s5, %s372
        %s374 = smul.u32 8, %s25
        %p375 = scmp.eq.s32.totalorder %s26, 0
        // Predicated region
        $region49: #{tpu_custom_call.1} parent=43 // pred_check
          %p376 = pneg %p375
        $region50: #{tpu_custom_call.1} parent=43 // pred_check_branch
          %378 = sbr.rel (%p376) target = $region52
        $region51: #{tpu_custom_call.1} parent=43 // pred_region
          %v379 = vld [vmem:[%s353] sm:$0xff]
          %v380 = vld [vmem:[%s353 + $0x8] sm:$0xff]
          %v381 = vld [vmem:[%s353 + $0x10] sm:$0xff]
          %v382 = vld [vmem:[%s353 + $0x18] sm:$0xff]
          %v383 = vld [vmem:[%s353 + $0x20] sm:$0xff]
          %v384 = vld [vmem:[%s353 + $0x28] sm:$0xff]
          %v385 = vld [vmem:[%s353 + $0x30] sm:$0xff]
          %v386 = vld [vmem:[%s353 + $0x38] sm:$0xff]
          %vm387 = vcmask 261120
          %388 = vst.msk [vmem:[#allocation2] sm:$0xff] %vm387, %v379
          %389 = vst.msk [vmem:[#allocation2 + $0x8] sm:$0xff] %vm387, %v380
          %390 = vst.msk [vmem:[#allocation2 + $0x10] sm:$0xff] %vm387, %v381
          %391 = vst.msk [vmem:[#allocation2 + $0x18] sm:$0xff] %vm387, %v382
          %392 = vst.msk [vmem:[#allocation2 + $0x20] sm:$0xff] %vm387, %v383
          %393 = vst.msk [vmem:[#allocation2 + $0x28] sm:$0xff] %vm387, %v384
          %394 = vst.msk [vmem:[#allocation2 + $0x30] sm:$0xff] %vm387, %v385
          %395 = vst.msk [vmem:[#allocation2 + $0x38] sm:$0xff] %vm387, %v386
        $region52: #{tpu_custom_call.1} parent=43 // pred_fallthru
          _
        %v396 = vld [vmem:[%s373] sm:$0xff]
        %v397 = vld [vmem:[#allocation2] sm:$0xff]
        %v398 = vld [vmem:[#allocation2 + $0x8] sm:$0xff]
        %v399 = vld [vmem:[#allocation2 + $0x10] sm:$0xff]
        %v400 = vld [vmem:[#allocation2 + $0x18] sm:$0xff]
        %v401 = vld [vmem:[#allocation2 + $0x20] sm:$0xff]
        %v402 = vld [vmem:[#allocation2 + $0x28] sm:$0xff]
        %v403 = vld [vmem:[#allocation2 + $0x30] sm:$0xff]
        %v404 = vld [vmem:[#allocation2 + $0x38] sm:$0xff]
        %vm405 = vcmask 261120
        %v406 = vsel %vm405, %v397, 0.0
        %407 = vadd.xlane.f32.xlu0 %v406
        %v408 = vpop.xlane.xlu0 %407
        %v409 = vsel %vm405, %v398, 0.0
        %410 = vadd.xlane.f32.xlu0 %v409
        %v411 = vpop.xlane.xlu0 %410
        %v412 = vsel %vm405, %v399, 0.0
        %413 = vadd.xlane.f32.xlu0 %v412
        %v414 = vpop.xlane.xlu0 %413
        %v415 = vsel %vm405, %v400, 0.0
        %416 = vadd.xlane.f32.xlu0 %v415
        %v417 = vpop.xlane.xlu0 %416
        %v418 = vsel %vm405, %v401, 0.0
        %419 = vadd.xlane.f32.xlu0 %v418
        %v420 = vpop.xlane.xlu0 %419
        %v421 = vsel %vm405, %v402, 0.0
        %422 = vadd.xlane.f32.xlu0 %v421
        %v423 = vpop.xlane.xlu0 %422
        %v424 = vsel %vm405, %v403, 0.0
        %425 = vadd.xlane.f32.xlu0 %v424
        %v426 = vpop.xlane.xlu0 %425
        %v427 = vsel %vm405, %v404, 0.0
        %428 = vadd.xlane.f32.xlu0 %v427
        %v429 = vpop.xlane.xlu0 %428
        %v430 = vrcp.pop 32.0
        %v431 = vmul.f32 %v408, %v430
        %v432 = vmul.f32 %v411, %v430
        %v433 = vmul.f32 %v414, %v430
        %v434 = vmul.f32 %v417, %v430
        %v435 = vmul.f32 %v420, %v430
        %v436 = vmul.f32 %v423, %v430
        %v437 = vmul.f32 %v426, %v430
        %v438 = vmul.f32 %v429, %v430
        %v439 = vsub.f32 %v397, %v431
        %v440 = vsub.f32 %v398, %v432
        %v441 = vsub.f32 %v399, %v433
        %v442 = vsub.f32 %v400, %v434
        %v443 = vsub.f32 %v401, %v435
        %v444 = vsub.f32 %v402, %v436
        %v445 = vsub.f32 %v403, %v437
        %v446 = vsub.f32 %v404, %v438
        %v447 = vmul.f32 %v439, %v439
        %v448 = vmul.f32 %v440, %v440
        %v449 = vmul.f32 %v441, %v441
        %v450 = vmul.f32 %v442, %v442
        %v451 = vmul.f32 %v443, %v443
        %v452 = vmul.f32 %v444, %v444
        %v453 = vmul.f32 %v445, %v445
        %v454 = vmul.f32 %v446, %v446
        %v455 = vsel %vm405, %v447, 0.0
        %456 = vadd.xlane.f32.xlu0 %v455
        %v457 = vpop.xlane.xlu0 %456
        %v458 = vsel %vm405, %v448, 0.0
        %459 = vadd.xlane.f32.xlu0 %v458
        %v460 = vpop.xlane.xlu0 %459
        %v461 = vsel %vm405, %v449, 0.0
        %462 = vadd.xlane.f32.xlu0 %v461
        %v463 = vpop.xlane.xlu0 %462
        %v464 = vsel %vm405, %v450, 0.0
        %465 = vadd.xlane.f32.xlu0 %v464
        %v466 = vpop.xlane.xlu0 %465
        %v467 = vsel %vm405, %v451, 0.0
        %468 = vadd.xlane.f32.xlu0 %v467
        %v469 = vpop.xlane.xlu0 %468
        %v470 = vsel %vm405, %v452, 0.0
        %471 = vadd.xlane.f32.xlu0 %v470
        %v472 = vpop.xlane.xlu0 %471
        %v473 = vsel %vm405, %v453, 0.0
        %474 = vadd.xlane.f32.xlu0 %v473
        %v475 = vpop.xlane.xlu0 %474
        %v476 = vsel %vm405, %v454, 0.0
        %477 = vadd.xlane.f32.xlu0 %v476
        %v478 = vpop.xlane.xlu0 %477
        %v479 = vmul.f32 %v457, %v430
        %v480 = vmul.f32 %v460, %v430
        %v481 = vmul.f32 %v463, %v430
        %v482 = vmul.f32 %v466, %v430
        %v483 = vmul.f32 %v469, %v430
        %v484 = vmul.f32 %v472, %v430
        %v485 = vmul.f32 %v475, %v430
        %v486 = vmul.f32 %v478, %v430
        %v487 = vadd.f32 %v479, 1e-05
        %v488 = vadd.f32 %v480, 1e-05
        %v489 = vadd.f32 %v481, 1e-05
        %v490 = vadd.f32 %v482, 1e-05
        %v491 = vadd.f32 %v483, 1e-05
        %v492 = vadd.f32 %v484, 1e-05
        %v493 = vadd.f32 %v485, 1e-05
        %v494 = vadd.f32 %v486, 1e-05
        %v495 = vrsqrt.pop %v487
        %v496 = vrsqrt.pop %v488
        %v497 = vrsqrt.pop %v489
        %v498 = vrsqrt.pop %v490
        %v499 = vrsqrt.pop %v491
        %v500 = vrsqrt.pop %v492
        %v501 = vrsqrt.pop %v493
        %v502 = vrsqrt.pop %v494
        %v503 = vmul.f32 %v439, %v495
        %v504 = vmul.f32 %v440, %v496
        %v505 = vmul.f32 %v441, %v497
        %v506 = vmul.f32 %v442, %v498
        %v507 = vmul.f32 %v443, %v499
        %v508 = vmul.f32 %v444, %v500
        %v509 = vmul.f32 %v445, %v501
        %v510 = vmul.f32 %v446, %v502
        %v511 = vlaneseq
        %v512 = vshrl.u32 %v511, 7
        %v513 = vsub.s32 0, %v512
        %v514 = vrot.slane %v396, %v513
        %v515 = vmul.f32 %v503, %v514
        %v516 = vmul.f32 %v504, %v514
        %v517 = vmul.f32 %v505, %v514
        %v518 = vmul.f32 %v506, %v514
        %v519 = vmul.f32 %v507, %v514
        %v520 = vmul.f32 %v508, %v514
        %v521 = vmul.f32 %v509, %v514
        %v522 = vmul.f32 %v510, %v514
        %v523 = vlaneseq
        %v524 = vshrl.u32 %v523, 7
        %v525 = vsub.s32 1, %v524
        %v526 = vrot.slane %v396, %v525
        %v527 = vadd.f32 %v515, %v526
        %v528 = vadd.f32 %v516, %v526
        %v529 = vadd.f32 %v517, %v526
        %v530 = vadd.f32 %v518, %v526
        %v531 = vadd.f32 %v519, %v526
        %v532 = vadd.f32 %v520, %v526
        %v533 = vadd.f32 %v521, %v526
        %v534 = vadd.f32 %v522, %v526
        %v535 = vld [vmem:[%s359] sm:$0xff]
        %v536 = vld [vmem:[%s359 + $0x8] sm:$0xff]
        %v537 = vld [vmem:[%s359 + $0x10] sm:$0xff]
        %v538 = vld [vmem:[%s359 + $0x18] sm:$0xff]
        %v540 = vsel %vm405, %v527, 0
        %v543 = vsel %vm405, %v528, 0
        %v546 = vsel %vm405, %v529, 0
        %v549 = vsel %vm405, %v530, 0
        %v552 = vsel %vm405, %v531, 0
        %v555 = vsel %vm405, %v532, 0
        %v558 = vsel %vm405, %v533, 0
        %v561 = vsel %vm405, %v534, 0
        %563 = vmatprep.subr.mxu0 0.0
        %564 = vmatpush1.msra.mxu0 %v535
        %565 = vmatprep.subr.mxu0 0.0
        %566 = vmatpush1.msra.mxu0 %v536
        %567 = vmatprep.subr.mxu0 0.0
        %568 = vmatpush1.msra.mxu0 %v537
        %569 = vmatprep.subr.mxu0 0.0
        %570 = vmatpush1.msra.mxu0 %v538
        %571 = vmatprep.subr.mxu0 0.0
        %572 = vmatpush1.msra.mxu0 0.0
        %573 = vmatprep.subr.mxu0 0.0
        %574 = vmatpush1.msra.mxu0 0.0
        %575 = vmatprep.subr.mxu0 0.0
        %576 = vmatpush1.msra.mxu0 0.0
        %577 = vmatprep.subr.mxu0 0.0
        %578 = vmatpush1.msra.mxu0 0.0
        %579 = vmatprep.subr.mxu0 0.0
        %580 = vmatpush1.msra.mxu0 0.0
        %581 = vmatprep.subr.mxu0 0.0
        %582 = vmatpush1.msra.mxu0 0.0
        %583 = vmatprep.subr.mxu0 0.0
        %584 = vmatpush1.msra.mxu0 0.0
        %585 = vmatprep.subr.mxu0 0.0
        %586 = vmatpush1.msra.mxu0 0.0
        %587 = vmatprep.subr.mxu0 0.0
        %588 = vmatpush1.msra.mxu0 0.0
        %589 = vmatprep.subr.mxu0 0.0
        %590 = vmatpush1.msra.mxu0 0.0
        %591 = vmatprep.subr.mxu0 0.0
        %592 = vmatpush1.msra.mxu0 0.0
        %593 = vmatprep.subr.mxu0 0.0
        %594 = vmatpush1.msra.mxu0 0.0
        %595 = vmatprep.subr.mxu0 0.0
        %596 = vmatpush1.msra.mxu0 0.0
        %597 = vmatprep.subr.mxu0 0.0
        %598 = vmatpush1.msra.mxu0 0.0
        %599 = vmatprep.subr.mxu0 0.0
        %600 = vmatpush1.msra.mxu0 0.0
        %601 = vmatprep.subr.mxu0 0.0
        %602 = vmatpush1.msra.mxu0 0.0
        %603 = vmatprep.subr.mxu0 0.0
        %604 = vmatpush1.msra.mxu0 0.0
        %605 = vmatprep.subr.mxu0 0.0
        %606 = vmatpush1.msra.mxu0 0.0
        %607 = vmatprep.subr.mxu0 0.0
        %608 = vmatpush1.msra.mxu0 0.0
        %609 = vmatprep.subr.mxu0 0.0
        %610 = vmatpush1.msra.mxu0 0.0
        %611 = vmatprep.subr.mxu0 0.0
        %612 = vmatpush1.msra.mxu0 0.0
        %613 = vmatprep.subr.mxu0 0.0
        %614 = vmatpush1.msra.mxu0 0.0
        %615 = vmatprep.subr.mxu0 0.0
        %616 = vmatpush1.msra.mxu0 0.0
        %617 = vmatprep.subr.mxu0 0.0
        %618 = vmatpush1.msra.mxu0 0.0
        %619 = vmatprep.subr.mxu0 0.0
        %620 = vmatpush1.msra.mxu0 0.0
        %621 = vmatprep.subr.mxu0 0.0
        %622 = vmatpush1.msra.mxu0 0.0
        %623 = vmatprep.subr.mxu0 0.0
        %624 = vmatpush1.msra.mxu0 0.0
        %625 = vmatprep.subr.mxu0 0.0
        %626 = vmatpush1.msra.mxu0 0.0
        %627 = vmatprep.mubr.f32.mxu0 0.0
        %628 = vmatmul.mubr.f32.gmra.mrb[0].mxu0 %v540
        %v629 = vpop.f32.mrb[0].mxu0
        %v630 = vadd.f32 0.0, %v629
        %v631 = vpop.f32.mrb[0].mxu0
        %632 = vmatprep.mubr.f32.mxu0 0.0
        %633 = vmatmul.mubr.f32.gmra.mrb[0].mxu0 %v543
        %v634 = vpop.f32.mrb[0].mxu0
        %v635 = vadd.f32 0.0, %v634
        %v636 = vpop.f32.mrb[0].mxu0
        %637 = vmatprep.mubr.f32.mxu0 0.0
        %638 = vmatmul.mubr.f32.gmra.mrb[0].mxu0 %v546
        %v639 = vpop.f32.mrb[0].mxu0
        %v640 = vadd.f32 0.0, %v639
        %v641 = vpop.f32.mrb[0].mxu0
        %642 = vmatprep.mubr.f32.mxu0 0.0
        %643 = vmatmul.mubr.f32.gmra.mrb[0].mxu0 %v549
        %v644 = vpop.f32.mrb[0].mxu0
        %v645 = vadd.f32 0.0, %v644
        %v646 = vpop.f32.mrb[0].mxu0
        %647 = vmatprep.mubr.f32.mxu0 0.0
        %648 = vmatmul.mubr.f32.gmra.mrb[0].mxu0 %v552
        %v649 = vpop.f32.mrb[0].mxu0
        %v650 = vadd.f32 0.0, %v649
        %v651 = vpop.f32.mrb[0].mxu0
        %652 = vmatprep.mubr.f32.mxu0 0.0
        %653 = vmatmul.mubr.f32.gmra.mrb[0].mxu0 %v555
        %v654 = vpop.f32.mrb[0].mxu0
        %v655 = vadd.f32 0.0, %v654
        %v656 = vpop.f32.mrb[0].mxu0
        %657 = vmatprep.mubr.f32.mxu0 0.0
        %658 = vmatmul.mubr.f32.gmra.mrb[0].mxu0 %v558
        %v659 = vpop.f32.mrb[0].mxu0
        %v660 = vadd.f32 0.0, %v659
        %v661 = vpop.f32.mrb[0].mxu0
        %662 = vmatprep.mubr.f32.mxu0 0.0
        %663 = vmatmul.mubr.f32.gmra.mrb[0].mxu0 %v561
        %v664 = vpop.f32.mrb[0].mxu0
        %v665 = vadd.f32 0.0, %v664
        %v666 = vpop.f32.mrb[0].mxu0
        %667 = vdwg.mxu0
        %669 = vrot.lane.b32.xlu0 %v630, 96
        %v670 = vpop.permute.xlu0 %669
        %vm671 = vcmask 64512
        %v672 = vsel %vm671, %v630, 0
        %v674 = vsel %vm671, %v670, 0
        %676 = vmatprep.subr.mxu0 0.0
        %677 = vmatpush1.xpose.msra.mxu0 %v674
        %678 = vmatprep.subr.mxu0 0.0
        %679 = vmatpush1.xpose.msra.mxu0 0.0
        %680 = vmatprep.subr.mxu0 0.0
        %681 = vmatpush1.xpose.msra.mxu0 0.0
        %682 = vmatprep.subr.mxu0 0.0
        %683 = vmatpush1.xpose.msra.mxu0 0.0
        %684 = vmatprep.subr.mxu0 0.0
        %685 = vmatpush1.xpose.msra.mxu0 0.0
        %686 = vmatprep.subr.mxu0 0.0
        %687 = vmatpush1.xpose.msra.mxu0 0.0
        %688 = vmatprep.subr.mxu0 0.0
        %689 = vmatpush1.xpose.msra.mxu0 0.0
        %690 = vmatprep.subr.mxu0 0.0
        %691 = vmatpush1.xpose.msra.mxu0 0.0
        %692 = vmatprep.subr.mxu0 0.0
        %693 = vmatpush1.xpose.msra.mxu0 0.0
        %694 = vmatprep.subr.mxu0 0.0
        %695 = vmatpush1.xpose.msra.mxu0 0.0
        %696 = vmatprep.subr.mxu0 0.0
        %697 = vmatpush1.xpose.msra.mxu0 0.0
        %698 = vmatprep.subr.mxu0 0.0
        %699 = vmatpush1.xpose.msra.mxu0 0.0
        %700 = vmatprep.subr.mxu0 0.0
        %701 = vmatpush1.xpose.msra.mxu0 0.0
        %702 = vmatprep.subr.mxu0 0.0
        %703 = vmatpush1.xpose.msra.mxu0 0.0
        %704 = vmatprep.subr.mxu0 0.0
        %705 = vmatpush1.xpose.msra.mxu0 0.0
        %706 = vmatprep.subr.mxu0 0.0
        %707 = vmatpush1.xpose.msra.mxu0 0.0
        %708 = vmatprep.subr.mxu0 0.0
        %709 = vmatpush1.xpose.msra.mxu0 0.0
        %710 = vmatprep.subr.mxu0 0.0
        %711 = vmatpush1.xpose.msra.mxu0 0.0
        %712 = vmatprep.subr.mxu0 0.0
        %713 = vmatpush1.xpose.msra.mxu0 0.0
        %714 = vmatprep.subr.mxu0 0.0
        %715 = vmatpush1.xpose.msra.mxu0 0.0
        %716 = vmatprep.subr.mxu0 0.0
        %717 = vmatpush1.xpose.msra.mxu0 0.0
        %718 = vmatprep.subr.mxu0 0.0
        %719 = vmatpush1.xpose.msra.mxu0 0.0
        %720 = vmatprep.subr.mxu0 0.0
        %721 = vmatpush1.xpose.msra.mxu0 0.0
        %722 = vmatprep.subr.mxu0 0.0
        %723 = vmatpush1.xpose.msra.mxu0 0.0
        %724 = vmatprep.subr.mxu0 0.0
        %725 = vmatpush1.xpose.msra.mxu0 0.0
        %726 = vmatprep.subr.mxu0 0.0
        %727 = vmatpush1.xpose.msra.mxu0 0.0
        %728 = vmatprep.subr.mxu0 0.0
        %729 = vmatpush1.xpose.msra.mxu0 0.0
        %730 = vmatprep.subr.mxu0 0.0
        %731 = vmatpush1.xpose.msra.mxu0 0.0
        %732 = vmatprep.subr.mxu0 0.0
        %733 = vmatpush1.xpose.msra.mxu0 0.0
        %734 = vmatprep.subr.mxu0 0.0
        %735 = vmatpush1.xpose.msra.mxu0 0.0
        %736 = vmatprep.subr.mxu0 0.0
        %737 = vmatpush1.xpose.msra.mxu0 0.0
        %738 = vmatprep.subr.mxu0 0.0
        %739 = vmatpush1.xpose.msra.mxu0 0.0
        %740 = vmatprep.mubr.f32.mxu0 0.0
        %741 = vmatmul.mubr.f32.gmra.mrb[0].mxu0 %v672
        %v742 = vpop.f32.mrb[0].mxu0
        %v743 = vadd.f32 0.0, %v742
        %v744 = vpop.f32.mrb[0].mxu0
        %745 = vdwg.mxu0
        %747 = vrot.lane.b32.xlu0 %v635, 96
        %v748 = vpop.permute.xlu0 %747
        %v749 = vsel %vm671, %v635, 0
        %v751 = vsel %vm671, %v748, 0
        %753 = vmatprep.subr.mxu0 0.0
        %754 = vmatpush1.xpose.msra.mxu0 %v751
        %755 = vmatprep.subr.mxu0 0.0
        %756 = vmatpush1.xpose.msra.mxu0 0.0
        %757 = vmatprep.subr.mxu0 0.0
        %758 = vmatpush1.xpose.msra.mxu0 0.0
        %759 = vmatprep.subr.mxu0 0.0
        %760 = vmatpush1.xpose.msra.mxu0 0.0
        %761 = vmatprep.subr.mxu0 0.0
        %762 = vmatpush1.xpose.msra.mxu0 0.0
        %763 = vmatprep.subr.mxu0 0.0
        %764 = vmatpush1.xpose.msra.mxu0 0.0
        %765 = vmatprep.subr.mxu0 0.0
        %766 = vmatpush1.xpose.msra.mxu0 0.0
        %767 = vmatprep.subr.mxu0 0.0
        %768 = vmatpush1.xpose.msra.mxu0 0.0
        %769 = vmatprep.subr.mxu0 0.0
        %770 = vmatpush1.xpose.msra.mxu0 0.0
        %771 = vmatprep.subr.mxu0 0.0
        %772 = vmatpush1.xpose.msra.mxu0 0.0
        %773 = vmatprep.subr.mxu0 0.0
        %774 = vmatpush1.xpose.msra.mxu0 0.0
        %775 = vmatprep.subr.mxu0 0.0
        %776 = vmatpush1.xpose.msra.mxu0 0.0
        %777 = vmatprep.subr.mxu0 0.0
        %778 = vmatpush1.xpose.msra.mxu0 0.0
        %779 = vmatprep.subr.mxu0 0.0
        %780 = vmatpush1.xpose.msra.mxu0 0.0
        %781 = vmatprep.subr.mxu0 0.0
        %782 = vmatpush1.xpose.msra.mxu0 0.0
        %783 = vmatprep.subr.mxu0 0.0
        %784 = vmatpush1.xpose.msra.mxu0 0.0
        %785 = vmatprep.subr.mxu0 0.0
        %786 = vmatpush1.xpose.msra.mxu0 0.0
        %787 = vmatprep.subr.mxu0 0.0
        %788 = vmatpush1.xpose.msra.mxu0 0.0
        %789 = vmatprep.subr.mxu0 0.0
        %790 = vmatpush1.xpose.msra.mxu0 0.0
        %791 = vmatprep.subr.mxu0 0.0
        %792 = vmatpush1.xpose.msra.mxu0 0.0
        %793 = vmatprep.subr.mxu0 0.0
        %794 = vmatpush1.xpose.msra.mxu0 0.0
        %795 = vmatprep.subr.mxu0 0.0
        %796 = vmatpush1.xpose.msra.mxu0 0.0
        %797 = vmatprep.subr.mxu0 0.0
        %798 = vmatpush1.xpose.msra.mxu0 0.0
        %799 = vmatprep.subr.mxu0 0.0
        %800 = vmatpush1.xpose.msra.mxu0 0.0
        %801 = vmatprep.subr.mxu0 0.0
        %802 = vmatpush1.xpose.msra.mxu0 0.0
        %803 = vmatprep.subr.mxu0 0.0
        %804 = vmatpush1.xpose.msra.mxu0 0.0
        %805 = vmatprep.subr.mxu0 0.0
        %806 = vmatpush1.xpose.msra.mxu0 0.0
        %807 = vmatprep.subr.mxu0 0.0
        %808 = vmatpush1.xpose.msra.mxu0 0.0
        %809 = vmatprep.subr.mxu0 0.0
        %810 = vmatpush1.xpose.msra.mxu0 0.0
        %811 = vmatprep.subr.mxu0 0.0
        %812 = vmatpush1.xpose.msra.mxu0 0.0
        %813 = vmatprep.subr.mxu0 0.0
        %814 = vmatpush1.xpose.msra.mxu0 0.0
        %815 = vmatprep.subr.mxu0 0.0
        %816 = vmatpush1.xpose.msra.mxu0 0.0
        %817 = vmatprep.mubr.f32.mxu0 0.0
        %818 = vmatmul.mubr.f32.gmra.mrb[0].mxu0 %v749
        %v819 = vpop.f32.mrb[0].mxu0
        %v820 = vadd.f32 0.0, %v819
        %v821 = vpop.f32.mrb[0].mxu0
        %822 = vdwg.mxu0
        %824 = vrot.lane.b32.xlu0 %v640, 96
        %v825 = vpop.permute.xlu0 %824
        %v826 = vsel %vm671, %v640, 0
        %v828 = vsel %vm671, %v825, 0
        %830 = vmatprep.subr.mxu0 0.0
        %831 = vmatpush1.xpose.msra.mxu0 %v828
        %832 = vmatprep.subr.mxu0 0.0
        %833 = vmatpush1.xpose.msra.mxu0 0.0
        %834 = vmatprep.subr.mxu0 0.0
        %835 = vmatpush1.xpose.msra.mxu0 0.0
        %836 = vmatprep.subr.mxu0 0.0
        %837 = vmatpush1.xpose.msra.mxu0 0.0
        %838 = vmatprep.subr.mxu0 0.0
        %839 = vmatpush1.xpose.msra.mxu0 0.0
        %840 = vmatprep.subr.mxu0 0.0
        %841 = vmatpush1.xpose.msra.mxu0 0.0
        %842 = vmatprep.subr.mxu0 0.0
        %843 = vmatpush1.xpose.msra.mxu0 0.0
        %844 = vmatprep.subr.mxu0 0.0
        %845 = vmatpush1.xpose.msra.mxu0 0.0
        %846 = vmatprep.subr.mxu0 0.0
        %847 = vmatpush1.xpose.msra.mxu0 0.0
        %848 = vmatprep.subr.mxu0 0.0
        %849 = vmatpush1.xpose.msra.mxu0 0.0
        %850 = vmatprep.subr.mxu0 0.0
        %851 = vmatpush1.xpose.msra.mxu0 0.0
        %852 = vmatprep.subr.mxu0 0.0
        %853 = vmatpush1.xpose.msra.mxu0 0.0
        %854 = vmatprep.subr.mxu0 0.0
        %855 = vmatpush1.xpose.msra.mxu0 0.0
        %856 = vmatprep.subr.mxu0 0.0
        %857 = vmatpush1.xpose.msra.mxu0 0.0
        %858 = vmatprep.subr.mxu0 0.0
        %859 = vmatpush1.xpose.msra.mxu0 0.0
        %860 = vmatprep.subr.mxu0 0.0
        %861 = vmatpush1.xpose.msra.mxu0 0.0
        %862 = vmatprep.subr.mxu0 0.0
        %863 = vmatpush1.xpose.msra.mxu0 0.0
        %864 = vmatprep.subr.mxu0 0.0
        %865 = vmatpush1.xpose.msra.mxu0 0.0
        %866 = vmatprep.subr.mxu0 0.0
        %867 = vmatpush1.xpose.msra.mxu0 0.0
        %868 = vmatprep.subr.mxu0 0.0
        %869 = vmatpush1.xpose.msra.mxu0 0.0
        %870 = vmatprep.subr.mxu0 0.0
        %871 = vmatpush1.xpose.msra.mxu0 0.0
        %872 = vmatprep.subr.mxu0 0.0
        %873 = vmatpush1.xpose.msra.mxu0 0.0
        %874 = vmatprep.subr.mxu0 0.0
        %875 = vmatpush1.xpose.msra.mxu0 0.0
        %876 = vmatprep.subr.mxu0 0.0
        %877 = vmatpush1.xpose.msra.mxu0 0.0
        %878 = vmatprep.subr.mxu0 0.0
        %879 = vmatpush1.xpose.msra.mxu0 0.0
        %880 = vmatprep.subr.mxu0 0.0
        %881 = vmatpush1.xpose.msra.mxu0 0.0
        %882 = vmatprep.subr.mxu0 0.0
        %883 = vmatpush1.xpose.msra.mxu0 0.0
        %884 = vmatprep.subr.mxu0 0.0
        %885 = vmatpush1.xpose.msra.mxu0 0.0
        %886 = vmatprep.subr.mxu0 0.0
        %887 = vmatpush1.xpose.msra.mxu0 0.0
        %888 = vmatprep.subr.mxu0 0.0
        %889 = vmatpush1.xpose.msra.mxu0 0.0
        %890 = vmatprep.subr.mxu0 0.0
        %891 = vmatpush1.xpose.msra.mxu0 0.0
        %892 = vmatprep.subr.mxu0 0.0
        %893 = vmatpush1.xpose.msra.mxu0 0.0
        %894 = vmatprep.mubr.f32.mxu0 0.0
        %895 = vmatmul.mubr.f32.gmra.mrb[0].mxu0 %v826
        %v896 = vpop.f32.mrb[0].mxu0
        %v897 = vadd.f32 0.0, %v896
        %v898 = vpop.f32.mrb[0].mxu0
        %899 = vdwg.mxu0
        %901 = vrot.lane.b32.xlu0 %v645, 96
        %v902 = vpop.permute.xlu0 %901
        %v903 = vsel %vm671, %v645, 0
        %v905 = vsel %vm671, %v902, 0
        %907 = vmatprep.subr.mxu0 0.0
        %908 = vmatpush1.xpose.msra.mxu0 %v905
        %909 = vmatprep.subr.mxu0 0.0
        %910 = vmatpush1.xpose.msra.mxu0 0.0
        %911 = vmatprep.subr.mxu0 0.0
        %912 = vmatpush1.xpose.msra.mxu0 0.0
        %913 = vmatprep.subr.mxu0 0.0
        %914 = vmatpush1.xpose.msra.mxu0 0.0
        %915 = vmatprep.subr.mxu0 0.0
        %916 = vmatpush1.xpose.msra.mxu0 0.0
        %917 = vmatprep.subr.mxu0 0.0
        %918 = vmatpush1.xpose.msra.mxu0 0.0
        %919 = vmatprep.subr.mxu0 0.0
        %920 = vmatpush1.xpose.msra.mxu0 0.0
        %921 = vmatprep.subr.mxu0 0.0
        %922 = vmatpush1.xpose.msra.mxu0 0.0
        %923 = vmatprep.subr.mxu0 0.0
        %924 = vmatpush1.xpose.msra.mxu0 0.0
        %925 = vmatprep.subr.mxu0 0.0
        %926 = vmatpush1.xpose.msra.mxu0 0.0
        %927 = vmatprep.subr.mxu0 0.0
        %928 = vmatpush1.xpose.msra.mxu0 0.0
        %929 = vmatprep.subr.mxu0 0.0
        %930 = vmatpush1.xpose.msra.mxu0 0.0
        %931 = vmatprep.subr.mxu0 0.0
        %932 = vmatpush1.xpose.msra.mxu0 0.0
        %933 = vmatprep.subr.mxu0 0.0
        %934 = vmatpush1.xpose.msra.mxu0 0.0
        %935 = vmatprep.subr.mxu0 0.0
        %936 = vmatpush1.xpose.msra.mxu0 0.0
        %937 = vmatprep.subr.mxu0 0.0
        %938 = vmatpush1.xpose.msra.mxu0 0.0
        %939 = vmatprep.subr.mxu0 0.0
        %940 = vmatpush1.xpose.msra.mxu0 0.0
        %941 = vmatprep.subr.mxu0 0.0
        %942 = vmatpush1.xpose.msra.mxu0 0.0
        %943 = vmatprep.subr.mxu0 0.0
        %944 = vmatpush1.xpose.msra.mxu0 0.0
        %945 = vmatprep.subr.mxu0 0.0
        %946 = vmatpush1.xpose.msra.mxu0 0.0
        %947 = vmatprep.subr.mxu0 0.0
        %948 = vmatpush1.xpose.msra.mxu0 0.0
        %949 = vmatprep.subr.mxu0 0.0
        %950 = vmatpush1.xpose.msra.mxu0 0.0
        %951 = vmatprep.subr.mxu0 0.0
        %952 = vmatpush1.xpose.msra.mxu0 0.0
        %953 = vmatprep.subr.mxu0 0.0
        %954 = vmatpush1.xpose.msra.mxu0 0.0
        %955 = vmatprep.subr.mxu0 0.0
        %956 = vmatpush1.xpose.msra.mxu0 0.0
        %957 = vmatprep.subr.mxu0 0.0
        %958 = vmatpush1.xpose.msra.mxu0 0.0
        %959 = vmatprep.subr.mxu0 0.0
        %960 = vmatpush1.xpose.msra.mxu0 0.0
        %961 = vmatprep.subr.mxu0 0.0
        %962 = vmatpush1.xpose.msra.mxu0 0.0
        %963 = vmatprep.subr.mxu0 0.0
        %964 = vmatpush1.xpose.msra.mxu0 0.0
        %965 = vmatprep.subr.mxu0 0.0
        %966 = vmatpush1.xpose.msra.mxu0 0.0
        %967 = vmatprep.subr.mxu0 0.0
        %968 = vmatpush1.xpose.msra.mxu0 0.0
        %969 = vmatprep.subr.mxu0 0.0
        %970 = vmatpush1.xpose.msra.mxu0 0.0
        %971 = vmatprep.mubr.f32.mxu0 0.0
        %972 = vmatmul.mubr.f32.gmra.mrb[0].mxu0 %v903
        %v973 = vpop.f32.mrb[0].mxu0
        %v974 = vadd.f32 0.0, %v973
        %v975 = vpop.f32.mrb[0].mxu0
        %976 = vdwg.mxu0
        %978 = vrot.lane.b32.xlu0 %v650, 96
        %v979 = vpop.permute.xlu0 %978
        %v980 = vsel %vm671, %v650, 0
        %v982 = vsel %vm671, %v979, 0
        %984 = vmatprep.subr.mxu0 0.0
        %985 = vmatpush1.xpose.msra.mxu0 %v982
        %986 = vmatprep.subr.mxu0 0.0
        %987 = vmatpush1.xpose.msra.mxu0 0.0
        %988 = vmatprep.subr.mxu0 0.0
        %989 = vmatpush1.xpose.msra.mxu0 0.0
        %990 = vmatprep.subr.mxu0 0.0
        %991 = vmatpush1.xpose.msra.mxu0 0.0
        %992 = vmatprep.subr.mxu0 0.0
        %993 = vmatpush1.xpose.msra.mxu0 0.0
        %994 = vmatprep.subr.mxu0 0.0
        %995 = vmatpush1.xpose.msra.mxu0 0.0
        %996 = vmatprep.subr.mxu0 0.0
        %997 = vmatpush1.xpose.msra.mxu0 0.0
        %998 = vmatprep.subr.mxu0 0.0
        %999 = vmatpush1.xpose.msra.mxu0 0.0
        %1000 = vmatprep.subr.mxu0 0.0
        %1001 = vmatpush1.xpose.msra.mxu0 0.0
        %1002 = vmatprep.subr.mxu0 0.0
        %1003 = vmatpush1.xpose.msra.mxu0 0.0
        %1004 = vmatprep.subr.mxu0 0.0
        %1005 = vmatpush1.xpose.msra.mxu0 0.0
        %1006 = vmatprep.subr.mxu0 0.0
        %1007 = vmatpush1.xpose.msra.mxu0 0.0
        %1008 = vmatprep.subr.mxu0 0.0
        %1009 = vmatpush1.xpose.msra.mxu0 0.0
        %1010 = vmatprep.subr.mxu0 0.0
        %1011 = vmatpush1.xpose.msra.mxu0 0.0
        %1012 = vmatprep.subr.mxu0 0.0
        %1013 = vmatpush1.xpose.msra.mxu0 0.0
        %1014 = vmatprep.subr.mxu0 0.0
        %1015 = vmatpush1.xpose.msra.mxu0 0.0
        %1016 = vmatprep.subr.mxu0 0.0
        %1017 = vmatpush1.xpose.msra.mxu0 0.0
        %1018 = vmatprep.subr.mxu0 0.0
        %1019 = vmatpush1.xpose.msra.mxu0 0.0
        %1020 = vmatprep.subr.mxu0 0.0
        %1021 = vmatpush1.xpose.msra.mxu0 0.0
        %1022 = vmatprep.subr.mxu0 0.0
        %1023 = vmatpush1.xpose.msra.mxu0 0.0
        %1024 = vmatprep.subr.mxu0 0.0
        %1025 = vmatpush1.xpose.msra.mxu0 0.0
        %1026 = vmatprep.subr.mxu0 0.0
        %1027 = vmatpush1.xpose.msra.mxu0 0.0
        %1028 = vmatprep.subr.mxu0 0.0
        %1029 = vmatpush1.xpose.msra.mxu0 0.0
        %1030 = vmatprep.subr.mxu0 0.0
        %1031 = vmatpush1.xpose.msra.mxu0 0.0
        %1032 = vmatprep.subr.mxu0 0.0
        %1033 = vmatpush1.xpose.msra.mxu0 0.0
        %1034 = vmatprep.subr.mxu0 0.0
        %1035 = vmatpush1.xpose.msra.mxu0 0.0
        %1036 = vmatprep.subr.mxu0 0.0
        %1037 = vmatpush1.xpose.msra.mxu0 0.0
        %1038 = vmatprep.subr.mxu0 0.0
        %1039 = vmatpush1.xpose.msra.mxu0 0.0
        %1040 = vmatprep.subr.mxu0 0.0
        %1041 = vmatpush1.xpose.msra.mxu0 0.0
        %1042 = vmatprep.subr.mxu0 0.0
        %1043 = vmatpush1.xpose.msra.mxu0 0.0
        %1044 = vmatprep.subr.mxu0 0.0
        %1045 = vmatpush1.xpose.msra.mxu0 0.0
        %1046 = vmatprep.subr.mxu0 0.0
        %1047 = vmatpush1.xpose.msra.mxu0 0.0
        %1048 = vmatprep.mubr.f32.mxu0 0.0
        %1049 = vmatmul.mubr.f32.gmra.mrb[0].mxu0 %v980
        %v1050 = vpop.f32.mrb[0].mxu0
        %v1051 = vadd.f32 0.0, %v1050
        %v1052 = vpop.f32.mrb[0].mxu0
        %1053 = vdwg.mxu0
        %1055 = vrot.lane.b32.xlu0 %v655, 96
        %v1056 = vpop.permute.xlu0 %1055
        %v1057 = vsel %vm671, %v655, 0
        %v1059 = vsel %vm671, %v1056, 0
        %1061 = vmatprep.subr.mxu0 0.0
        %1062 = vmatpush1.xpose.msra.mxu0 %v1059
        %1063 = vmatprep.subr.mxu0 0.0
        %1064 = vmatpush1.xpose.msra.mxu0 0.0
        %1065 = vmatprep.subr.mxu0 0.0
        %1066 = vmatpush1.xpose.msra.mxu0 0.0
        %1067 = vmatprep.subr.mxu0 0.0
        %1068 = vmatpush1.xpose.msra.mxu0 0.0
        %1069 = vmatprep.subr.mxu0 0.0
        %1070 = vmatpush1.xpose.msra.mxu0 0.0
        %1071 = vmatprep.subr.mxu0 0.0
        %1072 = vmatpush1.xpose.msra.mxu0 0.0
        %1073 = vmatprep.subr.mxu0 0.0
        %1074 = vmatpush1.xpose.msra.mxu0 0.0
        %1075 = vmatprep.subr.mxu0 0.0
        %1076 = vmatpush1.xpose.msra.mxu0 0.0
        %1077 = vmatprep.subr.mxu0 0.0
        %1078 = vmatpush1.xpose.msra.mxu0 0.0
        %1079 = vmatprep.subr.mxu0 0.0
        %1080 = vmatpush1.xpose.msra.mxu0 0.0
        %1081 = vmatprep.subr.mxu0 0.0
        %1082 = vmatpush1.xpose.msra.mxu0 0.0
        %1083 = vmatprep.subr.mxu0 0.0
        %1084 = vmatpush1.xpose.msra.mxu0 0.0
        %1085 = vmatprep.subr.mxu0 0.0
        %1086 = vmatpush1.xpose.msra.mxu0 0.0
        %1087 = vmatprep.subr.mxu0 0.0
        %1088 = vmatpush1.xpose.msra.mxu0 0.0
        %1089 = vmatprep.subr.mxu0 0.0
        %1090 = vmatpush1.xpose.msra.mxu0 0.0
        %1091 = vmatprep.subr.mxu0 0.0
        %1092 = vmatpush1.xpose.msra.mxu0 0.0
        %1093 = vmatprep.subr.mxu0 0.0
        %1094 = vmatpush1.xpose.msra.mxu0 0.0
        %1095 = vmatprep.subr.mxu0 0.0
        %1096 = vmatpush1.xpose.msra.mxu0 0.0
        %1097 = vmatprep.subr.mxu0 0.0
        %1098 = vmatpush1.xpose.msra.mxu0 0.0
        %1099 = vmatprep.subr.mxu0 0.0
        %1100 = vmatpush1.xpose.msra.mxu0 0.0
        %1101 = vmatprep.subr.mxu0 0.0
        %1102 = vmatpush1.xpose.msra.mxu0 0.0
        %1103 = vmatprep.subr.mxu0 0.0
        %1104 = vmatpush1.xpose.msra.mxu0 0.0
        %1105 = vmatprep.subr.mxu0 0.0
        %1106 = vmatpush1.xpose.msra.mxu0 0.0
        %1107 = vmatprep.subr.mxu0 0.0
        %1108 = vmatpush1.xpose.msra.mxu0 0.0
        %1109 = vmatprep.subr.mxu0 0.0
        %1110 = vmatpush1.xpose.msra.mxu0 0.0
        %1111 = vmatprep.subr.mxu0 0.0
        %1112 = vmatpush1.xpose.msra.mxu0 0.0
        %1113 = vmatprep.subr.mxu0 0.0
        %1114 = vmatpush1.xpose.msra.mxu0 0.0
        %1115 = vmatprep.subr.mxu0 0.0
        %1116 = vmatpush1.xpose.msra.mxu0 0.0
        %1117 = vmatprep.subr.mxu0 0.0
        %1118 = vmatpush1.xpose.msra.mxu0 0.0
        %1119 = vmatprep.subr.mxu0 0.0
        %1120 = vmatpush1.xpose.msra.mxu0 0.0
        %1121 = vmatprep.subr.mxu0 0.0
        %1122 = vmatpush1.xpose.msra.mxu0 0.0
        %1123 = vmatprep.subr.mxu0 0.0
        %1124 = vmatpush1.xpose.msra.mxu0 0.0
        %1125 = vmatprep.mubr.f32.mxu0 0.0
        %1126 = vmatmul.mubr.f32.gmra.mrb[0].mxu0 %v1057
        %v1127 = vpop.f32.mrb[0].mxu0
        %v1128 = vadd.f32 0.0, %v1127
        %v1129 = vpop.f32.mrb[0].mxu0
        %1130 = vdwg.mxu0
        %1132 = vrot.lane.b32.xlu0 %v660, 96
        %v1133 = vpop.permute.xlu0 %1132
        %v1134 = vsel %vm671, %v660, 0
        %v1136 = vsel %vm671, %v1133, 0
        %1138 = vmatprep.subr.mxu0 0.0
        %1139 = vmatpush1.xpose.msra.mxu0 %v1136
        %1140 = vmatprep.subr.mxu0 0.0
        %1141 = vmatpush1.xpose.msra.mxu0 0.0
        %1142 = vmatprep.subr.mxu0 0.0
        %1143 = vmatpush1.xpose.msra.mxu0 0.0
        %1144 = vmatprep.subr.mxu0 0.0
        %1145 = vmatpush1.xpose.msra.mxu0 0.0
        %1146 = vmatprep.subr.mxu0 0.0
        %1147 = vmatpush1.xpose.msra.mxu0 0.0
        %1148 = vmatprep.subr.mxu0 0.0
        %1149 = vmatpush1.xpose.msra.mxu0 0.0
        %1150 = vmatprep.subr.mxu0 0.0
        %1151 = vmatpush1.xpose.msra.mxu0 0.0
        %1152 = vmatprep.subr.mxu0 0.0
        %1153 = vmatpush1.xpose.msra.mxu0 0.0
        %1154 = vmatprep.subr.mxu0 0.0
        %1155 = vmatpush1.xpose.msra.mxu0 0.0
        %1156 = vmatprep.subr.mxu0 0.0
        %1157 = vmatpush1.xpose.msra.mxu0 0.0
        %1158 = vmatprep.subr.mxu0 0.0
        %1159 = vmatpush1.xpose.msra.mxu0 0.0
        %1160 = vmatprep.subr.mxu0 0.0
        %1161 = vmatpush1.xpose.msra.mxu0 0.0
        %1162 = vmatprep.subr.mxu0 0.0
        %1163 = vmatpush1.xpose.msra.mxu0 0.0
        %1164 = vmatprep.subr.mxu0 0.0
        %1165 = vmatpush1.xpose.msra.mxu0 0.0
        %1166 = vmatprep.subr.mxu0 0.0
        %1167 = vmatpush1.xpose.msra.mxu0 0.0
        %1168 = vmatprep.subr.mxu0 0.0
        %1169 = vmatpush1.xpose.msra.mxu0 0.0
        %1170 = vmatprep.subr.mxu0 0.0
        %1171 = vmatpush1.xpose.msra.mxu0 0.0
        %1172 = vmatprep.subr.mxu0 0.0
        %1173 = vmatpush1.xpose.msra.mxu0 0.0
        %1174 = vmatprep.subr.mxu0 0.0
        %1175 = vmatpush1.xpose.msra.mxu0 0.0
        %1176 = vmatprep.subr.mxu0 0.0
        %1177 = vmatpush1.xpose.msra.mxu0 0.0
        %1178 = vmatprep.subr.mxu0 0.0
        %1179 = vmatpush1.xpose.msra.mxu0 0.0
        %1180 = vmatprep.subr.mxu0 0.0
        %1181 = vmatpush1.xpose.msra.mxu0 0.0
        %1182 = vmatprep.subr.mxu0 0.0
        %1183 = vmatpush1.xpose.msra.mxu0 0.0
        %1184 = vmatprep.subr.mxu0 0.0
        %1185 = vmatpush1.xpose.msra.mxu0 0.0
        %1186 = vmatprep.subr.mxu0 0.0
        %1187 = vmatpush1.xpose.msra.mxu0 0.0
        %1188 = vmatprep.subr.mxu0 0.0
        %1189 = vmatpush1.xpose.msra.mxu0 0.0
        %1190 = vmatprep.subr.mxu0 0.0
        %1191 = vmatpush1.xpose.msra.mxu0 0.0
        %1192 = vmatprep.subr.mxu0 0.0
        %1193 = vmatpush1.xpose.msra.mxu0 0.0
        %1194 = vmatprep.subr.mxu0 0.0
        %1195 = vmatpush1.xpose.msra.mxu0 0.0
        %1196 = vmatprep.subr.mxu0 0.0
        %1197 = vmatpush1.xpose.msra.mxu0 0.0
        %1198 = vmatprep.subr.mxu0 0.0
        %1199 = vmatpush1.xpose.msra.mxu0 0.0
        %1200 = vmatprep.subr.mxu0 0.0
        %1201 = vmatpush1.xpose.msra.mxu0 0.0
        %1202 = vmatprep.mubr.f32.mxu0 0.0
        %1203 = vmatmul.mubr.f32.gmra.mrb[0].mxu0 %v1134
        %v1204 = vpop.f32.mrb[0].mxu0
        %v1205 = vadd.f32 0.0, %v1204
        %v1206 = vpop.f32.mrb[0].mxu0
        %1207 = vdwg.mxu0
        %1209 = vrot.lane.b32.xlu0 %v665, 96
        %v1210 = vpop.permute.xlu0 %1209
        %v1211 = vsel %vm671, %v665, 0
        %v1213 = vsel %vm671, %v1210, 0
        %1215 = vmatprep.subr.mxu0 0.0
        %1216 = vmatpush1.xpose.msra.mxu0 %v1213
        %1217 = vmatprep.subr.mxu0 0.0
        %1218 = vmatpush1.xpose.msra.mxu0 0.0
        %1219 = vmatprep.subr.mxu0 0.0
        %1220 = vmatpush1.xpose.msra.mxu0 0.0
        %1221 = vmatprep.subr.mxu0 0.0
        %1222 = vmatpush1.xpose.msra.mxu0 0.0
        %1223 = vmatprep.subr.mxu0 0.0
        %1224 = vmatpush1.xpose.msra.mxu0 0.0
        %1225 = vmatprep.subr.mxu0 0.0
        %1226 = vmatpush1.xpose.msra.mxu0 0.0
        %1227 = vmatprep.subr.mxu0 0.0
        %1228 = vmatpush1.xpose.msra.mxu0 0.0
        %1229 = vmatprep.subr.mxu0 0.0
        %1230 = vmatpush1.xpose.msra.mxu0 0.0
        %1231 = vmatprep.subr.mxu0 0.0
        %1232 = vmatpush1.xpose.msra.mxu0 0.0
        %1233 = vmatprep.subr.mxu0 0.0
        %1234 = vmatpush1.xpose.msra.mxu0 0.0
        %1235 = vmatprep.subr.mxu0 0.0
        %1236 = vmatpush1.xpose.msra.mxu0 0.0
        %1237 = vmatprep.subr.mxu0 0.0
        %1238 = vmatpush1.xpose.msra.mxu0 0.0
        %1239 = vmatprep.subr.mxu0 0.0
        %1240 = vmatpush1.xpose.msra.mxu0 0.0
        %1241 = vmatprep.subr.mxu0 0.0
        %1242 = vmatpush1.xpose.msra.mxu0 0.0
        %1243 = vmatprep.subr.mxu0 0.0
        %1244 = vmatpush1.xpose.msra.mxu0 0.0
        %1245 = vmatprep.subr.mxu0 0.0
        %1246 = vmatpush1.xpose.msra.mxu0 0.0
        %1247 = vmatprep.subr.mxu0 0.0
        %1248 = vmatpush1.xpose.msra.mxu0 0.0
        %1249 = vmatprep.subr.mxu0 0.0
        %1250 = vmatpush1.xpose.msra.mxu0 0.0
        %1251 = vmatprep.subr.mxu0 0.0
        %1252 = vmatpush1.xpose.msra.mxu0 0.0
        %1253 = vmatprep.subr.mxu0 0.0
        %1254 = vmatpush1.xpose.msra.mxu0 0.0
        %1255 = vmatprep.subr.mxu0 0.0
        %1256 = vmatpush1.xpose.msra.mxu0 0.0
        %1257 = vmatprep.subr.mxu0 0.0
        %1258 = vmatpush1.xpose.msra.mxu0 0.0
        %1259 = vmatprep.subr.mxu0 0.0
        %1260 = vmatpush1.xpose.msra.mxu0 0.0
        %1261 = vmatprep.subr.mxu0 0.0
        %1262 = vmatpush1.xpose.msra.mxu0 0.0
        %1263 = vmatprep.subr.mxu0 0.0
        %1264 = vmatpush1.xpose.msra.mxu0 0.0
        %1265 = vmatprep.subr.mxu0 0.0
        %1266 = vmatpush1.xpose.msra.mxu0 0.0
        %1267 = vmatprep.subr.mxu0 0.0
        %1268 = vmatpush1.xpose.msra.mxu0 0.0
        %1269 = vmatprep.subr.mxu0 0.0
        %1270 = vmatpush1.xpose.msra.mxu0 0.0
        %1271 = vmatprep.subr.mxu0 0.0
        %1272 = vmatpush1.xpose.msra.mxu0 0.0
        %1273 = vmatprep.subr.mxu0 0.0
        %1274 = vmatpush1.xpose.msra.mxu0 0.0
        %1275 = vmatprep.subr.mxu0 0.0
        %1276 = vmatpush1.xpose.msra.mxu0 0.0
        %1277 = vmatprep.subr.mxu0 0.0
        %1278 = vmatpush1.xpose.msra.mxu0 0.0
        %1279 = vmatprep.mubr.f32.mxu0 0.0
        %1280 = vmatmul.mubr.f32.gmra.mrb[0].mxu0 %v1211
        %v1281 = vpop.f32.mrb[0].mxu0
        %v1282 = vadd.f32 0.0, %v1281
        %v1283 = vpop.f32.mrb[0].mxu0
        %1284 = vdwg.mxu0
        %v1285 = vmul.f32 %v743, 0.35355338
        %v1286 = vmul.f32 %v820, 0.35355338
        %v1287 = vmul.f32 %v897, 0.35355338
        %v1288 = vmul.f32 %v974, 0.35355338
        %v1289 = vmul.f32 %v1051, 0.35355338
        %v1290 = vmul.f32 %v1128, 0.35355338
        %v1291 = vmul.f32 %v1205, 0.35355338
        %v1292 = vmul.f32 %v1282, 0.35355338
        %v1293 = vsel %vm671, %v1285, -inf
        %1294 = vmax.xlane.f32.xlu0 %v1293
        %v1295 = vpop.xlane.xlu0 %1294
        %v1296 = vsel %vm671, %v1286, -inf
        %1297 = vmax.xlane.f32.xlu0 %v1296
        %v1298 = vpop.xlane.xlu0 %1297
        %v1299 = vsel %vm671, %v1287, -inf
        %1300 = vmax.xlane.f32.xlu0 %v1299
        %v1301 = vpop.xlane.xlu0 %1300
        %v1302 = vsel %vm671, %v1288, -inf
        %1303 = vmax.xlane.f32.xlu0 %v1302
        %v1304 = vpop.xlane.xlu0 %1303
        %v1305 = vsel %vm671, %v1289, -inf
        %1306 = vmax.xlane.f32.xlu0 %v1305
        %v1307 = vpop.xlane.xlu0 %1306
        %v1308 = vsel %vm671, %v1290, -inf
        %1309 = vmax.xlane.f32.xlu0 %v1308
        %v1310 = vpop.xlane.xlu0 %1309
        %v1311 = vsel %vm671, %v1291, -inf
        %1312 = vmax.xlane.f32.xlu0 %v1311
        %v1313 = vpop.xlane.xlu0 %1312
        %v1314 = vsel %vm671, %v1292, -inf
        %1315 = vmax.xlane.f32.xlu0 %v1314
        %v1316 = vpop.xlane.xlu0 %1315
        %v1317 = vsub.f32 %v1285, %v1295
        %v1318 = vsub.f32 %v1286, %v1298
        %v1319 = vsub.f32 %v1287, %v1301
        %v1320 = vsub.f32 %v1288, %v1304
        %v1321 = vsub.f32 %v1289, %v1307
        %v1322 = vsub.f32 %v1290, %v1310
        %v1323 = vsub.f32 %v1291, %v1313
        %v1324 = vsub.f32 %v1292, %v1316
        %v1325 = vmul.f32 %v1317, 1.442695
        %v1326 = vpow.pop %v1325
        %v1327 = vmul.f32 %v1318, 1.442695
        %v1328 = vpow.pop %v1327
        %v1329 = vmul.f32 %v1319, 1.442695
        %v1330 = vpow.pop %v1329
        %v1331 = vmul.f32 %v1320, 1.442695
        %v1332 = vpow.pop %v1331
        %v1333 = vmul.f32 %v1321, 1.442695
        %v1334 = vpow.pop %v1333
        %v1335 = vmul.f32 %v1322, 1.442695
        %v1336 = vpow.pop %v1335
        %v1337 = vmul.f32 %v1323, 1.442695
        %v1338 = vpow.pop %v1337
        %v1339 = vmul.f32 %v1324, 1.442695
        %v1340 = vpow.pop %v1339
        %v1341 = vsel %vm671, %v1326, 0.0
        %1342 = vadd.xlane.f32.xlu0 %v1341
        %v1343 = vpop.xlane.xlu0 %1342
        %v1344 = vsel %vm671, %v1328, 0.0
        %1345 = vadd.xlane.f32.xlu0 %v1344
        %v1346 = vpop.xlane.xlu0 %1345
        %v1347 = vsel %vm671, %v1330, 0.0
        %1348 = vadd.xlane.f32.xlu0 %v1347
        %v1349 = vpop.xlane.xlu0 %1348
        %v1350 = vsel %vm671, %v1332, 0.0
        %1351 = vadd.xlane.f32.xlu0 %v1350
        %v1352 = vpop.xlane.xlu0 %1351
        %v1353 = vsel %vm671, %v1334, 0.0
        %1354 = vadd.xlane.f32.xlu0 %v1353
        %v1355 = vpop.xlane.xlu0 %1354
        %v1356 = vsel %vm671, %v1336, 0.0
        %1357 = vadd.xlane.f32.xlu0 %v1356
        %v1358 = vpop.xlane.xlu0 %1357
        %v1359 = vsel %vm671, %v1338, 0.0
        %1360 = vadd.xlane.f32.xlu0 %v1359
        %v1361 = vpop.xlane.xlu0 %1360
        %v1362 = vsel %vm671, %v1340, 0.0
        %1363 = vadd.xlane.f32.xlu0 %v1362
        %v1364 = vpop.xlane.xlu0 %1363
        %v1365 = vrcp.pop %v1343
        %v1366 = vrcp.pop %v1346
        %v1367 = vrcp.pop %v1349
        %v1368 = vrcp.pop %v1352
        %v1369 = vrcp.pop %v1355
        %v1370 = vrcp.pop %v1358
        %v1371 = vrcp.pop %v1361
        %v1372 = vrcp.pop %v1364
        %v1373 = vmul.f32 %v1326, %v1365
        %v1374 = vmul.f32 %v1328, %v1366
        %v1375 = vmul.f32 %v1330, %v1367
        %v1376 = vmul.f32 %v1332, %v1368
        %v1377 = vmul.f32 %v1334, %v1369
        %v1378 = vmul.f32 %v1336, %v1370
        %v1379 = vmul.f32 %v1338, %v1371
        %v1380 = vmul.f32 %v1340, %v1372
        %1381 = vrot.lane.b32.xlu0 %v630, 64
        %v1382 = vpop.permute.xlu0 %1381
        %v1385 = vsel %vm671, %v1373, 0
        %1387 = vmatprep.subr.mxu0 0.0
        %1388 = vmatpush1.msra.mxu0 %v1382
        %1389 = vmatprep.subr.mxu0 0.0
        %1390 = vmatpush1.msra.mxu0 0.0
        %1391 = vmatprep.subr.mxu0 0.0
        %1392 = vmatpush1.msra.mxu0 0.0
        %1393 = vmatprep.subr.mxu0 0.0
        %1394 = vmatpush1.msra.mxu0 0.0
        %1395 = vmatprep.subr.mxu0 0.0
        %1396 = vmatpush1.msra.mxu0 0.0
        %1397 = vmatprep.subr.mxu0 0.0
        %1398 = vmatpush1.msra.mxu0 0.0
        %1399 = vmatprep.subr.mxu0 0.0
        %1400 = vmatpush1.msra.mxu0 0.0
        %1401 = vmatprep.subr.mxu0 0.0
        %1402 = vmatpush1.msra.mxu0 0.0
        %1403 = vmatprep.subr.mxu0 0.0
        %1404 = vmatpush1.msra.mxu0 0.0
        %1405 = vmatprep.subr.mxu0 0.0
        %1406 = vmatpush1.msra.mxu0 0.0
        %1407 = vmatprep.subr.mxu0 0.0
        %1408 = vmatpush1.msra.mxu0 0.0
        %1409 = vmatprep.subr.mxu0 0.0
        %1410 = vmatpush1.msra.mxu0 0.0
        %1411 = vmatprep.subr.mxu0 0.0
        %1412 = vmatpush1.msra.mxu0 0.0
        %1413 = vmatprep.subr.mxu0 0.0
        %1414 = vmatpush1.msra.mxu0 0.0
        %1415 = vmatprep.subr.mxu0 0.0
        %1416 = vmatpush1.msra.mxu0 0.0
        %1417 = vmatprep.subr.mxu0 0.0
        %1418 = vmatpush1.msra.mxu0 0.0
        %1419 = vmatprep.subr.mxu0 0.0
        %1420 = vmatpush1.msra.mxu0 0.0
        %1421 = vmatprep.subr.mxu0 0.0
        %1422 = vmatpush1.msra.mxu0 0.0
        %1423 = vmatprep.subr.mxu0 0.0
        %1424 = vmatpush1.msra.mxu0 0.0
        %1425 = vmatprep.subr.mxu0 0.0
        %1426 = vmatpush1.msra.mxu0 0.0
        %1427 = vmatprep.subr.mxu0 0.0
        %1428 = vmatpush1.msra.mxu0 0.0
        %1429 = vmatprep.subr.mxu0 0.0
        %1430 = vmatpush1.msra.mxu0 0.0
        %1431 = vmatprep.subr.mxu0 0.0
        %1432 = vmatpush1.msra.mxu0 0.0
        %1433 = vmatprep.subr.mxu0 0.0
        %1434 = vmatpush1.msra.mxu0 0.0
        %1435 = vmatprep.subr.mxu0 0.0
        %1436 = vmatpush1.msra.mxu0 0.0
        %1437 = vmatprep.subr.mxu0 0.0
        %1438 = vmatpush1.msra.mxu0 0.0
        %1439 = vmatprep.subr.mxu0 0.0
        %1440 = vmatpush1.msra.mxu0 0.0
        %1441 = vmatprep.subr.mxu0 0.0
        %1442 = vmatpush1.msra.mxu0 0.0
        %1443 = vmatprep.subr.mxu0 0.0
        %1444 = vmatpush1.msra.mxu0 0.0
        %1445 = vmatprep.subr.mxu0 0.0
        %1446 = vmatpush1.msra.mxu0 0.0
        %1447 = vmatprep.subr.mxu0 0.0
        %1448 = vmatpush1.msra.mxu0 0.0
        %1449 = vmatprep.subr.mxu0 0.0
        %1450 = vmatpush1.msra.mxu0 0.0
        %1451 = vmatprep.mubr.f32.mxu0 0.0
        %1452 = vmatmul.mubr.f32.gmra.mrb[0].mxu0 %v1385
        %v1453 = vpop.f32.mrb[0].mxu0
        %v1454 = vadd.f32 0.0, %v1453
        %v1455 = vpop.f32.mrb[0].mxu0
        %1456 = vdwg.mxu0
        %1457 = vrot.lane.b32.xlu0 %v635, 64
        %v1458 = vpop.permute.xlu0 %1457
        %v1461 = vsel %vm671, %v1374, 0
        %1463 = vmatprep.subr.mxu0 0.0
        %1464 = vmatpush1.msra.mxu0 %v1458
        %1465 = vmatprep.subr.mxu0 0.0
        %1466 = vmatpush1.msra.mxu0 0.0
        %1467 = vmatprep.subr.mxu0 0.0
        %1468 = vmatpush1.msra.mxu0 0.0
        %1469 = vmatprep.subr.mxu0 0.0
        %1470 = vmatpush1.msra.mxu0 0.0
        %1471 = vmatprep.subr.mxu0 0.0
        %1472 = vmatpush1.msra.mxu0 0.0
        %1473 = vmatprep.subr.mxu0 0.0
        %1474 = vmatpush1.msra.mxu0 0.0
        %1475 = vmatprep.subr.mxu0 0.0
        %1476 = vmatpush1.msra.mxu0 0.0
        %1477 = vmatprep.subr.mxu0 0.0
        %1478 = vmatpush1.msra.mxu0 0.0
        %1479 = vmatprep.subr.mxu0 0.0
        %1480 = vmatpush1.msra.mxu0 0.0
        %1481 = vmatprep.subr.mxu0 0.0
        %1482 = vmatpush1.msra.mxu0 0.0
        %1483 = vmatprep.subr.mxu0 0.0
        %1484 = vmatpush1.msra.mxu0 0.0
        %1485 = vmatprep.subr.mxu0 0.0
        %1486 = vmatpush1.msra.mxu0 0.0
        %1487 = vmatprep.subr.mxu0 0.0
        %1488 = vmatpush1.msra.mxu0 0.0
        %1489 = vmatprep.subr.mxu0 0.0
        %1490 = vmatpush1.msra.mxu0 0.0
        %1491 = vmatprep.subr.mxu0 0.0
        %1492 = vmatpush1.msra.mxu0 0.0
        %1493 = vmatprep.subr.mxu0 0.0
        %1494 = vmatpush1.msra.mxu0 0.0
        %1495 = vmatprep.subr.mxu0 0.0
        %1496 = vmatpush1.msra.mxu0 0.0
        %1497 = vmatprep.subr.mxu0 0.0
        %1498 = vmatpush1.msra.mxu0 0.0
        %1499 = vmatprep.subr.mxu0 0.0
        %1500 = vmatpush1.msra.mxu0 0.0
        %1501 = vmatprep.subr.mxu0 0.0
        %1502 = vmatpush1.msra.mxu0 0.0
        %1503 = vmatprep.subr.mxu0 0.0
        %1504 = vmatpush1.msra.mxu0 0.0
        %1505 = vmatprep.subr.mxu0 0.0
        %1506 = vmatpush1.msra.mxu0 0.0
        %1507 = vmatprep.subr.mxu0 0.0
        %1508 = vmatpush1.msra.mxu0 0.0
        %1509 = vmatprep.subr.mxu0 0.0
        %1510 = vmatpush1.msra.mxu0 0.0
        %1511 = vmatprep.subr.mxu0 0.0
        %1512 = vmatpush1.msra.mxu0 0.0
        %1513 = vmatprep.subr.mxu0 0.0
        %1514 = vmatpush1.msra.mxu0 0.0
        %1515 = vmatprep.subr.mxu0 0.0
        %1516 = vmatpush1.msra.mxu0 0.0
        %1517 = vmatprep.subr.mxu0 0.0
        %1518 = vmatpush1.msra.mxu0 0.0
        %1519 = vmatprep.subr.mxu0 0.0
        %1520 = vmatpush1.msra.mxu0 0.0
        %1521 = vmatprep.subr.mxu0 0.0
        %1522 = vmatpush1.msra.mxu0 0.0
        %1523 = vmatprep.subr.mxu0 0.0
        %1524 = vmatpush1.msra.mxu0 0.0
        %1525 = vmatprep.subr.mxu0 0.0
        %1526 = vmatpush1.msra.mxu0 0.0
        %1527 = vmatprep.mubr.f32.mxu0 0.0
        %1528 = vmatmul.mubr.f32.gmra.mrb[0].mxu0 %v1461
        %v1529 = vpop.f32.mrb[0].mxu0
        %v1530 = vadd.f32 0.0, %v1529
        %v1531 = vpop.f32.mrb[0].mxu0
        %1532 = vdwg.mxu0
        %1533 = vrot.lane.b32.xlu0 %v640, 64
        %v1534 = vpop.permute.xlu0 %1533
        %v1537 = vsel %vm671, %v1375, 0
        %1539 = vmatprep.subr.mxu0 0.0
        %1540 = vmatpush1.msra.mxu0 %v1534
        %1541 = vmatprep.subr.mxu0 0.0
        %1542 = vmatpush1.msra.mxu0 0.0
        %1543 = vmatprep.subr.mxu0 0.0
        %1544 = vmatpush1.msra.mxu0 0.0
        %1545 = vmatprep.subr.mxu0 0.0
        %1546 = vmatpush1.msra.mxu0 0.0
        %1547 = vmatprep.subr.mxu0 0.0
        %1548 = vmatpush1.msra.mxu0 0.0
        %1549 = vmatprep.subr.mxu0 0.0
        %1550 = vmatpush1.msra.mxu0 0.0
        %1551 = vmatprep.subr.mxu0 0.0
        %1552 = vmatpush1.msra.mxu0 0.0
        %1553 = vmatprep.subr.mxu0 0.0
        %1554 = vmatpush1.msra.mxu0 0.0
        %1555 = vmatprep.subr.mxu0 0.0
        %1556 = vmatpush1.msra.mxu0 0.0
        %1557 = vmatprep.subr.mxu0 0.0
        %1558 = vmatpush1.msra.mxu0 0.0
        %1559 = vmatprep.subr.mxu0 0.0
        %1560 = vmatpush1.msra.mxu0 0.0
        %1561 = vmatprep.subr.mxu0 0.0
        %1562 = vmatpush1.msra.mxu0 0.0
        %1563 = vmatprep.subr.mxu0 0.0
        %1564 = vmatpush1.msra.mxu0 0.0
        %1565 = vmatprep.subr.mxu0 0.0
        %1566 = vmatpush1.msra.mxu0 0.0
        %1567 = vmatprep.subr.mxu0 0.0
        %1568 = vmatpush1.msra.mxu0 0.0
        %1569 = vmatprep.subr.mxu0 0.0
        %1570 = vmatpush1.msra.mxu0 0.0
        %1571 = vmatprep.subr.mxu0 0.0
        %1572 = vmatpush1.msra.mxu0 0.0
        %1573 = vmatprep.subr.mxu0 0.0
        %1574 = vmatpush1.msra.mxu0 0.0
        %1575 = vmatprep.subr.mxu0 0.0
        %1576 = vmatpush1.msra.mxu0 0.0
        %1577 = vmatprep.subr.mxu0 0.0
        %1578 = vmatpush1.msra.mxu0 0.0
        %1579 = vmatprep.subr.mxu0 0.0
        %1580 = vmatpush1.msra.mxu0 0.0
        %1581 = vmatprep.subr.mxu0 0.0
        %1582 = vmatpush1.msra.mxu0 0.0
        %1583 = vmatprep.subr.mxu0 0.0
        %1584 = vmatpush1.msra.mxu0 0.0
        %1585 = vmatprep.subr.mxu0 0.0
        %1586 = vmatpush1.msra.mxu0 0.0
        %1587 = vmatprep.subr.mxu0 0.0
        %1588 = vmatpush1.msra.mxu0 0.0
        %1589 = vmatprep.subr.mxu0 0.0
        %1590 = vmatpush1.msra.mxu0 0.0
        %1591 = vmatprep.subr.mxu0 0.0
        %1592 = vmatpush1.msra.mxu0 0.0
        %1593 = vmatprep.subr.mxu0 0.0
        %1594 = vmatpush1.msra.mxu0 0.0
        %1595 = vmatprep.subr.mxu0 0.0
        %1596 = vmatpush1.msra.mxu0 0.0
        %1597 = vmatprep.subr.mxu0 0.0
        %1598 = vmatpush1.msra.mxu0 0.0
        %1599 = vmatprep.subr.mxu0 0.0
        %1600 = vmatpush1.msra.mxu0 0.0
        %1601 = vmatprep.subr.mxu0 0.0
        %1602 = vmatpush1.msra.mxu0 0.0
        %1603 = vmatprep.mubr.f32.mxu0 0.0
        %1604 = vmatmul.mubr.f32.gmra.mrb[0].mxu0 %v1537
        %v1605 = vpop.f32.mrb[0].mxu0
        %v1606 = vadd.f32 0.0, %v1605
        %v1607 = vpop.f32.mrb[0].mxu0
        %1608 = vdwg.mxu0
        %1609 = vrot.lane.b32.xlu0 %v645, 64
        %v1610 = vpop.permute.xlu0 %1609
        %v1613 = vsel %vm671, %v1376, 0
        %1615 = vmatprep.subr.mxu0 0.0
        %1616 = vmatpush1.msra.mxu0 %v1610
        %1617 = vmatprep.subr.mxu0 0.0
        %1618 = vmatpush1.msra.mxu0 0.0
        %1619 = vmatprep.subr.mxu0 0.0
        %1620 = vmatpush1.msra.mxu0 0.0
        %1621 = vmatprep.subr.mxu0 0.0
        %1622 = vmatpush1.msra.mxu0 0.0
        %1623 = vmatprep.subr.mxu0 0.0
        %1624 = vmatpush1.msra.mxu0 0.0
        %1625 = vmatprep.subr.mxu0 0.0
        %1626 = vmatpush1.msra.mxu0 0.0
        %1627 = vmatprep.subr.mxu0 0.0
        %1628 = vmatpush1.msra.mxu0 0.0
        %1629 = vmatprep.subr.mxu0 0.0
        %1630 = vmatpush1.msra.mxu0 0.0
        %1631 = vmatprep.subr.mxu0 0.0
        %1632 = vmatpush1.msra.mxu0 0.0
        %1633 = vmatprep.subr.mxu0 0.0
        %1634 = vmatpush1.msra.mxu0 0.0
        %1635 = vmatprep.subr.mxu0 0.0
        %1636 = vmatpush1.msra.mxu0 0.0
        %1637 = vmatprep.subr.mxu0 0.0
        %1638 = vmatpush1.msra.mxu0 0.0
        %1639 = vmatprep.subr.mxu0 0.0
        %1640 = vmatpush1.msra.mxu0 0.0
        %1641 = vmatprep.subr.mxu0 0.0
        %1642 = vmatpush1.msra.mxu0 0.0
        %1643 = vmatprep.subr.mxu0 0.0
        %1644 = vmatpush1.msra.mxu0 0.0
        %1645 = vmatprep.subr.mxu0 0.0
        %1646 = vmatpush1.msra.mxu0 0.0
        %1647 = vmatprep.subr.mxu0 0.0
        %1648 = vmatpush1.msra.mxu0 0.0
        %1649 = vmatprep.subr.mxu0 0.0
        %1650 = vmatpush1.msra.mxu0 0.0
        %1651 = vmatprep.subr.mxu0 0.0
        %1652 = vmatpush1.msra.mxu0 0.0
        %1653 = vmatprep.subr.mxu0 0.0
        %1654 = vmatpush1.msra.mxu0 0.0
        %1655 = vmatprep.subr.mxu0 0.0
        %1656 = vmatpush1.msra.mxu0 0.0
        %1657 = vmatprep.subr.mxu0 0.0
        %1658 = vmatpush1.msra.mxu0 0.0
        %1659 = vmatprep.subr.mxu0 0.0
        %1660 = vmatpush1.msra.mxu0 0.0
        %1661 = vmatprep.subr.mxu0 0.0
        %1662 = vmatpush1.msra.mxu0 0.0
        %1663 = vmatprep.subr.mxu0 0.0
        %1664 = vmatpush1.msra.mxu0 0.0
        %1665 = vmatprep.subr.mxu0 0.0
        %1666 = vmatpush1.msra.mxu0 0.0
        %1667 = vmatprep.subr.mxu0 0.0
        %1668 = vmatpush1.msra.mxu0 0.0
        %1669 = vmatprep.subr.mxu0 0.0
        %1670 = vmatpush1.msra.mxu0 0.0
        %1671 = vmatprep.subr.mxu0 0.0
        %1672 = vmatpush1.msra.mxu0 0.0
        %1673 = vmatprep.subr.mxu0 0.0
        %1674 = vmatpush1.msra.mxu0 0.0
        %1675 = vmatprep.subr.mxu0 0.0
        %1676 = vmatpush1.msra.mxu0 0.0
        %1677 = vmatprep.subr.mxu0 0.0
        %1678 = vmatpush1.msra.mxu0 0.0
        %1679 = vmatprep.mubr.f32.mxu0 0.0
        %1680 = vmatmul.mubr.f32.gmra.mrb[0].mxu0 %v1613
        %v1681 = vpop.f32.mrb[0].mxu0
        %v1682 = vadd.f32 0.0, %v1681
        %v1683 = vpop.f32.mrb[0].mxu0
        %1684 = vdwg.mxu0
        %1685 = vrot.lane.b32.xlu0 %v650, 64
        %v1686 = vpop.permute.xlu0 %1685
        %v1689 = vsel %vm671, %v1377, 0
        %1691 = vmatprep.subr.mxu0 0.0
        %1692 = vmatpush1.msra.mxu0 %v1686
        %1693 = vmatprep.subr.mxu0 0.0
        %1694 = vmatpush1.msra.mxu0 0.0
        %1695 = vmatprep.subr.mxu0 0.0
        %1696 = vmatpush1.msra.mxu0 0.0
        %1697 = vmatprep.subr.mxu0 0.0
        %1698 = vmatpush1.msra.mxu0 0.0
        %1699 = vmatprep.subr.mxu0 0.0
        %1700 = vmatpush1.msra.mxu0 0.0
        %1701 = vmatprep.subr.mxu0 0.0
        %1702 = vmatpush1.msra.mxu0 0.0
        %1703 = vmatprep.subr.mxu0 0.0
        %1704 = vmatpush1.msra.mxu0 0.0
        %1705 = vmatprep.subr.mxu0 0.0
        %1706 = vmatpush1.msra.mxu0 0.0
        %1707 = vmatprep.subr.mxu0 0.0
        %1708 = vmatpush1.msra.mxu0 0.0
        %1709 = vmatprep.subr.mxu0 0.0
        %1710 = vmatpush1.msra.mxu0 0.0
        %1711 = vmatprep.subr.mxu0 0.0
        %1712 = vmatpush1.msra.mxu0 0.0
        %1713 = vmatprep.subr.mxu0 0.0
        %1714 = vmatpush1.msra.mxu0 0.0
        %1715 = vmatprep.subr.mxu0 0.0
        %1716 = vmatpush1.msra.mxu0 0.0
        %1717 = vmatprep.subr.mxu0 0.0
        %1718 = vmatpush1.msra.mxu0 0.0
        %1719 = vmatprep.subr.mxu0 0.0
        %1720 = vmatpush1.msra.mxu0 0.0
        %1721 = vmatprep.subr.mxu0 0.0
        %1722 = vmatpush1.msra.mxu0 0.0
        %1723 = vmatprep.subr.mxu0 0.0
        %1724 = vmatpush1.msra.mxu0 0.0
        %1725 = vmatprep.subr.mxu0 0.0
        %1726 = vmatpush1.msra.mxu0 0.0
        %1727 = vmatprep.subr.mxu0 0.0
        %1728 = vmatpush1.msra.mxu0 0.0
        %1729 = vmatprep.subr.mxu0 0.0
        %1730 = vmatpush1.msra.mxu0 0.0
        %1731 = vmatprep.subr.mxu0 0.0
        %1732 = vmatpush1.msra.mxu0 0.0
        %1733 = vmatprep.subr.mxu0 0.0
        %1734 = vmatpush1.msra.mxu0 0.0
        %1735 = vmatprep.subr.mxu0 0.0
        %1736 = vmatpush1.msra.mxu0 0.0
        %1737 = vmatprep.subr.mxu0 0.0
        %1738 = vmatpush1.msra.mxu0 0.0
        %1739 = vmatprep.subr.mxu0 0.0
        %1740 = vmatpush1.msra.mxu0 0.0
        %1741 = vmatprep.subr.mxu0 0.0
        %1742 = vmatpush1.msra.mxu0 0.0
        %1743 = vmatprep.subr.mxu0 0.0
        %1744 = vmatpush1.msra.mxu0 0.0
        %1745 = vmatprep.subr.mxu0 0.0
        %1746 = vmatpush1.msra.mxu0 0.0
        %1747 = vmatprep.subr.mxu0 0.0
        %1748 = vmatpush1.msra.mxu0 0.0
        %1749 = vmatprep.subr.mxu0 0.0
        %1750 = vmatpush1.msra.mxu0 0.0
        %1751 = vmatprep.subr.mxu0 0.0
        %1752 = vmatpush1.msra.mxu0 0.0
        %1753 = vmatprep.subr.mxu0 0.0
        %1754 = vmatpush1.msra.mxu0 0.0
        %1755 = vmatprep.mubr.f32.mxu0 0.0
        %1756 = vmatmul.mubr.f32.gmra.mrb[0].mxu0 %v1689
        %v1757 = vpop.f32.mrb[0].mxu0
        %v1758 = vadd.f32 0.0, %v1757
        %v1759 = vpop.f32.mrb[0].mxu0
        %1760 = vdwg.mxu0
        %1761 = vrot.lane.b32.xlu0 %v655, 64
        %v1762 = vpop.permute.xlu0 %1761
        %v1765 = vsel %vm671, %v1378, 0
        %1767 = vmatprep.subr.mxu0 0.0
        %1768 = vmatpush1.msra.mxu0 %v1762
        %1769 = vmatprep.subr.mxu0 0.0
        %1770 = vmatpush1.msra.mxu0 0.0
        %1771 = vmatprep.subr.mxu0 0.0
        %1772 = vmatpush1.msra.mxu0 0.0
        %1773 = vmatprep.subr.mxu0 0.0
        %1774 = vmatpush1.msra.mxu0 0.0
        %1775 = vmatprep.subr.mxu0 0.0
        %1776 = vmatpush1.msra.mxu0 0.0
        %1777 = vmatprep.subr.mxu0 0.0
        %1778 = vmatpush1.msra.mxu0 0.0
        %1779 = vmatprep.subr.mxu0 0.0
        %1780 = vmatpush1.msra.mxu0 0.0
        %1781 = vmatprep.subr.mxu0 0.0
        %1782 = vmatpush1.msra.mxu0 0.0
        %1783 = vmatprep.subr.mxu0 0.0
        %1784 = vmatpush1.msra.mxu0 0.0
        %1785 = vmatprep.subr.mxu0 0.0
        %1786 = vmatpush1.msra.mxu0 0.0
        %1787 = vmatprep.subr.mxu0 0.0
        %1788 = vmatpush1.msra.mxu0 0.0
        %1789 = vmatprep.subr.mxu0 0.0
        %1790 = vmatpush1.msra.mxu0 0.0
        %1791 = vmatprep.subr.mxu0 0.0
        %1792 = vmatpush1.msra.mxu0 0.0
        %1793 = vmatprep.subr.mxu0 0.0
        %1794 = vmatpush1.msra.mxu0 0.0
        %1795 = vmatprep.subr.mxu0 0.0
        %1796 = vmatpush1.msra.mxu0 0.0
        %1797 = vmatprep.subr.mxu0 0.0
        %1798 = vmatpush1.msra.mxu0 0.0
        %1799 = vmatprep.subr.mxu0 0.0
        %1800 = vmatpush1.msra.mxu0 0.0
        %1801 = vmatprep.subr.mxu0 0.0
        %1802 = vmatpush1.msra.mxu0 0.0
        %1803 = vmatprep.subr.mxu0 0.0
        %1804 = vmatpush1.msra.mxu0 0.0
        %1805 = vmatprep.subr.mxu0 0.0
        %1806 = vmatpush1.msra.mxu0 0.0
        %1807 = vmatprep.subr.mxu0 0.0
        %1808 = vmatpush1.msra.mxu0 0.0
        %1809 = vmatprep.subr.mxu0 0.0
        %1810 = vmatpush1.msra.mxu0 0.0
        %1811 = vmatprep.subr.mxu0 0.0
        %1812 = vmatpush1.msra.mxu0 0.0
        %1813 = vmatprep.subr.mxu0 0.0
        %1814 = vmatpush1.msra.mxu0 0.0
        %1815 = vmatprep.subr.mxu0 0.0
        %1816 = vmatpush1.msra.mxu0 0.0
        %1817 = vmatprep.subr.mxu0 0.0
        %1818 = vmatpush1.msra.mxu0 0.0
        %1819 = vmatprep.subr.mxu0 0.0
        %1820 = vmatpush1.msra.mxu0 0.0
        %1821 = vmatprep.subr.mxu0 0.0
        %1822 = vmatpush1.msra.mxu0 0.0
        %1823 = vmatprep.subr.mxu0 0.0
        %1824 = vmatpush1.msra.mxu0 0.0
        %1825 = vmatprep.subr.mxu0 0.0
        %1826 = vmatpush1.msra.mxu0 0.0
        %1827 = vmatprep.subr.mxu0 0.0
        %1828 = vmatpush1.msra.mxu0 0.0
        %1829 = vmatprep.subr.mxu0 0.0
        %1830 = vmatpush1.msra.mxu0 0.0
        %1831 = vmatprep.mubr.f32.mxu0 0.0
        %1832 = vmatmul.mubr.f32.gmra.mrb[0].mxu0 %v1765
        %v1833 = vpop.f32.mrb[0].mxu0
        %v1834 = vadd.f32 0.0, %v1833
        %v1835 = vpop.f32.mrb[0].mxu0
        %1836 = vdwg.mxu0
        %1837 = vrot.lane.b32.xlu0 %v660, 64
        %v1838 = vpop.permute.xlu0 %1837
        %v1841 = vsel %vm671, %v1379, 0
        %1843 = vmatprep.subr.mxu0 0.0
        %1844 = vmatpush1.msra.mxu0 %v1838
        %1845 = vmatprep.subr.mxu0 0.0
        %1846 = vmatpush1.msra.mxu0 0.0
        %1847 = vmatprep.subr.mxu0 0.0
        %1848 = vmatpush1.msra.mxu0 0.0
        %1849 = vmatprep.subr.mxu0 0.0
        %1850 = vmatpush1.msra.mxu0 0.0
        %1851 = vmatprep.subr.mxu0 0.0
        %1852 = vmatpush1.msra.mxu0 0.0
        %1853 = vmatprep.subr.mxu0 0.0
        %1854 = vmatpush1.msra.mxu0 0.0
        %1855 = vmatprep.subr.mxu0 0.0
        %1856 = vmatpush1.msra.mxu0 0.0
        %1857 = vmatprep.subr.mxu0 0.0
        %1858 = vmatpush1.msra.mxu0 0.0
        %1859 = vmatprep.subr.mxu0 0.0
        %1860 = vmatpush1.msra.mxu0 0.0
        %1861 = vmatprep.subr.mxu0 0.0
        %1862 = vmatpush1.msra.mxu0 0.0
        %1863 = vmatprep.subr.mxu0 0.0
        %1864 = vmatpush1.msra.mxu0 0.0
        %1865 = vmatprep.subr.mxu0 0.0
        %1866 = vmatpush1.msra.mxu0 0.0
        %1867 = vmatprep.subr.mxu0 0.0
        %1868 = vmatpush1.msra.mxu0 0.0
        %1869 = vmatprep.subr.mxu0 0.0
        %1870 = vmatpush1.msra.mxu0 0.0
        %1871 = vmatprep.subr.mxu0 0.0
        %1872 = vmatpush1.msra.mxu0 0.0
        %1873 = vmatprep.subr.mxu0 0.0
        %1874 = vmatpush1.msra.mxu0 0.0
        %1875 = vmatprep.subr.mxu0 0.0
        %1876 = vmatpush1.msra.mxu0 0.0
        %1877 = vmatprep.subr.mxu0 0.0
        %1878 = vmatpush1.msra.mxu0 0.0
        %1879 = vmatprep.subr.mxu0 0.0
        %1880 = vmatpush1.msra.mxu0 0.0
        %1881 = vmatprep.subr.mxu0 0.0
        %1882 = vmatpush1.msra.mxu0 0.0
        %1883 = vmatprep.subr.mxu0 0.0
        %1884 = vmatpush1.msra.mxu0 0.0
        %1885 = vmatprep.subr.mxu0 0.0
        %1886 = vmatpush1.msra.mxu0 0.0
        %1887 = vmatprep.subr.mxu0 0.0
        %1888 = vmatpush1.msra.mxu0 0.0
        %1889 = vmatprep.subr.mxu0 0.0
        %1890 = vmatpush1.msra.mxu0 0.0
        %1891 = vmatprep.subr.mxu0 0.0
        %1892 = vmatpush1.msra.mxu0 0.0
        %1893 = vmatprep.subr.mxu0 0.0
        %1894 = vmatpush1.msra.mxu0 0.0
        %1895 = vmatprep.subr.mxu0 0.0
        %1896 = vmatpush1.msra.mxu0 0.0
        %1897 = vmatprep.subr.mxu0 0.0
        %1898 = vmatpush1.msra.mxu0 0.0
        %1899 = vmatprep.subr.mxu0 0.0
        %1900 = vmatpush1.msra.mxu0 0.0
        %1901 = vmatprep.subr.mxu0 0.0
        %1902 = vmatpush1.msra.mxu0 0.0
        %1903 = vmatprep.subr.mxu0 0.0
        %1904 = vmatpush1.msra.mxu0 0.0
        %1905 = vmatprep.subr.mxu0 0.0
        %1906 = vmatpush1.msra.mxu0 0.0
        %1907 = vmatprep.mubr.f32.mxu0 0.0
        %1908 = vmatmul.mubr.f32.gmra.mrb[0].mxu0 %v1841
        %v1909 = vpop.f32.mrb[0].mxu0
        %v1910 = vadd.f32 0.0, %v1909
        %v1911 = vpop.f32.mrb[0].mxu0
        %1912 = vdwg.mxu0
        %1913 = vrot.lane.b32.xlu0 %v665, 64
        %v1914 = vpop.permute.xlu0 %1913
        %v1917 = vsel %vm671, %v1380, 0
        %1919 = vmatprep.subr.mxu0 0.0
        %1920 = vmatpush1.msra.mxu0 %v1914
        %1921 = vmatprep.subr.mxu0 0.0
        %1922 = vmatpush1.msra.mxu0 0.0
        %1923 = vmatprep.subr.mxu0 0.0
        %1924 = vmatpush1.msra.mxu0 0.0
        %1925 = vmatprep.subr.mxu0 0.0
        %1926 = vmatpush1.msra.mxu0 0.0
        %1927 = vmatprep.subr.mxu0 0.0
        %1928 = vmatpush1.msra.mxu0 0.0
        %1929 = vmatprep.subr.mxu0 0.0
        %1930 = vmatpush1.msra.mxu0 0.0
        %1931 = vmatprep.subr.mxu0 0.0
        %1932 = vmatpush1.msra.mxu0 0.0
        %1933 = vmatprep.subr.mxu0 0.0
        %1934 = vmatpush1.msra.mxu0 0.0
        %1935 = vmatprep.subr.mxu0 0.0
        %1936 = vmatpush1.msra.mxu0 0.0
        %1937 = vmatprep.subr.mxu0 0.0
        %1938 = vmatpush1.msra.mxu0 0.0
        %1939 = vmatprep.subr.mxu0 0.0
        %1940 = vmatpush1.msra.mxu0 0.0
        %1941 = vmatprep.subr.mxu0 0.0
        %1942 = vmatpush1.msra.mxu0 0.0
        %1943 = vmatprep.subr.mxu0 0.0
        %1944 = vmatpush1.msra.mxu0 0.0
        %1945 = vmatprep.subr.mxu0 0.0
        %1946 = vmatpush1.msra.mxu0 0.0
        %1947 = vmatprep.subr.mxu0 0.0
        %1948 = vmatpush1.msra.mxu0 0.0
        %1949 = vmatprep.subr.mxu0 0.0
        %1950 = vmatpush1.msra.mxu0 0.0
        %1951 = vmatprep.subr.mxu0 0.0
        %1952 = vmatpush1.msra.mxu0 0.0
        %1953 = vmatprep.subr.mxu0 0.0
        %1954 = vmatpush1.msra.mxu0 0.0
        %1955 = vmatprep.subr.mxu0 0.0
        %1956 = vmatpush1.msra.mxu0 0.0
        %1957 = vmatprep.subr.mxu0 0.0
        %1958 = vmatpush1.msra.mxu0 0.0
        %1959 = vmatprep.subr.mxu0 0.0
        %1960 = vmatpush1.msra.mxu0 0.0
        %1961 = vmatprep.subr.mxu0 0.0
        %1962 = vmatpush1.msra.mxu0 0.0
        %1963 = vmatprep.subr.mxu0 0.0
        %1964 = vmatpush1.msra.mxu0 0.0
        %1965 = vmatprep.subr.mxu0 0.0
        %1966 = vmatpush1.msra.mxu0 0.0
        %1967 = vmatprep.subr.mxu0 0.0
        %1968 = vmatpush1.msra.mxu0 0.0
        %1969 = vmatprep.subr.mxu0 0.0
        %1970 = vmatpush1.msra.mxu0 0.0
        %1971 = vmatprep.subr.mxu0 0.0
        %1972 = vmatpush1.msra.mxu0 0.0
        %1973 = vmatprep.subr.mxu0 0.0
        %1974 = vmatpush1.msra.mxu0 0.0
        %1975 = vmatprep.subr.mxu0 0.0
        %1976 = vmatpush1.msra.mxu0 0.0
        %1977 = vmatprep.subr.mxu0 0.0
        %1978 = vmatpush1.msra.mxu0 0.0
        %1979 = vmatprep.subr.mxu0 0.0
        %1980 = vmatpush1.msra.mxu0 0.0
        %1981 = vmatprep.subr.mxu0 0.0
        %1982 = vmatpush1.msra.mxu0 0.0
        %1983 = vmatprep.mubr.f32.mxu0 0.0
        %1984 = vmatmul.mubr.f32.gmra.mrb[0].mxu0 %v1917
        %v1985 = vpop.f32.mrb[0].mxu0
        %v1986 = vadd.f32 0.0, %v1985
        %v1987 = vpop.f32.mrb[0].mxu0
        %1988 = vdwg.mxu0
        %1989 = vrot.lane.b32.xlu0 %v630, 120
        %v1990 = vpop.permute.xlu0 %1989
        %1991 = vrot.lane.b32.xlu0 %v630, 88
        %v1992 = vpop.permute.xlu0 %1991
        %v1993 = vsel %vm671, %v1990, 0
        %v1995 = vsel %vm671, %v1992, 0
        %1997 = vmatprep.subr.mxu0 0.0
        %1998 = vmatpush1.xpose.msra.mxu0 %v1995
        %1999 = vmatprep.subr.mxu0 0.0
        %2000 = vmatpush1.xpose.msra.mxu0 0.0
        %2001 = vmatprep.subr.mxu0 0.0
        %2002 = vmatpush1.xpose.msra.mxu0 0.0
        %2003 = vmatprep.subr.mxu0 0.0
        %2004 = vmatpush1.xpose.msra.mxu0 0.0
        %2005 = vmatprep.subr.mxu0 0.0
        %2006 = vmatpush1.xpose.msra.mxu0 0.0
        %2007 = vmatprep.subr.mxu0 0.0
        %2008 = vmatpush1.xpose.msra.mxu0 0.0
        %2009 = vmatprep.subr.mxu0 0.0
        %2010 = vmatpush1.xpose.msra.mxu0 0.0
        %2011 = vmatprep.subr.mxu0 0.0
        %2012 = vmatpush1.xpose.msra.mxu0 0.0
        %2013 = vmatprep.subr.mxu0 0.0
        %2014 = vmatpush1.xpose.msra.mxu0 0.0
        %2015 = vmatprep.subr.mxu0 0.0
        %2016 = vmatpush1.xpose.msra.mxu0 0.0
        %2017 = vmatprep.subr.mxu0 0.0
        %2018 = vmatpush1.xpose.msra.mxu0 0.0
        %2019 = vmatprep.subr.mxu0 0.0
        %2020 = vmatpush1.xpose.msra.mxu0 0.0
        %2021 = vmatprep.subr.mxu0 0.0
        %2022 = vmatpush1.xpose.msra.mxu0 0.0
        %2023 = vmatprep.subr.mxu0 0.0
        %2024 = vmatpush1.xpose.msra.mxu0 0.0
        %2025 = vmatprep.subr.mxu0 0.0
        %2026 = vmatpush1.xpose.msra.mxu0 0.0
        %2027 = vmatprep.subr.mxu0 0.0
        %2028 = vmatpush1.xpose.msra.mxu0 0.0
        %2029 = vmatprep.subr.mxu0 0.0
        %2030 = vmatpush1.xpose.msra.mxu0 0.0
        %2031 = vmatprep.subr.mxu0 0.0
        %2032 = vmatpush1.xpose.msra.mxu0 0.0
        %2033 = vmatprep.subr.mxu0 0.0
        %2034 = vmatpush1.xpose.msra.mxu0 0.0
        %2035 = vmatprep.subr.mxu0 0.0
        %2036 = vmatpush1.xpose.msra.mxu0 0.0
        %2037 = vmatprep.subr.mxu0 0.0
        %2038 = vmatpush1.xpose.msra.mxu0 0.0
        %2039 = vmatprep.subr.mxu0 0.0
        %2040 = vmatpush1.xpose.msra.mxu0 0.0
        %2041 = vmatprep.subr.mxu0 0.0
        %2042 = vmatpush1.xpose.msra.mxu0 0.0
        %2043 = vmatprep.subr.mxu0 0.0
        %2044 = vmatpush1.xpose.msra.mxu0 0.0
        %2045 = vmatprep.subr.mxu0 0.0
        %2046 = vmatpush1.xpose.msra.mxu0 0.0
        %2047 = vmatprep.subr.mxu0 0.0
        %2048 = vmatpush1.xpose.msra.mxu0 0.0
        %2049 = vmatprep.subr.mxu0 0.0
        %2050 = vmatpush1.xpose.msra.mxu0 0.0
        %2051 = vmatprep.subr.mxu0 0.0
        %2052 = vmatpush1.xpose.msra.mxu0 0.0
        %2053 = vmatprep.subr.mxu0 0.0
        %2054 = vmatpush1.xpose.msra.mxu0 0.0
        %2055 = vmatprep.subr.mxu0 0.0
        %2056 = vmatpush1.xpose.msra.mxu0 0.0
        %2057 = vmatprep.subr.mxu0 0.0
        %2058 = vmatpush1.xpose.msra.mxu0 0.0
        %2059 = vmatprep.subr.mxu0 0.0
        %2060 = vmatpush1.xpose.msra.mxu0 0.0
        %2061 = vmatprep.mubr.f32.mxu0 0.0
        %2062 = vmatmul.mubr.f32.gmra.mrb[0].mxu0 %v1993
        %v2063 = vpop.f32.mrb[0].mxu0
        %v2064 = vadd.f32 0.0, %v2063
        %v2065 = vpop.f32.mrb[0].mxu0
        %2066 = vdwg.mxu0
        %2067 = vrot.lane.b32.xlu0 %v635, 120
        %v2068 = vpop.permute.xlu0 %2067
        %2069 = vrot.lane.b32.xlu0 %v635, 88
        %v2070 = vpop.permute.xlu0 %2069
        %v2071 = vsel %vm671, %v2068, 0
        %v2073 = vsel %vm671, %v2070, 0
        %2075 = vmatprep.subr.mxu0 0.0
        %2076 = vmatpush1.xpose.msra.mxu0 %v2073
        %2077 = vmatprep.subr.mxu0 0.0
        %2078 = vmatpush1.xpose.msra.mxu0 0.0
        %2079 = vmatprep.subr.mxu0 0.0
        %2080 = vmatpush1.xpose.msra.mxu0 0.0
        %2081 = vmatprep.subr.mxu0 0.0
        %2082 = vmatpush1.xpose.msra.mxu0 0.0
        %2083 = vmatprep.subr.mxu0 0.0
        %2084 = vmatpush1.xpose.msra.mxu0 0.0
        %2085 = vmatprep.subr.mxu0 0.0
        %2086 = vmatpush1.xpose.msra.mxu0 0.0
        %2087 = vmatprep.subr.mxu0 0.0
        %2088 = vmatpush1.xpose.msra.mxu0 0.0
        %2089 = vmatprep.subr.mxu0 0.0
        %2090 = vmatpush1.xpose.msra.mxu0 0.0
        %2091 = vmatprep.subr.mxu0 0.0
        %2092 = vmatpush1.xpose.msra.mxu0 0.0
        %2093 = vmatprep.subr.mxu0 0.0
        %2094 = vmatpush1.xpose.msra.mxu0 0.0
        %2095 = vmatprep.subr.mxu0 0.0
        %2096 = vmatpush1.xpose.msra.mxu0 0.0
        %2097 = vmatprep.subr.mxu0 0.0
        %2098 = vmatpush1.xpose.msra.mxu0 0.0
        %2099 = vmatprep.subr.mxu0 0.0
        %2100 = vmatpush1.xpose.msra.mxu0 0.0
        %2101 = vmatprep.subr.mxu0 0.0
        %2102 = vmatpush1.xpose.msra.mxu0 0.0
        %2103 = vmatprep.subr.mxu0 0.0
        %2104 = vmatpush1.xpose.msra.mxu0 0.0
        %2105 = vmatprep.subr.mxu0 0.0
        %2106 = vmatpush1.xpose.msra.mxu0 0.0
        %2107 = vmatprep.subr.mxu0 0.0
        %2108 = vmatpush1.xpose.msra.mxu0 0.0
        %2109 = vmatprep.subr.mxu0 0.0
        %2110 = vmatpush1.xpose.msra.mxu0 0.0
        %2111 = vmatprep.subr.mxu0 0.0
        %2112 = vmatpush1.xpose.msra.mxu0 0.0
        %2113 = vmatprep.subr.mxu0 0.0
        %2114 = vmatpush1.xpose.msra.mxu0 0.0
        %2115 = vmatprep.subr.mxu0 0.0
        %2116 = vmatpush1.xpose.msra.mxu0 0.0
        %2117 = vmatprep.subr.mxu0 0.0
        %2118 = vmatpush1.xpose.msra.mxu0 0.0
        %2119 = vmatprep.subr.mxu0 0.0
        %2120 = vmatpush1.xpose.msra.mxu0 0.0
        %2121 = vmatprep.subr.mxu0 0.0
        %2122 = vmatpush1.xpose.msra.mxu0 0.0
        %2123 = vmatprep.subr.mxu0 0.0
        %2124 = vmatpush1.xpose.msra.mxu0 0.0
        %2125 = vmatprep.subr.mxu0 0.0
        %2126 = vmatpush1.xpose.msra.mxu0 0.0
        %2127 = vmatprep.subr.mxu0 0.0
        %2128 = vmatpush1.xpose.msra.mxu0 0.0
        %2129 = vmatprep.subr.mxu0 0.0
        %2130 = vmatpush1.xpose.msra.mxu0 0.0
        %2131 = vmatprep.subr.mxu0 0.0
        %2132 = vmatpush1.xpose.msra.mxu0 0.0
        %2133 = vmatprep.subr.mxu0 0.0
        %2134 = vmatpush1.xpose.msra.mxu0 0.0
        %2135 = vmatprep.subr.mxu0 0.0
        %2136 = vmatpush1.xpose.msra.mxu0 0.0
        %2137 = vmatprep.subr.mxu0 0.0
        %2138 = vmatpush1.xpose.msra.mxu0 0.0
        %2139 = vmatprep.mubr.f32.mxu0 0.0
        %2140 = vmatmul.mubr.f32.gmra.mrb[0].mxu0 %v2071
        %v2141 = vpop.f32.mrb[0].mxu0
        %v2142 = vadd.f32 0.0, %v2141
        %v2143 = vpop.f32.mrb[0].mxu0
        %2144 = vdwg.mxu0
        %2145 = vrot.lane.b32.xlu0 %v640, 120
        %v2146 = vpop.permute.xlu0 %2145
        %2147 = vrot.lane.b32.xlu0 %v640, 88
        %v2148 = vpop.permute.xlu0 %2147
        %v2149 = vsel %vm671, %v2146, 0
        %v2151 = vsel %vm671, %v2148, 0
        %2153 = vmatprep.subr.mxu0 0.0
        %2154 = vmatpush1.xpose.msra.mxu0 %v2151
        %2155 = vmatprep.subr.mxu0 0.0
        %2156 = vmatpush1.xpose.msra.mxu0 0.0
        %2157 = vmatprep.subr.mxu0 0.0
        %2158 = vmatpush1.xpose.msra.mxu0 0.0
        %2159 = vmatprep.subr.mxu0 0.0
        %2160 = vmatpush1.xpose.msra.mxu0 0.0
        %2161 = vmatprep.subr.mxu0 0.0
        %2162 = vmatpush1.xpose.msra.mxu0 0.0
        %2163 = vmatprep.subr.mxu0 0.0
        %2164 = vmatpush1.xpose.msra.mxu0 0.0
        %2165 = vmatprep.subr.mxu0 0.0
        %2166 = vmatpush1.xpose.msra.mxu0 0.0
        %2167 = vmatprep.subr.mxu0 0.0
        %2168 = vmatpush1.xpose.msra.mxu0 0.0
        %2169 = vmatprep.subr.mxu0 0.0
        %2170 = vmatpush1.xpose.msra.mxu0 0.0
        %2171 = vmatprep.subr.mxu0 0.0
        %2172 = vmatpush1.xpose.msra.mxu0 0.0
        %2173 = vmatprep.subr.mxu0 0.0
        %2174 = vmatpush1.xpose.msra.mxu0 0.0
        %2175 = vmatprep.subr.mxu0 0.0
        %2176 = vmatpush1.xpose.msra.mxu0 0.0
        %2177 = vmatprep.subr.mxu0 0.0
        %2178 = vmatpush1.xpose.msra.mxu0 0.0
        %2179 = vmatprep.subr.mxu0 0.0
        %2180 = vmatpush1.xpose.msra.mxu0 0.0
        %2181 = vmatprep.subr.mxu0 0.0
        %2182 = vmatpush1.xpose.msra.mxu0 0.0
        %2183 = vmatprep.subr.mxu0 0.0
        %2184 = vmatpush1.xpose.msra.mxu0 0.0
        %2185 = vmatprep.subr.mxu0 0.0
        %2186 = vmatpush1.xpose.msra.mxu0 0.0
        %2187 = vmatprep.subr.mxu0 0.0
        %2188 = vmatpush1.xpose.msra.mxu0 0.0
        %2189 = vmatprep.subr.mxu0 0.0
        %2190 = vmatpush1.xpose.msra.mxu0 0.0
        %2191 = vmatprep.subr.mxu0 0.0
        %2192 = vmatpush1.xpose.msra.mxu0 0.0
        %2193 = vmatprep.subr.mxu0 0.0
        %2194 = vmatpush1.xpose.msra.mxu0 0.0
        %2195 = vmatprep.subr.mxu0 0.0
        %2196 = vmatpush1.xpose.msra.mxu0 0.0
        %2197 = vmatprep.subr.mxu0 0.0
        %2198 = vmatpush1.xpose.msra.mxu0 0.0
        %2199 = vmatprep.subr.mxu0 0.0
        %2200 = vmatpush1.xpose.msra.mxu0 0.0
        %2201 = vmatprep.subr.mxu0 0.0
        %2202 = vmatpush1.xpose.msra.mxu0 0.0
        %2203 = vmatprep.subr.mxu0 0.0
        %2204 = vmatpush1.xpose.msra.mxu0 0.0
        %2205 = vmatprep.subr.mxu0 0.0
        %2206 = vmatpush1.xpose.msra.mxu0 0.0
        %2207 = vmatprep.subr.mxu0 0.0
        %2208 = vmatpush1.xpose.msra.mxu0 0.0
        %2209 = vmatprep.subr.mxu0 0.0
        %2210 = vmatpush1.xpose.msra.mxu0 0.0
        %2211 = vmatprep.subr.mxu0 0.0
        %2212 = vmatpush1.xpose.msra.mxu0 0.0
        %2213 = vmatprep.subr.mxu0 0.0
        %2214 = vmatpush1.xpose.msra.mxu0 0.0
        %2215 = vmatprep.subr.mxu0 0.0
        %2216 = vmatpush1.xpose.msra.mxu0 0.0
        %2217 = vmatprep.mubr.f32.mxu0 0.0
        %2218 = vmatmul.mubr.f32.gmra.mrb[0].mxu0 %v2149
        %v2219 = vpop.f32.mrb[0].mxu0
        %v2220 = vadd.f32 0.0, %v2219
        %v2221 = vpop.f32.mrb[0].mxu0
        %2222 = vdwg.mxu0
        %2223 = vrot.lane.b32.xlu0 %v645, 120
        %v2224 = vpop.permute.xlu0 %2223
        %2225 = vrot.lane.b32.xlu0 %v645, 88
        %v2226 = vpop.permute.xlu0 %2225
        %v2227 = vsel %vm671, %v2224, 0
        %v2229 = vsel %vm671, %v2226, 0
        %2231 = vmatprep.subr.mxu0 0.0
        %2232 = vmatpush1.xpose.msra.mxu0 %v2229
        %2233 = vmatprep.subr.mxu0 0.0
        %2234 = vmatpush1.xpose.msra.mxu0 0.0
        %2235 = vmatprep.subr.mxu0 0.0
        %2236 = vmatpush1.xpose.msra.mxu0 0.0
        %2237 = vmatprep.subr.mxu0 0.0
        %2238 = vmatpush1.xpose.msra.mxu0 0.0
        %2239 = vmatprep.subr.mxu0 0.0
        %2240 = vmatpush1.xpose.msra.mxu0 0.0
        %2241 = vmatprep.subr.mxu0 0.0
        %2242 = vmatpush1.xpose.msra.mxu0 0.0
        %2243 = vmatprep.subr.mxu0 0.0
        %2244 = vmatpush1.xpose.msra.mxu0 0.0
        %2245 = vmatprep.subr.mxu0 0.0
        %2246 = vmatpush1.xpose.msra.mxu0 0.0
        %2247 = vmatprep.subr.mxu0 0.0
        %2248 = vmatpush1.xpose.msra.mxu0 0.0
        %2249 = vmatprep.subr.mxu0 0.0
        %2250 = vmatpush1.xpose.msra.mxu0 0.0
        %2251 = vmatprep.subr.mxu0 0.0
        %2252 = vmatpush1.xpose.msra.mxu0 0.0
        %2253 = vmatprep.subr.mxu0 0.0
        %2254 = vmatpush1.xpose.msra.mxu0 0.0
        %2255 = vmatprep.subr.mxu0 0.0
        %2256 = vmatpush1.xpose.msra.mxu0 0.0
        %2257 = vmatprep.subr.mxu0 0.0
        %2258 = vmatpush1.xpose.msra.mxu0 0.0
        %2259 = vmatprep.subr.mxu0 0.0
        %2260 = vmatpush1.xpose.msra.mxu0 0.0
        %2261 = vmatprep.subr.mxu0 0.0
        %2262 = vmatpush1.xpose.msra.mxu0 0.0
        %2263 = vmatprep.subr.mxu0 0.0
        %2264 = vmatpush1.xpose.msra.mxu0 0.0
        %2265 = vmatprep.subr.mxu0 0.0
        %2266 = vmatpush1.xpose.msra.mxu0 0.0
        %2267 = vmatprep.subr.mxu0 0.0
        %2268 = vmatpush1.xpose.msra.mxu0 0.0
        %2269 = vmatprep.subr.mxu0 0.0
        %2270 = vmatpush1.xpose.msra.mxu0 0.0
        %2271 = vmatprep.subr.mxu0 0.0
        %2272 = vmatpush1.xpose.msra.mxu0 0.0
        %2273 = vmatprep.subr.mxu0 0.0
        %2274 = vmatpush1.xpose.msra.mxu0 0.0
        %2275 = vmatprep.subr.mxu0 0.0
        %2276 = vmatpush1.xpose.msra.mxu0 0.0
        %2277 = vmatprep.subr.mxu0 0.0
        %2278 = vmatpush1.xpose.msra.mxu0 0.0
        %2279 = vmatprep.subr.mxu0 0.0
        %2280 = vmatpush1.xpose.msra.mxu0 0.0
        %2281 = vmatprep.subr.mxu0 0.0
        %2282 = vmatpush1.xpose.msra.mxu0 0.0
        %2283 = vmatprep.subr.mxu0 0.0
        %2284 = vmatpush1.xpose.msra.mxu0 0.0
        %2285 = vmatprep.subr.mxu0 0.0
        %2286 = vmatpush1.xpose.msra.mxu0 0.0
        %2287 = vmatprep.subr.mxu0 0.0
        %2288 = vmatpush1.xpose.msra.mxu0 0.0
        %2289 = vmatprep.subr.mxu0 0.0
        %2290 = vmatpush1.xpose.msra.mxu0 0.0
        %2291 = vmatprep.subr.mxu0 0.0
        %2292 = vmatpush1.xpose.msra.mxu0 0.0
        %2293 = vmatprep.subr.mxu0 0.0
        %2294 = vmatpush1.xpose.msra.mxu0 0.0
        %2295 = vmatprep.mubr.f32.mxu0 0.0
        %2296 = vmatmul.mubr.f32.gmra.mrb[0].mxu0 %v2227
        %v2297 = vpop.f32.mrb[0].mxu0
        %v2298 = vadd.f32 0.0, %v2297
        %v2299 = vpop.f32.mrb[0].mxu0
        %2300 = vdwg.mxu0
        %2301 = vrot.lane.b32.xlu0 %v650, 120
        %v2302 = vpop.permute.xlu0 %2301
        %2303 = vrot.lane.b32.xlu0 %v650, 88
        %v2304 = vpop.permute.xlu0 %2303
        %v2305 = vsel %vm671, %v2302, 0
        %v2307 = vsel %vm671, %v2304, 0
        %2309 = vmatprep.subr.mxu0 0.0
        %2310 = vmatpush1.xpose.msra.mxu0 %v2307
        %2311 = vmatprep.subr.mxu0 0.0
        %2312 = vmatpush1.xpose.msra.mxu0 0.0
        %2313 = vmatprep.subr.mxu0 0.0
        %2314 = vmatpush1.xpose.msra.mxu0 0.0
        %2315 = vmatprep.subr.mxu0 0.0
        %2316 = vmatpush1.xpose.msra.mxu0 0.0
        %2317 = vmatprep.subr.mxu0 0.0
        %2318 = vmatpush1.xpose.msra.mxu0 0.0
        %2319 = vmatprep.subr.mxu0 0.0
        %2320 = vmatpush1.xpose.msra.mxu0 0.0
        %2321 = vmatprep.subr.mxu0 0.0
        %2322 = vmatpush1.xpose.msra.mxu0 0.0
        %2323 = vmatprep.subr.mxu0 0.0
        %2324 = vmatpush1.xpose.msra.mxu0 0.0
        %2325 = vmatprep.subr.mxu0 0.0
        %2326 = vmatpush1.xpose.msra.mxu0 0.0
        %2327 = vmatprep.subr.mxu0 0.0
        %2328 = vmatpush1.xpose.msra.mxu0 0.0
        %2329 = vmatprep.subr.mxu0 0.0
        %2330 = vmatpush1.xpose.msra.mxu0 0.0
        %2331 = vmatprep.subr.mxu0 0.0
        %2332 = vmatpush1.xpose.msra.mxu0 0.0
        %2333 = vmatprep.subr.mxu0 0.0
        %2334 = vmatpush1.xpose.msra.mxu0 0.0
        %2335 = vmatprep.subr.mxu0 0.0
        %2336 = vmatpush1.xpose.msra.mxu0 0.0
        %2337 = vmatprep.subr.mxu0 0.0
        %2338 = vmatpush1.xpose.msra.mxu0 0.0
        %2339 = vmatprep.subr.mxu0 0.0
        %2340 = vmatpush1.xpose.msra.mxu0 0.0
        %2341 = vmatprep.subr.mxu0 0.0
        %2342 = vmatpush1.xpose.msra.mxu0 0.0
        %2343 = vmatprep.subr.mxu0 0.0
        %2344 = vmatpush1.xpose.msra.mxu0 0.0
        %2345 = vmatprep.subr.mxu0 0.0
        %2346 = vmatpush1.xpose.msra.mxu0 0.0
        %2347 = vmatprep.subr.mxu0 0.0
        %2348 = vmatpush1.xpose.msra.mxu0 0.0
        %2349 = vmatprep.subr.mxu0 0.0
        %2350 = vmatpush1.xpose.msra.mxu0 0.0
        %2351 = vmatprep.subr.mxu0 0.0
        %2352 = vmatpush1.xpose.msra.mxu0 0.0
        %2353 = vmatprep.subr.mxu0 0.0
        %2354 = vmatpush1.xpose.msra.mxu0 0.0
        %2355 = vmatprep.subr.mxu0 0.0
        %2356 = vmatpush1.xpose.msra.mxu0 0.0
        %2357 = vmatprep.subr.mxu0 0.0
        %2358 = vmatpush1.xpose.msra.mxu0 0.0
        %2359 = vmatprep.subr.mxu0 0.0
        %2360 = vmatpush1.xpose.msra.mxu0 0.0
        %2361 = vmatprep.subr.mxu0 0.0
        %2362 = vmatpush1.xpose.msra.mxu0 0.0
        %2363 = vmatprep.subr.mxu0 0.0
        %2364 = vmatpush1.xpose.msra.mxu0 0.0
        %2365 = vmatprep.subr.mxu0 0.0
        %2366 = vmatpush1.xpose.msra.mxu0 0.0
        %2367 = vmatprep.subr.mxu0 0.0
        %2368 = vmatpush1.xpose.msra.mxu0 0.0
        %2369 = vmatprep.subr.mxu0 0.0
        %2370 = vmatpush1.xpose.msra.mxu0 0.0
        %2371 = vmatprep.subr.mxu0 0.0
        %2372 = vmatpush1.xpose.msra.mxu0 0.0
        %2373 = vmatprep.mubr.f32.mxu0 0.0
        %2374 = vmatmul.mubr.f32.gmra.mrb[0].mxu0 %v2305
        %v2375 = vpop.f32.mrb[0].mxu0
        %v2376 = vadd.f32 0.0, %v2375
        %v2377 = vpop.f32.mrb[0].mxu0
        %2378 = vdwg.mxu0
        %2379 = vrot.lane.b32.xlu0 %v655, 120
        %v2380 = vpop.permute.xlu0 %2379
        %2381 = vrot.lane.b32.xlu0 %v655, 88
        %v2382 = vpop.permute.xlu0 %2381
        %v2383 = vsel %vm671, %v2380, 0
        %v2385 = vsel %vm671, %v2382, 0
        %2387 = vmatprep.subr.mxu0 0.0
        %2388 = vmatpush1.xpose.msra.mxu0 %v2385
        %2389 = vmatprep.subr.mxu0 0.0
        %2390 = vmatpush1.xpose.msra.mxu0 0.0
        %2391 = vmatprep.subr.mxu0 0.0
        %2392 = vmatpush1.xpose.msra.mxu0 0.0
        %2393 = vmatprep.subr.mxu0 0.0
        %2394 = vmatpush1.xpose.msra.mxu0 0.0
        %2395 = vmatprep.subr.mxu0 0.0
        %2396 = vmatpush1.xpose.msra.mxu0 0.0
        %2397 = vmatprep.subr.mxu0 0.0
        %2398 = vmatpush1.xpose.msra.mxu0 0.0
        %2399 = vmatprep.subr.mxu0 0.0
        %2400 = vmatpush1.xpose.msra.mxu0 0.0
        %2401 = vmatprep.subr.mxu0 0.0
        %2402 = vmatpush1.xpose.msra.mxu0 0.0
        %2403 = vmatprep.subr.mxu0 0.0
        %2404 = vmatpush1.xpose.msra.mxu0 0.0
        %2405 = vmatprep.subr.mxu0 0.0
        %2406 = vmatpush1.xpose.msra.mxu0 0.0
        %2407 = vmatprep.subr.mxu0 0.0
        %2408 = vmatpush1.xpose.msra.mxu0 0.0
        %2409 = vmatprep.subr.mxu0 0.0
        %2410 = vmatpush1.xpose.msra.mxu0 0.0
        %2411 = vmatprep.subr.mxu0 0.0
        %2412 = vmatpush1.xpose.msra.mxu0 0.0
        %2413 = vmatprep.subr.mxu0 0.0
        %2414 = vmatpush1.xpose.msra.mxu0 0.0
        %2415 = vmatprep.subr.mxu0 0.0
        %2416 = vmatpush1.xpose.msra.mxu0 0.0
        %2417 = vmatprep.subr.mxu0 0.0
        %2418 = vmatpush1.xpose.msra.mxu0 0.0
        %2419 = vmatprep.subr.mxu0 0.0
        %2420 = vmatpush1.xpose.msra.mxu0 0.0
        %2421 = vmatprep.subr.mxu0 0.0
        %2422 = vmatpush1.xpose.msra.mxu0 0.0
        %2423 = vmatprep.subr.mxu0 0.0
        %2424 = vmatpush1.xpose.msra.mxu0 0.0
        %2425 = vmatprep.subr.mxu0 0.0
        %2426 = vmatpush1.xpose.msra.mxu0 0.0
        %2427 = vmatprep.subr.mxu0 0.0
        %2428 = vmatpush1.xpose.msra.mxu0 0.0
        %2429 = vmatprep.subr.mxu0 0.0
        %2430 = vmatpush1.xpose.msra.mxu0 0.0
        %2431 = vmatprep.subr.mxu0 0.0
        %2432 = vmatpush1.xpose.msra.mxu0 0.0
        %2433 = vmatprep.subr.mxu0 0.0
        %2434 = vmatpush1.xpose.msra.mxu0 0.0
        %2435 = vmatprep.subr.mxu0 0.0
        %2436 = vmatpush1.xpose.msra.mxu0 0.0
        %2437 = vmatprep.subr.mxu0 0.0
        %2438 = vmatpush1.xpose.msra.mxu0 0.0
        %2439 = vmatprep.subr.mxu0 0.0
        %2440 = vmatpush1.xpose.msra.mxu0 0.0
        %2441 = vmatprep.subr.mxu0 0.0
        %2442 = vmatpush1.xpose.msra.mxu0 0.0
        %2443 = vmatprep.subr.mxu0 0.0
        %2444 = vmatpush1.xpose.msra.mxu0 0.0
        %2445 = vmatprep.subr.mxu0 0.0
        %2446 = vmatpush1.xpose.msra.mxu0 0.0
        %2447 = vmatprep.subr.mxu0 0.0
        %2448 = vmatpush1.xpose.msra.mxu0 0.0
        %2449 = vmatprep.subr.mxu0 0.0
        %2450 = vmatpush1.xpose.msra.mxu0 0.0
        %2451 = vmatprep.mubr.f32.mxu0 0.0
        %2452 = vmatmul.mubr.f32.gmra.mrb[0].mxu0 %v2383
        %v2453 = vpop.f32.mrb[0].mxu0
        %v2454 = vadd.f32 0.0, %v2453
        %v2455 = vpop.f32.mrb[0].mxu0
        %2456 = vdwg.mxu0
        %2457 = vrot.lane.b32.xlu0 %v660, 120
        %v2458 = vpop.permute.xlu0 %2457
        %2459 = vrot.lane.b32.xlu0 %v660, 88
        %v2460 = vpop.permute.xlu0 %2459
        %v2461 = vsel %vm671, %v2458, 0
        %v2463 = vsel %vm671, %v2460, 0
        %2465 = vmatprep.subr.mxu0 0.0
        %2466 = vmatpush1.xpose.msra.mxu0 %v2463
        %2467 = vmatprep.subr.mxu0 0.0
        %2468 = vmatpush1.xpose.msra.mxu0 0.0
        %2469 = vmatprep.subr.mxu0 0.0
        %2470 = vmatpush1.xpose.msra.mxu0 0.0
        %2471 = vmatprep.subr.mxu0 0.0
        %2472 = vmatpush1.xpose.msra.mxu0 0.0
        %2473 = vmatprep.subr.mxu0 0.0
        %2474 = vmatpush1.xpose.msra.mxu0 0.0
        %2475 = vmatprep.subr.mxu0 0.0
        %2476 = vmatpush1.xpose.msra.mxu0 0.0
        %2477 = vmatprep.subr.mxu0 0.0
        %2478 = vmatpush1.xpose.msra.mxu0 0.0
        %2479 = vmatprep.subr.mxu0 0.0
        %2480 = vmatpush1.xpose.msra.mxu0 0.0
        %2481 = vmatprep.subr.mxu0 0.0
        %2482 = vmatpush1.xpose.msra.mxu0 0.0
        %2483 = vmatprep.subr.mxu0 0.0
        %2484 = vmatpush1.xpose.msra.mxu0 0.0
        %2485 = vmatprep.subr.mxu0 0.0
        %2486 = vmatpush1.xpose.msra.mxu0 0.0
        %2487 = vmatprep.subr.mxu0 0.0
        %2488 = vmatpush1.xpose.msra.mxu0 0.0
        %2489 = vmatprep.subr.mxu0 0.0
        %2490 = vmatpush1.xpose.msra.mxu0 0.0
        %2491 = vmatprep.subr.mxu0 0.0
        %2492 = vmatpush1.xpose.msra.mxu0 0.0
        %2493 = vmatprep.subr.mxu0 0.0
        %2494 = vmatpush1.xpose.msra.mxu0 0.0
        %2495 = vmatprep.subr.mxu0 0.0
        %2496 = vmatpush1.xpose.msra.mxu0 0.0
        %2497 = vmatprep.subr.mxu0 0.0
        %2498 = vmatpush1.xpose.msra.mxu0 0.0
        %2499 = vmatprep.subr.mxu0 0.0
        %2500 = vmatpush1.xpose.msra.mxu0 0.0
        %2501 = vmatprep.subr.mxu0 0.0
        %2502 = vmatpush1.xpose.msra.mxu0 0.0
        %2503 = vmatprep.subr.mxu0 0.0
        %2504 = vmatpush1.xpose.msra.mxu0 0.0
        %2505 = vmatprep.subr.mxu0 0.0
        %2506 = vmatpush1.xpose.msra.mxu0 0.0
        %2507 = vmatprep.subr.mxu0 0.0
        %2508 = vmatpush1.xpose.msra.mxu0 0.0
        %2509 = vmatprep.subr.mxu0 0.0
        %2510 = vmatpush1.xpose.msra.mxu0 0.0
        %2511 = vmatprep.subr.mxu0 0.0
        %2512 = vmatpush1.xpose.msra.mxu0 0.0
        %2513 = vmatprep.subr.mxu0 0.0
        %2514 = vmatpush1.xpose.msra.mxu0 0.0
        %2515 = vmatprep.subr.mxu0 0.0
        %2516 = vmatpush1.xpose.msra.mxu0 0.0
        %2517 = vmatprep.subr.mxu0 0.0
        %2518 = vmatpush1.xpose.msra.mxu0 0.0
        %2519 = vmatprep.subr.mxu0 0.0
        %2520 = vmatpush1.xpose.msra.mxu0 0.0
        %2521 = vmatprep.subr.mxu0 0.0
        %2522 = vmatpush1.xpose.msra.mxu0 0.0
        %2523 = vmatprep.subr.mxu0 0.0
        %2524 = vmatpush1.xpose.msra.mxu0 0.0
        %2525 = vmatprep.subr.mxu0 0.0
        %2526 = vmatpush1.xpose.msra.mxu0 0.0
        %2527 = vmatprep.subr.mxu0 0.0
        %2528 = vmatpush1.xpose.msra.mxu0 0.0
        %2529 = vmatprep.mubr.f32.mxu0 0.0
        %2530 = vmatmul.mubr.f32.gmra.mrb[0].mxu0 %v2461
        %v2531 = vpop.f32.mrb[0].mxu0
        %v2532 = vadd.f32 0.0, %v2531
        %v2533 = vpop.f32.mrb[0].mxu0
        %2534 = vdwg.mxu0
        %2535 = vrot.lane.b32.xlu0 %v665, 120
        %v2536 = vpop.permute.xlu0 %2535
        %2537 = vrot.lane.b32.xlu0 %v665, 88
        %v2538 = vpop.permute.xlu0 %2537
        %v2539 = vsel %vm671, %v2536, 0
        %v2541 = vsel %vm671, %v2538, 0
        %2543 = vmatprep.subr.mxu0 0.0
        %2544 = vmatpush1.xpose.msra.mxu0 %v2541
        %2545 = vmatprep.subr.mxu0 0.0
        %2546 = vmatpush1.xpose.msra.mxu0 0.0
        %2547 = vmatprep.subr.mxu0 0.0
        %2548 = vmatpush1.xpose.msra.mxu0 0.0
        %2549 = vmatprep.subr.mxu0 0.0
        %2550 = vmatpush1.xpose.msra.mxu0 0.0
        %2551 = vmatprep.subr.mxu0 0.0
        %2552 = vmatpush1.xpose.msra.mxu0 0.0
        %2553 = vmatprep.subr.mxu0 0.0
        %2554 = vmatpush1.xpose.msra.mxu0 0.0
        %2555 = vmatprep.subr.mxu0 0.0
        %2556 = vmatpush1.xpose.msra.mxu0 0.0
        %2557 = vmatprep.subr.mxu0 0.0
        %2558 = vmatpush1.xpose.msra.mxu0 0.0
        %2559 = vmatprep.subr.mxu0 0.0
        %2560 = vmatpush1.xpose.msra.mxu0 0.0
        %2561 = vmatprep.subr.mxu0 0.0
        %2562 = vmatpush1.xpose.msra.mxu0 0.0
        %2563 = vmatprep.subr.mxu0 0.0
        %2564 = vmatpush1.xpose.msra.mxu0 0.0
        %2565 = vmatprep.subr.mxu0 0.0
        %2566 = vmatpush1.xpose.msra.mxu0 0.0
        %2567 = vmatprep.subr.mxu0 0.0
        %2568 = vmatpush1.xpose.msra.mxu0 0.0
        %2569 = vmatprep.subr.mxu0 0.0
        %2570 = vmatpush1.xpose.msra.mxu0 0.0
        %2571 = vmatprep.subr.mxu0 0.0
        %2572 = vmatpush1.xpose.msra.mxu0 0.0
        %2573 = vmatprep.subr.mxu0 0.0
        %2574 = vmatpush1.xpose.msra.mxu0 0.0
        %2575 = vmatprep.subr.mxu0 0.0
        %2576 = vmatpush1.xpose.msra.mxu0 0.0
        %2577 = vmatprep.subr.mxu0 0.0
        %2578 = vmatpush1.xpose.msra.mxu0 0.0
        %2579 = vmatprep.subr.mxu0 0.0
        %2580 = vmatpush1.xpose.msra.mxu0 0.0
        %2581 = vmatprep.subr.mxu0 0.0
        %2582 = vmatpush1.xpose.msra.mxu0 0.0
        %2583 = vmatprep.subr.mxu0 0.0
        %2584 = vmatpush1.xpose.msra.mxu0 0.0
        %2585 = vmatprep.subr.mxu0 0.0
        %2586 = vmatpush1.xpose.msra.mxu0 0.0
        %2587 = vmatprep.subr.mxu0 0.0
        %2588 = vmatpush1.xpose.msra.mxu0 0.0
        %2589 = vmatprep.subr.mxu0 0.0
        %2590 = vmatpush1.xpose.msra.mxu0 0.0
        %2591 = vmatprep.subr.mxu0 0.0
        %2592 = vmatpush1.xpose.msra.mxu0 0.0
        %2593 = vmatprep.subr.mxu0 0.0
        %2594 = vmatpush1.xpose.msra.mxu0 0.0
        %2595 = vmatprep.subr.mxu0 0.0
        %2596 = vmatpush1.xpose.msra.mxu0 0.0
        %2597 = vmatprep.subr.mxu0 0.0
        %2598 = vmatpush1.xpose.msra.mxu0 0.0
        %2599 = vmatprep.subr.mxu0 0.0
        %2600 = vmatpush1.xpose.msra.mxu0 0.0
        %2601 = vmatprep.subr.mxu0 0.0
        %2602 = vmatpush1.xpose.msra.mxu0 0.0
        %2603 = vmatprep.subr.mxu0 0.0
        %2604 = vmatpush1.xpose.msra.mxu0 0.0
        %2605 = vmatprep.subr.mxu0 0.0
        %2606 = vmatpush1.xpose.msra.mxu0 0.0
        %2607 = vmatprep.mubr.f32.mxu0 0.0
        %2608 = vmatmul.mubr.f32.gmra.mrb[0].mxu0 %v2539
        %v2609 = vpop.f32.mrb[0].mxu0
        %v2610 = vadd.f32 0.0, %v2609
        %v2611 = vpop.f32.mrb[0].mxu0
        %2612 = vdwg.mxu0
        %v2613 = vmul.f32 %v2064, 0.35355338
        %v2614 = vmul.f32 %v2142, 0.35355338
        %v2615 = vmul.f32 %v2220, 0.35355338
        %v2616 = vmul.f32 %v2298, 0.35355338
        %v2617 = vmul.f32 %v2376, 0.35355338
        %v2618 = vmul.f32 %v2454, 0.35355338
        %v2619 = vmul.f32 %v2532, 0.35355338
        %v2620 = vmul.f32 %v2610, 0.35355338
        %v2621 = vsel %vm671, %v2613, -inf
        %2622 = vmax.xlane.f32.xlu0 %v2621
        %v2623 = vpop.xlane.xlu0 %2622
        %v2624 = vsel %vm671, %v2614, -inf
        %2625 = vmax.xlane.f32.xlu0 %v2624
        %v2626 = vpop.xlane.xlu0 %2625
        %v2627 = vsel %vm671, %v2615, -inf
        %2628 = vmax.xlane.f32.xlu0 %v2627
        %v2629 = vpop.xlane.xlu0 %2628
        %v2630 = vsel %vm671, %v2616, -inf
        %2631 = vmax.xlane.f32.xlu0 %v2630
        %v2632 = vpop.xlane.xlu0 %2631
        %v2633 = vsel %vm671, %v2617, -inf
        %2634 = vmax.xlane.f32.xlu0 %v2633
        %v2635 = vpop.xlane.xlu0 %2634
        %v2636 = vsel %vm671, %v2618, -inf
        %2637 = vmax.xlane.f32.xlu0 %v2636
        %v2638 = vpop.xlane.xlu0 %2637
        %v2639 = vsel %vm671, %v2619, -inf
        %2640 = vmax.xlane.f32.xlu0 %v2639
        %v2641 = vpop.xlane.xlu0 %2640
        %v2642 = vsel %vm671, %v2620, -inf
        %2643 = vmax.xlane.f32.xlu0 %v2642
        %v2644 = vpop.xlane.xlu0 %2643
        %v2645 = vsub.f32 %v2613, %v2623
        %v2646 = vsub.f32 %v2614, %v2626
        %v2647 = vsub.f32 %v2615, %v2629
        %v2648 = vsub.f32 %v2616, %v2632
        %v2649 = vsub.f32 %v2617, %v2635
        %v2650 = vsub.f32 %v2618, %v2638
        %v2651 = vsub.f32 %v2619, %v2641
        %v2652 = vsub.f32 %v2620, %v2644
        %v2653 = vmul.f32 %v2645, 1.442695
        %v2654 = vpow.pop %v2653
        %v2655 = vmul.f32 %v2646, 1.442695
        %v2656 = vpow.pop %v2655
        %v2657 = vmul.f32 %v2647, 1.442695
        %v2658 = vpow.pop %v2657
        %v2659 = vmul.f32 %v2648, 1.442695
        %v2660 = vpow.pop %v2659
        %v2661 = vmul.f32 %v2649, 1.442695
        %v2662 = vpow.pop %v2661
        %v2663 = vmul.f32 %v2650, 1.442695
        %v2664 = vpow.pop %v2663
        %v2665 = vmul.f32 %v2651, 1.442695
        %v2666 = vpow.pop %v2665
        %v2667 = vmul.f32 %v2652, 1.442695
        %v2668 = vpow.pop %v2667
        %v2669 = vsel %vm671, %v2654, 0.0
        %2670 = vadd.xlane.f32.xlu0 %v2669
        %v2671 = vpop.xlane.xlu0 %2670
        %v2672 = vsel %vm671, %v2656, 0.0
        %2673 = vadd.xlane.f32.xlu0 %v2672
        %v2674 = vpop.xlane.xlu0 %2673
        %v2675 = vsel %vm671, %v2658, 0.0
        %2676 = vadd.xlane.f32.xlu0 %v2675
        %v2677 = vpop.xlane.xlu0 %2676
        %v2678 = vsel %vm671, %v2660, 0.0
        %2679 = vadd.xlane.f32.xlu0 %v2678
        %v2680 = vpop.xlane.xlu0 %2679
        %v2681 = vsel %vm671, %v2662, 0.0
        %2682 = vadd.xlane.f32.xlu0 %v2681
        %v2683 = vpop.xlane.xlu0 %2682
        %v2684 = vsel %vm671, %v2664, 0.0
        %2685 = vadd.xlane.f32.xlu0 %v2684
        %v2686 = vpop.xlane.xlu0 %2685
        %v2687 = vsel %vm671, %v2666, 0.0
        %2688 = vadd.xlane.f32.xlu0 %v2687
        %v2689 = vpop.xlane.xlu0 %2688
        %v2690 = vsel %vm671, %v2668, 0.0
        %2691 = vadd.xlane.f32.xlu0 %v2690
        %v2692 = vpop.xlane.xlu0 %2691
        %v2693 = vrcp.pop %v2671
        %v2694 = vrcp.pop %v2674
        %v2695 = vrcp.pop %v2677
        %v2696 = vrcp.pop %v2680
        %v2697 = vrcp.pop %v2683
        %v2698 = vrcp.pop %v2686
        %v2699 = vrcp.pop %v2689
        %v2700 = vrcp.pop %v2692
        %v2701 = vmul.f32 %v2654, %v2693
        %v2702 = vmul.f32 %v2656, %v2694
        %v2703 = vmul.f32 %v2658, %v2695
        %v2704 = vmul.f32 %v2660, %v2696
        %v2705 = vmul.f32 %v2662, %v2697
        %v2706 = vmul.f32 %v2664, %v2698
        %v2707 = vmul.f32 %v2666, %v2699
        %v2708 = vmul.f32 %v2668, %v2700
        %2709 = vrot.lane.b32.xlu0 %v630, 56
        %v2710 = vpop.permute.xlu0 %2709
        %v2713 = vsel %vm671, %v2701, 0
        %2715 = vmatprep.subr.mxu0 0.0
        %2716 = vmatpush1.msra.mxu0 %v2710
        %2717 = vmatprep.subr.mxu0 0.0
        %2718 = vmatpush1.msra.mxu0 0.0
        %2719 = vmatprep.subr.mxu0 0.0
        %2720 = vmatpush1.msra.mxu0 0.0
        %2721 = vmatprep.subr.mxu0 0.0
        %2722 = vmatpush1.msra.mxu0 0.0
        %2723 = vmatprep.subr.mxu0 0.0
        %2724 = vmatpush1.msra.mxu0 0.0
        %2725 = vmatprep.subr.mxu0 0.0
        %2726 = vmatpush1.msra.mxu0 0.0
        %2727 = vmatprep.subr.mxu0 0.0
        %2728 = vmatpush1.msra.mxu0 0.0
        %2729 = vmatprep.subr.mxu0 0.0
        %2730 = vmatpush1.msra.mxu0 0.0
        %2731 = vmatprep.subr.mxu0 0.0
        %2732 = vmatpush1.msra.mxu0 0.0
        %2733 = vmatprep.subr.mxu0 0.0
        %2734 = vmatpush1.msra.mxu0 0.0
        %2735 = vmatprep.subr.mxu0 0.0
        %2736 = vmatpush1.msra.mxu0 0.0
        %2737 = vmatprep.subr.mxu0 0.0
        %2738 = vmatpush1.msra.mxu0 0.0
        %2739 = vmatprep.subr.mxu0 0.0
        %2740 = vmatpush1.msra.mxu0 0.0
        %2741 = vmatprep.subr.mxu0 0.0
        %2742 = vmatpush1.msra.mxu0 0.0
        %2743 = vmatprep.subr.mxu0 0.0
        %2744 = vmatpush1.msra.mxu0 0.0
        %2745 = vmatprep.subr.mxu0 0.0
        %2746 = vmatpush1.msra.mxu0 0.0
        %2747 = vmatprep.subr.mxu0 0.0
        %2748 = vmatpush1.msra.mxu0 0.0
        %2749 = vmatprep.subr.mxu0 0.0
        %2750 = vmatpush1.msra.mxu0 0.0
        %2751 = vmatprep.subr.mxu0 0.0
        %2752 = vmatpush1.msra.mxu0 0.0
        %2753 = vmatprep.subr.mxu0 0.0
        %2754 = vmatpush1.msra.mxu0 0.0
        %2755 = vmatprep.subr.mxu0 0.0
        %2756 = vmatpush1.msra.mxu0 0.0
        %2757 = vmatprep.subr.mxu0 0.0
        %2758 = vmatpush1.msra.mxu0 0.0
        %2759 = vmatprep.subr.mxu0 0.0
        %2760 = vmatpush1.msra.mxu0 0.0
        %2761 = vmatprep.subr.mxu0 0.0
        %2762 = vmatpush1.msra.mxu0 0.0
        %2763 = vmatprep.subr.mxu0 0.0
        %2764 = vmatpush1.msra.mxu0 0.0
        %2765 = vmatprep.subr.mxu0 0.0
        %2766 = vmatpush1.msra.mxu0 0.0
        %2767 = vmatprep.subr.mxu0 0.0
        %2768 = vmatpush1.msra.mxu0 0.0
        %2769 = vmatprep.subr.mxu0 0.0
        %2770 = vmatpush1.msra.mxu0 0.0
        %2771 = vmatprep.subr.mxu0 0.0
        %2772 = vmatpush1.msra.mxu0 0.0
        %2773 = vmatprep.subr.mxu0 0.0
        %2774 = vmatpush1.msra.mxu0 0.0
        %2775 = vmatprep.subr.mxu0 0.0
        %2776 = vmatpush1.msra.mxu0 0.0
        %2777 = vmatprep.subr.mxu0 0.0
        %2778 = vmatpush1.msra.mxu0 0.0
        %2779 = vmatprep.mubr.f32.mxu0 0.0
        %2780 = vmatmul.mubr.f32.gmra.mrb[0].mxu0 %v2713
        %v2781 = vpop.f32.mrb[0].mxu0
        %v2782 = vadd.f32 0.0, %v2781
        %v2783 = vpop.f32.mrb[0].mxu0
        %2784 = vdwg.mxu0
        %2785 = vrot.lane.b32.xlu0 %v635, 56
        %v2786 = vpop.permute.xlu0 %2785
        %v2789 = vsel %vm671, %v2702, 0
        %2791 = vmatprep.subr.mxu0 0.0
        %2792 = vmatpush1.msra.mxu0 %v2786
        %2793 = vmatprep.subr.mxu0 0.0
        %2794 = vmatpush1.msra.mxu0 0.0
        %2795 = vmatprep.subr.mxu0 0.0
        %2796 = vmatpush1.msra.mxu0 0.0
        %2797 = vmatprep.subr.mxu0 0.0
        %2798 = vmatpush1.msra.mxu0 0.0
        %2799 = vmatprep.subr.mxu0 0.0
        %2800 = vmatpush1.msra.mxu0 0.0
        %2801 = vmatprep.subr.mxu0 0.0
        %2802 = vmatpush1.msra.mxu0 0.0
        %2803 = vmatprep.subr.mxu0 0.0
        %2804 = vmatpush1.msra.mxu0 0.0
        %2805 = vmatprep.subr.mxu0 0.0
        %2806 = vmatpush1.msra.mxu0 0.0
        %2807 = vmatprep.subr.mxu0 0.0
        %2808 = vmatpush1.msra.mxu0 0.0
        %2809 = vmatprep.subr.mxu0 0.0
        %2810 = vmatpush1.msra.mxu0 0.0
        %2811 = vmatprep.subr.mxu0 0.0
        %2812 = vmatpush1.msra.mxu0 0.0
        %2813 = vmatprep.subr.mxu0 0.0
        %2814 = vmatpush1.msra.mxu0 0.0
        %2815 = vmatprep.subr.mxu0 0.0
        %2816 = vmatpush1.msra.mxu0 0.0
        %2817 = vmatprep.subr.mxu0 0.0
        %2818 = vmatpush1.msra.mxu0 0.0
        %2819 = vmatprep.subr.mxu0 0.0
        %2820 = vmatpush1.msra.mxu0 0.0
        %2821 = vmatprep.subr.mxu0 0.0
        %2822 = vmatpush1.msra.mxu0 0.0
        %2823 = vmatprep.subr.mxu0 0.0
        %2824 = vmatpush1.msra.mxu0 0.0
        %2825 = vmatprep.subr.mxu0 0.0
        %2826 = vmatpush1.msra.mxu0 0.0
        %2827 = vmatprep.subr.mxu0 0.0
        %2828 = vmatpush1.msra.mxu0 0.0
        %2829 = vmatprep.subr.mxu0 0.0
        %2830 = vmatpush1.msra.mxu0 0.0
        %2831 = vmatprep.subr.mxu0 0.0
        %2832 = vmatpush1.msra.mxu0 0.0
        %2833 = vmatprep.subr.mxu0 0.0
        %2834 = vmatpush1.msra.mxu0 0.0
        %2835 = vmatprep.subr.mxu0 0.0
        %2836 = vmatpush1.msra.mxu0 0.0
        %2837 = vmatprep.subr.mxu0 0.0
        %2838 = vmatpush1.msra.mxu0 0.0
        %2839 = vmatprep.subr.mxu0 0.0
        %2840 = vmatpush1.msra.mxu0 0.0
        %2841 = vmatprep.subr.mxu0 0.0
        %2842 = vmatpush1.msra.mxu0 0.0
        %2843 = vmatprep.subr.mxu0 0.0
        %2844 = vmatpush1.msra.mxu0 0.0
        %2845 = vmatprep.subr.mxu0 0.0
        %2846 = vmatpush1.msra.mxu0 0.0
        %2847 = vmatprep.subr.mxu0 0.0
        %2848 = vmatpush1.msra.mxu0 0.0
        %2849 = vmatprep.subr.mxu0 0.0
        %2850 = vmatpush1.msra.mxu0 0.0
        %2851 = vmatprep.subr.mxu0 0.0
        %2852 = vmatpush1.msra.mxu0 0.0
        %2853 = vmatprep.subr.mxu0 0.0
        %2854 = vmatpush1.msra.mxu0 0.0
        %2855 = vmatprep.mubr.f32.mxu0 0.0
        %2856 = vmatmul.mubr.f32.gmra.mrb[0].mxu0 %v2789
        %v2857 = vpop.f32.mrb[0].mxu0
        %v2858 = vadd.f32 0.0, %v2857
        %v2859 = vpop.f32.mrb[0].mxu0
        %2860 = vdwg.mxu0
        %2861 = vrot.lane.b32.xlu0 %v640, 56
        %v2862 = vpop.permute.xlu0 %2861
        %v2865 = vsel %vm671, %v2703, 0
        %2867 = vmatprep.subr.mxu0 0.0
        %2868 = vmatpush1.msra.mxu0 %v2862
        %2869 = vmatprep.subr.mxu0 0.0
        %2870 = vmatpush1.msra.mxu0 0.0
        %2871 = vmatprep.subr.mxu0 0.0
        %2872 = vmatpush1.msra.mxu0 0.0
        %2873 = vmatprep.subr.mxu0 0.0
        %2874 = vmatpush1.msra.mxu0 0.0
        %2875 = vmatprep.subr.mxu0 0.0
        %2876 = vmatpush1.msra.mxu0 0.0
        %2877 = vmatprep.subr.mxu0 0.0
        %2878 = vmatpush1.msra.mxu0 0.0
        %2879 = vmatprep.subr.mxu0 0.0
        %2880 = vmatpush1.msra.mxu0 0.0
        %2881 = vmatprep.subr.mxu0 0.0
        %2882 = vmatpush1.msra.mxu0 0.0
        %2883 = vmatprep.subr.mxu0 0.0
        %2884 = vmatpush1.msra.mxu0 0.0
        %2885 = vmatprep.subr.mxu0 0.0
        %2886 = vmatpush1.msra.mxu0 0.0
        %2887 = vmatprep.subr.mxu0 0.0
        %2888 = vmatpush1.msra.mxu0 0.0
        %2889 = vmatprep.subr.mxu0 0.0
        %2890 = vmatpush1.msra.mxu0 0.0
        %2891 = vmatprep.subr.mxu0 0.0
        %2892 = vmatpush1.msra.mxu0 0.0
        %2893 = vmatprep.subr.mxu0 0.0
        %2894 = vmatpush1.msra.mxu0 0.0
        %2895 = vmatprep.subr.mxu0 0.0
        %2896 = vmatpush1.msra.mxu0 0.0
        %2897 = vmatprep.subr.mxu0 0.0
        %2898 = vmatpush1.msra.mxu0 0.0
        %2899 = vmatprep.subr.mxu0 0.0
        %2900 = vmatpush1.msra.mxu0 0.0
        %2901 = vmatprep.subr.mxu0 0.0
        %2902 = vmatpush1.msra.mxu0 0.0
        %2903 = vmatprep.subr.mxu0 0.0
        %2904 = vmatpush1.msra.mxu0 0.0
        %2905 = vmatprep.subr.mxu0 0.0
        %2906 = vmatpush1.msra.mxu0 0.0
        %2907 = vmatprep.subr.mxu0 0.0
        %2908 = vmatpush1.msra.mxu0 0.0
        %2909 = vmatprep.subr.mxu0 0.0
        %2910 = vmatpush1.msra.mxu0 0.0
        %2911 = vmatprep.subr.mxu0 0.0
        %2912 = vmatpush1.msra.mxu0 0.0
        %2913 = vmatprep.subr.mxu0 0.0
        %2914 = vmatpush1.msra.mxu0 0.0
        %2915 = vmatprep.subr.mxu0 0.0
        %2916 = vmatpush1.msra.mxu0 0.0
        %2917 = vmatprep.subr.mxu0 0.0
        %2918 = vmatpush1.msra.mxu0 0.0
        %2919 = vmatprep.subr.mxu0 0.0
        %2920 = vmatpush1.msra.mxu0 0.0
        %2921 = vmatprep.subr.mxu0 0.0
        %2922 = vmatpush1.msra.mxu0 0.0
        %2923 = vmatprep.subr.mxu0 0.0
        %2924 = vmatpush1.msra.mxu0 0.0
        %2925 = vmatprep.subr.mxu0 0.0
        %2926 = vmatpush1.msra.mxu0 0.0
        %2927 = vmatprep.subr.mxu0 0.0
        %2928 = vmatpush1.msra.mxu0 0.0
        %2929 = vmatprep.subr.mxu0 0.0
        %2930 = vmatpush1.msra.mxu0 0.0
        %2931 = vmatprep.mubr.f32.mxu0 0.0
        %2932 = vmatmul.mubr.f32.gmra.mrb[0].mxu0 %v2865
        %v2933 = vpop.f32.mrb[0].mxu0
        %v2934 = vadd.f32 0.0, %v2933
        %v2935 = vpop.f32.mrb[0].mxu0
        %2936 = vdwg.mxu0
        %2937 = vrot.lane.b32.xlu0 %v645, 56
        %v2938 = vpop.permute.xlu0 %2937
        %v2941 = vsel %vm671, %v2704, 0
        %2943 = vmatprep.subr.mxu0 0.0
        %2944 = vmatpush1.msra.mxu0 %v2938
        %2945 = vmatprep.subr.mxu0 0.0
        %2946 = vmatpush1.msra.mxu0 0.0
        %2947 = vmatprep.subr.mxu0 0.0
        %2948 = vmatpush1.msra.mxu0 0.0
        %2949 = vmatprep.subr.mxu0 0.0
        %2950 = vmatpush1.msra.mxu0 0.0
        %2951 = vmatprep.subr.mxu0 0.0
        %2952 = vmatpush1.msra.mxu0 0.0
        %2953 = vmatprep.subr.mxu0 0.0
        %2954 = vmatpush1.msra.mxu0 0.0
        %2955 = vmatprep.subr.mxu0 0.0
        %2956 = vmatpush1.msra.mxu0 0.0
        %2957 = vmatprep.subr.mxu0 0.0
        %2958 = vmatpush1.msra.mxu0 0.0
        %2959 = vmatprep.subr.mxu0 0.0
        %2960 = vmatpush1.msra.mxu0 0.0
        %2961 = vmatprep.subr.mxu0 0.0
        %2962 = vmatpush1.msra.mxu0 0.0
        %2963 = vmatprep.subr.mxu0 0.0
        %2964 = vmatpush1.msra.mxu0 0.0
        %2965 = vmatprep.subr.mxu0 0.0
        %2966 = vmatpush1.msra.mxu0 0.0
        %2967 = vmatprep.subr.mxu0 0.0
        %2968 = vmatpush1.msra.mxu0 0.0
        %2969 = vmatprep.subr.mxu0 0.0
        %2970 = vmatpush1.msra.mxu0 0.0
        %2971 = vmatprep.subr.mxu0 0.0
        %2972 = vmatpush1.msra.mxu0 0.0
        %2973 = vmatprep.subr.mxu0 0.0
        %2974 = vmatpush1.msra.mxu0 0.0
        %2975 = vmatprep.subr.mxu0 0.0
        %2976 = vmatpush1.msra.mxu0 0.0
        %2977 = vmatprep.subr.mxu0 0.0
        %2978 = vmatpush1.msra.mxu0 0.0
        %2979 = vmatprep.subr.mxu0 0.0
        %2980 = vmatpush1.msra.mxu0 0.0
        %2981 = vmatprep.subr.mxu0 0.0
        %2982 = vmatpush1.msra.mxu0 0.0
        %2983 = vmatprep.subr.mxu0 0.0
        %2984 = vmatpush1.msra.mxu0 0.0
        %2985 = vmatprep.subr.mxu0 0.0
        %2986 = vmatpush1.msra.mxu0 0.0
        %2987 = vmatprep.subr.mxu0 0.0
        %2988 = vmatpush1.msra.mxu0 0.0
        %2989 = vmatprep.subr.mxu0 0.0
        %2990 = vmatpush1.msra.mxu0 0.0
        %2991 = vmatprep.subr.mxu0 0.0
        %2992 = vmatpush1.msra.mxu0 0.0
        %2993 = vmatprep.subr.mxu0 0.0
        %2994 = vmatpush1.msra.mxu0 0.0
        %2995 = vmatprep.subr.mxu0 0.0
        %2996 = vmatpush1.msra.mxu0 0.0
        %2997 = vmatprep.subr.mxu0 0.0
        %2998 = vmatpush1.msra.mxu0 0.0
        %2999 = vmatprep.subr.mxu0 0.0
        %3000 = vmatpush1.msra.mxu0 0.0
        %3001 = vmatprep.subr.mxu0 0.0
        %3002 = vmatpush1.msra.mxu0 0.0
        %3003 = vmatprep.subr.mxu0 0.0
        %3004 = vmatpush1.msra.mxu0 0.0
        %3005 = vmatprep.subr.mxu0 0.0
        %3006 = vmatpush1.msra.mxu0 0.0
        %3007 = vmatprep.mubr.f32.mxu0 0.0
        %3008 = vmatmul.mubr.f32.gmra.mrb[0].mxu0 %v2941
        %v3009 = vpop.f32.mrb[0].mxu0
        %v3010 = vadd.f32 0.0, %v3009
        %v3011 = vpop.f32.mrb[0].mxu0
        %3012 = vdwg.mxu0
        %3013 = vrot.lane.b32.xlu0 %v650, 56
        %v3014 = vpop.permute.xlu0 %3013
        %v3017 = vsel %vm671, %v2705, 0
        %3019 = vmatprep.subr.mxu0 0.0
        %3020 = vmatpush1.msra.mxu0 %v3014
        %3021 = vmatprep.subr.mxu0 0.0
        %3022 = vmatpush1.msra.mxu0 0.0
        %3023 = vmatprep.subr.mxu0 0.0
        %3024 = vmatpush1.msra.mxu0 0.0
        %3025 = vmatprep.subr.mxu0 0.0
        %3026 = vmatpush1.msra.mxu0 0.0
        %3027 = vmatprep.subr.mxu0 0.0
        %3028 = vmatpush1.msra.mxu0 0.0
        %3029 = vmatprep.subr.mxu0 0.0
        %3030 = vmatpush1.msra.mxu0 0.0
        %3031 = vmatprep.subr.mxu0 0.0
        %3032 = vmatpush1.msra.mxu0 0.0
        %3033 = vmatprep.subr.mxu0 0.0
        %3034 = vmatpush1.msra.mxu0 0.0
        %3035 = vmatprep.subr.mxu0 0.0
        %3036 = vmatpush1.msra.mxu0 0.0
        %3037 = vmatprep.subr.mxu0 0.0
        %3038 = vmatpush1.msra.mxu0 0.0
        %3039 = vmatprep.subr.mxu0 0.0
        %3040 = vmatpush1.msra.mxu0 0.0
        %3041 = vmatprep.subr.mxu0 0.0
        %3042 = vmatpush1.msra.mxu0 0.0
        %3043 = vmatprep.subr.mxu0 0.0
        %3044 = vmatpush1.msra.mxu0 0.0
        %3045 = vmatprep.subr.mxu0 0.0
        %3046 = vmatpush1.msra.mxu0 0.0
        %3047 = vmatprep.subr.mxu0 0.0
        %3048 = vmatpush1.msra.mxu0 0.0
        %3049 = vmatprep.subr.mxu0 0.0
        %3050 = vmatpush1.msra.mxu0 0.0
        %3051 = vmatprep.subr.mxu0 0.0
        %3052 = vmatpush1.msra.mxu0 0.0
        %3053 = vmatprep.subr.mxu0 0.0
        %3054 = vmatpush1.msra.mxu0 0.0
        %3055 = vmatprep.subr.mxu0 0.0
        %3056 = vmatpush1.msra.mxu0 0.0
        %3057 = vmatprep.subr.mxu0 0.0
        %3058 = vmatpush1.msra.mxu0 0.0
        %3059 = vmatprep.subr.mxu0 0.0
        %3060 = vmatpush1.msra.mxu0 0.0
        %3061 = vmatprep.subr.mxu0 0.0
        %3062 = vmatpush1.msra.mxu0 0.0
        %3063 = vmatprep.subr.mxu0 0.0
        %3064 = vmatpush1.msra.mxu0 0.0
        %3065 = vmatprep.subr.mxu0 0.0
        %3066 = vmatpush1.msra.mxu0 0.0
        %3067 = vmatprep.subr.mxu0 0.0
        %3068 = vmatpush1.msra.mxu0 0.0
        %3069 = vmatprep.subr.mxu0 0.0
        %3070 = vmatpush1.msra.mxu0 0.0
        %3071 = vmatprep.subr.mxu0 0.0
        %3072 = vmatpush1.msra.mxu0 0.0
        %3073 = vmatprep.subr.mxu0 0.0
        %3074 = vmatpush1.msra.mxu0 0.0
        %3075 = vmatprep.subr.mxu0 0.0
        %3076 = vmatpush1.msra.mxu0 0.0
        %3077 = vmatprep.subr.mxu0 0.0
        %3078 = vmatpush1.msra.mxu0 0.0
        %3079 = vmatprep.subr.mxu0 0.0
        %3080 = vmatpush1.msra.mxu0 0.0
        %3081 = vmatprep.subr.mxu0 0.0
        %3082 = vmatpush1.msra.mxu0 0.0
        %3083 = vmatprep.mubr.f32.mxu0 0.0
        %3084 = vmatmul.mubr.f32.gmra.mrb[0].mxu0 %v3017
        %v3085 = vpop.f32.mrb[0].mxu0
        %v3086 = vadd.f32 0.0, %v3085
        %v3087 = vpop.f32.mrb[0].mxu0
        %3088 = vdwg.mxu0
        %3089 = vrot.lane.b32.xlu0 %v655, 56
        %v3090 = vpop.permute.xlu0 %3089
        %v3093 = vsel %vm671, %v2706, 0
        %3095 = vmatprep.subr.mxu0 0.0
        %3096 = vmatpush1.msra.mxu0 %v3090
        %3097 = vmatprep.subr.mxu0 0.0
        %3098 = vmatpush1.msra.mxu0 0.0
        %3099 = vmatprep.subr.mxu0 0.0
        %3100 = vmatpush1.msra.mxu0 0.0
        %3101 = vmatprep.subr.mxu0 0.0
        %3102 = vmatpush1.msra.mxu0 0.0
        %3103 = vmatprep.subr.mxu0 0.0
        %3104 = vmatpush1.msra.mxu0 0.0
        %3105 = vmatprep.subr.mxu0 0.0
        %3106 = vmatpush1.msra.mxu0 0.0
        %3107 = vmatprep.subr.mxu0 0.0
        %3108 = vmatpush1.msra.mxu0 0.0
        %3109 = vmatprep.subr.mxu0 0.0
        %3110 = vmatpush1.msra.mxu0 0.0
        %3111 = vmatprep.subr.mxu0 0.0
        %3112 = vmatpush1.msra.mxu0 0.0
        %3113 = vmatprep.subr.mxu0 0.0
        %3114 = vmatpush1.msra.mxu0 0.0
        %3115 = vmatprep.subr.mxu0 0.0
        %3116 = vmatpush1.msra.mxu0 0.0
        %3117 = vmatprep.subr.mxu0 0.0
        %3118 = vmatpush1.msra.mxu0 0.0
        %3119 = vmatprep.subr.mxu0 0.0
        %3120 = vmatpush1.msra.mxu0 0.0
        %3121 = vmatprep.subr.mxu0 0.0
        %3122 = vmatpush1.msra.mxu0 0.0
        %3123 = vmatprep.subr.mxu0 0.0
        %3124 = vmatpush1.msra.mxu0 0.0
        %3125 = vmatprep.subr.mxu0 0.0
        %3126 = vmatpush1.msra.mxu0 0.0
        %3127 = vmatprep.subr.mxu0 0.0
        %3128 = vmatpush1.msra.mxu0 0.0
        %3129 = vmatprep.subr.mxu0 0.0
        %3130 = vmatpush1.msra.mxu0 0.0
        %3131 = vmatprep.subr.mxu0 0.0
        %3132 = vmatpush1.msra.mxu0 0.0
        %3133 = vmatprep.subr.mxu0 0.0
        %3134 = vmatpush1.msra.mxu0 0.0
        %3135 = vmatprep.subr.mxu0 0.0
        %3136 = vmatpush1.msra.mxu0 0.0
        %3137 = vmatprep.subr.mxu0 0.0
        %3138 = vmatpush1.msra.mxu0 0.0
        %3139 = vmatprep.subr.mxu0 0.0
        %3140 = vmatpush1.msra.mxu0 0.0
        %3141 = vmatprep.subr.mxu0 0.0
        %3142 = vmatpush1.msra.mxu0 0.0
        %3143 = vmatprep.subr.mxu0 0.0
        %3144 = vmatpush1.msra.mxu0 0.0
        %3145 = vmatprep.subr.mxu0 0.0
        %3146 = vmatpush1.msra.mxu0 0.0
        %3147 = vmatprep.subr.mxu0 0.0
        %3148 = vmatpush1.msra.mxu0 0.0
        %3149 = vmatprep.subr.mxu0 0.0
        %3150 = vmatpush1.msra.mxu0 0.0
        %3151 = vmatprep.subr.mxu0 0.0
        %3152 = vmatpush1.msra.mxu0 0.0
        %3153 = vmatprep.subr.mxu0 0.0
        %3154 = vmatpush1.msra.mxu0 0.0
        %3155 = vmatprep.subr.mxu0 0.0
        %3156 = vmatpush1.msra.mxu0 0.0
        %3157 = vmatprep.subr.mxu0 0.0
        %3158 = vmatpush1.msra.mxu0 0.0
        %3159 = vmatprep.mubr.f32.mxu0 0.0
        %3160 = vmatmul.mubr.f32.gmra.mrb[0].mxu0 %v3093
        %v3161 = vpop.f32.mrb[0].mxu0
        %v3162 = vadd.f32 0.0, %v3161
        %v3163 = vpop.f32.mrb[0].mxu0
        %3164 = vdwg.mxu0
        %3165 = vrot.lane.b32.xlu0 %v660, 56
        %v3166 = vpop.permute.xlu0 %3165
        %v3169 = vsel %vm671, %v2707, 0
        %3171 = vmatprep.subr.mxu0 0.0
        %3172 = vmatpush1.msra.mxu0 %v3166
        %3173 = vmatprep.subr.mxu0 0.0
        %3174 = vmatpush1.msra.mxu0 0.0
        %3175 = vmatprep.subr.mxu0 0.0
        %3176 = vmatpush1.msra.mxu0 0.0
        %3177 = vmatprep.subr.mxu0 0.0
        %3178 = vmatpush1.msra.mxu0 0.0
        %3179 = vmatprep.subr.mxu0 0.0
        %3180 = vmatpush1.msra.mxu0 0.0
        %3181 = vmatprep.subr.mxu0 0.0
        %3182 = vmatpush1.msra.mxu0 0.0
        %3183 = vmatprep.subr.mxu0 0.0
        %3184 = vmatpush1.msra.mxu0 0.0
        %3185 = vmatprep.subr.mxu0 0.0
        %3186 = vmatpush1.msra.mxu0 0.0
        %3187 = vmatprep.subr.mxu0 0.0
        %3188 = vmatpush1.msra.mxu0 0.0
        %3189 = vmatprep.subr.mxu0 0.0
        %3190 = vmatpush1.msra.mxu0 0.0
        %3191 = vmatprep.subr.mxu0 0.0
        %3192 = vmatpush1.msra.mxu0 0.0
        %3193 = vmatprep.subr.mxu0 0.0
        %3194 = vmatpush1.msra.mxu0 0.0
        %3195 = vmatprep.subr.mxu0 0.0
        %3196 = vmatpush1.msra.mxu0 0.0
        %3197 = vmatprep.subr.mxu0 0.0
        %3198 = vmatpush1.msra.mxu0 0.0
        %3199 = vmatprep.subr.mxu0 0.0
        %3200 = vmatpush1.msra.mxu0 0.0
        %3201 = vmatprep.subr.mxu0 0.0
        %3202 = vmatpush1.msra.mxu0 0.0
        %3203 = vmatprep.subr.mxu0 0.0
        %3204 = vmatpush1.msra.mxu0 0.0
        %3205 = vmatprep.subr.mxu0 0.0
        %3206 = vmatpush1.msra.mxu0 0.0
        %3207 = vmatprep.subr.mxu0 0.0
        %3208 = vmatpush1.msra.mxu0 0.0
        %3209 = vmatprep.subr.mxu0 0.0
        %3210 = vmatpush1.msra.mxu0 0.0
        %3211 = vmatprep.subr.mxu0 0.0
        %3212 = vmatpush1.msra.mxu0 0.0
        %3213 = vmatprep.subr.mxu0 0.0
        %3214 = vmatpush1.msra.mxu0 0.0
        %3215 = vmatprep.subr.mxu0 0.0
        %3216 = vmatpush1.msra.mxu0 0.0
        %3217 = vmatprep.subr.mxu0 0.0
        %3218 = vmatpush1.msra.mxu0 0.0
        %3219 = vmatprep.subr.mxu0 0.0
        %3220 = vmatpush1.msra.mxu0 0.0
        %3221 = vmatprep.subr.mxu0 0.0
        %3222 = vmatpush1.msra.mxu0 0.0
        %3223 = vmatprep.subr.mxu0 0.0
        %3224 = vmatpush1.msra.mxu0 0.0
        %3225 = vmatprep.subr.mxu0 0.0
        %3226 = vmatpush1.msra.mxu0 0.0
        %3227 = vmatprep.subr.mxu0 0.0
        %3228 = vmatpush1.msra.mxu0 0.0
        %3229 = vmatprep.subr.mxu0 0.0
        %3230 = vmatpush1.msra.mxu0 0.0
        %3231 = vmatprep.subr.mxu0 0.0
        %3232 = vmatpush1.msra.mxu0 0.0
        %3233 = vmatprep.subr.mxu0 0.0
        %3234 = vmatpush1.msra.mxu0 0.0
        %3235 = vmatprep.mubr.f32.mxu0 0.0
        %3236 = vmatmul.mubr.f32.gmra.mrb[0].mxu0 %v3169
        %v3237 = vpop.f32.mrb[0].mxu0
        %v3238 = vadd.f32 0.0, %v3237
        %v3239 = vpop.f32.mrb[0].mxu0
        %3240 = vdwg.mxu0
        %3241 = vrot.lane.b32.xlu0 %v665, 56
        %v3242 = vpop.permute.xlu0 %3241
        %v3245 = vsel %vm671, %v2708, 0
        %3247 = vmatprep.subr.mxu0 0.0
        %3248 = vmatpush1.msra.mxu0 %v3242
        %3249 = vmatprep.subr.mxu0 0.0
        %3250 = vmatpush1.msra.mxu0 0.0
        %3251 = vmatprep.subr.mxu0 0.0
        %3252 = vmatpush1.msra.mxu0 0.0
        %3253 = vmatprep.subr.mxu0 0.0
        %3254 = vmatpush1.msra.mxu0 0.0
        %3255 = vmatprep.subr.mxu0 0.0
        %3256 = vmatpush1.msra.mxu0 0.0
        %3257 = vmatprep.subr.mxu0 0.0
        %3258 = vmatpush1.msra.mxu0 0.0
        %3259 = vmatprep.subr.mxu0 0.0
        %3260 = vmatpush1.msra.mxu0 0.0
        %3261 = vmatprep.subr.mxu0 0.0
        %3262 = vmatpush1.msra.mxu0 0.0
        %3263 = vmatprep.subr.mxu0 0.0
        %3264 = vmatpush1.msra.mxu0 0.0
        %3265 = vmatprep.subr.mxu0 0.0
        %3266 = vmatpush1.msra.mxu0 0.0
        %3267 = vmatprep.subr.mxu0 0.0
        %3268 = vmatpush1.msra.mxu0 0.0
        %3269 = vmatprep.subr.mxu0 0.0
        %3270 = vmatpush1.msra.mxu0 0.0
        %3271 = vmatprep.subr.mxu0 0.0
        %3272 = vmatpush1.msra.mxu0 0.0
        %3273 = vmatprep.subr.mxu0 0.0
        %3274 = vmatpush1.msra.mxu0 0.0
        %3275 = vmatprep.subr.mxu0 0.0
        %3276 = vmatpush1.msra.mxu0 0.0
        %3277 = vmatprep.subr.mxu0 0.0
        %3278 = vmatpush1.msra.mxu0 0.0
        %3279 = vmatprep.subr.mxu0 0.0
        %3280 = vmatpush1.msra.mxu0 0.0
        %3281 = vmatprep.subr.mxu0 0.0
        %3282 = vmatpush1.msra.mxu0 0.0
        %3283 = vmatprep.subr.mxu0 0.0
        %3284 = vmatpush1.msra.mxu0 0.0
        %3285 = vmatprep.subr.mxu0 0.0
        %3286 = vmatpush1.msra.mxu0 0.0
        %3287 = vmatprep.subr.mxu0 0.0
        %3288 = vmatpush1.msra.mxu0 0.0
        %3289 = vmatprep.subr.mxu0 0.0
        %3290 = vmatpush1.msra.mxu0 0.0
        %3291 = vmatprep.subr.mxu0 0.0
        %3292 = vmatpush1.msra.mxu0 0.0
        %3293 = vmatprep.subr.mxu0 0.0
        %3294 = vmatpush1.msra.mxu0 0.0
        %3295 = vmatprep.subr.mxu0 0.0
        %3296 = vmatpush1.msra.mxu0 0.0
        %3297 = vmatprep.subr.mxu0 0.0
        %3298 = vmatpush1.msra.mxu0 0.0
        %3299 = vmatprep.subr.mxu0 0.0
        %3300 = vmatpush1.msra.mxu0 0.0
        %3301 = vmatprep.subr.mxu0 0.0
        %3302 = vmatpush1.msra.mxu0 0.0
        %3303 = vmatprep.subr.mxu0 0.0
        %3304 = vmatpush1.msra.mxu0 0.0
        %3305 = vmatprep.subr.mxu0 0.0
        %3306 = vmatpush1.msra.mxu0 0.0
        %3307 = vmatprep.subr.mxu0 0.0
        %3308 = vmatpush1.msra.mxu0 0.0
        %3309 = vmatprep.subr.mxu0 0.0
        %3310 = vmatpush1.msra.mxu0 0.0
        %3311 = vmatprep.mubr.f32.mxu0 0.0
        %3312 = vmatmul.mubr.f32.gmra.mrb[0].mxu0 %v3245
        %v3313 = vpop.f32.mrb[0].mxu0
        %v3314 = vadd.f32 0.0, %v3313
        %v3315 = vpop.f32.mrb[0].mxu0
        %3316 = vdwg.mxu0
        %3317 = vrot.lane.b32.xlu0 %v630, 112
        %v3318 = vpop.permute.xlu0 %3317
        %3319 = vrot.lane.b32.xlu0 %v630, 80
        %v3320 = vpop.permute.xlu0 %3319
        %v3321 = vsel %vm671, %v3318, 0
        %v3323 = vsel %vm671, %v3320, 0
        %3325 = vmatprep.subr.mxu0 0.0
        %3326 = vmatpush1.xpose.msra.mxu0 %v3323
        %3327 = vmatprep.subr.mxu0 0.0
        %3328 = vmatpush1.xpose.msra.mxu0 0.0
        %3329 = vmatprep.subr.mxu0 0.0
        %3330 = vmatpush1.xpose.msra.mxu0 0.0
        %3331 = vmatprep.subr.mxu0 0.0
        %3332 = vmatpush1.xpose.msra.mxu0 0.0
        %3333 = vmatprep.subr.mxu0 0.0
        %3334 = vmatpush1.xpose.msra.mxu0 0.0
        %3335 = vmatprep.subr.mxu0 0.0
        %3336 = vmatpush1.xpose.msra.mxu0 0.0
        %3337 = vmatprep.subr.mxu0 0.0
        %3338 = vmatpush1.xpose.msra.mxu0 0.0
        %3339 = vmatprep.subr.mxu0 0.0
        %3340 = vmatpush1.xpose.msra.mxu0 0.0
        %3341 = vmatprep.subr.mxu0 0.0
        %3342 = vmatpush1.xpose.msra.mxu0 0.0
        %3343 = vmatprep.subr.mxu0 0.0
        %3344 = vmatpush1.xpose.msra.mxu0 0.0
        %3345 = vmatprep.subr.mxu0 0.0
        %3346 = vmatpush1.xpose.msra.mxu0 0.0
        %3347 = vmatprep.subr.mxu0 0.0
        %3348 = vmatpush1.xpose.msra.mxu0 0.0
        %3349 = vmatprep.subr.mxu0 0.0
        %3350 = vmatpush1.xpose.msra.mxu0 0.0
        %3351 = vmatprep.subr.mxu0 0.0
        %3352 = vmatpush1.xpose.msra.mxu0 0.0
        %3353 = vmatprep.subr.mxu0 0.0
        %3354 = vmatpush1.xpose.msra.mxu0 0.0
        %3355 = vmatprep.subr.mxu0 0.0
        %3356 = vmatpush1.xpose.msra.mxu0 0.0
        %3357 = vmatprep.subr.mxu0 0.0
        %3358 = vmatpush1.xpose.msra.mxu0 0.0
        %3359 = vmatprep.subr.mxu0 0.0
        %3360 = vmatpush1.xpose.msra.mxu0 0.0
        %3361 = vmatprep.subr.mxu0 0.0
        %3362 = vmatpush1.xpose.msra.mxu0 0.0
        %3363 = vmatprep.subr.mxu0 0.0
        %3364 = vmatpush1.xpose.msra.mxu0 0.0
        %3365 = vmatprep.subr.mxu0 0.0
        %3366 = vmatpush1.xpose.msra.mxu0 0.0
        %3367 = vmatprep.subr.mxu0 0.0
        %3368 = vmatpush1.xpose.msra.mxu0 0.0
        %3369 = vmatprep.subr.mxu0 0.0
        %3370 = vmatpush1.xpose.msra.mxu0 0.0
        %3371 = vmatprep.subr.mxu0 0.0
        %3372 = vmatpush1.xpose.msra.mxu0 0.0
        %3373 = vmatprep.subr.mxu0 0.0
        %3374 = vmatpush1.xpose.msra.mxu0 0.0
        %3375 = vmatprep.subr.mxu0 0.0
        %3376 = vmatpush1.xpose.msra.mxu0 0.0
        %3377 = vmatprep.subr.mxu0 0.0
        %3378 = vmatpush1.xpose.msra.mxu0 0.0
        %3379 = vmatprep.subr.mxu0 0.0
        %3380 = vmatpush1.xpose.msra.mxu0 0.0
        %3381 = vmatprep.subr.mxu0 0.0
        %3382 = vmatpush1.xpose.msra.mxu0 0.0
        %3383 = vmatprep.subr.mxu0 0.0
        %3384 = vmatpush1.xpose.msra.mxu0 0.0
        %3385 = vmatprep.subr.mxu0 0.0
        %3386 = vmatpush1.xpose.msra.mxu0 0.0
        %3387 = vmatprep.subr.mxu0 0.0
        %3388 = vmatpush1.xpose.msra.mxu0 0.0
        %3389 = vmatprep.mubr.f32.mxu0 0.0
        %3390 = vmatmul.mubr.f32.gmra.mrb[0].mxu0 %v3321
        %v3391 = vpop.f32.mrb[0].mxu0
        %v3392 = vadd.f32 0.0, %v3391
        %v3393 = vpop.f32.mrb[0].mxu0
        %3394 = vdwg.mxu0
        %3395 = vrot.lane.b32.xlu0 %v635, 112
        %v3396 = vpop.permute.xlu0 %3395
        %3397 = vrot.lane.b32.xlu0 %v635, 80
        %v3398 = vpop.permute.xlu0 %3397
        %v3399 = vsel %vm671, %v3396, 0
        %v3401 = vsel %vm671, %v3398, 0
        %3403 = vmatprep.subr.mxu0 0.0
        %3404 = vmatpush1.xpose.msra.mxu0 %v3401
        %3405 = vmatprep.subr.mxu0 0.0
        %3406 = vmatpush1.xpose.msra.mxu0 0.0
        %3407 = vmatprep.subr.mxu0 0.0
        %3408 = vmatpush1.xpose.msra.mxu0 0.0
        %3409 = vmatprep.subr.mxu0 0.0
        %3410 = vmatpush1.xpose.msra.mxu0 0.0
        %3411 = vmatprep.subr.mxu0 0.0
        %3412 = vmatpush1.xpose.msra.mxu0 0.0
        %3413 = vmatprep.subr.mxu0 0.0
        %3414 = vmatpush1.xpose.msra.mxu0 0.0
        %3415 = vmatprep.subr.mxu0 0.0
        %3416 = vmatpush1.xpose.msra.mxu0 0.0
        %3417 = vmatprep.subr.mxu0 0.0
        %3418 = vmatpush1.xpose.msra.mxu0 0.0
        %3419 = vmatprep.subr.mxu0 0.0
        %3420 = vmatpush1.xpose.msra.mxu0 0.0
        %3421 = vmatprep.subr.mxu0 0.0
        %3422 = vmatpush1.xpose.msra.mxu0 0.0
        %3423 = vmatprep.subr.mxu0 0.0
        %3424 = vmatpush1.xpose.msra.mxu0 0.0
        %3425 = vmatprep.subr.mxu0 0.0
        %3426 = vmatpush1.xpose.msra.mxu0 0.0
        %3427 = vmatprep.subr.mxu0 0.0
        %3428 = vmatpush1.xpose.msra.mxu0 0.0
        %3429 = vmatprep.subr.mxu0 0.0
        %3430 = vmatpush1.xpose.msra.mxu0 0.0
        %3431 = vmatprep.subr.mxu0 0.0
        %3432 = vmatpush1.xpose.msra.mxu0 0.0
        %3433 = vmatprep.subr.mxu0 0.0
        %3434 = vmatpush1.xpose.msra.mxu0 0.0
        %3435 = vmatprep.subr.mxu0 0.0
        %3436 = vmatpush1.xpose.msra.mxu0 0.0
        %3437 = vmatprep.subr.mxu0 0.0
        %3438 = vmatpush1.xpose.msra.mxu0 0.0
        %3439 = vmatprep.subr.mxu0 0.0
        %3440 = vmatpush1.xpose.msra.mxu0 0.0
        %3441 = vmatprep.subr.mxu0 0.0
        %3442 = vmatpush1.xpose.msra.mxu0 0.0
        %3443 = vmatprep.subr.mxu0 0.0
        %3444 = vmatpush1.xpose.msra.mxu0 0.0
        %3445 = vmatprep.subr.mxu0 0.0
        %3446 = vmatpush1.xpose.msra.mxu0 0.0
        %3447 = vmatprep.subr.mxu0 0.0
        %3448 = vmatpush1.xpose.msra.mxu0 0.0
        %3449 = vmatprep.subr.mxu0 0.0
        %3450 = vmatpush1.xpose.msra.mxu0 0.0
        %3451 = vmatprep.subr.mxu0 0.0
        %3452 = vmatpush1.xpose.msra.mxu0 0.0
        %3453 = vmatprep.subr.mxu0 0.0
        %3454 = vmatpush1.xpose.msra.mxu0 0.0
        %3455 = vmatprep.subr.mxu0 0.0
        %3456 = vmatpush1.xpose.msra.mxu0 0.0
        %3457 = vmatprep.subr.mxu0 0.0
        %3458 = vmatpush1.xpose.msra.mxu0 0.0
        %3459 = vmatprep.subr.mxu0 0.0
        %3460 = vmatpush1.xpose.msra.mxu0 0.0
        %3461 = vmatprep.subr.mxu0 0.0
        %3462 = vmatpush1.xpose.msra.mxu0 0.0
        %3463 = vmatprep.subr.mxu0 0.0
        %3464 = vmatpush1.xpose.msra.mxu0 0.0
        %3465 = vmatprep.subr.mxu0 0.0
        %3466 = vmatpush1.xpose.msra.mxu0 0.0
        %3467 = vmatprep.mubr.f32.mxu0 0.0
        %3468 = vmatmul.mubr.f32.gmra.mrb[0].mxu0 %v3399
        %v3469 = vpop.f32.mrb[0].mxu0
        %v3470 = vadd.f32 0.0, %v3469
        %v3471 = vpop.f32.mrb[0].mxu0
        %3472 = vdwg.mxu0
        %3473 = vrot.lane.b32.xlu0 %v640, 112
        %v3474 = vpop.permute.xlu0 %3473
        %3475 = vrot.lane.b32.xlu0 %v640, 80
        %v3476 = vpop.permute.xlu0 %3475
        %v3477 = vsel %vm671, %v3474, 0
        %v3479 = vsel %vm671, %v3476, 0
        %3481 = vmatprep.subr.mxu0 0.0
        %3482 = vmatpush1.xpose.msra.mxu0 %v3479
        %3483 = vmatprep.subr.mxu0 0.0
        %3484 = vmatpush1.xpose.msra.mxu0 0.0
        %3485 = vmatprep.subr.mxu0 0.0
        %3486 = vmatpush1.xpose.msra.mxu0 0.0
        %3487 = vmatprep.subr.mxu0 0.0
        %3488 = vmatpush1.xpose.msra.mxu0 0.0
        %3489 = vmatprep.subr.mxu0 0.0
        %3490 = vmatpush1.xpose.msra.mxu0 0.0
        %3491 = vmatprep.subr.mxu0 0.0
        %3492 = vmatpush1.xpose.msra.mxu0 0.0
        %3493 = vmatprep.subr.mxu0 0.0
        %3494 = vmatpush1.xpose.msra.mxu0 0.0
        %3495 = vmatprep.subr.mxu0 0.0
        %3496 = vmatpush1.xpose.msra.mxu0 0.0
        %3497 = vmatprep.subr.mxu0 0.0
        %3498 = vmatpush1.xpose.msra.mxu0 0.0
        %3499 = vmatprep.subr.mxu0 0.0
        %3500 = vmatpush1.xpose.msra.mxu0 0.0
        %3501 = vmatprep.subr.mxu0 0.0
        %3502 = vmatpush1.xpose.msra.mxu0 0.0
        %3503 = vmatprep.subr.mxu0 0.0
        %3504 = vmatpush1.xpose.msra.mxu0 0.0
        %3505 = vmatprep.subr.mxu0 0.0
        %3506 = vmatpush1.xpose.msra.mxu0 0.0
        %3507 = vmatprep.subr.mxu0 0.0
        %3508 = vmatpush1.xpose.msra.mxu0 0.0
        %3509 = vmatprep.subr.mxu0 0.0
        %3510 = vmatpush1.xpose.msra.mxu0 0.0
        %3511 = vmatprep.subr.mxu0 0.0
        %3512 = vmatpush1.xpose.msra.mxu0 0.0
        %3513 = vmatprep.subr.mxu0 0.0
        %3514 = vmatpush1.xpose.msra.mxu0 0.0
        %3515 = vmatprep.subr.mxu0 0.0
        %3516 = vmatpush1.xpose.msra.mxu0 0.0
        %3517 = vmatprep.subr.mxu0 0.0
        %3518 = vmatpush1.xpose.msra.mxu0 0.0
        %3519 = vmatprep.subr.mxu0 0.0
        %3520 = vmatpush1.xpose.msra.mxu0 0.0
        %3521 = vmatprep.subr.mxu0 0.0
        %3522 = vmatpush1.xpose.msra.mxu0 0.0
        %3523 = vmatprep.subr.mxu0 0.0
        %3524 = vmatpush1.xpose.msra.mxu0 0.0
        %3525 = vmatprep.subr.mxu0 0.0
        %3526 = vmatpush1.xpose.msra.mxu0 0.0
        %3527 = vmatprep.subr.mxu0 0.0
        %3528 = vmatpush1.xpose.msra.mxu0 0.0
        %3529 = vmatprep.subr.mxu0 0.0
        %3530 = vmatpush1.xpose.msra.mxu0 0.0
        %3531 = vmatprep.subr.mxu0 0.0
        %3532 = vmatpush1.xpose.msra.mxu0 0.0
        %3533 = vmatprep.subr.mxu0 0.0
        %3534 = vmatpush1.xpose.msra.mxu0 0.0
        %3535 = vmatprep.subr.mxu0 0.0
        %3536 = vmatpush1.xpose.msra.mxu0 0.0
        %3537 = vmatprep.subr.mxu0 0.0
        %3538 = vmatpush1.xpose.msra.mxu0 0.0
        %3539 = vmatprep.subr.mxu0 0.0
        %3540 = vmatpush1.xpose.msra.mxu0 0.0
        %3541 = vmatprep.subr.mxu0 0.0
        %3542 = vmatpush1.xpose.msra.mxu0 0.0
        %3543 = vmatprep.subr.mxu0 0.0
        %3544 = vmatpush1.xpose.msra.mxu0 0.0
        %3545 = vmatprep.mubr.f32.mxu0 0.0
        %3546 = vmatmul.mubr.f32.gmra.mrb[0].mxu0 %v3477
        %v3547 = vpop.f32.mrb[0].mxu0
        %v3548 = vadd.f32 0.0, %v3547
        %v3549 = vpop.f32.mrb[0].mxu0
        %3550 = vdwg.mxu0
        %3551 = vrot.lane.b32.xlu0 %v645, 112
        %v3552 = vpop.permute.xlu0 %3551
        %3553 = vrot.lane.b32.xlu0 %v645, 80
        %v3554 = vpop.permute.xlu0 %3553
        %v3555 = vsel %vm671, %v3552, 0
        %v3557 = vsel %vm671, %v3554, 0
        %3559 = vmatprep.subr.mxu0 0.0
        %3560 = vmatpush1.xpose.msra.mxu0 %v3557
        %3561 = vmatprep.subr.mxu0 0.0
        %3562 = vmatpush1.xpose.msra.mxu0 0.0
        %3563 = vmatprep.subr.mxu0 0.0
        %3564 = vmatpush1.xpose.msra.mxu0 0.0
        %3565 = vmatprep.subr.mxu0 0.0
        %3566 = vmatpush1.xpose.msra.mxu0 0.0
        %3567 = vmatprep.subr.mxu0 0.0
        %3568 = vmatpush1.xpose.msra.mxu0 0.0
        %3569 = vmatprep.subr.mxu0 0.0
        %3570 = vmatpush1.xpose.msra.mxu0 0.0
        %3571 = vmatprep.subr.mxu0 0.0
        %3572 = vmatpush1.xpose.msra.mxu0 0.0
        %3573 = vmatprep.subr.mxu0 0.0
        %3574 = vmatpush1.xpose.msra.mxu0 0.0
        %3575 = vmatprep.subr.mxu0 0.0
        %3576 = vmatpush1.xpose.msra.mxu0 0.0
        %3577 = vmatprep.subr.mxu0 0.0
        %3578 = vmatpush1.xpose.msra.mxu0 0.0
        %3579 = vmatprep.subr.mxu0 0.0
        %3580 = vmatpush1.xpose.msra.mxu0 0.0
        %3581 = vmatprep.subr.mxu0 0.0
        %3582 = vmatpush1.xpose.msra.mxu0 0.0
        %3583 = vmatprep.subr.mxu0 0.0
        %3584 = vmatpush1.xpose.msra.mxu0 0.0
        %3585 = vmatprep.subr.mxu0 0.0
        %3586 = vmatpush1.xpose.msra.mxu0 0.0
        %3587 = vmatprep.subr.mxu0 0.0
        %3588 = vmatpush1.xpose.msra.mxu0 0.0
        %3589 = vmatprep.subr.mxu0 0.0
        %3590 = vmatpush1.xpose.msra.mxu0 0.0
        %3591 = vmatprep.subr.mxu0 0.0
        %3592 = vmatpush1.xpose.msra.mxu0 0.0
        %3593 = vmatprep.subr.mxu0 0.0
        %3594 = vmatpush1.xpose.msra.mxu0 0.0
        %3595 = vmatprep.subr.mxu0 0.0
        %3596 = vmatpush1.xpose.msra.mxu0 0.0
        %3597 = vmatprep.subr.mxu0 0.0
        %3598 = vmatpush1.xpose.msra.mxu0 0.0
        %3599 = vmatprep.subr.mxu0 0.0
        %3600 = vmatpush1.xpose.msra.mxu0 0.0
        %3601 = vmatprep.subr.mxu0 0.0
        %3602 = vmatpush1.xpose.msra.mxu0 0.0
        %3603 = vmatprep.subr.mxu0 0.0
        %3604 = vmatpush1.xpose.msra.mxu0 0.0
        %3605 = vmatprep.subr.mxu0 0.0
        %3606 = vmatpush1.xpose.msra.mxu0 0.0
        %3607 = vmatprep.subr.mxu0 0.0
        %3608 = vmatpush1.xpose.msra.mxu0 0.0
        %3609 = vmatprep.subr.mxu0 0.0
        %3610 = vmatpush1.xpose.msra.mxu0 0.0
        %3611 = vmatprep.subr.mxu0 0.0
        %3612 = vmatpush1.xpose.msra.mxu0 0.0
        %3613 = vmatprep.subr.mxu0 0.0
        %3614 = vmatpush1.xpose.msra.mxu0 0.0
        %3615 = vmatprep.subr.mxu0 0.0
        %3616 = vmatpush1.xpose.msra.mxu0 0.0
        %3617 = vmatprep.subr.mxu0 0.0
        %3618 = vmatpush1.xpose.msra.mxu0 0.0
        %3619 = vmatprep.subr.mxu0 0.0
        %3620 = vmatpush1.xpose.msra.mxu0 0.0
        %3621 = vmatprep.subr.mxu0 0.0
        %3622 = vmatpush1.xpose.msra.mxu0 0.0
        %3623 = vmatprep.mubr.f32.mxu0 0.0
        %3624 = vmatmul.mubr.f32.gmra.mrb[0].mxu0 %v3555
        %v3625 = vpop.f32.mrb[0].mxu0
        %v3626 = vadd.f32 0.0, %v3625
        %v3627 = vpop.f32.mrb[0].mxu0
        %3628 = vdwg.mxu0
        %3629 = vrot.lane.b32.xlu0 %v650, 112
        %v3630 = vpop.permute.xlu0 %3629
        %3631 = vrot.lane.b32.xlu0 %v650, 80
        %v3632 = vpop.permute.xlu0 %3631
        %v3633 = vsel %vm671, %v3630, 0
        %v3635 = vsel %vm671, %v3632, 0
        %3637 = vmatprep.subr.mxu0 0.0
        %3638 = vmatpush1.xpose.msra.mxu0 %v3635
        %3639 = vmatprep.subr.mxu0 0.0
        %3640 = vmatpush1.xpose.msra.mxu0 0.0
        %3641 = vmatprep.subr.mxu0 0.0
        %3642 = vmatpush1.xpose.msra.mxu0 0.0
        %3643 = vmatprep.subr.mxu0 0.0
        %3644 = vmatpush1.xpose.msra.mxu0 0.0
        %3645 = vmatprep.subr.mxu0 0.0
        %3646 = vmatpush1.xpose.msra.mxu0 0.0
        %3647 = vmatprep.subr.mxu0 0.0
        %3648 = vmatpush1.xpose.msra.mxu0 0.0
        %3649 = vmatprep.subr.mxu0 0.0
        %3650 = vmatpush1.xpose.msra.mxu0 0.0
        %3651 = vmatprep.subr.mxu0 0.0
        %3652 = vmatpush1.xpose.msra.mxu0 0.0
        %3653 = vmatprep.subr.mxu0 0.0
        %3654 = vmatpush1.xpose.msra.mxu0 0.0
        %3655 = vmatprep.subr.mxu0 0.0
        %3656 = vmatpush1.xpose.msra.mxu0 0.0
        %3657 = vmatprep.subr.mxu0 0.0
        %3658 = vmatpush1.xpose.msra.mxu0 0.0
        %3659 = vmatprep.subr.mxu0 0.0
        %3660 = vmatpush1.xpose.msra.mxu0 0.0
        %3661 = vmatprep.subr.mxu0 0.0
        %3662 = vmatpush1.xpose.msra.mxu0 0.0
        %3663 = vmatprep.subr.mxu0 0.0
        %3664 = vmatpush1.xpose.msra.mxu0 0.0
        %3665 = vmatprep.subr.mxu0 0.0
        %3666 = vmatpush1.xpose.msra.mxu0 0.0
        %3667 = vmatprep.subr.mxu0 0.0
        %3668 = vmatpush1.xpose.msra.mxu0 0.0
        %3669 = vmatprep.subr.mxu0 0.0
        %3670 = vmatpush1.xpose.msra.mxu0 0.0
        %3671 = vmatprep.subr.mxu0 0.0
        %3672 = vmatpush1.xpose.msra.mxu0 0.0
        %3673 = vmatprep.subr.mxu0 0.0
        %3674 = vmatpush1.xpose.msra.mxu0 0.0
        %3675 = vmatprep.subr.mxu0 0.0
        %3676 = vmatpush1.xpose.msra.mxu0 0.0
        %3677 = vmatprep.subr.mxu0 0.0
        %3678 = vmatpush1.xpose.msra.mxu0 0.0
        %3679 = vmatprep.subr.mxu0 0.0
        %3680 = vmatpush1.xpose.msra.mxu0 0.0
        %3681 = vmatprep.subr.mxu0 0.0
        %3682 = vmatpush1.xpose.msra.mxu0 0.0
        %3683 = vmatprep.subr.mxu0 0.0
        %3684 = vmatpush1.xpose.msra.mxu0 0.0
        %3685 = vmatprep.subr.mxu0 0.0
        %3686 = vmatpush1.xpose.msra.mxu0 0.0
        %3687 = vmatprep.subr.mxu0 0.0
        %3688 = vmatpush1.xpose.msra.mxu0 0.0
        %3689 = vmatprep.subr.mxu0 0.0
        %3690 = vmatpush1.xpose.msra.mxu0 0.0
        %3691 = vmatprep.subr.mxu0 0.0
        %3692 = vmatpush1.xpose.msra.mxu0 0.0
        %3693 = vmatprep.subr.mxu0 0.0
        %3694 = vmatpush1.xpose.msra.mxu0 0.0
        %3695 = vmatprep.subr.mxu0 0.0
        %3696 = vmatpush1.xpose.msra.mxu0 0.0
        %3697 = vmatprep.subr.mxu0 0.0
        %3698 = vmatpush1.xpose.msra.mxu0 0.0
        %3699 = vmatprep.subr.mxu0 0.0
        %3700 = vmatpush1.xpose.msra.mxu0 0.0
        %3701 = vmatprep.mubr.f32.mxu0 0.0
        %3702 = vmatmul.mubr.f32.gmra.mrb[0].mxu0 %v3633
        %v3703 = vpop.f32.mrb[0].mxu0
        %v3704 = vadd.f32 0.0, %v3703
        %v3705 = vpop.f32.mrb[0].mxu0
        %3706 = vdwg.mxu0
        %3707 = vrot.lane.b32.xlu0 %v655, 112
        %v3708 = vpop.permute.xlu0 %3707
        %3709 = vrot.lane.b32.xlu0 %v655, 80
        %v3710 = vpop.permute.xlu0 %3709
        %v3711 = vsel %vm671, %v3708, 0
        %v3713 = vsel %vm671, %v3710, 0
        %3715 = vmatprep.subr.mxu0 0.0
        %3716 = vmatpush1.xpose.msra.mxu0 %v3713
        %3717 = vmatprep.subr.mxu0 0.0
        %3718 = vmatpush1.xpose.msra.mxu0 0.0
        %3719 = vmatprep.subr.mxu0 0.0
        %3720 = vmatpush1.xpose.msra.mxu0 0.0
        %3721 = vmatprep.subr.mxu0 0.0
        %3722 = vmatpush1.xpose.msra.mxu0 0.0
        %3723 = vmatprep.subr.mxu0 0.0
        %3724 = vmatpush1.xpose.msra.mxu0 0.0
        %3725 = vmatprep.subr.mxu0 0.0
        %3726 = vmatpush1.xpose.msra.mxu0 0.0
        %3727 = vmatprep.subr.mxu0 0.0
        %3728 = vmatpush1.xpose.msra.mxu0 0.0
        %3729 = vmatprep.subr.mxu0 0.0
        %3730 = vmatpush1.xpose.msra.mxu0 0.0
        %3731 = vmatprep.subr.mxu0 0.0
        %3732 = vmatpush1.xpose.msra.mxu0 0.0
        %3733 = vmatprep.subr.mxu0 0.0
        %3734 = vmatpush1.xpose.msra.mxu0 0.0
        %3735 = vmatprep.subr.mxu0 0.0
        %3736 = vmatpush1.xpose.msra.mxu0 0.0
        %3737 = vmatprep.subr.mxu0 0.0
        %3738 = vmatpush1.xpose.msra.mxu0 0.0
        %3739 = vmatprep.subr.mxu0 0.0
        %3740 = vmatpush1.xpose.msra.mxu0 0.0
        %3741 = vmatprep.subr.mxu0 0.0
        %3742 = vmatpush1.xpose.msra.mxu0 0.0
        %3743 = vmatprep.subr.mxu0 0.0
        %3744 = vmatpush1.xpose.msra.mxu0 0.0
        %3745 = vmatprep.subr.mxu0 0.0
        %3746 = vmatpush1.xpose.msra.mxu0 0.0
        %3747 = vmatprep.subr.mxu0 0.0
        %3748 = vmatpush1.xpose.msra.mxu0 0.0
        %3749 = vmatprep.subr.mxu0 0.0
        %3750 = vmatpush1.xpose.msra.mxu0 0.0
        %3751 = vmatprep.subr.mxu0 0.0
        %3752 = vmatpush1.xpose.msra.mxu0 0.0
        %3753 = vmatprep.subr.mxu0 0.0
        %3754 = vmatpush1.xpose.msra.mxu0 0.0
        %3755 = vmatprep.subr.mxu0 0.0
        %3756 = vmatpush1.xpose.msra.mxu0 0.0
        %3757 = vmatprep.subr.mxu0 0.0
        %3758 = vmatpush1.xpose.msra.mxu0 0.0
        %3759 = vmatprep.subr.mxu0 0.0
        %3760 = vmatpush1.xpose.msra.mxu0 0.0
        %3761 = vmatprep.subr.mxu0 0.0
        %3762 = vmatpush1.xpose.msra.mxu0 0.0
        %3763 = vmatprep.subr.mxu0 0.0
        %3764 = vmatpush1.xpose.msra.mxu0 0.0
        %3765 = vmatprep.subr.mxu0 0.0
        %3766 = vmatpush1.xpose.msra.mxu0 0.0
        %3767 = vmatprep.subr.mxu0 0.0
        %3768 = vmatpush1.xpose.msra.mxu0 0.0
        %3769 = vmatprep.subr.mxu0 0.0
        %3770 = vmatpush1.xpose.msra.mxu0 0.0
        %3771 = vmatprep.subr.mxu0 0.0
        %3772 = vmatpush1.xpose.msra.mxu0 0.0
        %3773 = vmatprep.subr.mxu0 0.0
        %3774 = vmatpush1.xpose.msra.mxu0 0.0
        %3775 = vmatprep.subr.mxu0 0.0
        %3776 = vmatpush1.xpose.msra.mxu0 0.0
        %3777 = vmatprep.subr.mxu0 0.0
        %3778 = vmatpush1.xpose.msra.mxu0 0.0
        %3779 = vmatprep.mubr.f32.mxu0 0.0
        %3780 = vmatmul.mubr.f32.gmra.mrb[0].mxu0 %v3711
        %v3781 = vpop.f32.mrb[0].mxu0
        %v3782 = vadd.f32 0.0, %v3781
        %v3783 = vpop.f32.mrb[0].mxu0
        %3784 = vdwg.mxu0
        %3785 = vrot.lane.b32.xlu0 %v660, 112
        %v3786 = vpop.permute.xlu0 %3785
        %3787 = vrot.lane.b32.xlu0 %v660, 80
        %v3788 = vpop.permute.xlu0 %3787
        %v3789 = vsel %vm671, %v3786, 0
        %v3791 = vsel %vm671, %v3788, 0
        %3793 = vmatprep.subr.mxu0 0.0
        %3794 = vmatpush1.xpose.msra.mxu0 %v3791
        %3795 = vmatprep.subr.mxu0 0.0
        %3796 = vmatpush1.xpose.msra.mxu0 0.0
        %3797 = vmatprep.subr.mxu0 0.0
        %3798 = vmatpush1.xpose.msra.mxu0 0.0
        %3799 = vmatprep.subr.mxu0 0.0
        %3800 = vmatpush1.xpose.msra.mxu0 0.0
        %3801 = vmatprep.subr.mxu0 0.0
        %3802 = vmatpush1.xpose.msra.mxu0 0.0
        %3803 = vmatprep.subr.mxu0 0.0
        %3804 = vmatpush1.xpose.msra.mxu0 0.0
        %3805 = vmatprep.subr.mxu0 0.0
        %3806 = vmatpush1.xpose.msra.mxu0 0.0
        %3807 = vmatprep.subr.mxu0 0.0
        %3808 = vmatpush1.xpose.msra.mxu0 0.0
        %3809 = vmatprep.subr.mxu0 0.0
        %3810 = vmatpush1.xpose.msra.mxu0 0.0
        %3811 = vmatprep.subr.mxu0 0.0
        %3812 = vmatpush1.xpose.msra.mxu0 0.0
        %3813 = vmatprep.subr.mxu0 0.0
        %3814 = vmatpush1.xpose.msra.mxu0 0.0
        %3815 = vmatprep.subr.mxu0 0.0
        %3816 = vmatpush1.xpose.msra.mxu0 0.0
        %3817 = vmatprep.subr.mxu0 0.0
        %3818 = vmatpush1.xpose.msra.mxu0 0.0
        %3819 = vmatprep.subr.mxu0 0.0
        %3820 = vmatpush1.xpose.msra.mxu0 0.0
        %3821 = vmatprep.subr.mxu0 0.0
        %3822 = vmatpush1.xpose.msra.mxu0 0.0
        %3823 = vmatprep.subr.mxu0 0.0
        %3824 = vmatpush1.xpose.msra.mxu0 0.0
        %3825 = vmatprep.subr.mxu0 0.0
        %3826 = vmatpush1.xpose.msra.mxu0 0.0
        %3827 = vmatprep.subr.mxu0 0.0
        %3828 = vmatpush1.xpose.msra.mxu0 0.0
        %3829 = vmatprep.subr.mxu0 0.0
        %3830 = vmatpush1.xpose.msra.mxu0 0.0
        %3831 = vmatprep.subr.mxu0 0.0
        %3832 = vmatpush1.xpose.msra.mxu0 0.0
        %3833 = vmatprep.subr.mxu0 0.0
        %3834 = vmatpush1.xpose.msra.mxu0 0.0
        %3835 = vmatprep.subr.mxu0 0.0
        %3836 = vmatpush1.xpose.msra.mxu0 0.0
        %3837 = vmatprep.subr.mxu0 0.0
        %3838 = vmatpush1.xpose.msra.mxu0 0.0
        %3839 = vmatprep.subr.mxu0 0.0
        %3840 = vmatpush1.xpose.msra.mxu0 0.0
        %3841 = vmatprep.subr.mxu0 0.0
        %3842 = vmatpush1.xpose.msra.mxu0 0.0
        %3843 = vmatprep.subr.mxu0 0.0
        %3844 = vmatpush1.xpose.msra.mxu0 0.0
        %3845 = vmatprep.subr.mxu0 0.0
        %3846 = vmatpush1.xpose.msra.mxu0 0.0
        %3847 = vmatprep.subr.mxu0 0.0
        %3848 = vmatpush1.xpose.msra.mxu0 0.0
        %3849 = vmatprep.subr.mxu0 0.0
        %3850 = vmatpush1.xpose.msra.mxu0 0.0
        %3851 = vmatprep.subr.mxu0 0.0
        %3852 = vmatpush1.xpose.msra.mxu0 0.0
        %3853 = vmatprep.subr.mxu0 0.0
        %3854 = vmatpush1.xpose.msra.mxu0 0.0
        %3855 = vmatprep.subr.mxu0 0.0
        %3856 = vmatpush1.xpose.msra.mxu0 0.0
        %3857 = vmatprep.mubr.f32.mxu0 0.0
        %3858 = vmatmul.mubr.f32.gmra.mrb[0].mxu0 %v3789
        %v3859 = vpop.f32.mrb[0].mxu0
        %v3860 = vadd.f32 0.0, %v3859
        %v3861 = vpop.f32.mrb[0].mxu0
        %3862 = vdwg.mxu0
        %3863 = vrot.lane.b32.xlu0 %v665, 112
        %v3864 = vpop.permute.xlu0 %3863
        %3865 = vrot.lane.b32.xlu0 %v665, 80
        %v3866 = vpop.permute.xlu0 %3865
        %v3867 = vsel %vm671, %v3864, 0
        %v3869 = vsel %vm671, %v3866, 0
        %3871 = vmatprep.subr.mxu0 0.0
        %3872 = vmatpush1.xpose.msra.mxu0 %v3869
        %3873 = vmatprep.subr.mxu0 0.0
        %3874 = vmatpush1.xpose.msra.mxu0 0.0
        %3875 = vmatprep.subr.mxu0 0.0
        %3876 = vmatpush1.xpose.msra.mxu0 0.0
        %3877 = vmatprep.subr.mxu0 0.0
        %3878 = vmatpush1.xpose.msra.mxu0 0.0
        %3879 = vmatprep.subr.mxu0 0.0
        %3880 = vmatpush1.xpose.msra.mxu0 0.0
        %3881 = vmatprep.subr.mxu0 0.0
        %3882 = vmatpush1.xpose.msra.mxu0 0.0
        %3883 = vmatprep.subr.mxu0 0.0
        %3884 = vmatpush1.xpose.msra.mxu0 0.0
        %3885 = vmatprep.subr.mxu0 0.0
        %3886 = vmatpush1.xpose.msra.mxu0 0.0
        %3887 = vmatprep.subr.mxu0 0.0
        %3888 = vmatpush1.xpose.msra.mxu0 0.0
        %3889 = vmatprep.subr.mxu0 0.0
        %3890 = vmatpush1.xpose.msra.mxu0 0.0
        %3891 = vmatprep.subr.mxu0 0.0
        %3892 = vmatpush1.xpose.msra.mxu0 0.0
        %3893 = vmatprep.subr.mxu0 0.0
        %3894 = vmatpush1.xpose.msra.mxu0 0.0
        %3895 = vmatprep.subr.mxu0 0.0
        %3896 = vmatpush1.xpose.msra.mxu0 0.0
        %3897 = vmatprep.subr.mxu0 0.0
        %3898 = vmatpush1.xpose.msra.mxu0 0.0
        %3899 = vmatprep.subr.mxu0 0.0
        %3900 = vmatpush1.xpose.msra.mxu0 0.0
        %3901 = vmatprep.subr.mxu0 0.0
        %3902 = vmatpush1.xpose.msra.mxu0 0.0
        %3903 = vmatprep.subr.mxu0 0.0
        %3904 = vmatpush1.xpose.msra.mxu0 0.0
        %3905 = vmatprep.subr.mxu0 0.0
        %3906 = vmatpush1.xpose.msra.mxu0 0.0
        %3907 = vmatprep.subr.mxu0 0.0
        %3908 = vmatpush1.xpose.msra.mxu0 0.0
        %3909 = vmatprep.subr.mxu0 0.0
        %3910 = vmatpush1.xpose.msra.mxu0 0.0
        %3911 = vmatprep.subr.mxu0 0.0
        %3912 = vmatpush1.xpose.msra.mxu0 0.0
        %3913 = vmatprep.subr.mxu0 0.0
        %3914 = vmatpush1.xpose.msra.mxu0 0.0
        %3915 = vmatprep.subr.mxu0 0.0
        %3916 = vmatpush1.xpose.msra.mxu0 0.0
        %3917 = vmatprep.subr.mxu0 0.0
        %3918 = vmatpush1.xpose.msra.mxu0 0.0
        %3919 = vmatprep.subr.mxu0 0.0
        %3920 = vmatpush1.xpose.msra.mxu0 0.0
        %3921 = vmatprep.subr.mxu0 0.0
        %3922 = vmatpush1.xpose.msra.mxu0 0.0
        %3923 = vmatprep.subr.mxu0 0.0
        %3924 = vmatpush1.xpose.msra.mxu0 0.0
        %3925 = vmatprep.subr.mxu0 0.0
        %3926 = vmatpush1.xpose.msra.mxu0 0.0
        %3927 = vmatprep.subr.mxu0 0.0
        %3928 = vmatpush1.xpose.msra.mxu0 0.0
        %3929 = vmatprep.subr.mxu0 0.0
        %3930 = vmatpush1.xpose.msra.mxu0 0.0
        %3931 = vmatprep.subr.mxu0 0.0
        %3932 = vmatpush1.xpose.msra.mxu0 0.0
        %3933 = vmatprep.subr.mxu0 0.0
        %3934 = vmatpush1.xpose.msra.mxu0 0.0
        %3935 = vmatprep.mubr.f32.mxu0 0.0
        %3936 = vmatmul.mubr.f32.gmra.mrb[0].mxu0 %v3867
        %v3937 = vpop.f32.mrb[0].mxu0
        %v3938 = vadd.f32 0.0, %v3937
        %v3939 = vpop.f32.mrb[0].mxu0
        %3940 = vdwg.mxu0
        %v3941 = vmul.f32 %v3392, 0.35355338
        %v3942 = vmul.f32 %v3470, 0.35355338
        %v3943 = vmul.f32 %v3548, 0.35355338
        %v3944 = vmul.f32 %v3626, 0.35355338
        %v3945 = vmul.f32 %v3704, 0.35355338
        %v3946 = vmul.f32 %v3782, 0.35355338
        %v3947 = vmul.f32 %v3860, 0.35355338
        %v3948 = vmul.f32 %v3938, 0.35355338
        %v3949 = vsel %vm671, %v3941, -inf
        %3950 = vmax.xlane.f32.xlu0 %v3949
        %v3951 = vpop.xlane.xlu0 %3950
        %v3952 = vsel %vm671, %v3942, -inf
        %3953 = vmax.xlane.f32.xlu0 %v3952
        %v3954 = vpop.xlane.xlu0 %3953
        %v3955 = vsel %vm671, %v3943, -inf
        %3956 = vmax.xlane.f32.xlu0 %v3955
        %v3957 = vpop.xlane.xlu0 %3956
        %v3958 = vsel %vm671, %v3944, -inf
        %3959 = vmax.xlane.f32.xlu0 %v3958
        %v3960 = vpop.xlane.xlu0 %3959
        %v3961 = vsel %vm671, %v3945, -inf
        %3962 = vmax.xlane.f32.xlu0 %v3961
        %v3963 = vpop.xlane.xlu0 %3962
        %v3964 = vsel %vm671, %v3946, -inf
        %3965 = vmax.xlane.f32.xlu0 %v3964
        %v3966 = vpop.xlane.xlu0 %3965
        %v3967 = vsel %vm671, %v3947, -inf
        %3968 = vmax.xlane.f32.xlu0 %v3967
        %v3969 = vpop.xlane.xlu0 %3968
        %v3970 = vsel %vm671, %v3948, -inf
        %3971 = vmax.xlane.f32.xlu0 %v3970
        %v3972 = vpop.xlane.xlu0 %3971
        %v3973 = vsub.f32 %v3941, %v3951
        %v3974 = vsub.f32 %v3942, %v3954
        %v3975 = vsub.f32 %v3943, %v3957
        %v3976 = vsub.f32 %v3944, %v3960
        %v3977 = vsub.f32 %v3945, %v3963
        %v3978 = vsub.f32 %v3946, %v3966
        %v3979 = vsub.f32 %v3947, %v3969
        %v3980 = vsub.f32 %v3948, %v3972
        %v3981 = vmul.f32 %v3973, 1.442695
        %v3982 = vpow.pop %v3981
        %v3983 = vmul.f32 %v3974, 1.442695
        %v3984 = vpow.pop %v3983
        %v3985 = vmul.f32 %v3975, 1.442695
        %v3986 = vpow.pop %v3985
        %v3987 = vmul.f32 %v3976, 1.442695
        %v3988 = vpow.pop %v3987
        %v3989 = vmul.f32 %v3977, 1.442695
        %v3990 = vpow.pop %v3989
        %v3991 = vmul.f32 %v3978, 1.442695
        %v3992 = vpow.pop %v3991
        %v3993 = vmul.f32 %v3979, 1.442695
        %v3994 = vpow.pop %v3993
        %v3995 = vmul.f32 %v3980, 1.442695
        %v3996 = vpow.pop %v3995
        %v3997 = vsel %vm671, %v3982, 0.0
        %3998 = vadd.xlane.f32.xlu0 %v3997
        %v3999 = vpop.xlane.xlu0 %3998
        %v4000 = vsel %vm671, %v3984, 0.0
        %4001 = vadd.xlane.f32.xlu0 %v4000
        %v4002 = vpop.xlane.xlu0 %4001
        %v4003 = vsel %vm671, %v3986, 0.0
        %4004 = vadd.xlane.f32.xlu0 %v4003
        %v4005 = vpop.xlane.xlu0 %4004
        %v4006 = vsel %vm671, %v3988, 0.0
        %4007 = vadd.xlane.f32.xlu0 %v4006
        %v4008 = vpop.xlane.xlu0 %4007
        %v4009 = vsel %vm671, %v3990, 0.0
        %4010 = vadd.xlane.f32.xlu0 %v4009
        %v4011 = vpop.xlane.xlu0 %4010
        %v4012 = vsel %vm671, %v3992, 0.0
        %4013 = vadd.xlane.f32.xlu0 %v4012
        %v4014 = vpop.xlane.xlu0 %4013
        %v4015 = vsel %vm671, %v3994, 0.0
        %4016 = vadd.xlane.f32.xlu0 %v4015
        %v4017 = vpop.xlane.xlu0 %4016
        %v4018 = vsel %vm671, %v3996, 0.0
        %4019 = vadd.xlane.f32.xlu0 %v4018
        %v4020 = vpop.xlane.xlu0 %4019
        %v4021 = vrcp.pop %v3999
        %v4022 = vrcp.pop %v4002
        %v4023 = vrcp.pop %v4005
        %v4024 = vrcp.pop %v4008
        %v4025 = vrcp.pop %v4011
        %v4026 = vrcp.pop %v4014
        %v4027 = vrcp.pop %v4017
        %v4028 = vrcp.pop %v4020
        %v4029 = vmul.f32 %v3982, %v4021
        %v4030 = vmul.f32 %v3984, %v4022
        %v4031 = vmul.f32 %v3986, %v4023
        %v4032 = vmul.f32 %v3988, %v4024
        %v4033 = vmul.f32 %v3990, %v4025
        %v4034 = vmul.f32 %v3992, %v4026
        %v4035 = vmul.f32 %v3994, %v4027
        %v4036 = vmul.f32 %v3996, %v4028
        %4037 = vrot.lane.b32.xlu0 %v630, 48
        %v4038 = vpop.permute.xlu0 %4037
        %v4041 = vsel %vm671, %v4029, 0
        %4043 = vmatprep.subr.mxu0 0.0
        %4044 = vmatpush1.msra.mxu0 %v4038
        %4045 = vmatprep.subr.mxu0 0.0
        %4046 = vmatpush1.msra.mxu0 0.0
        %4047 = vmatprep.subr.mxu0 0.0
        %4048 = vmatpush1.msra.mxu0 0.0
        %4049 = vmatprep.subr.mxu0 0.0
        %4050 = vmatpush1.msra.mxu0 0.0
        %4051 = vmatprep.subr.mxu0 0.0
        %4052 = vmatpush1.msra.mxu0 0.0
        %4053 = vmatprep.subr.mxu0 0.0
        %4054 = vmatpush1.msra.mxu0 0.0
        %4055 = vmatprep.subr.mxu0 0.0
        %4056 = vmatpush1.msra.mxu0 0.0
        %4057 = vmatprep.subr.mxu0 0.0
        %4058 = vmatpush1.msra.mxu0 0.0
        %4059 = vmatprep.subr.mxu0 0.0
        %4060 = vmatpush1.msra.mxu0 0.0
        %4061 = vmatprep.subr.mxu0 0.0
        %4062 = vmatpush1.msra.mxu0 0.0
        %4063 = vmatprep.subr.mxu0 0.0
        %4064 = vmatpush1.msra.mxu0 0.0
        %4065 = vmatprep.subr.mxu0 0.0
        %4066 = vmatpush1.msra.mxu0 0.0
        %4067 = vmatprep.subr.mxu0 0.0
        %4068 = vmatpush1.msra.mxu0 0.0
        %4069 = vmatprep.subr.mxu0 0.0
        %4070 = vmatpush1.msra.mxu0 0.0
        %4071 = vmatprep.subr.mxu0 0.0
        %4072 = vmatpush1.msra.mxu0 0.0
        %4073 = vmatprep.subr.mxu0 0.0
        %4074 = vmatpush1.msra.mxu0 0.0
        %4075 = vmatprep.subr.mxu0 0.0
        %4076 = vmatpush1.msra.mxu0 0.0
        %4077 = vmatprep.subr.mxu0 0.0
        %4078 = vmatpush1.msra.mxu0 0.0
        %4079 = vmatprep.subr.mxu0 0.0
        %4080 = vmatpush1.msra.mxu0 0.0
        %4081 = vmatprep.subr.mxu0 0.0
        %4082 = vmatpush1.msra.mxu0 0.0
        %4083 = vmatprep.subr.mxu0 0.0
        %4084 = vmatpush1.msra.mxu0 0.0
        %4085 = vmatprep.subr.mxu0 0.0
        %4086 = vmatpush1.msra.mxu0 0.0
        %4087 = vmatprep.subr.mxu0 0.0
        %4088 = vmatpush1.msra.mxu0 0.0
        %4089 = vmatprep.subr.mxu0 0.0
        %4090 = vmatpush1.msra.mxu0 0.0
        %4091 = vmatprep.subr.mxu0 0.0
        %4092 = vmatpush1.msra.mxu0 0.0
        %4093 = vmatprep.subr.mxu0 0.0
        %4094 = vmatpush1.msra.mxu0 0.0
        %4095 = vmatprep.subr.mxu0 0.0
        %4096 = vmatpush1.msra.mxu0 0.0
        %4097 = vmatprep.subr.mxu0 0.0
        %4098 = vmatpush1.msra.mxu0 0.0
        %4099 = vmatprep.subr.mxu0 0.0
        %4100 = vmatpush1.msra.mxu0 0.0
        %4101 = vmatprep.subr.mxu0 0.0
        %4102 = vmatpush1.msra.mxu0 0.0
        %4103 = vmatprep.subr.mxu0 0.0
        %4104 = vmatpush1.msra.mxu0 0.0
        %4105 = vmatprep.subr.mxu0 0.0
        %4106 = vmatpush1.msra.mxu0 0.0
        %4107 = vmatprep.mubr.f32.mxu0 0.0
        %4108 = vmatmul.mubr.f32.gmra.mrb[0].mxu0 %v4041
        %v4109 = vpop.f32.mrb[0].mxu0
        %v4110 = vadd.f32 0.0, %v4109
        %v4111 = vpop.f32.mrb[0].mxu0
        %4112 = vdwg.mxu0
        %4113 = vrot.lane.b32.xlu0 %v635, 48
        %v4114 = vpop.permute.xlu0 %4113
        %v4117 = vsel %vm671, %v4030, 0
        %4119 = vmatprep.subr.mxu0 0.0
        %4120 = vmatpush1.msra.mxu0 %v4114
        %4121 = vmatprep.subr.mxu0 0.0
        %4122 = vmatpush1.msra.mxu0 0.0
        %4123 = vmatprep.subr.mxu0 0.0
        %4124 = vmatpush1.msra.mxu0 0.0
        %4125 = vmatprep.subr.mxu0 0.0
        %4126 = vmatpush1.msra.mxu0 0.0
        %4127 = vmatprep.subr.mxu0 0.0
        %4128 = vmatpush1.msra.mxu0 0.0
        %4129 = vmatprep.subr.mxu0 0.0
        %4130 = vmatpush1.msra.mxu0 0.0
        %4131 = vmatprep.subr.mxu0 0.0
        %4132 = vmatpush1.msra.mxu0 0.0
        %4133 = vmatprep.subr.mxu0 0.0
        %4134 = vmatpush1.msra.mxu0 0.0
        %4135 = vmatprep.subr.mxu0 0.0
        %4136 = vmatpush1.msra.mxu0 0.0
        %4137 = vmatprep.subr.mxu0 0.0
        %4138 = vmatpush1.msra.mxu0 0.0
        %4139 = vmatprep.subr.mxu0 0.0
        %4140 = vmatpush1.msra.mxu0 0.0
        %4141 = vmatprep.subr.mxu0 0.0
        %4142 = vmatpush1.msra.mxu0 0.0
        %4143 = vmatprep.subr.mxu0 0.0
        %4144 = vmatpush1.msra.mxu0 0.0
        %4145 = vmatprep.subr.mxu0 0.0
        %4146 = vmatpush1.msra.mxu0 0.0
        %4147 = vmatprep.subr.mxu0 0.0
        %4148 = vmatpush1.msra.mxu0 0.0
        %4149 = vmatprep.subr.mxu0 0.0
        %4150 = vmatpush1.msra.mxu0 0.0
        %4151 = vmatprep.subr.mxu0 0.0
        %4152 = vmatpush1.msra.mxu0 0.0
        %4153 = vmatprep.subr.mxu0 0.0
        %4154 = vmatpush1.msra.mxu0 0.0
        %4155 = vmatprep.subr.mxu0 0.0
        %4156 = vmatpush1.msra.mxu0 0.0
        %4157 = vmatprep.subr.mxu0 0.0
        %4158 = vmatpush1.msra.mxu0 0.0
        %4159 = vmatprep.subr.mxu0 0.0
        %4160 = vmatpush1.msra.mxu0 0.0
        %4161 = vmatprep.subr.mxu0 0.0
        %4162 = vmatpush1.msra.mxu0 0.0
        %4163 = vmatprep.subr.mxu0 0.0
        %4164 = vmatpush1.msra.mxu0 0.0
        %4165 = vmatprep.subr.mxu0 0.0
        %4166 = vmatpush1.msra.mxu0 0.0
        %4167 = vmatprep.subr.mxu0 0.0
        %4168 = vmatpush1.msra.mxu0 0.0
        %4169 = vmatprep.subr.mxu0 0.0
        %4170 = vmatpush1.msra.mxu0 0.0
        %4171 = vmatprep.subr.mxu0 0.0
        %4172 = vmatpush1.msra.mxu0 0.0
        %4173 = vmatprep.subr.mxu0 0.0
        %4174 = vmatpush1.msra.mxu0 0.0
        %4175 = vmatprep.subr.mxu0 0.0
        %4176 = vmatpush1.msra.mxu0 0.0
        %4177 = vmatprep.subr.mxu0 0.0
        %4178 = vmatpush1.msra.mxu0 0.0
        %4179 = vmatprep.subr.mxu0 0.0
        %4180 = vmatpush1.msra.mxu0 0.0
        %4181 = vmatprep.subr.mxu0 0.0
        %4182 = vmatpush1.msra.mxu0 0.0
        %4183 = vmatprep.mubr.f32.mxu0 0.0
        %4184 = vmatmul.mubr.f32.gmra.mrb[0].mxu0 %v4117
        %v4185 = vpop.f32.mrb[0].mxu0
        %v4186 = vadd.f32 0.0, %v4185
        %v4187 = vpop.f32.mrb[0].mxu0
        %4188 = vdwg.mxu0
        %4189 = vrot.lane.b32.xlu0 %v640, 48
        %v4190 = vpop.permute.xlu0 %4189
        %v4193 = vsel %vm671, %v4031, 0
        %4195 = vmatprep.subr.mxu0 0.0
        %4196 = vmatpush1.msra.mxu0 %v4190
        %4197 = vmatprep.subr.mxu0 0.0
        %4198 = vmatpush1.msra.mxu0 0.0
        %4199 = vmatprep.subr.mxu0 0.0
        %4200 = vmatpush1.msra.mxu0 0.0
        %4201 = vmatprep.subr.mxu0 0.0
        %4202 = vmatpush1.msra.mxu0 0.0
        %4203 = vmatprep.subr.mxu0 0.0
        %4204 = vmatpush1.msra.mxu0 0.0
        %4205 = vmatprep.subr.mxu0 0.0
        %4206 = vmatpush1.msra.mxu0 0.0
        %4207 = vmatprep.subr.mxu0 0.0
        %4208 = vmatpush1.msra.mxu0 0.0
        %4209 = vmatprep.subr.mxu0 0.0
        %4210 = vmatpush1.msra.mxu0 0.0
        %4211 = vmatprep.subr.mxu0 0.0
        %4212 = vmatpush1.msra.mxu0 0.0
        %4213 = vmatprep.subr.mxu0 0.0
        %4214 = vmatpush1.msra.mxu0 0.0
        %4215 = vmatprep.subr.mxu0 0.0
        %4216 = vmatpush1.msra.mxu0 0.0
        %4217 = vmatprep.subr.mxu0 0.0
        %4218 = vmatpush1.msra.mxu0 0.0
        %4219 = vmatprep.subr.mxu0 0.0
        %4220 = vmatpush1.msra.mxu0 0.0
        %4221 = vmatprep.subr.mxu0 0.0
        %4222 = vmatpush1.msra.mxu0 0.0
        %4223 = vmatprep.subr.mxu0 0.0
        %4224 = vmatpush1.msra.mxu0 0.0
        %4225 = vmatprep.subr.mxu0 0.0
        %4226 = vmatpush1.msra.mxu0 0.0
        %4227 = vmatprep.subr.mxu0 0.0
        %4228 = vmatpush1.msra.mxu0 0.0
        %4229 = vmatprep.subr.mxu0 0.0
        %4230 = vmatpush1.msra.mxu0 0.0
        %4231 = vmatprep.subr.mxu0 0.0
        %4232 = vmatpush1.msra.mxu0 0.0
        %4233 = vmatprep.subr.mxu0 0.0
        %4234 = vmatpush1.msra.mxu0 0.0
        %4235 = vmatprep.subr.mxu0 0.0
        %4236 = vmatpush1.msra.mxu0 0.0
        %4237 = vmatprep.subr.mxu0 0.0
        %4238 = vmatpush1.msra.mxu0 0.0
        %4239 = vmatprep.subr.mxu0 0.0
        %4240 = vmatpush1.msra.mxu0 0.0
        %4241 = vmatprep.subr.mxu0 0.0
        %4242 = vmatpush1.msra.mxu0 0.0
        %4243 = vmatprep.subr.mxu0 0.0
        %4244 = vmatpush1.msra.mxu0 0.0
        %4245 = vmatprep.subr.mxu0 0.0
        %4246 = vmatpush1.msra.mxu0 0.0
        %4247 = vmatprep.subr.mxu0 0.0
        %4248 = vmatpush1.msra.mxu0 0.0
        %4249 = vmatprep.subr.mxu0 0.0
        %4250 = vmatpush1.msra.mxu0 0.0
        %4251 = vmatprep.subr.mxu0 0.0
        %4252 = vmatpush1.msra.mxu0 0.0
        %4253 = vmatprep.subr.mxu0 0.0
        %4254 = vmatpush1.msra.mxu0 0.0
        %4255 = vmatprep.subr.mxu0 0.0
        %4256 = vmatpush1.msra.mxu0 0.0
        %4257 = vmatprep.subr.mxu0 0.0
        %4258 = vmatpush1.msra.mxu0 0.0
        %4259 = vmatprep.mubr.f32.mxu0 0.0
        %4260 = vmatmul.mubr.f32.gmra.mrb[0].mxu0 %v4193
        %v4261 = vpop.f32.mrb[0].mxu0
        %v4262 = vadd.f32 0.0, %v4261
        %v4263 = vpop.f32.mrb[0].mxu0
        %4264 = vdwg.mxu0
        %4265 = vrot.lane.b32.xlu0 %v645, 48
        %v4266 = vpop.permute.xlu0 %4265
        %v4269 = vsel %vm671, %v4032, 0
        %4271 = vmatprep.subr.mxu0 0.0
        %4272 = vmatpush1.msra.mxu0 %v4266
        %4273 = vmatprep.subr.mxu0 0.0
        %4274 = vmatpush1.msra.mxu0 0.0
        %4275 = vmatprep.subr.mxu0 0.0
        %4276 = vmatpush1.msra.mxu0 0.0
        %4277 = vmatprep.subr.mxu0 0.0
        %4278 = vmatpush1.msra.mxu0 0.0
        %4279 = vmatprep.subr.mxu0 0.0
        %4280 = vmatpush1.msra.mxu0 0.0
        %4281 = vmatprep.subr.mxu0 0.0
        %4282 = vmatpush1.msra.mxu0 0.0
        %4283 = vmatprep.subr.mxu0 0.0
        %4284 = vmatpush1.msra.mxu0 0.0
        %4285 = vmatprep.subr.mxu0 0.0
        %4286 = vmatpush1.msra.mxu0 0.0
        %4287 = vmatprep.subr.mxu0 0.0
        %4288 = vmatpush1.msra.mxu0 0.0
        %4289 = vmatprep.subr.mxu0 0.0
        %4290 = vmatpush1.msra.mxu0 0.0
        %4291 = vmatprep.subr.mxu0 0.0
        %4292 = vmatpush1.msra.mxu0 0.0
        %4293 = vmatprep.subr.mxu0 0.0
        %4294 = vmatpush1.msra.mxu0 0.0
        %4295 = vmatprep.subr.mxu0 0.0
        %4296 = vmatpush1.msra.mxu0 0.0
        %4297 = vmatprep.subr.mxu0 0.0
        %4298 = vmatpush1.msra.mxu0 0.0
        %4299 = vmatprep.subr.mxu0 0.0
        %4300 = vmatpush1.msra.mxu0 0.0
        %4301 = vmatprep.subr.mxu0 0.0
        %4302 = vmatpush1.msra.mxu0 0.0
        %4303 = vmatprep.subr.mxu0 0.0
        %4304 = vmatpush1.msra.mxu0 0.0
        %4305 = vmatprep.subr.mxu0 0.0
        %4306 = vmatpush1.msra.mxu0 0.0
        %4307 = vmatprep.subr.mxu0 0.0
        %4308 = vmatpush1.msra.mxu0 0.0
        %4309 = vmatprep.subr.mxu0 0.0
        %4310 = vmatpush1.msra.mxu0 0.0
        %4311 = vmatprep.subr.mxu0 0.0
        %4312 = vmatpush1.msra.mxu0 0.0
        %4313 = vmatprep.subr.mxu0 0.0
        %4314 = vmatpush1.msra.mxu0 0.0
        %4315 = vmatprep.subr.mxu0 0.0
        %4316 = vmatpush1.msra.mxu0 0.0
        %4317 = vmatprep.subr.mxu0 0.0
        %4318 = vmatpush1.msra.mxu0 0.0
        %4319 = vmatprep.subr.mxu0 0.0
        %4320 = vmatpush1.msra.mxu0 0.0
        %4321 = vmatprep.subr.mxu0 0.0
        %4322 = vmatpush1.msra.mxu0 0.0
        %4323 = vmatprep.subr.mxu0 0.0
        %4324 = vmatpush1.msra.mxu0 0.0
        %4325 = vmatprep.subr.mxu0 0.0
        %4326 = vmatpush1.msra.mxu0 0.0
        %4327 = vmatprep.subr.mxu0 0.0
        %4328 = vmatpush1.msra.mxu0 0.0
        %4329 = vmatprep.subr.mxu0 0.0
        %4330 = vmatpush1.msra.mxu0 0.0
        %4331 = vmatprep.subr.mxu0 0.0
        %4332 = vmatpush1.msra.mxu0 0.0
        %4333 = vmatprep.subr.mxu0 0.0
        %4334 = vmatpush1.msra.mxu0 0.0
        %4335 = vmatprep.mubr.f32.mxu0 0.0
        %4336 = vmatmul.mubr.f32.gmra.mrb[0].mxu0 %v4269
        %v4337 = vpop.f32.mrb[0].mxu0
        %v4338 = vadd.f32 0.0, %v4337
        %v4339 = vpop.f32.mrb[0].mxu0
        %4340 = vdwg.mxu0
        %4341 = vrot.lane.b32.xlu0 %v650, 48
        %v4342 = vpop.permute.xlu0 %4341
        %v4345 = vsel %vm671, %v4033, 0
        %4347 = vmatprep.subr.mxu0 0.0
        %4348 = vmatpush1.msra.mxu0 %v4342
        %4349 = vmatprep.subr.mxu0 0.0
        %4350 = vmatpush1.msra.mxu0 0.0
        %4351 = vmatprep.subr.mxu0 0.0
        %4352 = vmatpush1.msra.mxu0 0.0
        %4353 = vmatprep.subr.mxu0 0.0
        %4354 = vmatpush1.msra.mxu0 0.0
        %4355 = vmatprep.subr.mxu0 0.0
        %4356 = vmatpush1.msra.mxu0 0.0
        %4357 = vmatprep.subr.mxu0 0.0
        %4358 = vmatpush1.msra.mxu0 0.0
        %4359 = vmatprep.subr.mxu0 0.0
        %4360 = vmatpush1.msra.mxu0 0.0
        %4361 = vmatprep.subr.mxu0 0.0
        %4362 = vmatpush1.msra.mxu0 0.0
        %4363 = vmatprep.subr.mxu0 0.0
        %4364 = vmatpush1.msra.mxu0 0.0
        %4365 = vmatprep.subr.mxu0 0.0
        %4366 = vmatpush1.msra.mxu0 0.0
        %4367 = vmatprep.subr.mxu0 0.0
        %4368 = vmatpush1.msra.mxu0 0.0
        %4369 = vmatprep.subr.mxu0 0.0
        %4370 = vmatpush1.msra.mxu0 0.0
        %4371 = vmatprep.subr.mxu0 0.0
        %4372 = vmatpush1.msra.mxu0 0.0
        %4373 = vmatprep.subr.mxu0 0.0
        %4374 = vmatpush1.msra.mxu0 0.0
        %4375 = vmatprep.subr.mxu0 0.0
        %4376 = vmatpush1.msra.mxu0 0.0
        %4377 = vmatprep.subr.mxu0 0.0
        %4378 = vmatpush1.msra.mxu0 0.0
        %4379 = vmatprep.subr.mxu0 0.0
        %4380 = vmatpush1.msra.mxu0 0.0
        %4381 = vmatprep.subr.mxu0 0.0
        %4382 = vmatpush1.msra.mxu0 0.0
        %4383 = vmatprep.subr.mxu0 0.0
        %4384 = vmatpush1.msra.mxu0 0.0
        %4385 = vmatprep.subr.mxu0 0.0
        %4386 = vmatpush1.msra.mxu0 0.0
        %4387 = vmatprep.subr.mxu0 0.0
        %4388 = vmatpush1.msra.mxu0 0.0
        %4389 = vmatprep.subr.mxu0 0.0
        %4390 = vmatpush1.msra.mxu0 0.0
        %4391 = vmatprep.subr.mxu0 0.0
        %4392 = vmatpush1.msra.mxu0 0.0
        %4393 = vmatprep.subr.mxu0 0.0
        %4394 = vmatpush1.msra.mxu0 0.0
        %4395 = vmatprep.subr.mxu0 0.0
        %4396 = vmatpush1.msra.mxu0 0.0
        %4397 = vmatprep.subr.mxu0 0.0
        %4398 = vmatpush1.msra.mxu0 0.0
        %4399 = vmatprep.subr.mxu0 0.0
        %4400 = vmatpush1.msra.mxu0 0.0
        %4401 = vmatprep.subr.mxu0 0.0
        %4402 = vmatpush1.msra.mxu0 0.0
        %4403 = vmatprep.subr.mxu0 0.0
        %4404 = vmatpush1.msra.mxu0 0.0
        %4405 = vmatprep.subr.mxu0 0.0
        %4406 = vmatpush1.msra.mxu0 0.0
        %4407 = vmatprep.subr.mxu0 0.0
        %4408 = vmatpush1.msra.mxu0 0.0
        %4409 = vmatprep.subr.mxu0 0.0
        %4410 = vmatpush1.msra.mxu0 0.0
        %4411 = vmatprep.mubr.f32.mxu0 0.0
        %4412 = vmatmul.mubr.f32.gmra.mrb[0].mxu0 %v4345
        %v4413 = vpop.f32.mrb[0].mxu0
        %v4414 = vadd.f32 0.0, %v4413
        %v4415 = vpop.f32.mrb[0].mxu0
        %4416 = vdwg.mxu0
        %4417 = vrot.lane.b32.xlu0 %v655, 48
        %v4418 = vpop.permute.xlu0 %4417
        %v4421 = vsel %vm671, %v4034, 0
        %4423 = vmatprep.subr.mxu0 0.0
        %4424 = vmatpush1.msra.mxu0 %v4418
        %4425 = vmatprep.subr.mxu0 0.0
        %4426 = vmatpush1.msra.mxu0 0.0
        %4427 = vmatprep.subr.mxu0 0.0
        %4428 = vmatpush1.msra.mxu0 0.0
        %4429 = vmatprep.subr.mxu0 0.0
        %4430 = vmatpush1.msra.mxu0 0.0
        %4431 = vmatprep.subr.mxu0 0.0
        %4432 = vmatpush1.msra.mxu0 0.0
        %4433 = vmatprep.subr.mxu0 0.0
        %4434 = vmatpush1.msra.mxu0 0.0
        %4435 = vmatprep.subr.mxu0 0.0
        %4436 = vmatpush1.msra.mxu0 0.0
        %4437 = vmatprep.subr.mxu0 0.0
        %4438 = vmatpush1.msra.mxu0 0.0
        %4439 = vmatprep.subr.mxu0 0.0
        %4440 = vmatpush1.msra.mxu0 0.0
        %4441 = vmatprep.subr.mxu0 0.0
        %4442 = vmatpush1.msra.mxu0 0.0
        %4443 = vmatprep.subr.mxu0 0.0
        %4444 = vmatpush1.msra.mxu0 0.0
        %4445 = vmatprep.subr.mxu0 0.0
        %4446 = vmatpush1.msra.mxu0 0.0
        %4447 = vmatprep.subr.mxu0 0.0
        %4448 = vmatpush1.msra.mxu0 0.0
        %4449 = vmatprep.subr.mxu0 0.0
        %4450 = vmatpush1.msra.mxu0 0.0
        %4451 = vmatprep.subr.mxu0 0.0
        %4452 = vmatpush1.msra.mxu0 0.0
        %4453 = vmatprep.subr.mxu0 0.0
        %4454 = vmatpush1.msra.mxu0 0.0
        %4455 = vmatprep.subr.mxu0 0.0
        %4456 = vmatpush1.msra.mxu0 0.0
        %4457 = vmatprep.subr.mxu0 0.0
        %4458 = vmatpush1.msra.mxu0 0.0
        %4459 = vmatprep.subr.mxu0 0.0
        %4460 = vmatpush1.msra.mxu0 0.0
        %4461 = vmatprep.subr.mxu0 0.0
        %4462 = vmatpush1.msra.mxu0 0.0
        %4463 = vmatprep.subr.mxu0 0.0
        %4464 = vmatpush1.msra.mxu0 0.0
        %4465 = vmatprep.subr.mxu0 0.0
        %4466 = vmatpush1.msra.mxu0 0.0
        %4467 = vmatprep.subr.mxu0 0.0
        %4468 = vmatpush1.msra.mxu0 0.0
        %4469 = vmatprep.subr.mxu0 0.0
        %4470 = vmatpush1.msra.mxu0 0.0
        %4471 = vmatprep.subr.mxu0 0.0
        %4472 = vmatpush1.msra.mxu0 0.0
        %4473 = vmatprep.subr.mxu0 0.0
        %4474 = vmatpush1.msra.mxu0 0.0
        %4475 = vmatprep.subr.mxu0 0.0
        %4476 = vmatpush1.msra.mxu0 0.0
        %4477 = vmatprep.subr.mxu0 0.0
        %4478 = vmatpush1.msra.mxu0 0.0
        %4479 = vmatprep.subr.mxu0 0.0
        %4480 = vmatpush1.msra.mxu0 0.0
        %4481 = vmatprep.subr.mxu0 0.0
        %4482 = vmatpush1.msra.mxu0 0.0
        %4483 = vmatprep.subr.mxu0 0.0
        %4484 = vmatpush1.msra.mxu0 0.0
        %4485 = vmatprep.subr.mxu0 0.0
        %4486 = vmatpush1.msra.mxu0 0.0
        %4487 = vmatprep.mubr.f32.mxu0 0.0
        %4488 = vmatmul.mubr.f32.gmra.mrb[0].mxu0 %v4421
        %v4489 = vpop.f32.mrb[0].mxu0
        %v4490 = vadd.f32 0.0, %v4489
        %v4491 = vpop.f32.mrb[0].mxu0
        %4492 = vdwg.mxu0
        %4493 = vrot.lane.b32.xlu0 %v660, 48
        %v4494 = vpop.permute.xlu0 %4493
        %v4497 = vsel %vm671, %v4035, 0
        %4499 = vmatprep.subr.mxu0 0.0
        %4500 = vmatpush1.msra.mxu0 %v4494
        %4501 = vmatprep.subr.mxu0 0.0
        %4502 = vmatpush1.msra.mxu0 0.0
        %4503 = vmatprep.subr.mxu0 0.0
        %4504 = vmatpush1.msra.mxu0 0.0
        %4505 = vmatprep.subr.mxu0 0.0
        %4506 = vmatpush1.msra.mxu0 0.0
        %4507 = vmatprep.subr.mxu0 0.0
        %4508 = vmatpush1.msra.mxu0 0.0
        %4509 = vmatprep.subr.mxu0 0.0
        %4510 = vmatpush1.msra.mxu0 0.0
        %4511 = vmatprep.subr.mxu0 0.0
        %4512 = vmatpush1.msra.mxu0 0.0
        %4513 = vmatprep.subr.mxu0 0.0
        %4514 = vmatpush1.msra.mxu0 0.0
        %4515 = vmatprep.subr.mxu0 0.0
        %4516 = vmatpush1.msra.mxu0 0.0
        %4517 = vmatprep.subr.mxu0 0.0
        %4518 = vmatpush1.msra.mxu0 0.0
        %4519 = vmatprep.subr.mxu0 0.0
        %4520 = vmatpush1.msra.mxu0 0.0
        %4521 = vmatprep.subr.mxu0 0.0
        %4522 = vmatpush1.msra.mxu0 0.0
        %4523 = vmatprep.subr.mxu0 0.0
        %4524 = vmatpush1.msra.mxu0 0.0
        %4525 = vmatprep.subr.mxu0 0.0
        %4526 = vmatpush1.msra.mxu0 0.0
        %4527 = vmatprep.subr.mxu0 0.0
        %4528 = vmatpush1.msra.mxu0 0.0
        %4529 = vmatprep.subr.mxu0 0.0
        %4530 = vmatpush1.msra.mxu0 0.0
        %4531 = vmatprep.subr.mxu0 0.0
        %4532 = vmatpush1.msra.mxu0 0.0
        %4533 = vmatprep.subr.mxu0 0.0
        %4534 = vmatpush1.msra.mxu0 0.0
        %4535 = vmatprep.subr.mxu0 0.0
        %4536 = vmatpush1.msra.mxu0 0.0
        %4537 = vmatprep.subr.mxu0 0.0
        %4538 = vmatpush1.msra.mxu0 0.0
        %4539 = vmatprep.subr.mxu0 0.0
        %4540 = vmatpush1.msra.mxu0 0.0
        %4541 = vmatprep.subr.mxu0 0.0
        %4542 = vmatpush1.msra.mxu0 0.0
        %4543 = vmatprep.subr.mxu0 0.0
        %4544 = vmatpush1.msra.mxu0 0.0
        %4545 = vmatprep.subr.mxu0 0.0
        %4546 = vmatpush1.msra.mxu0 0.0
        %4547 = vmatprep.subr.mxu0 0.0
        %4548 = vmatpush1.msra.mxu0 0.0
        %4549 = vmatprep.subr.mxu0 0.0
        %4550 = vmatpush1.msra.mxu0 0.0
        %4551 = vmatprep.subr.mxu0 0.0
        %4552 = vmatpush1.msra.mxu0 0.0
        %4553 = vmatprep.subr.mxu0 0.0
        %4554 = vmatpush1.msra.mxu0 0.0
        %4555 = vmatprep.subr.mxu0 0.0
        %4556 = vmatpush1.msra.mxu0 0.0
        %4557 = vmatprep.subr.mxu0 0.0
        %4558 = vmatpush1.msra.mxu0 0.0
        %4559 = vmatprep.subr.mxu0 0.0
        %4560 = vmatpush1.msra.mxu0 0.0
        %4561 = vmatprep.subr.mxu0 0.0
        %4562 = vmatpush1.msra.mxu0 0.0
        %4563 = vmatprep.mubr.f32.mxu0 0.0
        %4564 = vmatmul.mubr.f32.gmra.mrb[0].mxu0 %v4497
        %v4565 = vpop.f32.mrb[0].mxu0
        %v4566 = vadd.f32 0.0, %v4565
        %v4567 = vpop.f32.mrb[0].mxu0
        %4568 = vdwg.mxu0
        %4569 = vrot.lane.b32.xlu0 %v665, 48
        %v4570 = vpop.permute.xlu0 %4569
        %v4573 = vsel %vm671, %v4036, 0
        %4575 = vmatprep.subr.mxu0 0.0
        %4576 = vmatpush1.msra.mxu0 %v4570
        %4577 = vmatprep.subr.mxu0 0.0
        %4578 = vmatpush1.msra.mxu0 0.0
        %4579 = vmatprep.subr.mxu0 0.0
        %4580 = vmatpush1.msra.mxu0 0.0
        %4581 = vmatprep.subr.mxu0 0.0
        %4582 = vmatpush1.msra.mxu0 0.0
        %4583 = vmatprep.subr.mxu0 0.0
        %4584 = vmatpush1.msra.mxu0 0.0
        %4585 = vmatprep.subr.mxu0 0.0
        %4586 = vmatpush1.msra.mxu0 0.0
        %4587 = vmatprep.subr.mxu0 0.0
        %4588 = vmatpush1.msra.mxu0 0.0
        %4589 = vmatprep.subr.mxu0 0.0
        %4590 = vmatpush1.msra.mxu0 0.0
        %4591 = vmatprep.subr.mxu0 0.0
        %4592 = vmatpush1.msra.mxu0 0.0
        %4593 = vmatprep.subr.mxu0 0.0
        %4594 = vmatpush1.msra.mxu0 0.0
        %4595 = vmatprep.subr.mxu0 0.0
        %4596 = vmatpush1.msra.mxu0 0.0
        %4597 = vmatprep.subr.mxu0 0.0
        %4598 = vmatpush1.msra.mxu0 0.0
        %4599 = vmatprep.subr.mxu0 0.0
        %4600 = vmatpush1.msra.mxu0 0.0
        %4601 = vmatprep.subr.mxu0 0.0
        %4602 = vmatpush1.msra.mxu0 0.0
        %4603 = vmatprep.subr.mxu0 0.0
        %4604 = vmatpush1.msra.mxu0 0.0
        %4605 = vmatprep.subr.mxu0 0.0
        %4606 = vmatpush1.msra.mxu0 0.0
        %4607 = vmatprep.subr.mxu0 0.0
        %4608 = vmatpush1.msra.mxu0 0.0
        %4609 = vmatprep.subr.mxu0 0.0
        %4610 = vmatpush1.msra.mxu0 0.0
        %4611 = vmatprep.subr.mxu0 0.0
        %4612 = vmatpush1.msra.mxu0 0.0
        %4613 = vmatprep.subr.mxu0 0.0
        %4614 = vmatpush1.msra.mxu0 0.0
        %4615 = vmatprep.subr.mxu0 0.0
        %4616 = vmatpush1.msra.mxu0 0.0
        %4617 = vmatprep.subr.mxu0 0.0
        %4618 = vmatpush1.msra.mxu0 0.0
        %4619 = vmatprep.subr.mxu0 0.0
        %4620 = vmatpush1.msra.mxu0 0.0
        %4621 = vmatprep.subr.mxu0 0.0
        %4622 = vmatpush1.msra.mxu0 0.0
        %4623 = vmatprep.subr.mxu0 0.0
        %4624 = vmatpush1.msra.mxu0 0.0
        %4625 = vmatprep.subr.mxu0 0.0
        %4626 = vmatpush1.msra.mxu0 0.0
        %4627 = vmatprep.subr.mxu0 0.0
        %4628 = vmatpush1.msra.mxu0 0.0
        %4629 = vmatprep.subr.mxu0 0.0
        %4630 = vmatpush1.msra.mxu0 0.0
        %4631 = vmatprep.subr.mxu0 0.0
        %4632 = vmatpush1.msra.mxu0 0.0
        %4633 = vmatprep.subr.mxu0 0.0
        %4634 = vmatpush1.msra.mxu0 0.0
        %4635 = vmatprep.subr.mxu0 0.0
        %4636 = vmatpush1.msra.mxu0 0.0
        %4637 = vmatprep.subr.mxu0 0.0
        %4638 = vmatpush1.msra.mxu0 0.0
        %4639 = vmatprep.mubr.f32.mxu0 0.0
        %4640 = vmatmul.mubr.f32.gmra.mrb[0].mxu0 %v4573
        %v4641 = vpop.f32.mrb[0].mxu0
        %v4642 = vadd.f32 0.0, %v4641
        %v4643 = vpop.f32.mrb[0].mxu0
        %4644 = vdwg.mxu0
        %4645 = vrot.lane.b32.xlu0 %v630, 104
        %v4646 = vpop.permute.xlu0 %4645
        %4647 = vrot.lane.b32.xlu0 %v630, 72
        %v4648 = vpop.permute.xlu0 %4647
        %v4649 = vsel %vm671, %v4646, 0
        %v4651 = vsel %vm671, %v4648, 0
        %4653 = vmatprep.subr.mxu0 0.0
        %4654 = vmatpush1.xpose.msra.mxu0 %v4651
        %4655 = vmatprep.subr.mxu0 0.0
        %4656 = vmatpush1.xpose.msra.mxu0 0.0
        %4657 = vmatprep.subr.mxu0 0.0
        %4658 = vmatpush1.xpose.msra.mxu0 0.0
        %4659 = vmatprep.subr.mxu0 0.0
        %4660 = vmatpush1.xpose.msra.mxu0 0.0
        %4661 = vmatprep.subr.mxu0 0.0
        %4662 = vmatpush1.xpose.msra.mxu0 0.0
        %4663 = vmatprep.subr.mxu0 0.0
        %4664 = vmatpush1.xpose.msra.mxu0 0.0
        %4665 = vmatprep.subr.mxu0 0.0
        %4666 = vmatpush1.xpose.msra.mxu0 0.0
        %4667 = vmatprep.subr.mxu0 0.0
        %4668 = vmatpush1.xpose.msra.mxu0 0.0
        %4669 = vmatprep.subr.mxu0 0.0
        %4670 = vmatpush1.xpose.msra.mxu0 0.0
        %4671 = vmatprep.subr.mxu0 0.0
        %4672 = vmatpush1.xpose.msra.mxu0 0.0
        %4673 = vmatprep.subr.mxu0 0.0
        %4674 = vmatpush1.xpose.msra.mxu0 0.0
        %4675 = vmatprep.subr.mxu0 0.0
        %4676 = vmatpush1.xpose.msra.mxu0 0.0
        %4677 = vmatprep.subr.mxu0 0.0
        %4678 = vmatpush1.xpose.msra.mxu0 0.0
        %4679 = vmatprep.subr.mxu0 0.0
        %4680 = vmatpush1.xpose.msra.mxu0 0.0
        %4681 = vmatprep.subr.mxu0 0.0
        %4682 = vmatpush1.xpose.msra.mxu0 0.0
        %4683 = vmatprep.subr.mxu0 0.0
        %4684 = vmatpush1.xpose.msra.mxu0 0.0
        %4685 = vmatprep.subr.mxu0 0.0
        %4686 = vmatpush1.xpose.msra.mxu0 0.0
        %4687 = vmatprep.subr.mxu0 0.0
        %4688 = vmatpush1.xpose.msra.mxu0 0.0
        %4689 = vmatprep.subr.mxu0 0.0
        %4690 = vmatpush1.xpose.msra.mxu0 0.0
        %4691 = vmatprep.subr.mxu0 0.0
        %4692 = vmatpush1.xpose.msra.mxu0 0.0
        %4693 = vmatprep.subr.mxu0 0.0
        %4694 = vmatpush1.xpose.msra.mxu0 0.0
        %4695 = vmatprep.subr.mxu0 0.0
        %4696 = vmatpush1.xpose.msra.mxu0 0.0
        %4697 = vmatprep.subr.mxu0 0.0
        %4698 = vmatpush1.xpose.msra.mxu0 0.0
        %4699 = vmatprep.subr.mxu0 0.0
        %4700 = vmatpush1.xpose.msra.mxu0 0.0
        %4701 = vmatprep.subr.mxu0 0.0
        %4702 = vmatpush1.xpose.msra.mxu0 0.0
        %4703 = vmatprep.subr.mxu0 0.0
        %4704 = vmatpush1.xpose.msra.mxu0 0.0
        %4705 = vmatprep.subr.mxu0 0.0
        %4706 = vmatpush1.xpose.msra.mxu0 0.0
        %4707 = vmatprep.subr.mxu0 0.0
        %4708 = vmatpush1.xpose.msra.mxu0 0.0
        %4709 = vmatprep.subr.mxu0 0.0
        %4710 = vmatpush1.xpose.msra.mxu0 0.0
        %4711 = vmatprep.subr.mxu0 0.0
        %4712 = vmatpush1.xpose.msra.mxu0 0.0
        %4713 = vmatprep.subr.mxu0 0.0
        %4714 = vmatpush1.xpose.msra.mxu0 0.0
        %4715 = vmatprep.subr.mxu0 0.0
        %4716 = vmatpush1.xpose.msra.mxu0 0.0
        %4717 = vmatprep.mubr.f32.mxu0 0.0
        %4718 = vmatmul.mubr.f32.gmra.mrb[0].mxu0 %v4649
        %v4719 = vpop.f32.mrb[0].mxu0
        %v4720 = vadd.f32 0.0, %v4719
        %v4721 = vpop.f32.mrb[0].mxu0
        %4722 = vdwg.mxu0
        %4723 = vrot.lane.b32.xlu0 %v635, 104
        %v4724 = vpop.permute.xlu0 %4723
        %4725 = vrot.lane.b32.xlu0 %v635, 72
        %v4726 = vpop.permute.xlu0 %4725
        %v4727 = vsel %vm671, %v4724, 0
        %v4729 = vsel %vm671, %v4726, 0
        %4731 = vmatprep.subr.mxu0 0.0
        %4732 = vmatpush1.xpose.msra.mxu0 %v4729
        %4733 = vmatprep.subr.mxu0 0.0
        %4734 = vmatpush1.xpose.msra.mxu0 0.0
        %4735 = vmatprep.subr.mxu0 0.0
        %4736 = vmatpush1.xpose.msra.mxu0 0.0
        %4737 = vmatprep.subr.mxu0 0.0
        %4738 = vmatpush1.xpose.msra.mxu0 0.0
        %4739 = vmatprep.subr.mxu0 0.0
        %4740 = vmatpush1.xpose.msra.mxu0 0.0
        %4741 = vmatprep.subr.mxu0 0.0
        %4742 = vmatpush1.xpose.msra.mxu0 0.0
        %4743 = vmatprep.subr.mxu0 0.0
        %4744 = vmatpush1.xpose.msra.mxu0 0.0
        %4745 = vmatprep.subr.mxu0 0.0
        %4746 = vmatpush1.xpose.msra.mxu0 0.0
        %4747 = vmatprep.subr.mxu0 0.0
        %4748 = vmatpush1.xpose.msra.mxu0 0.0
        %4749 = vmatprep.subr.mxu0 0.0
        %4750 = vmatpush1.xpose.msra.mxu0 0.0
        %4751 = vmatprep.subr.mxu0 0.0
        %4752 = vmatpush1.xpose.msra.mxu0 0.0
        %4753 = vmatprep.subr.mxu0 0.0
        %4754 = vmatpush1.xpose.msra.mxu0 0.0
        %4755 = vmatprep.subr.mxu0 0.0
        %4756 = vmatpush1.xpose.msra.mxu0 0.0
        %4757 = vmatprep.subr.mxu0 0.0
        %4758 = vmatpush1.xpose.msra.mxu0 0.0
        %4759 = vmatprep.subr.mxu0 0.0
        %4760 = vmatpush1.xpose.msra.mxu0 0.0
        %4761 = vmatprep.subr.mxu0 0.0
        %4762 = vmatpush1.xpose.msra.mxu0 0.0
        %4763 = vmatprep.subr.mxu0 0.0
        %4764 = vmatpush1.xpose.msra.mxu0 0.0
        %4765 = vmatprep.subr.mxu0 0.0
        %4766 = vmatpush1.xpose.msra.mxu0 0.0
        %4767 = vmatprep.subr.mxu0 0.0
        %4768 = vmatpush1.xpose.msra.mxu0 0.0
        %4769 = vmatprep.subr.mxu0 0.0
        %4770 = vmatpush1.xpose.msra.mxu0 0.0
        %4771 = vmatprep.subr.mxu0 0.0
        %4772 = vmatpush1.xpose.msra.mxu0 0.0
        %4773 = vmatprep.subr.mxu0 0.0
        %4774 = vmatpush1.xpose.msra.mxu0 0.0
        %4775 = vmatprep.subr.mxu0 0.0
        %4776 = vmatpush1.xpose.msra.mxu0 0.0
        %4777 = vmatprep.subr.mxu0 0.0
        %4778 = vmatpush1.xpose.msra.mxu0 0.0
        %4779 = vmatprep.subr.mxu0 0.0
        %4780 = vmatpush1.xpose.msra.mxu0 0.0
        %4781 = vmatprep.subr.mxu0 0.0
        %4782 = vmatpush1.xpose.msra.mxu0 0.0
        %4783 = vmatprep.subr.mxu0 0.0
        %4784 = vmatpush1.xpose.msra.mxu0 0.0
        %4785 = vmatprep.subr.mxu0 0.0
        %4786 = vmatpush1.xpose.msra.mxu0 0.0
        %4787 = vmatprep.subr.mxu0 0.0
        %4788 = vmatpush1.xpose.msra.mxu0 0.0
        %4789 = vmatprep.subr.mxu0 0.0
        %4790 = vmatpush1.xpose.msra.mxu0 0.0
        %4791 = vmatprep.subr.mxu0 0.0
        %4792 = vmatpush1.xpose.msra.mxu0 0.0
        %4793 = vmatprep.subr.mxu0 0.0
        %4794 = vmatpush1.xpose.msra.mxu0 0.0
        %4795 = vmatprep.mubr.f32.mxu0 0.0
        %4796 = vmatmul.mubr.f32.gmra.mrb[0].mxu0 %v4727
        %v4797 = vpop.f32.mrb[0].mxu0
        %v4798 = vadd.f32 0.0, %v4797
        %v4799 = vpop.f32.mrb[0].mxu0
        %4800 = vdwg.mxu0
        %4801 = vrot.lane.b32.xlu0 %v640, 104
        %v4802 = vpop.permute.xlu0 %4801
        %4803 = vrot.lane.b32.xlu0 %v640, 72
        %v4804 = vpop.permute.xlu0 %4803
        %v4805 = vsel %vm671, %v4802, 0
        %v4807 = vsel %vm671, %v4804, 0
        %4809 = vmatprep.subr.mxu0 0.0
        %4810 = vmatpush1.xpose.msra.mxu0 %v4807
        %4811 = vmatprep.subr.mxu0 0.0
        %4812 = vmatpush1.xpose.msra.mxu0 0.0
        %4813 = vmatprep.subr.mxu0 0.0
        %4814 = vmatpush1.xpose.msra.mxu0 0.0
        %4815 = vmatprep.subr.mxu0 0.0
        %4816 = vmatpush1.xpose.msra.mxu0 0.0
        %4817 = vmatprep.subr.mxu0 0.0
        %4818 = vmatpush1.xpose.msra.mxu0 0.0
        %4819 = vmatprep.subr.mxu0 0.0
        %4820 = vmatpush1.xpose.msra.mxu0 0.0
        %4821 = vmatprep.subr.mxu0 0.0
        %4822 = vmatpush1.xpose.msra.mxu0 0.0
        %4823 = vmatprep.subr.mxu0 0.0
        %4824 = vmatpush1.xpose.msra.mxu0 0.0
        %4825 = vmatprep.subr.mxu0 0.0
        %4826 = vmatpush1.xpose.msra.mxu0 0.0
        %4827 = vmatprep.subr.mxu0 0.0
        %4828 = vmatpush1.xpose.msra.mxu0 0.0
        %4829 = vmatprep.subr.mxu0 0.0
        %4830 = vmatpush1.xpose.msra.mxu0 0.0
        %4831 = vmatprep.subr.mxu0 0.0
        %4832 = vmatpush1.xpose.msra.mxu0 0.0
        %4833 = vmatprep.subr.mxu0 0.0
        %4834 = vmatpush1.xpose.msra.mxu0 0.0
        %4835 = vmatprep.subr.mxu0 0.0
        %4836 = vmatpush1.xpose.msra.mxu0 0.0
        %4837 = vmatprep.subr.mxu0 0.0
        %4838 = vmatpush1.xpose.msra.mxu0 0.0
        %4839 = vmatprep.subr.mxu0 0.0
        %4840 = vmatpush1.xpose.msra.mxu0 0.0
        %4841 = vmatprep.subr.mxu0 0.0
        %4842 = vmatpush1.xpose.msra.mxu0 0.0
        %4843 = vmatprep.subr.mxu0 0.0
        %4844 = vmatpush1.xpose.msra.mxu0 0.0
        %4845 = vmatprep.subr.mxu0 0.0
        %4846 = vmatpush1.xpose.msra.mxu0 0.0
        %4847 = vmatprep.subr.mxu0 0.0
        %4848 = vmatpush1.xpose.msra.mxu0 0.0
        %4849 = vmatprep.subr.mxu0 0.0
        %4850 = vmatpush1.xpose.msra.mxu0 0.0
        %4851 = vmatprep.subr.mxu0 0.0
        %4852 = vmatpush1.xpose.msra.mxu0 0.0
        %4853 = vmatprep.subr.mxu0 0.0
        %4854 = vmatpush1.xpose.msra.mxu0 0.0
        %4855 = vmatprep.subr.mxu0 0.0
        %4856 = vmatpush1.xpose.msra.mxu0 0.0
        %4857 = vmatprep.subr.mxu0 0.0
        %4858 = vmatpush1.xpose.msra.mxu0 0.0
        %4859 = vmatprep.subr.mxu0 0.0
        %4860 = vmatpush1.xpose.msra.mxu0 0.0
        %4861 = vmatprep.subr.mxu0 0.0
        %4862 = vmatpush1.xpose.msra.mxu0 0.0
        %4863 = vmatprep.subr.mxu0 0.0
        %4864 = vmatpush1.xpose.msra.mxu0 0.0
        %4865 = vmatprep.subr.mxu0 0.0
        %4866 = vmatpush1.xpose.msra.mxu0 0.0
        %4867 = vmatprep.subr.mxu0 0.0
        %4868 = vmatpush1.xpose.msra.mxu0 0.0
        %4869 = vmatprep.subr.mxu0 0.0
        %4870 = vmatpush1.xpose.msra.mxu0 0.0
        %4871 = vmatprep.subr.mxu0 0.0
        %4872 = vmatpush1.xpose.msra.mxu0 0.0
        %4873 = vmatprep.mubr.f32.mxu0 0.0
        %4874 = vmatmul.mubr.f32.gmra.mrb[0].mxu0 %v4805
        %v4875 = vpop.f32.mrb[0].mxu0
        %v4876 = vadd.f32 0.0, %v4875
        %v4877 = vpop.f32.mrb[0].mxu0
        %4878 = vdwg.mxu0
        %4879 = vrot.lane.b32.xlu0 %v645, 104
        %v4880 = vpop.permute.xlu0 %4879
        %4881 = vrot.lane.b32.xlu0 %v645, 72
        %v4882 = vpop.permute.xlu0 %4881
        %v4883 = vsel %vm671, %v4880, 0
        %v4885 = vsel %vm671, %v4882, 0
        %4887 = vmatprep.subr.mxu0 0.0
        %4888 = vmatpush1.xpose.msra.mxu0 %v4885
        %4889 = vmatprep.subr.mxu0 0.0
        %4890 = vmatpush1.xpose.msra.mxu0 0.0
        %4891 = vmatprep.subr.mxu0 0.0
        %4892 = vmatpush1.xpose.msra.mxu0 0.0
        %4893 = vmatprep.subr.mxu0 0.0
        %4894 = vmatpush1.xpose.msra.mxu0 0.0
        %4895 = vmatprep.subr.mxu0 0.0
        %4896 = vmatpush1.xpose.msra.mxu0 0.0
        %4897 = vmatprep.subr.mxu0 0.0
        %4898 = vmatpush1.xpose.msra.mxu0 0.0
        %4899 = vmatprep.subr.mxu0 0.0
        %4900 = vmatpush1.xpose.msra.mxu0 0.0
        %4901 = vmatprep.subr.mxu0 0.0
        %4902 = vmatpush1.xpose.msra.mxu0 0.0
        %4903 = vmatprep.subr.mxu0 0.0
        %4904 = vmatpush1.xpose.msra.mxu0 0.0
        %4905 = vmatprep.subr.mxu0 0.0
        %4906 = vmatpush1.xpose.msra.mxu0 0.0
        %4907 = vmatprep.subr.mxu0 0.0
        %4908 = vmatpush1.xpose.msra.mxu0 0.0
        %4909 = vmatprep.subr.mxu0 0.0
        %4910 = vmatpush1.xpose.msra.mxu0 0.0
        %4911 = vmatprep.subr.mxu0 0.0
        %4912 = vmatpush1.xpose.msra.mxu0 0.0
        %4913 = vmatprep.subr.mxu0 0.0
        %4914 = vmatpush1.xpose.msra.mxu0 0.0
        %4915 = vmatprep.subr.mxu0 0.0
        %4916 = vmatpush1.xpose.msra.mxu0 0.0
        %4917 = vmatprep.subr.mxu0 0.0
        %4918 = vmatpush1.xpose.msra.mxu0 0.0
        %4919 = vmatprep.subr.mxu0 0.0
        %4920 = vmatpush1.xpose.msra.mxu0 0.0
        %4921 = vmatprep.subr.mxu0 0.0
        %4922 = vmatpush1.xpose.msra.mxu0 0.0
        %4923 = vmatprep.subr.mxu0 0.0
        %4924 = vmatpush1.xpose.msra.mxu0 0.0
        %4925 = vmatprep.subr.mxu0 0.0
        %4926 = vmatpush1.xpose.msra.mxu0 0.0
        %4927 = vmatprep.subr.mxu0 0.0
        %4928 = vmatpush1.xpose.msra.mxu0 0.0
        %4929 = vmatprep.subr.mxu0 0.0
        %4930 = vmatpush1.xpose.msra.mxu0 0.0
        %4931 = vmatprep.subr.mxu0 0.0
        %4932 = vmatpush1.xpose.msra.mxu0 0.0
        %4933 = vmatprep.subr.mxu0 0.0
        %4934 = vmatpush1.xpose.msra.mxu0 0.0
        %4935 = vmatprep.subr.mxu0 0.0
        %4936 = vmatpush1.xpose.msra.mxu0 0.0
        %4937 = vmatprep.subr.mxu0 0.0
        %4938 = vmatpush1.xpose.msra.mxu0 0.0
        %4939 = vmatprep.subr.mxu0 0.0
        %4940 = vmatpush1.xpose.msra.mxu0 0.0
        %4941 = vmatprep.subr.mxu0 0.0
        %4942 = vmatpush1.xpose.msra.mxu0 0.0
        %4943 = vmatprep.subr.mxu0 0.0
        %4944 = vmatpush1.xpose.msra.mxu0 0.0
        %4945 = vmatprep.subr.mxu0 0.0
        %4946 = vmatpush1.xpose.msra.mxu0 0.0
        %4947 = vmatprep.subr.mxu0 0.0
        %4948 = vmatpush1.xpose.msra.mxu0 0.0
        %4949 = vmatprep.subr.mxu0 0.0
        %4950 = vmatpush1.xpose.msra.mxu0 0.0
        %4951 = vmatprep.mubr.f32.mxu0 0.0
        %4952 = vmatmul.mubr.f32.gmra.mrb[0].mxu0 %v4883
        %v4953 = vpop.f32.mrb[0].mxu0
        %v4954 = vadd.f32 0.0, %v4953
        %v4955 = vpop.f32.mrb[0].mxu0
        %4956 = vdwg.mxu0
        %4957 = vrot.lane.b32.xlu0 %v650, 104
        %v4958 = vpop.permute.xlu0 %4957
        %4959 = vrot.lane.b32.xlu0 %v650, 72
        %v4960 = vpop.permute.xlu0 %4959
        %v4961 = vsel %vm671, %v4958, 0
        %v4963 = vsel %vm671, %v4960, 0
        %4965 = vmatprep.subr.mxu0 0.0
        %4966 = vmatpush1.xpose.msra.mxu0 %v4963
        %4967 = vmatprep.subr.mxu0 0.0
        %4968 = vmatpush1.xpose.msra.mxu0 0.0
        %4969 = vmatprep.subr.mxu0 0.0
        %4970 = vmatpush1.xpose.msra.mxu0 0.0
        %4971 = vmatprep.subr.mxu0 0.0
        %4972 = vmatpush1.xpose.msra.mxu0 0.0
        %4973 = vmatprep.subr.mxu0 0.0
        %4974 = vmatpush1.xpose.msra.mxu0 0.0
        %4975 = vmatprep.subr.mxu0 0.0
        %4976 = vmatpush1.xpose.msra.mxu0 0.0
        %4977 = vmatprep.subr.mxu0 0.0
        %4978 = vmatpush1.xpose.msra.mxu0 0.0
        %4979 = vmatprep.subr.mxu0 0.0
        %4980 = vmatpush1.xpose.msra.mxu0 0.0
        %4981 = vmatprep.subr.mxu0 0.0
        %4982 = vmatpush1.xpose.msra.mxu0 0.0
        %4983 = vmatprep.subr.mxu0 0.0
        %4984 = vmatpush1.xpose.msra.mxu0 0.0
        %4985 = vmatprep.subr.mxu0 0.0
        %4986 = vmatpush1.xpose.msra.mxu0 0.0
        %4987 = vmatprep.subr.mxu0 0.0
        %4988 = vmatpush1.xpose.msra.mxu0 0.0
        %4989 = vmatprep.subr.mxu0 0.0
        %4990 = vmatpush1.xpose.msra.mxu0 0.0
        %4991 = vmatprep.subr.mxu0 0.0
        %4992 = vmatpush1.xpose.msra.mxu0 0.0
        %4993 = vmatprep.subr.mxu0 0.0
        %4994 = vmatpush1.xpose.msra.mxu0 0.0
        %4995 = vmatprep.subr.mxu0 0.0
        %4996 = vmatpush1.xpose.msra.mxu0 0.0
        %4997 = vmatprep.subr.mxu0 0.0
        %4998 = vmatpush1.xpose.msra.mxu0 0.0
        %4999 = vmatprep.subr.mxu0 0.0
        %5000 = vmatpush1.xpose.msra.mxu0 0.0
        %5001 = vmatprep.subr.mxu0 0.0
        %5002 = vmatpush1.xpose.msra.mxu0 0.0
        %5003 = vmatprep.subr.mxu0 0.0
        %5004 = vmatpush1.xpose.msra.mxu0 0.0
        %5005 = vmatprep.subr.mxu0 0.0
        %5006 = vmatpush1.xpose.msra.mxu0 0.0
        %5007 = vmatprep.subr.mxu0 0.0
        %5008 = vmatpush1.xpose.msra.mxu0 0.0
        %5009 = vmatprep.subr.mxu0 0.0
        %5010 = vmatpush1.xpose.msra.mxu0 0.0
        %5011 = vmatprep.subr.mxu0 0.0
        %5012 = vmatpush1.xpose.msra.mxu0 0.0
        %5013 = vmatprep.subr.mxu0 0.0
        %5014 = vmatpush1.xpose.msra.mxu0 0.0
        %5015 = vmatprep.subr.mxu0 0.0
        %5016 = vmatpush1.xpose.msra.mxu0 0.0
        %5017 = vmatprep.subr.mxu0 0.0
        %5018 = vmatpush1.xpose.msra.mxu0 0.0
        %5019 = vmatprep.subr.mxu0 0.0
        %5020 = vmatpush1.xpose.msra.mxu0 0.0
        %5021 = vmatprep.subr.mxu0 0.0
        %5022 = vmatpush1.xpose.msra.mxu0 0.0
        %5023 = vmatprep.subr.mxu0 0.0
        %5024 = vmatpush1.xpose.msra.mxu0 0.0
        %5025 = vmatprep.subr.mxu0 0.0
        %5026 = vmatpush1.xpose.msra.mxu0 0.0
        %5027 = vmatprep.subr.mxu0 0.0
        %5028 = vmatpush1.xpose.msra.mxu0 0.0
        %5029 = vmatprep.mubr.f32.mxu0 0.0
        %5030 = vmatmul.mubr.f32.gmra.mrb[0].mxu0 %v4961
        %v5031 = vpop.f32.mrb[0].mxu0
        %v5032 = vadd.f32 0.0, %v5031
        %v5033 = vpop.f32.mrb[0].mxu0
        %5034 = vdwg.mxu0
        %5035 = vrot.lane.b32.xlu0 %v655, 104
        %v5036 = vpop.permute.xlu0 %5035
        %5037 = vrot.lane.b32.xlu0 %v655, 72
        %v5038 = vpop.permute.xlu0 %5037
        %v5039 = vsel %vm671, %v5036, 0
        %v5041 = vsel %vm671, %v5038, 0
        %5043 = vmatprep.subr.mxu0 0.0
        %5044 = vmatpush1.xpose.msra.mxu0 %v5041
        %5045 = vmatprep.subr.mxu0 0.0
        %5046 = vmatpush1.xpose.msra.mxu0 0.0
        %5047 = vmatprep.subr.mxu0 0.0
        %5048 = vmatpush1.xpose.msra.mxu0 0.0
        %5049 = vmatprep.subr.mxu0 0.0
        %5050 = vmatpush1.xpose.msra.mxu0 0.0
        %5051 = vmatprep.subr.mxu0 0.0
        %5052 = vmatpush1.xpose.msra.mxu0 0.0
        %5053 = vmatprep.subr.mxu0 0.0
        %5054 = vmatpush1.xpose.msra.mxu0 0.0
        %5055 = vmatprep.subr.mxu0 0.0
        %5056 = vmatpush1.xpose.msra.mxu0 0.0
        %5057 = vmatprep.subr.mxu0 0.0
        %5058 = vmatpush1.xpose.msra.mxu0 0.0
        %5059 = vmatprep.subr.mxu0 0.0
        %5060 = vmatpush1.xpose.msra.mxu0 0.0
        %5061 = vmatprep.subr.mxu0 0.0
        %5062 = vmatpush1.xpose.msra.mxu0 0.0
        %5063 = vmatprep.subr.mxu0 0.0
        %5064 = vmatpush1.xpose.msra.mxu0 0.0
        %5065 = vmatprep.subr.mxu0 0.0
        %5066 = vmatpush1.xpose.msra.mxu0 0.0
        %5067 = vmatprep.subr.mxu0 0.0
        %5068 = vmatpush1.xpose.msra.mxu0 0.0
        %5069 = vmatprep.subr.mxu0 0.0
        %5070 = vmatpush1.xpose.msra.mxu0 0.0
        %5071 = vmatprep.subr.mxu0 0.0
        %5072 = vmatpush1.xpose.msra.mxu0 0.0
        %5073 = vmatprep.subr.mxu0 0.0
        %5074 = vmatpush1.xpose.msra.mxu0 0.0
        %5075 = vmatprep.subr.mxu0 0.0
        %5076 = vmatpush1.xpose.msra.mxu0 0.0
        %5077 = vmatprep.subr.mxu0 0.0
        %5078 = vmatpush1.xpose.msra.mxu0 0.0
        %5079 = vmatprep.subr.mxu0 0.0
        %5080 = vmatpush1.xpose.msra.mxu0 0.0
        %5081 = vmatprep.subr.mxu0 0.0
        %5082 = vmatpush1.xpose.msra.mxu0 0.0
        %5083 = vmatprep.subr.mxu0 0.0
        %5084 = vmatpush1.xpose.msra.mxu0 0.0
        %5085 = vmatprep.subr.mxu0 0.0
        %5086 = vmatpush1.xpose.msra.mxu0 0.0
        %5087 = vmatprep.subr.mxu0 0.0
        %5088 = vmatpush1.xpose.msra.mxu0 0.0
        %5089 = vmatprep.subr.mxu0 0.0
        %5090 = vmatpush1.xpose.msra.mxu0 0.0
        %5091 = vmatprep.subr.mxu0 0.0
        %5092 = vmatpush1.xpose.msra.mxu0 0.0
        %5093 = vmatprep.subr.mxu0 0.0
        %5094 = vmatpush1.xpose.msra.mxu0 0.0
        %5095 = vmatprep.subr.mxu0 0.0
        %5096 = vmatpush1.xpose.msra.mxu0 0.0
        %5097 = vmatprep.subr.mxu0 0.0
        %5098 = vmatpush1.xpose.msra.mxu0 0.0
        %5099 = vmatprep.subr.mxu0 0.0
        %5100 = vmatpush1.xpose.msra.mxu0 0.0
        %5101 = vmatprep.subr.mxu0 0.0
        %5102 = vmatpush1.xpose.msra.mxu0 0.0
        %5103 = vmatprep.subr.mxu0 0.0
        %5104 = vmatpush1.xpose.msra.mxu0 0.0
        %5105 = vmatprep.subr.mxu0 0.0
        %5106 = vmatpush1.xpose.msra.mxu0 0.0
        %5107 = vmatprep.mubr.f32.mxu0 0.0
        %5108 = vmatmul.mubr.f32.gmra.mrb[0].mxu0 %v5039
        %v5109 = vpop.f32.mrb[0].mxu0
        %v5110 = vadd.f32 0.0, %v5109
        %v5111 = vpop.f32.mrb[0].mxu0
        %5112 = vdwg.mxu0
        %5113 = vrot.lane.b32.xlu0 %v660, 104
        %v5114 = vpop.permute.xlu0 %5113
        %5115 = vrot.lane.b32.xlu0 %v660, 72
        %v5116 = vpop.permute.xlu0 %5115
        %v5117 = vsel %vm671, %v5114, 0
        %v5119 = vsel %vm671, %v5116, 0
        %5121 = vmatprep.subr.mxu0 0.0
        %5122 = vmatpush1.xpose.msra.mxu0 %v5119
        %5123 = vmatprep.subr.mxu0 0.0
        %5124 = vmatpush1.xpose.msra.mxu0 0.0
        %5125 = vmatprep.subr.mxu0 0.0
        %5126 = vmatpush1.xpose.msra.mxu0 0.0
        %5127 = vmatprep.subr.mxu0 0.0
        %5128 = vmatpush1.xpose.msra.mxu0 0.0
        %5129 = vmatprep.subr.mxu0 0.0
        %5130 = vmatpush1.xpose.msra.mxu0 0.0
        %5131 = vmatprep.subr.mxu0 0.0
        %5132 = vmatpush1.xpose.msra.mxu0 0.0
        %5133 = vmatprep.subr.mxu0 0.0
        %5134 = vmatpush1.xpose.msra.mxu0 0.0
        %5135 = vmatprep.subr.mxu0 0.0
        %5136 = vmatpush1.xpose.msra.mxu0 0.0
        %5137 = vmatprep.subr.mxu0 0.0
        %5138 = vmatpush1.xpose.msra.mxu0 0.0
        %5139 = vmatprep.subr.mxu0 0.0
        %5140 = vmatpush1.xpose.msra.mxu0 0.0
        %5141 = vmatprep.subr.mxu0 0.0
        %5142 = vmatpush1.xpose.msra.mxu0 0.0
        %5143 = vmatprep.subr.mxu0 0.0
        %5144 = vmatpush1.xpose.msra.mxu0 0.0
        %5145 = vmatprep.subr.mxu0 0.0
        %5146 = vmatpush1.xpose.msra.mxu0 0.0
        %5147 = vmatprep.subr.mxu0 0.0
        %5148 = vmatpush1.xpose.msra.mxu0 0.0
        %5149 = vmatprep.subr.mxu0 0.0
        %5150 = vmatpush1.xpose.msra.mxu0 0.0
        %5151 = vmatprep.subr.mxu0 0.0
        %5152 = vmatpush1.xpose.msra.mxu0 0.0
        %5153 = vmatprep.subr.mxu0 0.0
        %5154 = vmatpush1.xpose.msra.mxu0 0.0
        %5155 = vmatprep.subr.mxu0 0.0
        %5156 = vmatpush1.xpose.msra.mxu0 0.0
        %5157 = vmatprep.subr.mxu0 0.0
        %5158 = vmatpush1.xpose.msra.mxu0 0.0
        %5159 = vmatprep.subr.mxu0 0.0
        %5160 = vmatpush1.xpose.msra.mxu0 0.0
        %5161 = vmatprep.subr.mxu0 0.0
        %5162 = vmatpush1.xpose.msra.mxu0 0.0
        %5163 = vmatprep.subr.mxu0 0.0
        %5164 = vmatpush1.xpose.msra.mxu0 0.0
        %5165 = vmatprep.subr.mxu0 0.0
        %5166 = vmatpush1.xpose.msra.mxu0 0.0
        %5167 = vmatprep.subr.mxu0 0.0
        %5168 = vmatpush1.xpose.msra.mxu0 0.0
        %5169 = vmatprep.subr.mxu0 0.0
        %5170 = vmatpush1.xpose.msra.mxu0 0.0
        %5171 = vmatprep.subr.mxu0 0.0
        %5172 = vmatpush1.xpose.msra.mxu0 0.0
        %5173 = vmatprep.subr.mxu0 0.0
        %5174 = vmatpush1.xpose.msra.mxu0 0.0
        %5175 = vmatprep.subr.mxu0 0.0
        %5176 = vmatpush1.xpose.msra.mxu0 0.0
        %5177 = vmatprep.subr.mxu0 0.0
        %5178 = vmatpush1.xpose.msra.mxu0 0.0
        %5179 = vmatprep.subr.mxu0 0.0
        %5180 = vmatpush1.xpose.msra.mxu0 0.0
        %5181 = vmatprep.subr.mxu0 0.0
        %5182 = vmatpush1.xpose.msra.mxu0 0.0
        %5183 = vmatprep.subr.mxu0 0.0
        %5184 = vmatpush1.xpose.msra.mxu0 0.0
        %5185 = vmatprep.mubr.f32.mxu0 0.0
        %5186 = vmatmul.mubr.f32.gmra.mrb[0].mxu0 %v5117
        %v5187 = vpop.f32.mrb[0].mxu0
        %v5188 = vadd.f32 0.0, %v5187
        %v5189 = vpop.f32.mrb[0].mxu0
        %5190 = vdwg.mxu0
        %5191 = vrot.lane.b32.xlu0 %v665, 104
        %v5192 = vpop.permute.xlu0 %5191
        %5193 = vrot.lane.b32.xlu0 %v665, 72
        %v5194 = vpop.permute.xlu0 %5193
        %v5195 = vsel %vm671, %v5192, 0
        %v5197 = vsel %vm671, %v5194, 0
        %5199 = vmatprep.subr.mxu0 0.0
        %5200 = vmatpush1.xpose.msra.mxu0 %v5197
        %5201 = vmatprep.subr.mxu0 0.0
        %5202 = vmatpush1.xpose.msra.mxu0 0.0
        %5203 = vmatprep.subr.mxu0 0.0
        %5204 = vmatpush1.xpose.msra.mxu0 0.0
        %5205 = vmatprep.subr.mxu0 0.0
        %5206 = vmatpush1.xpose.msra.mxu0 0.0
        %5207 = vmatprep.subr.mxu0 0.0
        %5208 = vmatpush1.xpose.msra.mxu0 0.0
        %5209 = vmatprep.subr.mxu0 0.0
        %5210 = vmatpush1.xpose.msra.mxu0 0.0
        %5211 = vmatprep.subr.mxu0 0.0
        %5212 = vmatpush1.xpose.msra.mxu0 0.0
        %5213 = vmatprep.subr.mxu0 0.0
        %5214 = vmatpush1.xpose.msra.mxu0 0.0
        %5215 = vmatprep.subr.mxu0 0.0
        %5216 = vmatpush1.xpose.msra.mxu0 0.0
        %5217 = vmatprep.subr.mxu0 0.0
        %5218 = vmatpush1.xpose.msra.mxu0 0.0
        %5219 = vmatprep.subr.mxu0 0.0
        %5220 = vmatpush1.xpose.msra.mxu0 0.0
        %5221 = vmatprep.subr.mxu0 0.0
        %5222 = vmatpush1.xpose.msra.mxu0 0.0
        %5223 = vmatprep.subr.mxu0 0.0
        %5224 = vmatpush1.xpose.msra.mxu0 0.0
        %5225 = vmatprep.subr.mxu0 0.0
        %5226 = vmatpush1.xpose.msra.mxu0 0.0
        %5227 = vmatprep.subr.mxu0 0.0
        %5228 = vmatpush1.xpose.msra.mxu0 0.0
        %5229 = vmatprep.subr.mxu0 0.0
        %5230 = vmatpush1.xpose.msra.mxu0 0.0
        %5231 = vmatprep.subr.mxu0 0.0
        %5232 = vmatpush1.xpose.msra.mxu0 0.0
        %5233 = vmatprep.subr.mxu0 0.0
        %5234 = vmatpush1.xpose.msra.mxu0 0.0
        %5235 = vmatprep.subr.mxu0 0.0
        %5236 = vmatpush1.xpose.msra.mxu0 0.0
        %5237 = vmatprep.subr.mxu0 0.0
        %5238 = vmatpush1.xpose.msra.mxu0 0.0
        %5239 = vmatprep.subr.mxu0 0.0
        %5240 = vmatpush1.xpose.msra.mxu0 0.0
        %5241 = vmatprep.subr.mxu0 0.0
        %5242 = vmatpush1.xpose.msra.mxu0 0.0
        %5243 = vmatprep.subr.mxu0 0.0
        %5244 = vmatpush1.xpose.msra.mxu0 0.0
        %5245 = vmatprep.subr.mxu0 0.0
        %5246 = vmatpush1.xpose.msra.mxu0 0.0
        %5247 = vmatprep.subr.mxu0 0.0
        %5248 = vmatpush1.xpose.msra.mxu0 0.0
        %5249 = vmatprep.subr.mxu0 0.0
        %5250 = vmatpush1.xpose.msra.mxu0 0.0
        %5251 = vmatprep.subr.mxu0 0.0
        %5252 = vmatpush1.xpose.msra.mxu0 0.0
        %5253 = vmatprep.subr.mxu0 0.0
        %5254 = vmatpush1.xpose.msra.mxu0 0.0
        %5255 = vmatprep.subr.mxu0 0.0
        %5256 = vmatpush1.xpose.msra.mxu0 0.0
        %5257 = vmatprep.subr.mxu0 0.0
        %5258 = vmatpush1.xpose.msra.mxu0 0.0
        %5259 = vmatprep.subr.mxu0 0.0
        %5260 = vmatpush1.xpose.msra.mxu0 0.0
        %5261 = vmatprep.subr.mxu0 0.0
        %5262 = vmatpush1.xpose.msra.mxu0 0.0
        %5263 = vmatprep.mubr.f32.mxu0 0.0
        %5264 = vmatmul.mubr.f32.gmra.mrb[0].mxu0 %v5195
        %v5265 = vpop.f32.mrb[0].mxu0
        %v5266 = vadd.f32 0.0, %v5265
        %v5267 = vpop.f32.mrb[0].mxu0
        %5268 = vdwg.mxu0
        %v5269 = vmul.f32 %v4720, 0.35355338
        %v5270 = vmul.f32 %v4798, 0.35355338
        %v5271 = vmul.f32 %v4876, 0.35355338
        %v5272 = vmul.f32 %v4954, 0.35355338
        %v5273 = vmul.f32 %v5032, 0.35355338
        %v5274 = vmul.f32 %v5110, 0.35355338
        %v5275 = vmul.f32 %v5188, 0.35355338
        %v5276 = vmul.f32 %v5266, 0.35355338
        %v5277 = vsel %vm671, %v5269, -inf
        %5278 = vmax.xlane.f32.xlu0 %v5277
        %v5279 = vpop.xlane.xlu0 %5278
        %v5280 = vsel %vm671, %v5270, -inf
        %5281 = vmax.xlane.f32.xlu0 %v5280
        %v5282 = vpop.xlane.xlu0 %5281
        %v5283 = vsel %vm671, %v5271, -inf
        %5284 = vmax.xlane.f32.xlu0 %v5283
        %v5285 = vpop.xlane.xlu0 %5284
        %v5286 = vsel %vm671, %v5272, -inf
        %5287 = vmax.xlane.f32.xlu0 %v5286
        %v5288 = vpop.xlane.xlu0 %5287
        %v5289 = vsel %vm671, %v5273, -inf
        %5290 = vmax.xlane.f32.xlu0 %v5289
        %v5291 = vpop.xlane.xlu0 %5290
        %v5292 = vsel %vm671, %v5274, -inf
        %5293 = vmax.xlane.f32.xlu0 %v5292
        %v5294 = vpop.xlane.xlu0 %5293
        %v5295 = vsel %vm671, %v5275, -inf
        %5296 = vmax.xlane.f32.xlu0 %v5295
        %v5297 = vpop.xlane.xlu0 %5296
        %v5298 = vsel %vm671, %v5276, -inf
        %5299 = vmax.xlane.f32.xlu0 %v5298
        %v5300 = vpop.xlane.xlu0 %5299
        %v5301 = vsub.f32 %v5269, %v5279
        %v5302 = vsub.f32 %v5270, %v5282
        %v5303 = vsub.f32 %v5271, %v5285
        %v5304 = vsub.f32 %v5272, %v5288
        %v5305 = vsub.f32 %v5273, %v5291
        %v5306 = vsub.f32 %v5274, %v5294
        %v5307 = vsub.f32 %v5275, %v5297
        %v5308 = vsub.f32 %v5276, %v5300
        %v5309 = vmul.f32 %v5301, 1.442695
        %v5310 = vpow.pop %v5309
        %v5311 = vmul.f32 %v5302, 1.442695
        %v5312 = vpow.pop %v5311
        %v5313 = vmul.f32 %v5303, 1.442695
        %v5314 = vpow.pop %v5313
        %v5315 = vmul.f32 %v5304, 1.442695
        %v5316 = vpow.pop %v5315
        %v5317 = vmul.f32 %v5305, 1.442695
        %v5318 = vpow.pop %v5317
        %v5319 = vmul.f32 %v5306, 1.442695
        %v5320 = vpow.pop %v5319
        %v5321 = vmul.f32 %v5307, 1.442695
        %v5322 = vpow.pop %v5321
        %v5323 = vmul.f32 %v5308, 1.442695
        %v5324 = vpow.pop %v5323
        %v5325 = vsel %vm671, %v5310, 0.0
        %5326 = vadd.xlane.f32.xlu0 %v5325
        %v5327 = vpop.xlane.xlu0 %5326
        %v5328 = vsel %vm671, %v5312, 0.0
        %5329 = vadd.xlane.f32.xlu0 %v5328
        %v5330 = vpop.xlane.xlu0 %5329
        %v5331 = vsel %vm671, %v5314, 0.0
        %5332 = vadd.xlane.f32.xlu0 %v5331
        %v5333 = vpop.xlane.xlu0 %5332
        %v5334 = vsel %vm671, %v5316, 0.0
        %5335 = vadd.xlane.f32.xlu0 %v5334
        %v5336 = vpop.xlane.xlu0 %5335
        %v5337 = vsel %vm671, %v5318, 0.0
        %5338 = vadd.xlane.f32.xlu0 %v5337
        %v5339 = vpop.xlane.xlu0 %5338
        %v5340 = vsel %vm671, %v5320, 0.0
        %5341 = vadd.xlane.f32.xlu0 %v5340
        %v5342 = vpop.xlane.xlu0 %5341
        %v5343 = vsel %vm671, %v5322, 0.0
        %5344 = vadd.xlane.f32.xlu0 %v5343
        %v5345 = vpop.xlane.xlu0 %5344
        %v5346 = vsel %vm671, %v5324, 0.0
        %5347 = vadd.xlane.f32.xlu0 %v5346
        %v5348 = vpop.xlane.xlu0 %5347
        %v5349 = vrcp.pop %v5327
        %v5350 = vrcp.pop %v5330
        %v5351 = vrcp.pop %v5333
        %v5352 = vrcp.pop %v5336
        %v5353 = vrcp.pop %v5339
        %v5354 = vrcp.pop %v5342
        %v5355 = vrcp.pop %v5345
        %v5356 = vrcp.pop %v5348
        %v5357 = vmul.f32 %v5310, %v5349
        %v5358 = vmul.f32 %v5312, %v5350
        %v5359 = vmul.f32 %v5314, %v5351
        %v5360 = vmul.f32 %v5316, %v5352
        %v5361 = vmul.f32 %v5318, %v5353
        %v5362 = vmul.f32 %v5320, %v5354
        %v5363 = vmul.f32 %v5322, %v5355
        %v5364 = vmul.f32 %v5324, %v5356
        %5365 = vrot.lane.b32.xlu0 %v630, 40
        %v5366 = vpop.permute.xlu0 %5365
        %v5369 = vsel %vm671, %v5357, 0
        %5371 = vmatprep.subr.mxu0 0.0
        %5372 = vmatpush1.msra.mxu0 %v5366
        %5373 = vmatprep.subr.mxu0 0.0
        %5374 = vmatpush1.msra.mxu0 0.0
        %5375 = vmatprep.subr.mxu0 0.0
        %5376 = vmatpush1.msra.mxu0 0.0
        %5377 = vmatprep.subr.mxu0 0.0
        %5378 = vmatpush1.msra.mxu0 0.0
        %5379 = vmatprep.subr.mxu0 0.0
        %5380 = vmatpush1.msra.mxu0 0.0
        %5381 = vmatprep.subr.mxu0 0.0
        %5382 = vmatpush1.msra.mxu0 0.0
        %5383 = vmatprep.subr.mxu0 0.0
        %5384 = vmatpush1.msra.mxu0 0.0
        %5385 = vmatprep.subr.mxu0 0.0
        %5386 = vmatpush1.msra.mxu0 0.0
        %5387 = vmatprep.subr.mxu0 0.0
        %5388 = vmatpush1.msra.mxu0 0.0
        %5389 = vmatprep.subr.mxu0 0.0
        %5390 = vmatpush1.msra.mxu0 0.0
        %5391 = vmatprep.subr.mxu0 0.0
        %5392 = vmatpush1.msra.mxu0 0.0
        %5393 = vmatprep.subr.mxu0 0.0
        %5394 = vmatpush1.msra.mxu0 0.0
        %5395 = vmatprep.subr.mxu0 0.0
        %5396 = vmatpush1.msra.mxu0 0.0
        %5397 = vmatprep.subr.mxu0 0.0
        %5398 = vmatpush1.msra.mxu0 0.0
        %5399 = vmatprep.subr.mxu0 0.0
        %5400 = vmatpush1.msra.mxu0 0.0
        %5401 = vmatprep.subr.mxu0 0.0
        %5402 = vmatpush1.msra.mxu0 0.0
        %5403 = vmatprep.subr.mxu0 0.0
        %5404 = vmatpush1.msra.mxu0 0.0
        %5405 = vmatprep.subr.mxu0 0.0
        %5406 = vmatpush1.msra.mxu0 0.0
        %5407 = vmatprep.subr.mxu0 0.0
        %5408 = vmatpush1.msra.mxu0 0.0
        %5409 = vmatprep.subr.mxu0 0.0
        %5410 = vmatpush1.msra.mxu0 0.0
        %5411 = vmatprep.subr.mxu0 0.0
        %5412 = vmatpush1.msra.mxu0 0.0
        %5413 = vmatprep.subr.mxu0 0.0
        %5414 = vmatpush1.msra.mxu0 0.0
        %5415 = vmatprep.subr.mxu0 0.0
        %5416 = vmatpush1.msra.mxu0 0.0
        %5417 = vmatprep.subr.mxu0 0.0
        %5418 = vmatpush1.msra.mxu0 0.0
        %5419 = vmatprep.subr.mxu0 0.0
        %5420 = vmatpush1.msra.mxu0 0.0
        %5421 = vmatprep.subr.mxu0 0.0
        %5422 = vmatpush1.msra.mxu0 0.0
        %5423 = vmatprep.subr.mxu0 0.0
        %5424 = vmatpush1.msra.mxu0 0.0
        %5425 = vmatprep.subr.mxu0 0.0
        %5426 = vmatpush1.msra.mxu0 0.0
        %5427 = vmatprep.subr.mxu0 0.0
        %5428 = vmatpush1.msra.mxu0 0.0
        %5429 = vmatprep.subr.mxu0 0.0
        %5430 = vmatpush1.msra.mxu0 0.0
        %5431 = vmatprep.subr.mxu0 0.0
        %5432 = vmatpush1.msra.mxu0 0.0
        %5433 = vmatprep.subr.mxu0 0.0
        %5434 = vmatpush1.msra.mxu0 0.0
        %5435 = vmatprep.mubr.f32.mxu0 0.0
        %5436 = vmatmul.mubr.f32.gmra.mrb[0].mxu0 %v5369
        %v5437 = vpop.f32.mrb[0].mxu0
        %v5438 = vadd.f32 0.0, %v5437
        %v5439 = vpop.f32.mrb[0].mxu0
        %5440 = vdwg.mxu0
        %5441 = vrot.lane.b32.xlu0 %v635, 40
        %v5442 = vpop.permute.xlu0 %5441
        %v5445 = vsel %vm671, %v5358, 0
        %5447 = vmatprep.subr.mxu0 0.0
        %5448 = vmatpush1.msra.mxu0 %v5442
        %5449 = vmatprep.subr.mxu0 0.0
        %5450 = vmatpush1.msra.mxu0 0.0
        %5451 = vmatprep.subr.mxu0 0.0
        %5452 = vmatpush1.msra.mxu0 0.0
        %5453 = vmatprep.subr.mxu0 0.0
        %5454 = vmatpush1.msra.mxu0 0.0
        %5455 = vmatprep.subr.mxu0 0.0
        %5456 = vmatpush1.msra.mxu0 0.0
        %5457 = vmatprep.subr.mxu0 0.0
        %5458 = vmatpush1.msra.mxu0 0.0
        %5459 = vmatprep.subr.mxu0 0.0
        %5460 = vmatpush1.msra.mxu0 0.0
        %5461 = vmatprep.subr.mxu0 0.0
        %5462 = vmatpush1.msra.mxu0 0.0
        %5463 = vmatprep.subr.mxu0 0.0
        %5464 = vmatpush1.msra.mxu0 0.0
        %5465 = vmatprep.subr.mxu0 0.0
        %5466 = vmatpush1.msra.mxu0 0.0
        %5467 = vmatprep.subr.mxu0 0.0
        %5468 = vmatpush1.msra.mxu0 0.0
        %5469 = vmatprep.subr.mxu0 0.0
        %5470 = vmatpush1.msra.mxu0 0.0
        %5471 = vmatprep.subr.mxu0 0.0
        %5472 = vmatpush1.msra.mxu0 0.0
        %5473 = vmatprep.subr.mxu0 0.0
        %5474 = vmatpush1.msra.mxu0 0.0
        %5475 = vmatprep.subr.mxu0 0.0
        %5476 = vmatpush1.msra.mxu0 0.0
        %5477 = vmatprep.subr.mxu0 0.0
        %5478 = vmatpush1.msra.mxu0 0.0
        %5479 = vmatprep.subr.mxu0 0.0
        %5480 = vmatpush1.msra.mxu0 0.0
        %5481 = vmatprep.subr.mxu0 0.0
        %5482 = vmatpush1.msra.mxu0 0.0
        %5483 = vmatprep.subr.mxu0 0.0
        %5484 = vmatpush1.msra.mxu0 0.0
        %5485 = vmatprep.subr.mxu0 0.0
        %5486 = vmatpush1.msra.mxu0 0.0
        %5487 = vmatprep.subr.mxu0 0.0
        %5488 = vmatpush1.msra.mxu0 0.0
        %5489 = vmatprep.subr.mxu0 0.0
        %5490 = vmatpush1.msra.mxu0 0.0
        %5491 = vmatprep.subr.mxu0 0.0
        %5492 = vmatpush1.msra.mxu0 0.0
        %5493 = vmatprep.subr.mxu0 0.0
        %5494 = vmatpush1.msra.mxu0 0.0
        %5495 = vmatprep.subr.mxu0 0.0
        %5496 = vmatpush1.msra.mxu0 0.0
        %5497 = vmatprep.subr.mxu0 0.0
        %5498 = vmatpush1.msra.mxu0 0.0
        %5499 = vmatprep.subr.mxu0 0.0
        %5500 = vmatpush1.msra.mxu0 0.0
        %5501 = vmatprep.subr.mxu0 0.0
        %5502 = vmatpush1.msra.mxu0 0.0
        %5503 = vmatprep.subr.mxu0 0.0
        %5504 = vmatpush1.msra.mxu0 0.0
        %5505 = vmatprep.subr.mxu0 0.0
        %5506 = vmatpush1.msra.mxu0 0.0
        %5507 = vmatprep.subr.mxu0 0.0
        %5508 = vmatpush1.msra.mxu0 0.0
        %5509 = vmatprep.subr.mxu0 0.0
        %5510 = vmatpush1.msra.mxu0 0.0
        %5511 = vmatprep.mubr.f32.mxu0 0.0
        %5512 = vmatmul.mubr.f32.gmra.mrb[0].mxu0 %v5445
        %v5513 = vpop.f32.mrb[0].mxu0
        %v5514 = vadd.f32 0.0, %v5513
        %v5515 = vpop.f32.mrb[0].mxu0
        %5516 = vdwg.mxu0
        %5517 = vrot.lane.b32.xlu0 %v640, 40
        %v5518 = vpop.permute.xlu0 %5517
        %v5521 = vsel %vm671, %v5359, 0
        %5523 = vmatprep.subr.mxu0 0.0
        %5524 = vmatpush1.msra.mxu0 %v5518
        %5525 = vmatprep.subr.mxu0 0.0
        %5526 = vmatpush1.msra.mxu0 0.0
        %5527 = vmatprep.subr.mxu0 0.0
        %5528 = vmatpush1.msra.mxu0 0.0
        %5529 = vmatprep.subr.mxu0 0.0
        %5530 = vmatpush1.msra.mxu0 0.0
        %5531 = vmatprep.subr.mxu0 0.0
        %5532 = vmatpush1.msra.mxu0 0.0
        %5533 = vmatprep.subr.mxu0 0.0
        %5534 = vmatpush1.msra.mxu0 0.0
        %5535 = vmatprep.subr.mxu0 0.0
        %5536 = vmatpush1.msra.mxu0 0.0
        %5537 = vmatprep.subr.mxu0 0.0
        %5538 = vmatpush1.msra.mxu0 0.0
        %5539 = vmatprep.subr.mxu0 0.0
        %5540 = vmatpush1.msra.mxu0 0.0
        %5541 = vmatprep.subr.mxu0 0.0
        %5542 = vmatpush1.msra.mxu0 0.0
        %5543 = vmatprep.subr.mxu0 0.0
        %5544 = vmatpush1.msra.mxu0 0.0
        %5545 = vmatprep.subr.mxu0 0.0
        %5546 = vmatpush1.msra.mxu0 0.0
        %5547 = vmatprep.subr.mxu0 0.0
        %5548 = vmatpush1.msra.mxu0 0.0
        %5549 = vmatprep.subr.mxu0 0.0
        %5550 = vmatpush1.msra.mxu0 0.0
        %5551 = vmatprep.subr.mxu0 0.0
        %5552 = vmatpush1.msra.mxu0 0.0
        %5553 = vmatprep.subr.mxu0 0.0
        %5554 = vmatpush1.msra.mxu0 0.0
        %5555 = vmatprep.subr.mxu0 0.0
        %5556 = vmatpush1.msra.mxu0 0.0
        %5557 = vmatprep.subr.mxu0 0.0
        %5558 = vmatpush1.msra.mxu0 0.0
        %5559 = vmatprep.subr.mxu0 0.0
        %5560 = vmatpush1.msra.mxu0 0.0
        %5561 = vmatprep.subr.mxu0 0.0
        %5562 = vmatpush1.msra.mxu0 0.0
        %5563 = vmatprep.subr.mxu0 0.0
        %5564 = vmatpush1.msra.mxu0 0.0
        %5565 = vmatprep.subr.mxu0 0.0
        %5566 = vmatpush1.msra.mxu0 0.0
        %5567 = vmatprep.subr.mxu0 0.0
        %5568 = vmatpush1.msra.mxu0 0.0
        %5569 = vmatprep.subr.mxu0 0.0
        %5570 = vmatpush1.msra.mxu0 0.0
        %5571 = vmatprep.subr.mxu0 0.0
        %5572 = vmatpush1.msra.mxu0 0.0
        %5573 = vmatprep.subr.mxu0 0.0
        %5574 = vmatpush1.msra.mxu0 0.0
        %5575 = vmatprep.subr.mxu0 0.0
        %5576 = vmatpush1.msra.mxu0 0.0
        %5577 = vmatprep.subr.mxu0 0.0
        %5578 = vmatpush1.msra.mxu0 0.0
        %5579 = vmatprep.subr.mxu0 0.0
        %5580 = vmatpush1.msra.mxu0 0.0
        %5581 = vmatprep.subr.mxu0 0.0
        %5582 = vmatpush1.msra.mxu0 0.0
        %5583 = vmatprep.subr.mxu0 0.0
        %5584 = vmatpush1.msra.mxu0 0.0
        %5585 = vmatprep.subr.mxu0 0.0
        %5586 = vmatpush1.msra.mxu0 0.0
        %5587 = vmatprep.mubr.f32.mxu0 0.0
        %5588 = vmatmul.mubr.f32.gmra.mrb[0].mxu0 %v5521
        %v5589 = vpop.f32.mrb[0].mxu0
        %v5590 = vadd.f32 0.0, %v5589
        %v5591 = vpop.f32.mrb[0].mxu0
        %5592 = vdwg.mxu0
        %5593 = vrot.lane.b32.xlu0 %v645, 40
        %v5594 = vpop.permute.xlu0 %5593
        %v5597 = vsel %vm671, %v5360, 0
        %5599 = vmatprep.subr.mxu0 0.0
        %5600 = vmatpush1.msra.mxu0 %v5594
        %5601 = vmatprep.subr.mxu0 0.0
        %5602 = vmatpush1.msra.mxu0 0.0
        %5603 = vmatprep.subr.mxu0 0.0
        %5604 = vmatpush1.msra.mxu0 0.0
        %5605 = vmatprep.subr.mxu0 0.0
        %5606 = vmatpush1.msra.mxu0 0.0
        %5607 = vmatprep.subr.mxu0 0.0
        %5608 = vmatpush1.msra.mxu0 0.0
        %5609 = vmatprep.subr.mxu0 0.0
        %5610 = vmatpush1.msra.mxu0 0.0
        %5611 = vmatprep.subr.mxu0 0.0
        %5612 = vmatpush1.msra.mxu0 0.0
        %5613 = vmatprep.subr.mxu0 0.0
        %5614 = vmatpush1.msra.mxu0 0.0
        %5615 = vmatprep.subr.mxu0 0.0
        %5616 = vmatpush1.msra.mxu0 0.0
        %5617 = vmatprep.subr.mxu0 0.0
        %5618 = vmatpush1.msra.mxu0 0.0
        %5619 = vmatprep.subr.mxu0 0.0
        %5620 = vmatpush1.msra.mxu0 0.0
        %5621 = vmatprep.subr.mxu0 0.0
        %5622 = vmatpush1.msra.mxu0 0.0
        %5623 = vmatprep.subr.mxu0 0.0
        %5624 = vmatpush1.msra.mxu0 0.0
        %5625 = vmatprep.subr.mxu0 0.0
        %5626 = vmatpush1.msra.mxu0 0.0
        %5627 = vmatprep.subr.mxu0 0.0
        %5628 = vmatpush1.msra.mxu0 0.0
        %5629 = vmatprep.subr.mxu0 0.0
        %5630 = vmatpush1.msra.mxu0 0.0
        %5631 = vmatprep.subr.mxu0 0.0
        %5632 = vmatpush1.msra.mxu0 0.0
        %5633 = vmatprep.subr.mxu0 0.0
        %5634 = vmatpush1.msra.mxu0 0.0
        %5635 = vmatprep.subr.mxu0 0.0
        %5636 = vmatpush1.msra.mxu0 0.0
        %5637 = vmatprep.subr.mxu0 0.0
        %5638 = vmatpush1.msra.mxu0 0.0
        %5639 = vmatprep.subr.mxu0 0.0
        %5640 = vmatpush1.msra.mxu0 0.0
        %5641 = vmatprep.subr.mxu0 0.0
        %5642 = vmatpush1.msra.mxu0 0.0
        %5643 = vmatprep.subr.mxu0 0.0
        %5644 = vmatpush1.msra.mxu0 0.0
        %5645 = vmatprep.subr.mxu0 0.0
        %5646 = vmatpush1.msra.mxu0 0.0
        %5647 = vmatprep.subr.mxu0 0.0
        %5648 = vmatpush1.msra.mxu0 0.0
        %5649 = vmatprep.subr.mxu0 0.0
        %5650 = vmatpush1.msra.mxu0 0.0
        %5651 = vmatprep.subr.mxu0 0.0
        %5652 = vmatpush1.msra.mxu0 0.0
        %5653 = vmatprep.subr.mxu0 0.0
        %5654 = vmatpush1.msra.mxu0 0.0
        %5655 = vmatprep.subr.mxu0 0.0
        %5656 = vmatpush1.msra.mxu0 0.0
        %5657 = vmatprep.subr.mxu0 0.0
        %5658 = vmatpush1.msra.mxu0 0.0
        %5659 = vmatprep.subr.mxu0 0.0
        %5660 = vmatpush1.msra.mxu0 0.0
        %5661 = vmatprep.subr.mxu0 0.0
        %5662 = vmatpush1.msra.mxu0 0.0
        %5663 = vmatprep.mubr.f32.mxu0 0.0
        %5664 = vmatmul.mubr.f32.gmra.mrb[0].mxu0 %v5597
        %v5665 = vpop.f32.mrb[0].mxu0
        %v5666 = vadd.f32 0.0, %v5665
        %v5667 = vpop.f32.mrb[0].mxu0
        %5668 = vdwg.mxu0
        %5669 = vrot.lane.b32.xlu0 %v650, 40
        %v5670 = vpop.permute.xlu0 %5669
        %v5673 = vsel %vm671, %v5361, 0
        %5675 = vmatprep.subr.mxu0 0.0
        %5676 = vmatpush1.msra.mxu0 %v5670
        %5677 = vmatprep.subr.mxu0 0.0
        %5678 = vmatpush1.msra.mxu0 0.0
        %5679 = vmatprep.subr.mxu0 0.0
        %5680 = vmatpush1.msra.mxu0 0.0
        %5681 = vmatprep.subr.mxu0 0.0
        %5682 = vmatpush1.msra.mxu0 0.0
        %5683 = vmatprep.subr.mxu0 0.0
        %5684 = vmatpush1.msra.mxu0 0.0
        %5685 = vmatprep.subr.mxu0 0.0
        %5686 = vmatpush1.msra.mxu0 0.0
        %5687 = vmatprep.subr.mxu0 0.0
        %5688 = vmatpush1.msra.mxu0 0.0
        %5689 = vmatprep.subr.mxu0 0.0
        %5690 = vmatpush1.msra.mxu0 0.0
        %5691 = vmatprep.subr.mxu0 0.0
        %5692 = vmatpush1.msra.mxu0 0.0
        %5693 = vmatprep.subr.mxu0 0.0
        %5694 = vmatpush1.msra.mxu0 0.0
        %5695 = vmatprep.subr.mxu0 0.0
        %5696 = vmatpush1.msra.mxu0 0.0
        %5697 = vmatprep.subr.mxu0 0.0
        %5698 = vmatpush1.msra.mxu0 0.0
        %5699 = vmatprep.subr.mxu0 0.0
        %5700 = vmatpush1.msra.mxu0 0.0
        %5701 = vmatprep.subr.mxu0 0.0
        %5702 = vmatpush1.msra.mxu0 0.0
        %5703 = vmatprep.subr.mxu0 0.0
        %5704 = vmatpush1.msra.mxu0 0.0
        %5705 = vmatprep.subr.mxu0 0.0
        %5706 = vmatpush1.msra.mxu0 0.0
        %5707 = vmatprep.subr.mxu0 0.0
        %5708 = vmatpush1.msra.mxu0 0.0
        %5709 = vmatprep.subr.mxu0 0.0
        %5710 = vmatpush1.msra.mxu0 0.0
        %5711 = vmatprep.subr.mxu0 0.0
        %5712 = vmatpush1.msra.mxu0 0.0
        %5713 = vmatprep.subr.mxu0 0.0
        %5714 = vmatpush1.msra.mxu0 0.0
        %5715 = vmatprep.subr.mxu0 0.0
        %5716 = vmatpush1.msra.mxu0 0.0
        %5717 = vmatprep.subr.mxu0 0.0
        %5718 = vmatpush1.msra.mxu0 0.0
        %5719 = vmatprep.subr.mxu0 0.0
        %5720 = vmatpush1.msra.mxu0 0.0
        %5721 = vmatprep.subr.mxu0 0.0
        %5722 = vmatpush1.msra.mxu0 0.0
        %5723 = vmatprep.subr.mxu0 0.0
        %5724 = vmatpush1.msra.mxu0 0.0
        %5725 = vmatprep.subr.mxu0 0.0
        %5726 = vmatpush1.msra.mxu0 0.0
        %5727 = vmatprep.subr.mxu0 0.0
        %5728 = vmatpush1.msra.mxu0 0.0
        %5729 = vmatprep.subr.mxu0 0.0
        %5730 = vmatpush1.msra.mxu0 0.0
        %5731 = vmatprep.subr.mxu0 0.0
        %5732 = vmatpush1.msra.mxu0 0.0
        %5733 = vmatprep.subr.mxu0 0.0
        %5734 = vmatpush1.msra.mxu0 0.0
        %5735 = vmatprep.subr.mxu0 0.0
        %5736 = vmatpush1.msra.mxu0 0.0
        %5737 = vmatprep.subr.mxu0 0.0
        %5738 = vmatpush1.msra.mxu0 0.0
        %5739 = vmatprep.mubr.f32.mxu0 0.0
        %5740 = vmatmul.mubr.f32.gmra.mrb[0].mxu0 %v5673
        %v5741 = vpop.f32.mrb[0].mxu0
        %v5742 = vadd.f32 0.0, %v5741
        %v5743 = vpop.f32.mrb[0].mxu0
        %5744 = vdwg.mxu0
        %5745 = vrot.lane.b32.xlu0 %v655, 40
        %v5746 = vpop.permute.xlu0 %5745
        %v5749 = vsel %vm671, %v5362, 0
        %5751 = vmatprep.subr.mxu0 0.0
        %5752 = vmatpush1.msra.mxu0 %v5746
        %5753 = vmatprep.subr.mxu0 0.0
        %5754 = vmatpush1.msra.mxu0 0.0
        %5755 = vmatprep.subr.mxu0 0.0
        %5756 = vmatpush1.msra.mxu0 0.0
        %5757 = vmatprep.subr.mxu0 0.0
        %5758 = vmatpush1.msra.mxu0 0.0
        %5759 = vmatprep.subr.mxu0 0.0
        %5760 = vmatpush1.msra.mxu0 0.0
        %5761 = vmatprep.subr.mxu0 0.0
        %5762 = vmatpush1.msra.mxu0 0.0
        %5763 = vmatprep.subr.mxu0 0.0
        %5764 = vmatpush1.msra.mxu0 0.0
        %5765 = vmatprep.subr.mxu0 0.0
        %5766 = vmatpush1.msra.mxu0 0.0
        %5767 = vmatprep.subr.mxu0 0.0
        %5768 = vmatpush1.msra.mxu0 0.0
        %5769 = vmatprep.subr.mxu0 0.0
        %5770 = vmatpush1.msra.mxu0 0.0
        %5771 = vmatprep.subr.mxu0 0.0
        %5772 = vmatpush1.msra.mxu0 0.0
        %5773 = vmatprep.subr.mxu0 0.0
        %5774 = vmatpush1.msra.mxu0 0.0
        %5775 = vmatprep.subr.mxu0 0.0
        %5776 = vmatpush1.msra.mxu0 0.0
        %5777 = vmatprep.subr.mxu0 0.0
        %5778 = vmatpush1.msra.mxu0 0.0
        %5779 = vmatprep.subr.mxu0 0.0
        %5780 = vmatpush1.msra.mxu0 0.0
        %5781 = vmatprep.subr.mxu0 0.0
        %5782 = vmatpush1.msra.mxu0 0.0
        %5783 = vmatprep.subr.mxu0 0.0
        %5784 = vmatpush1.msra.mxu0 0.0
        %5785 = vmatprep.subr.mxu0 0.0
        %5786 = vmatpush1.msra.mxu0 0.0
        %5787 = vmatprep.subr.mxu0 0.0
        %5788 = vmatpush1.msra.mxu0 0.0
        %5789 = vmatprep.subr.mxu0 0.0
        %5790 = vmatpush1.msra.mxu0 0.0
        %5791 = vmatprep.subr.mxu0 0.0
        %5792 = vmatpush1.msra.mxu0 0.0
        %5793 = vmatprep.subr.mxu0 0.0
        %5794 = vmatpush1.msra.mxu0 0.0
        %5795 = vmatprep.subr.mxu0 0.0
        %5796 = vmatpush1.msra.mxu0 0.0
        %5797 = vmatprep.subr.mxu0 0.0
        %5798 = vmatpush1.msra.mxu0 0.0
        %5799 = vmatprep.subr.mxu0 0.0
        %5800 = vmatpush1.msra.mxu0 0.0
        %5801 = vmatprep.subr.mxu0 0.0
        %5802 = vmatpush1.msra.mxu0 0.0
        %5803 = vmatprep.subr.mxu0 0.0
        %5804 = vmatpush1.msra.mxu0 0.0
        %5805 = vmatprep.subr.mxu0 0.0
        %5806 = vmatpush1.msra.mxu0 0.0
        %5807 = vmatprep.subr.mxu0 0.0
        %5808 = vmatpush1.msra.mxu0 0.0
        %5809 = vmatprep.subr.mxu0 0.0
        %5810 = vmatpush1.msra.mxu0 0.0
        %5811 = vmatprep.subr.mxu0 0.0
        %5812 = vmatpush1.msra.mxu0 0.0
        %5813 = vmatprep.subr.mxu0 0.0
        %5814 = vmatpush1.msra.mxu0 0.0
        %5815 = vmatprep.mubr.f32.mxu0 0.0
        %5816 = vmatmul.mubr.f32.gmra.mrb[0].mxu0 %v5749
        %v5817 = vpop.f32.mrb[0].mxu0
        %v5818 = vadd.f32 0.0, %v5817
        %v5819 = vpop.f32.mrb[0].mxu0
        %5820 = vdwg.mxu0
        %5821 = vrot.lane.b32.xlu0 %v660, 40
        %v5822 = vpop.permute.xlu0 %5821
        %v5825 = vsel %vm671, %v5363, 0
        %5827 = vmatprep.subr.mxu0 0.0
        %5828 = vmatpush1.msra.mxu0 %v5822
        %5829 = vmatprep.subr.mxu0 0.0
        %5830 = vmatpush1.msra.mxu0 0.0
        %5831 = vmatprep.subr.mxu0 0.0
        %5832 = vmatpush1.msra.mxu0 0.0
        %5833 = vmatprep.subr.mxu0 0.0
        %5834 = vmatpush1.msra.mxu0 0.0
        %5835 = vmatprep.subr.mxu0 0.0
        %5836 = vmatpush1.msra.mxu0 0.0
        %5837 = vmatprep.subr.mxu0 0.0
        %5838 = vmatpush1.msra.mxu0 0.0
        %5839 = vmatprep.subr.mxu0 0.0
        %5840 = vmatpush1.msra.mxu0 0.0
        %5841 = vmatprep.subr.mxu0 0.0
        %5842 = vmatpush1.msra.mxu0 0.0
        %5843 = vmatprep.subr.mxu0 0.0
        %5844 = vmatpush1.msra.mxu0 0.0
        %5845 = vmatprep.subr.mxu0 0.0
        %5846 = vmatpush1.msra.mxu0 0.0
        %5847 = vmatprep.subr.mxu0 0.0
        %5848 = vmatpush1.msra.mxu0 0.0
        %5849 = vmatprep.subr.mxu0 0.0
        %5850 = vmatpush1.msra.mxu0 0.0
        %5851 = vmatprep.subr.mxu0 0.0
        %5852 = vmatpush1.msra.mxu0 0.0
        %5853 = vmatprep.subr.mxu0 0.0
        %5854 = vmatpush1.msra.mxu0 0.0
        %5855 = vmatprep.subr.mxu0 0.0
        %5856 = vmatpush1.msra.mxu0 0.0
        %5857 = vmatprep.subr.mxu0 0.0
        %5858 = vmatpush1.msra.mxu0 0.0
        %5859 = vmatprep.subr.mxu0 0.0
        %5860 = vmatpush1.msra.mxu0 0.0
        %5861 = vmatprep.subr.mxu0 0.0
        %5862 = vmatpush1.msra.mxu0 0.0
        %5863 = vmatprep.subr.mxu0 0.0
        %5864 = vmatpush1.msra.mxu0 0.0
        %5865 = vmatprep.subr.mxu0 0.0
        %5866 = vmatpush1.msra.mxu0 0.0
        %5867 = vmatprep.subr.mxu0 0.0
        %5868 = vmatpush1.msra.mxu0 0.0
        %5869 = vmatprep.subr.mxu0 0.0
        %5870 = vmatpush1.msra.mxu0 0.0
        %5871 = vmatprep.subr.mxu0 0.0
        %5872 = vmatpush1.msra.mxu0 0.0
        %5873 = vmatprep.subr.mxu0 0.0
        %5874 = vmatpush1.msra.mxu0 0.0
        %5875 = vmatprep.subr.mxu0 0.0
        %5876 = vmatpush1.msra.mxu0 0.0
        %5877 = vmatprep.subr.mxu0 0.0
        %5878 = vmatpush1.msra.mxu0 0.0
        %5879 = vmatprep.subr.mxu0 0.0
        %5880 = vmatpush1.msra.mxu0 0.0
        %5881 = vmatprep.subr.mxu0 0.0
        %5882 = vmatpush1.msra.mxu0 0.0
        %5883 = vmatprep.subr.mxu0 0.0
        %5884 = vmatpush1.msra.mxu0 0.0
        %5885 = vmatprep.subr.mxu0 0.0
        %5886 = vmatpush1.msra.mxu0 0.0
        %5887 = vmatprep.subr.mxu0 0.0
        %5888 = vmatpush1.msra.mxu0 0.0
        %5889 = vmatprep.subr.mxu0 0.0
        %5890 = vmatpush1.msra.mxu0 0.0
        %5891 = vmatprep.mubr.f32.mxu0 0.0
        %5892 = vmatmul.mubr.f32.gmra.mrb[0].mxu0 %v5825
        %v5893 = vpop.f32.mrb[0].mxu0
        %v5894 = vadd.f32 0.0, %v5893
        %v5895 = vpop.f32.mrb[0].mxu0
        %5896 = vdwg.mxu0
        %5897 = vrot.lane.b32.xlu0 %v665, 40
        %v5898 = vpop.permute.xlu0 %5897
        %v5901 = vsel %vm671, %v5364, 0
        %5903 = vmatprep.subr.mxu0 0.0
        %5904 = vmatpush1.msra.mxu0 %v5898
        %5905 = vmatprep.subr.mxu0 0.0
        %5906 = vmatpush1.msra.mxu0 0.0
        %5907 = vmatprep.subr.mxu0 0.0
        %5908 = vmatpush1.msra.mxu0 0.0
        %5909 = vmatprep.subr.mxu0 0.0
        %5910 = vmatpush1.msra.mxu0 0.0
        %5911 = vmatprep.subr.mxu0 0.0
        %5912 = vmatpush1.msra.mxu0 0.0
        %5913 = vmatprep.subr.mxu0 0.0
        %5914 = vmatpush1.msra.mxu0 0.0
        %5915 = vmatprep.subr.mxu0 0.0
        %5916 = vmatpush1.msra.mxu0 0.0
        %5917 = vmatprep.subr.mxu0 0.0
        %5918 = vmatpush1.msra.mxu0 0.0
        %5919 = vmatprep.subr.mxu0 0.0
        %5920 = vmatpush1.msra.mxu0 0.0
        %5921 = vmatprep.subr.mxu0 0.0
        %5922 = vmatpush1.msra.mxu0 0.0
        %5923 = vmatprep.subr.mxu0 0.0
        %5924 = vmatpush1.msra.mxu0 0.0
        %5925 = vmatprep.subr.mxu0 0.0
        %5926 = vmatpush1.msra.mxu0 0.0
        %5927 = vmatprep.subr.mxu0 0.0
        %5928 = vmatpush1.msra.mxu0 0.0
        %5929 = vmatprep.subr.mxu0 0.0
        %5930 = vmatpush1.msra.mxu0 0.0
        %5931 = vmatprep.subr.mxu0 0.0
        %5932 = vmatpush1.msra.mxu0 0.0
        %5933 = vmatprep.subr.mxu0 0.0
        %5934 = vmatpush1.msra.mxu0 0.0
        %5935 = vmatprep.subr.mxu0 0.0
        %5936 = vmatpush1.msra.mxu0 0.0
        %5937 = vmatprep.subr.mxu0 0.0
        %5938 = vmatpush1.msra.mxu0 0.0
        %5939 = vmatprep.subr.mxu0 0.0
        %5940 = vmatpush1.msra.mxu0 0.0
        %5941 = vmatprep.subr.mxu0 0.0
        %5942 = vmatpush1.msra.mxu0 0.0
        %5943 = vmatprep.subr.mxu0 0.0
        %5944 = vmatpush1.msra.mxu0 0.0
        %5945 = vmatprep.subr.mxu0 0.0
        %5946 = vmatpush1.msra.mxu0 0.0
        %5947 = vmatprep.subr.mxu0 0.0
        %5948 = vmatpush1.msra.mxu0 0.0
        %5949 = vmatprep.subr.mxu0 0.0
        %5950 = vmatpush1.msra.mxu0 0.0
        %5951 = vmatprep.subr.mxu0 0.0
        %5952 = vmatpush1.msra.mxu0 0.0
        %5953 = vmatprep.subr.mxu0 0.0
        %5954 = vmatpush1.msra.mxu0 0.0
        %5955 = vmatprep.subr.mxu0 0.0
        %5956 = vmatpush1.msra.mxu0 0.0
        %5957 = vmatprep.subr.mxu0 0.0
        %5958 = vmatpush1.msra.mxu0 0.0
        %5959 = vmatprep.subr.mxu0 0.0
        %5960 = vmatpush1.msra.mxu0 0.0
        %5961 = vmatprep.subr.mxu0 0.0
        %5962 = vmatpush1.msra.mxu0 0.0
        %5963 = vmatprep.subr.mxu0 0.0
        %5964 = vmatpush1.msra.mxu0 0.0
        %5965 = vmatprep.subr.mxu0 0.0
        %5966 = vmatpush1.msra.mxu0 0.0
        %5967 = vmatprep.mubr.f32.mxu0 0.0
        %5968 = vmatmul.mubr.f32.gmra.mrb[0].mxu0 %v5901
        %v5969 = vpop.f32.mrb[0].mxu0
        %v5970 = vadd.f32 0.0, %v5969
        %v5971 = vpop.f32.mrb[0].mxu0
        %5972 = vdwg.mxu0
        %5981 = vrot.lane.b32.xlu0 %v2782, 8
        %v5982 = vpop.permute.xlu0 %5981
        %5983 = vrot.lane.b32.xlu0 %v2858, 8
        %v5984 = vpop.permute.xlu0 %5983
        %5985 = vrot.lane.b32.xlu0 %v2934, 8
        %v5986 = vpop.permute.xlu0 %5985
        %5987 = vrot.lane.b32.xlu0 %v3010, 8
        %v5988 = vpop.permute.xlu0 %5987
        %5989 = vrot.lane.b32.xlu0 %v3086, 8
        %v5990 = vpop.permute.xlu0 %5989
        %5991 = vrot.lane.b32.xlu0 %v3162, 8
        %v5992 = vpop.permute.xlu0 %5991
        %5993 = vrot.lane.b32.xlu0 %v3238, 8
        %v5994 = vpop.permute.xlu0 %5993
        %5995 = vrot.lane.b32.xlu0 %v3314, 8
        %v5996 = vpop.permute.xlu0 %5995
        %6013 = vrot.lane.b32.xlu0 %v4110, 16
        %v6014 = vpop.permute.xlu0 %6013
        %6015 = vrot.lane.b32.xlu0 %v4186, 16
        %v6016 = vpop.permute.xlu0 %6015
        %6017 = vrot.lane.b32.xlu0 %v4262, 16
        %v6018 = vpop.permute.xlu0 %6017
        %6019 = vrot.lane.b32.xlu0 %v4338, 16
        %v6020 = vpop.permute.xlu0 %6019
        %6021 = vrot.lane.b32.xlu0 %v4414, 16
        %v6022 = vpop.permute.xlu0 %6021
        %6023 = vrot.lane.b32.xlu0 %v4490, 16
        %v6024 = vpop.permute.xlu0 %6023
        %6025 = vrot.lane.b32.xlu0 %v4566, 16
        %v6026 = vpop.permute.xlu0 %6025
        %6027 = vrot.lane.b32.xlu0 %v4642, 16
        %v6028 = vpop.permute.xlu0 %6027
        %6045 = vrot.lane.b32.xlu0 %v5438, 24
        %v6046 = vpop.permute.xlu0 %6045
        %6047 = vrot.lane.b32.xlu0 %v5514, 24
        %v6048 = vpop.permute.xlu0 %6047
        %6049 = vrot.lane.b32.xlu0 %v5590, 24
        %v6050 = vpop.permute.xlu0 %6049
        %6051 = vrot.lane.b32.xlu0 %v5666, 24
        %v6052 = vpop.permute.xlu0 %6051
        %6053 = vrot.lane.b32.xlu0 %v5742, 24
        %v6054 = vpop.permute.xlu0 %6053
        %6055 = vrot.lane.b32.xlu0 %v5818, 24
        %v6056 = vpop.permute.xlu0 %6055
        %6057 = vrot.lane.b32.xlu0 %v5894, 24
        %v6058 = vpop.permute.xlu0 %6057
        %6059 = vrot.lane.b32.xlu0 %v5970, 24
        %v6060 = vpop.permute.xlu0 %6059
        %v6069 = vsel %vm671, %v1454, %v5982
        %v6070 = vsel %vm671, %v1530, %v5984
        %v6071 = vsel %vm671, %v1606, %v5986
        %v6072 = vsel %vm671, %v1682, %v5988
        %v6073 = vsel %vm671, %v1758, %v5990
        %v6074 = vsel %vm671, %v1834, %v5992
        %v6075 = vsel %vm671, %v1910, %v5994
        %v6076 = vsel %vm671, %v1986, %v5996
        %vm6077 = vcmask 130048
        %v6078 = vsel %vm6077, %v6069, %v6014
        %v6079 = vsel %vm6077, %v6070, %v6016
        %v6080 = vsel %vm6077, %v6071, %v6018
        %v6081 = vsel %vm6077, %v6072, %v6020
        %v6082 = vsel %vm6077, %v6073, %v6022
        %v6083 = vsel %vm6077, %v6074, %v6024
        %v6084 = vsel %vm6077, %v6075, %v6026
        %v6085 = vsel %vm6077, %v6076, %v6028
        %vm6086 = vcmask 195584
        %v6087 = vsel %vm6086, %v6078, %v6046
        %v6088 = vsel %vm6086, %v6079, %v6048
        %v6089 = vsel %vm6086, %v6080, %v6050
        %v6090 = vsel %vm6086, %v6081, %v6052
        %v6091 = vsel %vm6086, %v6082, %v6054
        %v6092 = vsel %vm6086, %v6083, %v6056
        %v6093 = vsel %vm6086, %v6084, %v6058
        %v6094 = vsel %vm6086, %v6085, %v6060
        %v6095 = vld [vmem:[%s364] sm:$0xff]
        %v6096 = vld [vmem:[%s364 + $0x8] sm:$0xff]
        %v6097 = vld [vmem:[%s364 + $0x10] sm:$0xff]
        %v6098 = vld [vmem:[%s364 + $0x18] sm:$0xff]
        %v6099 = vlaneseq
        %v6100 = vshrl.u32 %v6099, 7
        %v6101 = vsub.s32 2, %v6100
        %v6102 = vrot.slane %v396, %v6101
        %v6104 = vsel %vm405, %v6087, 0
        %v6107 = vsel %vm405, %v6088, 0
        %v6110 = vsel %vm405, %v6089, 0
        %v6113 = vsel %vm405, %v6090, 0
        %v6116 = vsel %vm405, %v6091, 0
        %v6119 = vsel %vm405, %v6092, 0
        %v6122 = vsel %vm405, %v6093, 0
        %v6125 = vsel %vm405, %v6094, 0
        %6127 = vmatprep.subr.mxu0 0.0
        %6128 = vmatpush1.msra.mxu0 %v6095
        %6129 = vmatprep.subr.mxu0 0.0
        %6130 = vmatpush1.msra.mxu0 %v6096
        %6131 = vmatprep.subr.mxu0 0.0
        %6132 = vmatpush1.msra.mxu0 %v6097
        %6133 = vmatprep.subr.mxu0 0.0
        %6134 = vmatpush1.msra.mxu0 %v6098
        %6135 = vmatprep.subr.mxu0 0.0
        %6136 = vmatpush1.msra.mxu0 0.0
        %6137 = vmatprep.subr.mxu0 0.0
        %6138 = vmatpush1.msra.mxu0 0.0
        %6139 = vmatprep.subr.mxu0 0.0
        %6140 = vmatpush1.msra.mxu0 0.0
        %6141 = vmatprep.subr.mxu0 0.0
        %6142 = vmatpush1.msra.mxu0 0.0
        %6143 = vmatprep.subr.mxu0 0.0
        %6144 = vmatpush1.msra.mxu0 0.0
        %6145 = vmatprep.subr.mxu0 0.0
        %6146 = vmatpush1.msra.mxu0 0.0
        %6147 = vmatprep.subr.mxu0 0.0
        %6148 = vmatpush1.msra.mxu0 0.0
        %6149 = vmatprep.subr.mxu0 0.0
        %6150 = vmatpush1.msra.mxu0 0.0
        %6151 = vmatprep.subr.mxu0 0.0
        %6152 = vmatpush1.msra.mxu0 0.0
        %6153 = vmatprep.subr.mxu0 0.0
        %6154 = vmatpush1.msra.mxu0 0.0
        %6155 = vmatprep.subr.mxu0 0.0
        %6156 = vmatpush1.msra.mxu0 0.0
        %6157 = vmatprep.subr.mxu0 0.0
        %6158 = vmatpush1.msra.mxu0 0.0
        %6159 = vmatprep.subr.mxu0 0.0
        %6160 = vmatpush1.msra.mxu0 0.0
        %6161 = vmatprep.subr.mxu0 0.0
        %6162 = vmatpush1.msra.mxu0 0.0
        %6163 = vmatprep.subr.mxu0 0.0
        %6164 = vmatpush1.msra.mxu0 0.0
        %6165 = vmatprep.subr.mxu0 0.0
        %6166 = vmatpush1.msra.mxu0 0.0
        %6167 = vmatprep.subr.mxu0 0.0
        %6168 = vmatpush1.msra.mxu0 0.0
        %6169 = vmatprep.subr.mxu0 0.0
        %6170 = vmatpush1.msra.mxu0 0.0
        %6171 = vmatprep.subr.mxu0 0.0
        %6172 = vmatpush1.msra.mxu0 0.0
        %6173 = vmatprep.subr.mxu0 0.0
        %6174 = vmatpush1.msra.mxu0 0.0
        %6175 = vmatprep.subr.mxu0 0.0
        %6176 = vmatpush1.msra.mxu0 0.0
        %6177 = vmatprep.subr.mxu0 0.0
        %6178 = vmatpush1.msra.mxu0 0.0
        %6179 = vmatprep.subr.mxu0 0.0
        %6180 = vmatpush1.msra.mxu0 0.0
        %6181 = vmatprep.subr.mxu0 0.0
        %6182 = vmatpush1.msra.mxu0 0.0
        %6183 = vmatprep.subr.mxu0 0.0
        %6184 = vmatpush1.msra.mxu0 0.0
        %6185 = vmatprep.subr.mxu0 0.0
        %6186 = vmatpush1.msra.mxu0 0.0
        %6187 = vmatprep.subr.mxu0 0.0
        %6188 = vmatpush1.msra.mxu0 0.0
        %6189 = vmatprep.subr.mxu0 0.0
        %6190 = vmatpush1.msra.mxu0 0.0
        %6191 = vmatprep.mubr.f32.mxu0 0.0
        %6192 = vmatmul.mubr.f32.gmra.mrb[0].mxu0 %v6104
        %v6193 = vpop.f32.mrb[0].mxu0
        %v6194 = vadd.f32 %v6102, %v6193
        %v6195 = vpop.f32.mrb[0].mxu0
        %6196 = vmatprep.mubr.f32.mxu0 0.0
        %6197 = vmatmul.mubr.f32.gmra.mrb[0].mxu0 %v6107
        %v6198 = vpop.f32.mrb[0].mxu0
        %v6199 = vadd.f32 %v6102, %v6198
        %v6200 = vpop.f32.mrb[0].mxu0
        %6201 = vmatprep.mubr.f32.mxu0 0.0
        %6202 = vmatmul.mubr.f32.gmra.mrb[0].mxu0 %v6110
        %v6203 = vpop.f32.mrb[0].mxu0
        %v6204 = vadd.f32 %v6102, %v6203
        %v6205 = vpop.f32.mrb[0].mxu0
        %6206 = vmatprep.mubr.f32.mxu0 0.0
        %6207 = vmatmul.mubr.f32.gmra.mrb[0].mxu0 %v6113
        %v6208 = vpop.f32.mrb[0].mxu0
        %v6209 = vadd.f32 %v6102, %v6208
        %v6210 = vpop.f32.mrb[0].mxu0
        %6211 = vmatprep.mubr.f32.mxu0 0.0
        %6212 = vmatmul.mubr.f32.gmra.mrb[0].mxu0 %v6116
        %v6213 = vpop.f32.mrb[0].mxu0
        %v6214 = vadd.f32 %v6102, %v6213
        %v6215 = vpop.f32.mrb[0].mxu0
        %6216 = vmatprep.mubr.f32.mxu0 0.0
        %6217 = vmatmul.mubr.f32.gmra.mrb[0].mxu0 %v6119
        %v6218 = vpop.f32.mrb[0].mxu0
        %v6219 = vadd.f32 %v6102, %v6218
        %v6220 = vpop.f32.mrb[0].mxu0
        %6221 = vmatprep.mubr.f32.mxu0 0.0
        %6222 = vmatmul.mubr.f32.gmra.mrb[0].mxu0 %v6122
        %v6223 = vpop.f32.mrb[0].mxu0
        %v6224 = vadd.f32 %v6102, %v6223
        %v6225 = vpop.f32.mrb[0].mxu0
        %6226 = vmatprep.mubr.f32.mxu0 0.0
        %6227 = vmatmul.mubr.f32.gmra.mrb[0].mxu0 %v6125
        %v6228 = vpop.f32.mrb[0].mxu0
        %v6229 = vadd.f32 %v6102, %v6228
        %v6230 = vpop.f32.mrb[0].mxu0
        %6231 = vdwg.mxu0
        %v6232 = vadd.f32 %v397, %v6194
        %v6233 = vadd.f32 %v398, %v6199
        %v6234 = vadd.f32 %v399, %v6204
        %v6235 = vadd.f32 %v400, %v6209
        %v6236 = vadd.f32 %v401, %v6214
        %v6237 = vadd.f32 %v402, %v6219
        %v6238 = vadd.f32 %v403, %v6224
        %v6239 = vadd.f32 %v404, %v6229
        %v6240 = vsel %vm405, %v6232, 0.0
        %6241 = vadd.xlane.f32.xlu0 %v6240
        %v6242 = vpop.xlane.xlu0 %6241
        %v6243 = vsel %vm405, %v6233, 0.0
        %6244 = vadd.xlane.f32.xlu0 %v6243
        %v6245 = vpop.xlane.xlu0 %6244
        %v6246 = vsel %vm405, %v6234, 0.0
        %6247 = vadd.xlane.f32.xlu0 %v6246
        %v6248 = vpop.xlane.xlu0 %6247
        %v6249 = vsel %vm405, %v6235, 0.0
        %6250 = vadd.xlane.f32.xlu0 %v6249
        %v6251 = vpop.xlane.xlu0 %6250
        %v6252 = vsel %vm405, %v6236, 0.0
        %6253 = vadd.xlane.f32.xlu0 %v6252
        %v6254 = vpop.xlane.xlu0 %6253
        %v6255 = vsel %vm405, %v6237, 0.0
        %6256 = vadd.xlane.f32.xlu0 %v6255
        %v6257 = vpop.xlane.xlu0 %6256
        %v6258 = vsel %vm405, %v6238, 0.0
        %6259 = vadd.xlane.f32.xlu0 %v6258
        %v6260 = vpop.xlane.xlu0 %6259
        %v6261 = vsel %vm405, %v6239, 0.0
        %6262 = vadd.xlane.f32.xlu0 %v6261
        %v6263 = vpop.xlane.xlu0 %6262
        %v6264 = vmul.f32 %v6242, %v430
        %v6265 = vmul.f32 %v6245, %v430
        %v6266 = vmul.f32 %v6248, %v430
        %v6267 = vmul.f32 %v6251, %v430
        %v6268 = vmul.f32 %v6254, %v430
        %v6269 = vmul.f32 %v6257, %v430
        %v6270 = vmul.f32 %v6260, %v430
        %v6271 = vmul.f32 %v6263, %v430
        %v6272 = vsub.f32 %v6232, %v6264
        %v6273 = vsub.f32 %v6233, %v6265
        %v6274 = vsub.f32 %v6234, %v6266
        %v6275 = vsub.f32 %v6235, %v6267
        %v6276 = vsub.f32 %v6236, %v6268
        %v6277 = vsub.f32 %v6237, %v6269
        %v6278 = vsub.f32 %v6238, %v6270
        %v6279 = vsub.f32 %v6239, %v6271
        %v6280 = vmul.f32 %v6272, %v6272
        %v6281 = vmul.f32 %v6273, %v6273
        %v6282 = vmul.f32 %v6274, %v6274
        %v6283 = vmul.f32 %v6275, %v6275
        %v6284 = vmul.f32 %v6276, %v6276
        %v6285 = vmul.f32 %v6277, %v6277
        %v6286 = vmul.f32 %v6278, %v6278
        %v6287 = vmul.f32 %v6279, %v6279
        %v6288 = vsel %vm405, %v6280, 0.0
        %6289 = vadd.xlane.f32.xlu0 %v6288
        %v6290 = vpop.xlane.xlu0 %6289
        %v6291 = vsel %vm405, %v6281, 0.0
        %6292 = vadd.xlane.f32.xlu0 %v6291
        %v6293 = vpop.xlane.xlu0 %6292
        %v6294 = vsel %vm405, %v6282, 0.0
        %6295 = vadd.xlane.f32.xlu0 %v6294
        %v6296 = vpop.xlane.xlu0 %6295
        %v6297 = vsel %vm405, %v6283, 0.0
        %6298 = vadd.xlane.f32.xlu0 %v6297
        %v6299 = vpop.xlane.xlu0 %6298
        %v6300 = vsel %vm405, %v6284, 0.0
        %6301 = vadd.xlane.f32.xlu0 %v6300
        %v6302 = vpop.xlane.xlu0 %6301
        %v6303 = vsel %vm405, %v6285, 0.0
        %6304 = vadd.xlane.f32.xlu0 %v6303
        %v6305 = vpop.xlane.xlu0 %6304
        %v6306 = vsel %vm405, %v6286, 0.0
        %6307 = vadd.xlane.f32.xlu0 %v6306
        %v6308 = vpop.xlane.xlu0 %6307
        %v6309 = vsel %vm405, %v6287, 0.0
        %6310 = vadd.xlane.f32.xlu0 %v6309
        %v6311 = vpop.xlane.xlu0 %6310
        %v6312 = vmul.f32 %v6290, %v430
        %v6313 = vmul.f32 %v6293, %v430
        %v6314 = vmul.f32 %v6296, %v430
        %v6315 = vmul.f32 %v6299, %v430
        %v6316 = vmul.f32 %v6302, %v430
        %v6317 = vmul.f32 %v6305, %v430
        %v6318 = vmul.f32 %v6308, %v430
        %v6319 = vmul.f32 %v6311, %v430
        %v6320 = vadd.f32 %v6312, 1e-05
        %v6321 = vadd.f32 %v6313, 1e-05
        %v6322 = vadd.f32 %v6314, 1e-05
        %v6323 = vadd.f32 %v6315, 1e-05
        %v6324 = vadd.f32 %v6316, 1e-05
        %v6325 = vadd.f32 %v6317, 1e-05
        %v6326 = vadd.f32 %v6318, 1e-05
        %v6327 = vadd.f32 %v6319, 1e-05
        %v6328 = vrsqrt.pop %v6320
        %v6329 = vrsqrt.pop %v6321
        %v6330 = vrsqrt.pop %v6322
        %v6331 = vrsqrt.pop %v6323
        %v6332 = vrsqrt.pop %v6324
        %v6333 = vrsqrt.pop %v6325
        %v6334 = vrsqrt.pop %v6326
        %v6335 = vrsqrt.pop %v6327
        %v6336 = vmul.f32 %v6272, %v6328
        %v6337 = vmul.f32 %v6273, %v6329
        %v6338 = vmul.f32 %v6274, %v6330
        %v6339 = vmul.f32 %v6275, %v6331
        %v6340 = vmul.f32 %v6276, %v6332
        %v6341 = vmul.f32 %v6277, %v6333
        %v6342 = vmul.f32 %v6278, %v6334
        %v6343 = vmul.f32 %v6279, %v6335
        %v6344 = vlaneseq
        %v6345 = vshrl.u32 %v6344, 7
        %v6346 = vsub.s32 3, %v6345
        %v6347 = vrot.slane %v396, %v6346
        %v6348 = vmul.f32 %v6336, %v6347
        %v6349 = vmul.f32 %v6337, %v6347
        %v6350 = vmul.f32 %v6338, %v6347
        %v6351 = vmul.f32 %v6339, %v6347
        %v6352 = vmul.f32 %v6340, %v6347
        %v6353 = vmul.f32 %v6341, %v6347
        %v6354 = vmul.f32 %v6342, %v6347
        %v6355 = vmul.f32 %v6343, %v6347
        %v6356 = vlaneseq
        %v6357 = vshrl.u32 %v6356, 7
        %v6358 = vsub.s32 4, %v6357
        %v6359 = vrot.slane %v396, %v6358
        %v6360 = vadd.f32 %v6348, %v6359
        %v6361 = vadd.f32 %v6349, %v6359
        %v6362 = vadd.f32 %v6350, %v6359
        %v6363 = vadd.f32 %v6351, %v6359
        %v6364 = vadd.f32 %v6352, %v6359
        %v6365 = vadd.f32 %v6353, %v6359
        %v6366 = vadd.f32 %v6354, %v6359
        %v6367 = vadd.f32 %v6355, %v6359
        %v6368 = vld [vmem:[%s301] sm:$0xff]
        %v6369 = vld [vmem:[%s301 + $0x8] sm:$0xff]
        %v6370 = vld [vmem:[%s301 + $0x10] sm:$0xff]
        %v6371 = vld [vmem:[%s301 + $0x18] sm:$0xff]
        %v6372 = vlaneseq
        %v6373 = vshrl.u32 %v6372, 7
        %v6374 = vsub.s32 6, %v6373
        %v6375 = vrot.slane %v396, %v6374
        %v6377 = vsel %vm405, %v6360, 0
        %v6380 = vsel %vm405, %v6361, 0
        %v6383 = vsel %vm405, %v6362, 0
        %v6386 = vsel %vm405, %v6363, 0
        %v6389 = vsel %vm405, %v6364, 0
        %v6392 = vsel %vm405, %v6365, 0
        %v6395 = vsel %vm405, %v6366, 0
        %v6398 = vsel %vm405, %v6367, 0
        %6400 = vmatprep.subr.mxu0 0.0
        %6401 = vmatpush1.msra.mxu0 %v6368
        %6402 = vmatprep.subr.mxu0 0.0
        %6403 = vmatpush1.msra.mxu0 %v6369
        %6404 = vmatprep.subr.mxu0 0.0
        %6405 = vmatpush1.msra.mxu0 %v6370
        %6406 = vmatprep.subr.mxu0 0.0
        %6407 = vmatpush1.msra.mxu0 %v6371
        %6408 = vmatprep.subr.mxu0 0.0
        %6409 = vmatpush1.msra.mxu0 0.0
        %6410 = vmatprep.subr.mxu0 0.0
        %6411 = vmatpush1.msra.mxu0 0.0
        %6412 = vmatprep.subr.mxu0 0.0
        %6413 = vmatpush1.msra.mxu0 0.0
        %6414 = vmatprep.subr.mxu0 0.0
        %6415 = vmatpush1.msra.mxu0 0.0
        %6416 = vmatprep.subr.mxu0 0.0
        %6417 = vmatpush1.msra.mxu0 0.0
        %6418 = vmatprep.subr.mxu0 0.0
        %6419 = vmatpush1.msra.mxu0 0.0
        %6420 = vmatprep.subr.mxu0 0.0
        %6421 = vmatpush1.msra.mxu0 0.0
        %6422 = vmatprep.subr.mxu0 0.0
        %6423 = vmatpush1.msra.mxu0 0.0
        %6424 = vmatprep.subr.mxu0 0.0
        %6425 = vmatpush1.msra.mxu0 0.0
        %6426 = vmatprep.subr.mxu0 0.0
        %6427 = vmatpush1.msra.mxu0 0.0
        %6428 = vmatprep.subr.mxu0 0.0
        %6429 = vmatpush1.msra.mxu0 0.0
        %6430 = vmatprep.subr.mxu0 0.0
        %6431 = vmatpush1.msra.mxu0 0.0
        %6432 = vmatprep.subr.mxu0 0.0
        %6433 = vmatpush1.msra.mxu0 0.0
        %6434 = vmatprep.subr.mxu0 0.0
        %6435 = vmatpush1.msra.mxu0 0.0
        %6436 = vmatprep.subr.mxu0 0.0
        %6437 = vmatpush1.msra.mxu0 0.0
        %6438 = vmatprep.subr.mxu0 0.0
        %6439 = vmatpush1.msra.mxu0 0.0
        %6440 = vmatprep.subr.mxu0 0.0
        %6441 = vmatpush1.msra.mxu0 0.0
        %6442 = vmatprep.subr.mxu0 0.0
        %6443 = vmatpush1.msra.mxu0 0.0
        %6444 = vmatprep.subr.mxu0 0.0
        %6445 = vmatpush1.msra.mxu0 0.0
        %6446 = vmatprep.subr.mxu0 0.0
        %6447 = vmatpush1.msra.mxu0 0.0
        %6448 = vmatprep.subr.mxu0 0.0
        %6449 = vmatpush1.msra.mxu0 0.0
        %6450 = vmatprep.subr.mxu0 0.0
        %6451 = vmatpush1.msra.mxu0 0.0
        %6452 = vmatprep.subr.mxu0 0.0
        %6453 = vmatpush1.msra.mxu0 0.0
        %6454 = vmatprep.subr.mxu0 0.0
        %6455 = vmatpush1.msra.mxu0 0.0
        %6456 = vmatprep.subr.mxu0 0.0
        %6457 = vmatpush1.msra.mxu0 0.0
        %6458 = vmatprep.subr.mxu0 0.0
        %6459 = vmatpush1.msra.mxu0 0.0
        %6460 = vmatprep.subr.mxu0 0.0
        %6461 = vmatpush1.msra.mxu0 0.0
        %6462 = vmatprep.subr.mxu0 0.0
        %6463 = vmatpush1.msra.mxu0 0.0
        %6464 = vmatprep.mubr.f32.mxu0 0.0
        %6465 = vmatmul.mubr.f32.gmra.mrb[0].mxu0 %v6377
        %v6466 = vpop.f32.mrb[0].mxu0
        %v6467 = vadd.f32 %v6375, %v6466
        %v6468 = vpop.f32.mrb[0].mxu0
        %6469 = vmatprep.mubr.f32.mxu0 0.0
        %6470 = vmatmul.mubr.f32.gmra.mrb[0].mxu0 %v6380
        %v6471 = vpop.f32.mrb[0].mxu0
        %v6472 = vadd.f32 %v6375, %v6471
        %v6473 = vpop.f32.mrb[0].mxu0
        %6474 = vmatprep.mubr.f32.mxu0 0.0
        %6475 = vmatmul.mubr.f32.gmra.mrb[0].mxu0 %v6383
        %v6476 = vpop.f32.mrb[0].mxu0
        %v6477 = vadd.f32 %v6375, %v6476
        %v6478 = vpop.f32.mrb[0].mxu0
        %6479 = vmatprep.mubr.f32.mxu0 0.0
        %6480 = vmatmul.mubr.f32.gmra.mrb[0].mxu0 %v6386
        %v6481 = vpop.f32.mrb[0].mxu0
        %v6482 = vadd.f32 %v6375, %v6481
        %v6483 = vpop.f32.mrb[0].mxu0
        %6484 = vmatprep.mubr.f32.mxu0 0.0
        %6485 = vmatmul.mubr.f32.gmra.mrb[0].mxu0 %v6389
        %v6486 = vpop.f32.mrb[0].mxu0
        %v6487 = vadd.f32 %v6375, %v6486
        %v6488 = vpop.f32.mrb[0].mxu0
        %6489 = vmatprep.mubr.f32.mxu0 0.0
        %6490 = vmatmul.mubr.f32.gmra.mrb[0].mxu0 %v6392
        %v6491 = vpop.f32.mrb[0].mxu0
        %v6492 = vadd.f32 %v6375, %v6491
        %v6493 = vpop.f32.mrb[0].mxu0
        %6494 = vmatprep.mubr.f32.mxu0 0.0
        %6495 = vmatmul.mubr.f32.gmra.mrb[0].mxu0 %v6395
        %v6496 = vpop.f32.mrb[0].mxu0
        %v6497 = vadd.f32 %v6375, %v6496
        %v6498 = vpop.f32.mrb[0].mxu0
        %6499 = vmatprep.mubr.f32.mxu0 0.0
        %6500 = vmatmul.mubr.f32.gmra.mrb[0].mxu0 %v6398
        %v6501 = vpop.f32.mrb[0].mxu0
        %v6502 = vadd.f32 %v6375, %v6501
        %v6503 = vpop.f32.mrb[0].mxu0
        %6504 = vdwg.mxu0
        %v6505 = vxor.u32 %v6467, 2147483648
        %v6506 = vxor.u32 %v6472, 2147483648
        %v6507 = vxor.u32 %v6477, 2147483648
        %v6508 = vxor.u32 %v6482, 2147483648
        %v6509 = vxor.u32 %v6487, 2147483648
        %v6510 = vxor.u32 %v6492, 2147483648
        %v6511 = vxor.u32 %v6497, 2147483648
        %v6512 = vxor.u32 %v6502, 2147483648
        %v6513 = vmul.f32 %v6505, 1.442695
        %v6514 = vpow.pop %v6513
        %v6515 = vmul.f32 %v6506, 1.442695
        %v6516 = vpow.pop %v6515
        %v6517 = vmul.f32 %v6507, 1.442695
        %v6518 = vpow.pop %v6517
        %v6519 = vmul.f32 %v6508, 1.442695
        %v6520 = vpow.pop %v6519
        %v6521 = vmul.f32 %v6509, 1.442695
        %v6522 = vpow.pop %v6521
        %v6523 = vmul.f32 %v6510, 1.442695
        %v6524 = vpow.pop %v6523
        %v6525 = vmul.f32 %v6511, 1.442695
        %v6526 = vpow.pop %v6525
        %v6527 = vmul.f32 %v6512, 1.442695
        %v6528 = vpow.pop %v6527
        %v6529 = vadd.f32 %v6514, 1.0
        %v6530 = vadd.f32 %v6516, 1.0
        %v6531 = vadd.f32 %v6518, 1.0
        %v6532 = vadd.f32 %v6520, 1.0
        %v6533 = vadd.f32 %v6522, 1.0
        %v6534 = vadd.f32 %v6524, 1.0
        %v6535 = vadd.f32 %v6526, 1.0
        %v6536 = vadd.f32 %v6528, 1.0
        %v6537 = vrcp.pop %v6529
        %v6538 = vmul.f32 1.0, %v6537
        %v6539 = vrcp.pop %v6530
        %v6540 = vmul.f32 1.0, %v6539
        %v6541 = vrcp.pop %v6531
        %v6542 = vmul.f32 1.0, %v6541
        %v6543 = vrcp.pop %v6532
        %v6544 = vmul.f32 1.0, %v6543
        %v6545 = vrcp.pop %v6533
        %v6546 = vmul.f32 1.0, %v6545
        %v6547 = vrcp.pop %v6534
        %v6548 = vmul.f32 1.0, %v6547
        %v6549 = vrcp.pop %v6535
        %v6550 = vmul.f32 1.0, %v6549
        %v6551 = vrcp.pop %v6536
        %v6552 = vmul.f32 1.0, %v6551
        %v6553 = vmul.f32 %v6467, %v6538
        %v6554 = vmul.f32 %v6472, %v6540
        %v6555 = vmul.f32 %v6477, %v6542
        %v6556 = vmul.f32 %v6482, %v6544
        %v6557 = vmul.f32 %v6487, %v6546
        %v6558 = vmul.f32 %v6492, %v6548
        %v6559 = vmul.f32 %v6497, %v6550
        %v6560 = vmul.f32 %v6502, %v6552
        %v6561 = vld [vmem:[%s369] sm:$0xff]
        %v6562 = vld [vmem:[%s369 + $0x8] sm:$0xff]
        %v6563 = vld [vmem:[%s369 + $0x10] sm:$0xff]
        %v6564 = vld [vmem:[%s369 + $0x18] sm:$0xff]
        %v6565 = vld [vmem:[%s369 + $0x20] sm:$0xff]
        %v6566 = vld [vmem:[%s369 + $0x28] sm:$0xff]
        %v6567 = vld [vmem:[%s369 + $0x30] sm:$0xff]
        %v6568 = vld [vmem:[%s369 + $0x38] sm:$0xff]
        %v6569 = vlaneseq
        %v6570 = vshrl.u32 %v6569, 7
        %v6571 = vsub.s32 5, %v6570
        %v6572 = vrot.slane %v396, %v6571
        %vm6573 = vcmask 523264
        %v6575 = vsel %vm6573, %v6553, 0
        %v6578 = vsel %vm6573, %v6554, 0
        %v6581 = vsel %vm6573, %v6555, 0
        %v6584 = vsel %vm6573, %v6556, 0
        %v6587 = vsel %vm6573, %v6557, 0
        %v6590 = vsel %vm6573, %v6558, 0
        %v6593 = vsel %vm6573, %v6559, 0
        %v6596 = vsel %vm6573, %v6560, 0
        %6598 = vmatprep.subr.mxu0 0.0
        %6599 = vmatpush1.msra.mxu0 %v6561
        %6600 = vmatprep.subr.mxu0 0.0
        %6601 = vmatpush1.msra.mxu0 %v6562
        %6602 = vmatprep.subr.mxu0 0.0
        %6603 = vmatpush1.msra.mxu0 %v6563
        %6604 = vmatprep.subr.mxu0 0.0
        %6605 = vmatpush1.msra.mxu0 %v6564
        %6606 = vmatprep.subr.mxu0 0.0
        %6607 = vmatpush1.msra.mxu0 %v6565
        %6608 = vmatprep.subr.mxu0 0.0
        %6609 = vmatpush1.msra.mxu0 %v6566
        %6610 = vmatprep.subr.mxu0 0.0
        %6611 = vmatpush1.msra.mxu0 %v6567
        %6612 = vmatprep.subr.mxu0 0.0
        %6613 = vmatpush1.msra.mxu0 %v6568
        %6614 = vmatprep.subr.mxu0 0.0
        %6615 = vmatpush1.msra.mxu0 0.0
        %6616 = vmatprep.subr.mxu0 0.0
        %6617 = vmatpush1.msra.mxu0 0.0
        %6618 = vmatprep.subr.mxu0 0.0
        %6619 = vmatpush1.msra.mxu0 0.0
        %6620 = vmatprep.subr.mxu0 0.0
        %6621 = vmatpush1.msra.mxu0 0.0
        %6622 = vmatprep.subr.mxu0 0.0
        %6623 = vmatpush1.msra.mxu0 0.0
        %6624 = vmatprep.subr.mxu0 0.0
        %6625 = vmatpush1.msra.mxu0 0.0
        %6626 = vmatprep.subr.mxu0 0.0
        %6627 = vmatpush1.msra.mxu0 0.0
        %6628 = vmatprep.subr.mxu0 0.0
        %6629 = vmatpush1.msra.mxu0 0.0
        %6630 = vmatprep.subr.mxu0 0.0
        %6631 = vmatpush1.msra.mxu0 0.0
        %6632 = vmatprep.subr.mxu0 0.0
        %6633 = vmatpush1.msra.mxu0 0.0
        %6634 = vmatprep.subr.mxu0 0.0
        %6635 = vmatpush1.msra.mxu0 0.0
        %6636 = vmatprep.subr.mxu0 0.0
        %6637 = vmatpush1.msra.mxu0 0.0
        %6638 = vmatprep.subr.mxu0 0.0
        %6639 = vmatpush1.msra.mxu0 0.0
        %6640 = vmatprep.subr.mxu0 0.0
        %6641 = vmatpush1.msra.mxu0 0.0
        %6642 = vmatprep.subr.mxu0 0.0
        %6643 = vmatpush1.msra.mxu0 0.0
        %6644 = vmatprep.subr.mxu0 0.0
        %6645 = vmatpush1.msra.mxu0 0.0
        %6646 = vmatprep.subr.mxu0 0.0
        %6647 = vmatpush1.msra.mxu0 0.0
        %6648 = vmatprep.subr.mxu0 0.0
        %6649 = vmatpush1.msra.mxu0 0.0
        %6650 = vmatprep.subr.mxu0 0.0
        %6651 = vmatpush1.msra.mxu0 0.0
        %6652 = vmatprep.subr.mxu0 0.0
        %6653 = vmatpush1.msra.mxu0 0.0
        %6654 = vmatprep.subr.mxu0 0.0
        %6655 = vmatpush1.msra.mxu0 0.0
        %6656 = vmatprep.subr.mxu0 0.0
        %6657 = vmatpush1.msra.mxu0 0.0
        %6658 = vmatprep.subr.mxu0 0.0
        %6659 = vmatpush1.msra.mxu0 0.0
        %6660 = vmatprep.subr.mxu0 0.0
        %6661 = vmatpush1.msra.mxu0 0.0
        %6662 = vmatprep.mubr.f32.mxu0 0.0
        %6663 = vmatmul.mubr.f32.gmra.mrb[0].mxu0 %v6575
        %v6664 = vpop.f32.mrb[0].mxu0
        %v6665 = vadd.f32 %v6572, %v6664
        %v6666 = vpop.f32.mrb[0].mxu0
        %6667 = vmatprep.mubr.f32.mxu0 0.0
        %6668 = vmatmul.mubr.f32.gmra.mrb[0].mxu0 %v6578
        %v6669 = vpop.f32.mrb[0].mxu0
        %v6670 = vadd.f32 %v6572, %v6669
        %v6671 = vpop.f32.mrb[0].mxu0
        %6672 = vmatprep.mubr.f32.mxu0 0.0
        %6673 = vmatmul.mubr.f32.gmra.mrb[0].mxu0 %v6581
        %v6674 = vpop.f32.mrb[0].mxu0
        %v6675 = vadd.f32 %v6572, %v6674
        %v6676 = vpop.f32.mrb[0].mxu0
        %6677 = vmatprep.mubr.f32.mxu0 0.0
        %6678 = vmatmul.mubr.f32.gmra.mrb[0].mxu0 %v6584
        %v6679 = vpop.f32.mrb[0].mxu0
        %v6680 = vadd.f32 %v6572, %v6679
        %v6681 = vpop.f32.mrb[0].mxu0
        %6682 = vmatprep.mubr.f32.mxu0 0.0
        %6683 = vmatmul.mubr.f32.gmra.mrb[0].mxu0 %v6587
        %v6684 = vpop.f32.mrb[0].mxu0
        %v6685 = vadd.f32 %v6572, %v6684
        %v6686 = vpop.f32.mrb[0].mxu0
        %6687 = vmatprep.mubr.f32.mxu0 0.0
        %6688 = vmatmul.mubr.f32.gmra.mrb[0].mxu0 %v6590
        %v6689 = vpop.f32.mrb[0].mxu0
        %v6690 = vadd.f32 %v6572, %v6689
        %v6691 = vpop.f32.mrb[0].mxu0
        %6692 = vmatprep.mubr.f32.mxu0 0.0
        %6693 = vmatmul.mubr.f32.gmra.mrb[0].mxu0 %v6593
        %v6694 = vpop.f32.mrb[0].mxu0
        %v6695 = vadd.f32 %v6572, %v6694
        %v6696 = vpop.f32.mrb[0].mxu0
        %6697 = vmatprep.mubr.f32.mxu0 0.0
        %6698 = vmatmul.mubr.f32.gmra.mrb[0].mxu0 %v6596
        %v6699 = vpop.f32.mrb[0].mxu0
        %v6700 = vadd.f32 %v6572, %v6699
        %v6701 = vpop.f32.mrb[0].mxu0
        %6702 = vdwg.mxu0
        %v6703 = vadd.f32 %v6232, %v6665
        %v6704 = vadd.f32 %v6233, %v6670
        %v6705 = vadd.f32 %v6234, %v6675
        %v6706 = vadd.f32 %v6235, %v6680
        %v6707 = vadd.f32 %v6236, %v6685
        %v6708 = vadd.f32 %v6237, %v6690
        %v6709 = vadd.f32 %v6238, %v6695
        %v6710 = vadd.f32 %v6239, %v6700
        %6711 = vst.msk [vmem:[#allocation2] sm:$0xff] %vm405, %v6703
        %6712 = vst.msk [vmem:[#allocation2 + $0x8] sm:$0xff] %vm405, %v6704
        %6713 = vst.msk [vmem:[#allocation2 + $0x10] sm:$0xff] %vm405, %v6705
        %6714 = vst.msk [vmem:[#allocation2 + $0x18] sm:$0xff] %vm405, %v6706
        %6715 = vst.msk [vmem:[#allocation2 + $0x20] sm:$0xff] %vm405, %v6707
        %6716 = vst.msk [vmem:[#allocation2 + $0x28] sm:$0xff] %vm405, %v6708
        %6717 = vst.msk [vmem:[#allocation2 + $0x30] sm:$0xff] %vm405, %v6709
        %6718 = vst.msk [vmem:[#allocation2 + $0x38] sm:$0xff] %vm405, %v6710
        %p6719 = scmp.eq.s32.totalorder %s26, 1
        // Predicated region
        $region53: #{tpu_custom_call.1} parent=43 // pred_check
          %p6720 = pneg %p6719
        $region54: #{tpu_custom_call.1} parent=43 // pred_check_branch
          %6722 = sbr.rel (%p6720) target = $region56
        $region55: #{tpu_custom_call.1} parent=43 // pred_region
          %6723 = vst.msk [vmem:[#allocation6] sm:$0xff] %vm405, %v6703
          %6724 = vst.msk [vmem:[#allocation6 + $0x8] sm:$0xff] %vm405, %v6704
          %6725 = vst.msk [vmem:[#allocation6 + $0x10] sm:$0xff] %vm405, %v6705
          %6726 = vst.msk [vmem:[#allocation6 + $0x18] sm:$0xff] %vm405, %v6706
          %6727 = vst.msk [vmem:[#allocation6 + $0x20] sm:$0xff] %vm405, %v6707
          %6728 = vst.msk [vmem:[#allocation6 + $0x28] sm:$0xff] %vm405, %v6708
          %6729 = vst.msk [vmem:[#allocation6 + $0x30] sm:$0xff] %vm405, %v6709
          %6730 = vst.msk [vmem:[#allocation6 + $0x38] sm:$0xff] %vm405, %v6710
        $region56: #{tpu_custom_call.1} parent=43 // pred_fallthru
          _
        // Predicated region
        $region57: #{tpu_custom_call.1} parent=43 // pred_check
          %p6731 = pneg %p207
        $region58: #{tpu_custom_call.1} parent=43 // pred_check_branch
          %6733 = sbr.rel (%p6731) target = $region60
        $region59: #{tpu_custom_call.1} parent=43 // pred_region
          %s6734 = smul.u32 8, %s25
          %s6736 = ssub.s32 1024, 1024
          %6737 = vsyncadd [#allocation5], %s6736
          %s6738 = smul.addr %s6734, 128
          %s6739 = scalar_lea.hbm %s6, %s6738
          %s6740 = sshll.u32 [#allocation6], 4
          %s6741 = int_to_ptr.vmem [resolvable:$true] %s6740
          %6746 = dma.vmem_to_hbm [thread:$0]  %s6741, 1024, %s6739, [#allocation5], 128, 128, 8
        $region60: #{tpu_custom_call.1} parent=43 // pred_fallthru
          _
        // Predicated region
        $region61: #{tpu_custom_call.1} parent=43 // pred_check
          %p6747 = pneg %p207
        $region62: #{tpu_custom_call.1} parent=43 // pred_check_branch
          %6749 = sbr.rel (%p6747) target = $region64
        $region63: #{tpu_custom_call.1} parent=43 // pred_region
          %6750 = dma.done [#allocation5], 1024
        $region64: #{tpu_custom_call.1} parent=43 // pred_fallthru
          _
      $region44: #{tpu_custom_call.1} parent=5 // pred_fallthru
        _
      %p6751 = scmp.le.s32.totalorder 2, %s16
      // Predicated region
      $region65: #{tpu_custom_call.1} parent=5 // pred_check
        %p6752 = pneg %p6751
      $region66: #{tpu_custom_call.1} parent=5 // pred_check_branch
        %6754 = sbr.rel (%p6752) target = $region68
      $region67: #{tpu_custom_call.1} parent=5 // pred_region
        %s6755 = ssub.s32 %s16, 2
      $region68: #{tpu_custom_call.1} parent=5 // pred_fallthru
        _
    $region6: #{tpu_custom_call.1} parent=1 // loop_footer
      %s20 = sadd.s32 1, %s16
    $region7: #{tpu_custom_call.1} parent=1 // loop_footer_branch
      %15 = sbr.rel target = $region3
    $region8: #{tpu_custom_call.1} parent=1 // loop_exit
      _
    %6756 = vsyncpa [#allocation4], 1
    %s6757 = scalar_lea.sflag [#allocation4], 1
    %6758 = vsyncpa %s6757, 1
    %6759 = vsyncpa [#allocation5], 1
    %s6760 = scalar_lea.sflag [#allocation5], 1
    %6761 = vsyncpa %s6760, 1

</llo_original>
